<compile_context>
chip_gen: v7x
topology: tpu7x:2x2x1
jax: 0.10.0
libtpu: 0.0.40
codegen_flags: <defaults>
</compile_context>

<pallas_src>
import functools

import jax
import jax.numpy as jnp
import numpy as np
from jax.experimental import pallas as pl
from jax.experimental.pallas import tpu as pltpu


# ----------------------------------------------------------------------------
# In-kernel helper: 3x3 'SAME' conv + bias + ReLU on one image plane.
# ----------------------------------------------------------------------------
def _conv3x3_relu(xpad_ref, w_ref, b_ref, x_val, H, W):
    """xpad_ref: (H+2, W+2, Cin) bf16 VMEM halo scratch
       w_ref   : (3, 3, Cin, Cout) bf16 weights
       b_ref   : (1, Cout) f32 bias
       x_val   : (H, W, Cin) bf16 input value
       returns : (H, W, Cout) f32 (post-ReLU)"""
    Cin = xpad_ref.shape[-1]
    Cout = w_ref.shape[-1]
    dt = xpad_ref.dtype

    # Zero only the halo strips; interior is fully overwritten right after.
    xpad_ref[pl.ds(0, 1), :, :] = jnp.zeros((1, W + 2, Cin), dt)
    xpad_ref[pl.ds(H + 1, 1), :, :] = jnp.zeros((1, W + 2, Cin), dt)
    xpad_ref[:, pl.ds(0, 1), :] = jnp.zeros((H + 2, 1, Cin), dt)
    xpad_ref[:, pl.ds(W + 1, 1), :] = jnp.zeros((H + 2, 1, Cin), dt)
    xpad_ref[pl.ds(1, H), pl.ds(1, W), :] = x_val

    # 9 shifted bf16 MXU matmuls, register-resident f32 accumulator.
    acc = jnp.zeros((H * W, Cout), jnp.float32)
    for kh in range(3):                       # static unroll
        for kw in range(3):
            patch = xpad_ref[pl.ds(kh, H), pl.ds(kw, W), :].reshape(H * W, Cin)
            acc = acc + jnp.dot(patch, w_ref[kh, kw],
                                preferred_element_type=jnp.float32)

    y = jnp.maximum(acc + b_ref[...], 0.0)    # bias + ReLU in f32
    return y.reshape(H, W, Cout)


# ----------------------------------------------------------------------------
# Fused kernel: conv1_1 -> conv1_2 -> pool1 -> conv2_1 -> conv2_2.
# One grid step = one batch element; the small spatial planes fit VMEM.
# ----------------------------------------------------------------------------
def _vgg_block_kernel(x_ref, w1_ref, b1_ref, w2_ref, b2_ref, w3_ref, b3_ref,
                      w4_ref, b4_ref,
                      o1_ref, o2_ref, o3_ref, o4_ref,
                      xpad2_ref, xpad3_ref, xpad4_ref, *, H, W):
    H2, W2 = H // 2, W // 2

    # conv1_1: im2col'd input (K=27 padded to 32) -> single MXU matmul.
    y1 = jnp.dot(x_ref[0], w1_ref[...], preferred_element_type=jnp.float32)
    y1 = jnp.maximum(y1 + b1_ref[...], 0.0).reshape(H, W, 64)
    o1_ref[0] = y1.astype(o1_ref.dtype)                          # relu1_1

    # conv1_2 + fused 2x2/2 maxpool (pooled result stays on-chip).
    y2 = _conv3x3_relu(xpad2_ref, w2_ref, b2_ref, y1.astype(jnp.bfloat16), H, W)
    o2_ref[0] = y2.astype(o2_ref.dtype)                          # relu1_2
    p = y2.reshape(H2, 2, W2, 2, 64)
    p = jnp.max(jnp.max(p, axis=3), axis=1)                      # pool1

    # conv2_1.
    y3 = _conv3x3_relu(xpad3_ref, w3_ref, b3_ref, p.astype(jnp.bfloat16), H2, W2)
    o3_ref[0] = y3.astype(o3_ref.dtype)                          # relu2_1

    # conv2_2.
    y4 = _conv3x3_relu(xpad4_ref, w4_ref, b4_ref, y3.astype(jnp.bfloat16), H2, W2)
    o4_ref[0] = y4.astype(o4_ref.dtype)                          # relu2_2


def vgg_features_fused(x_im, w1, b1, w2, b2, w3, b3, w4, b4, *, H, W):
    """x_im: (N, H*W, 32) bf16 im2col'd input; weights bf16, biases (1,C) f32."""
    N = x_im.shape[0]
    H2, W2 = H // 2, W // 2

    flops = 2 * N * (H * W * 32 * 64 + H * W * 9 * 64 * 64
                     + H2 * W2 * 9 * 64 * 128 + H2 * W2 * 9 * 128 * 128)
    out_shapes = (
        jax.ShapeDtypeStruct((N, H, W, 64), jnp.bfloat16),
        jax.ShapeDtypeStruct((N, H, W, 64), jnp.bfloat16),
        jax.ShapeDtypeStruct((N, H2, W2, 128), jnp.bfloat16),
        jax.ShapeDtypeStruct((N, H2, W2, 128), jnp.bfloat16),
    )
    bytes_accessed = int(
        sum(int(np.prod(a.shape)) * a.dtype.itemsize
            for a in (x_im, w1, b1, w2, b2, w3, b3, w4, b4))
        + sum(int(np.prod(s.shape)) * s.dtype.itemsize for s in out_shapes))

    return pl.pallas_call(
        functools.partial(_vgg_block_kernel, H=H, W=W),
        out_shape=out_shapes,
        grid=(N,),
        in_specs=[
            pl.BlockSpec((1, H * W, 32), lambda n: (n, 0, 0)),
            pl.BlockSpec((32, 64), lambda n: (0, 0)),
            pl.BlockSpec((1, 64), lambda n: (0, 0)),
            pl.BlockSpec((3, 3, 64, 64), lambda n: (0, 0, 0, 0)),
            pl.BlockSpec((1, 64), lambda n: (0, 0)),
            pl.BlockSpec((3, 3, 64, 128), lambda n: (0, 0, 0, 0)),
            pl.BlockSpec((1, 128), lambda n: (0, 0)),
            pl.BlockSpec((3, 3, 128, 128), lambda n: (0, 0, 0, 0)),
            pl.BlockSpec((1, 128), lambda n: (0, 0)),
        ],
        out_specs=(
            pl.BlockSpec((1, H, W, 64), lambda n: (n, 0, 0, 0)),
            pl.BlockSpec((1, H, W, 64), lambda n: (n, 0, 0, 0)),
            pl.BlockSpec((1, H2, W2, 128), lambda n: (n, 0, 0, 0)),
            pl.BlockSpec((1, H2, W2, 128), lambda n: (n, 0, 0, 0)),
        ),
        scratch_shapes=[
            pltpu.VMEM((H + 2, W + 2, 64), jnp.bfloat16),    # conv1_2 halo buffer
            pltpu.VMEM((H2 + 2, W2 + 2, 64), jnp.bfloat16),  # conv2_1 halo buffer
            pltpu.VMEM((H2 + 2, W2 + 2, 128), jnp.bfloat16), # conv2_2 halo buffer
        ],
        compiler_params=pltpu.CompilerParams(
            dimension_semantics=("parallel",)),
        cost_estimate=pl.CostEstimate(flops=flops, transcendentals=0,
                                      bytes_accessed=bytes_accessed),
    )(x_im, w1, b1, w2, b2, w3, b3, w4, b4)


# ----------------------------------------------------------------------------
# vgg.forward equivalent: run the VGG16 `features` prefix collecting the
# activations after layers 1, 3, 6, 8 (relu1_1, relu1_2, relu2_1, relu2_2).
# ----------------------------------------------------------------------------
def init_params(key):
    """Deterministic He-style init for the first four VGG16 conv layers (HWIO)."""
    shapes = {
        "w1_1": (3, 3, 3, 64), "b1_1": (64,),
        "w1_2": (3, 3, 64, 64), "b1_2": (64,),
        "w2_1": (3, 3, 64, 128), "b2_1": (128,),
        "w2_2": (3, 3, 128, 128), "b2_2": (128,),
    }
    params = {}
    keys = jax.random.split(key, len(shapes))
    for k_rng, (name, shp) in zip(keys, sorted(shapes.items())):
        if name.startswith("w"):
            fan_in = shp[0] * shp[1] * shp[2]
            params[name] = (jax.random.normal(k_rng, shp, jnp.float32)
                            * np.sqrt(2.0 / fan_in)).astype(jnp.float32)
        else:
            params[name] = 0.01 * jax.random.normal(k_rng, shp, jnp.float32)
    return params


@jax.jit
def vgg_forward(x_nchw, params):
    # NCHW (PyTorch) -> NHWC; bf16 activations between layers, f32 accumulation.
    x = jnp.transpose(x_nchw, (0, 2, 3, 1)).astype(jnp.bfloat16)
    N, H, W, _ = x.shape
    assert H % 2 == 0 and W % 2 == 0, "2x2 pool requires even spatial dims"

    # im2col for conv1_1 (Cin=3): 3x3 patches -> K=27, zero-padded to K=32.
    xp = jnp.pad(x, ((0, 0), (1, 1), (1, 1), (0, 0)))
    x_im = jnp.concatenate(
        [xp[:, kh:kh + H, kw:kw + W, :] for kh in range(3) for kw in range(3)],
        axis=-1)                                                  # (N, H, W, 27)
    x_im = jnp.pad(x_im, ((0, 0), (0, 0), (0, 0), (0, 5)))
    x_im = x_im.reshape(N, H * W, 32)

    bf = jnp.bfloat16
    w1 = jnp.pad(params["w1_1"].reshape(27, 64), ((0, 5), (0, 0))).astype(bf)
    b1 = params["b1_1"].reshape(1, 64).astype(jnp.float32)
    w2 = params["w1_2"].astype(bf)
    b2 = params["b1_2"].reshape(1, 64).astype(jnp.float32)
    w3 = params["w2_1"].astype(bf)
    b3 = params["b2_1"].reshape(1, 128).astype(jnp.float32)
    w4 = params["w2_2"].astype(bf)
    b4 = params["b2_2"].reshape(1, 128).astype(jnp.float32)

    o1, o2, o3, o4 = vgg_features_fused(
        x_im, w1, b1, w2, b2, w3, b3, w4, b4, H=H, W=W)

    to_nchw = lambda a: jnp.transpose(a, (0, 3, 1, 2)).astype(jnp.float32)
    # TODO(synk): the reference forward keeps iterating through the remaining
    # VGG16 feature layers (pool2 .. pool5), but those cannot affect the
    # returned list, so that dead compute is skipped here.
    return [to_nchw(o1), to_nchw(o2), to_nchw(o3), to_nchw(o4)]


# ----------------------------------------------------------------------------
# Pure-JAX reference (same bf16-rounded inputs/weights, f32 accumulation).
# ----------------------------------------------------------------------------
def _ref_forward(x_nchw, params):
    dn = ("NHWC", "HWIO", "NHWC")
    bf = lambda a: a.astype(jnp.bfloat16).astype(jnp.float32)
    x = bf(jnp.transpose(x_nchw, (0, 2, 3, 1)))

    def conv(x, w, b):
        y = jax.lax.conv_general_dilated(
            x, bf(w), (1, 1), "SAME", dimension_numbers=dn,
            precision=jax.lax.Precision.HIGHEST,
            preferred_element_type=jnp.float32)
        y = jnp.maximum(y + b[None, None, None, :].astype(jnp.float32), 0.0)
        return bf(y)   # match the kernel's bf16 activation storage

    outs = []
    x = conv(x, params["w1_1"], params["b1_1"]); outs.append(x)
    x = conv(x, params["w1_2"], params["b1_2"]); outs.append(x)
    x = jax.lax.reduce_window(x, -jnp.inf, jax.lax.max,
                              (1, 2, 2, 1), (1, 2, 2, 1), "VALID")
    x = conv(x, params["w2_1"], params["b2_1"]); outs.append(x)
    x = conv(x, params["w2_2"], params["b2_2"]); outs.append(x)
    return [jnp.transpose(o, (0, 3, 1, 2)) for o in outs]


if __name__ == "__main__":
    key = jax.random.PRNGKey(0)
    k_x, k_p = jax.random.split(key)
    x = jax.random.normal(k_x, (2, 3, 16, 16), jnp.float32)  # NCHW, like PyTorch
    params = init_params(k_p)

    outs = vgg_forward(x, params)
    outs = [jax.block_until_ready(o) for o in outs]

    refs = _ref_forward(x, params)
    expected_shapes = [(2, 64, 16, 16), (2, 64, 16, 16),
                       (2, 128, 8, 8), (2, 128, 8, 8)]
    assert [tuple(o.shape) for o in outs] == expected_shapes
    for o, r in zip(outs, refs):
        np.testing.assert_allclose(np.asarray(o, dtype=np.float32),
                                   np.asarray(r, dtype=np.float32),
                                   rtol=2e-2, atol=2e-2)

    print("KERNEL_OK")
</pallas_src>

<mosaic_0001>
module attributes {stable_mosaic.version = 11 : i64} {
  func.func @_vgg_block_kernel(%arg0: i32, %arg1: memref<1x256x32xbf16, #tpu.memory_space<vmem>>, %arg2: memref<32x64xbf16, #tpu.memory_space<vmem>>, %arg3: memref<1x64xf32, #tpu.memory_space<vmem>>, %arg4: memref<3x3x64x64xbf16, #tpu.memory_space<vmem>>, %arg5: memref<1x64xf32, #tpu.memory_space<vmem>>, %arg6: memref<3x3x64x128xbf16, #tpu.memory_space<vmem>>, %arg7: memref<1x128xf32, #tpu.memory_space<vmem>>, %arg8: memref<3x3x128x128xbf16, #tpu.memory_space<vmem>>, %arg9: memref<1x128xf32, #tpu.memory_space<vmem>>, %arg10: memref<1x16x16x64xbf16, #tpu.memory_space<vmem>>, %arg11: memref<1x16x16x64xbf16, #tpu.memory_space<vmem>>, %arg12: memref<1x8x8x128xbf16, #tpu.memory_space<vmem>>, %arg13: memref<1x8x8x128xbf16, #tpu.memory_space<vmem>>, %arg14: memref<18x18x64xbf16, #tpu.memory_space<vmem>>, %arg15: memref<10x10x64xbf16, #tpu.memory_space<vmem>>, %arg16: memref<10x10x128xbf16, #tpu.memory_space<vmem>>) attributes {dimension_semantics = [#tpu.dimension_semantics<parallel>], iteration_bounds = array<i64: 2>, scalar_prefetch = 0 : i64, scratch_operands = 3 : i64, tpu.core_type = #tpu.core_type<tc>, window_params = [{transform_indices = @transform_0, window_bounds = array<i64: 1, 256, 32>}, {pipeline_mode = #tpu.pipeline_mode<synchronous>, transform_indices = @transform_1, window_bounds = array<i64: 32, 64>}, {pipeline_mode = #tpu.pipeline_mode<synchronous>, transform_indices = @transform_2, window_bounds = array<i64: 1, 64>}, {pipeline_mode = #tpu.pipeline_mode<synchronous>, transform_indices = @transform_3, window_bounds = array<i64: 3, 3, 64, 64>}, {pipeline_mode = #tpu.pipeline_mode<synchronous>, transform_indices = @transform_4, window_bounds = array<i64: 1, 64>}, {pipeline_mode = #tpu.pipeline_mode<synchronous>, transform_indices = @transform_5, window_bounds = array<i64: 3, 3, 64, 128>}, {pipeline_mode = #tpu.pipeline_mode<synchronous>, transform_indices = @transform_6, window_bounds = array<i64: 1, 128>}, {pipeline_mode = #tpu.pipeline_mode<synchronous>, transform_indices = @transform_7, window_bounds = array<i64: 3, 3, 128, 128>}, {pipeline_mode = #tpu.pipeline_mode<synchronous>, transform_indices = @transform_8, window_bounds = array<i64: 1, 128>}, {transform_indices = @transform_9, window_bounds = array<i64: 1, 16, 16, 64>}, {transform_indices = @transform_10, window_bounds = array<i64: 1, 16, 16, 64>}, {transform_indices = @transform_11, window_bounds = array<i64: 1, 8, 8, 128>}, {transform_indices = @transform_12, window_bounds = array<i64: 1, 8, 8, 128>}]} {
    %c0 = arith.constant 0 : index
    %c0_0 = arith.constant 0 : index
    %c0_1 = arith.constant 0 : index
    %0 = vector.load %arg1[%c0, %c0_0, %c0_1] : memref<1x256x32xbf16, #tpu.memory_space<vmem>>, vector<1x256x32xbf16>
    %1 = vector.shape_cast %0 : vector<1x256x32xbf16> to vector<256x32xbf16>
    %c0_2 = arith.constant 0 : index
    %c0_3 = arith.constant 0 : index
    %2 = vector.load %arg2[%c0_2, %c0_3] : memref<32x64xbf16, #tpu.memory_space<vmem>>, vector<32x64xbf16>
    %cst = arith.constant dense<0.000000e+00> : vector<256x64xf32>
    %3 = tpu.matmul %1, %2, %cst {dimension_numbers = #tpu.dot_dimension_numbers<[1], [0], [0], [1], [0, 0, 1, 1], [], []>} : vector<256x32xbf16>, vector<32x64xbf16>, vector<256x64xf32> -> vector<256x64xf32>
    %c0_4 = arith.constant 0 : index
    %c0_5 = arith.constant 0 : index
    %4 = vector.load %arg3[%c0_4, %c0_5] : memref<1x64xf32, #tpu.memory_space<vmem>>, vector<1x64xf32>
    %5 = vector.broadcast %4 : vector<1x64xf32> to vector<256x64xf32>
    %6 = arith.addf %3, %5 : vector<256x64xf32>
    %cst_6 = arith.constant 0.000000e+00 : f32
    %7 = vector.broadcast %cst_6 : f32 to vector<256x64xf32>
    %8 = arith.maximumf %6, %7 : vector<256x64xf32>
    %9 = vector.shape_cast %8 : vector<256x64xf32> to vector<16x16x64xf32>
    %10 = arith.truncf %9 : vector<16x16x64xf32> to vector<16x16x64xbf16>
    %c0_7 = arith.constant 0 : index
    %c0_8 = arith.constant 0 : index
    %c0_9 = arith.constant 0 : index
    %c0_10 = arith.constant 0 : index
    %11 = vector.load %arg10[%c0_7, %c0_8, %c0_9, %c0_10] : memref<1x16x16x64xbf16, #tpu.memory_space<vmem>>, vector<1x16x16x64xbf16>
    %12 = vector.shape_cast %11 : vector<1x16x16x64xbf16> to vector<16x16x64xbf16>
    %13 = vector.shape_cast %10 : vector<16x16x64xbf16> to vector<1x16x16x64xbf16>
    tpu.vector_store %arg10[%c0_7, %c0_8, %c0_9, %c0_10], %13 {strides = array<i32>} : memref<1x16x16x64xbf16, #tpu.memory_space<vmem>>, vector<1x16x16x64xbf16>,
    %14 = arith.truncf %9 : vector<16x16x64xf32> to vector<16x16x64xbf16>
    %cst_11 = arith.constant 0.000000e+00 : bf16
    %15 = vector.broadcast %cst_11 : bf16 to vector<1x18x64xbf16>
    %c0_12 = arith.constant 0 : index
    %c0_13 = arith.constant 0 : index
    %c0_14 = arith.constant 0 : index
    %16 = vector.load %arg14[%c0_12, %c0_13, %c0_14] : memref<18x18x64xbf16, #tpu.memory_space<vmem>>, vector<1x18x64xbf16>
    tpu.vector_store %arg14[%c0_12, %c0_13, %c0_14], %15 {strides = array<i32>} : memref<18x18x64xbf16, #tpu.memory_space<vmem>>, vector<1x18x64xbf16>,
    %cst_15 = arith.constant 0.000000e+00 : bf16
    %17 = vector.broadcast %cst_15 : bf16 to vector<1x18x64xbf16>
    %c17 = arith.constant 17 : index
    %c0_16 = arith.constant 0 : index
    %c0_17 = arith.constant 0 : index
    %18 = vector.load %arg14[%c17, %c0_16, %c0_17] : memref<18x18x64xbf16, #tpu.memory_space<vmem>>, vector<1x18x64xbf16>
    tpu.vector_store %arg14[%c17, %c0_16, %c0_17], %17 {strides = array<i32>} : memref<18x18x64xbf16, #tpu.memory_space<vmem>>, vector<1x18x64xbf16>,
    %cst_18 = arith.constant 0.000000e+00 : bf16
    %19 = vector.broadcast %cst_18 : bf16 to vector<18x1x64xbf16>
    %c0_19 = arith.constant 0 : index
    %c0_20 = arith.constant 0 : index
    %c0_21 = arith.constant 0 : index
    %20 = vector.load %arg14[%c0_19, %c0_20, %c0_21] : memref<18x18x64xbf16, #tpu.memory_space<vmem>>, vector<18x1x64xbf16>
    tpu.vector_store %arg14[%c0_19, %c0_20, %c0_21], %19 {strides = array<i32>} : memref<18x18x64xbf16, #tpu.memory_space<vmem>>, vector<18x1x64xbf16>,
    %cst_22 = arith.constant 0.000000e+00 : bf16
    %21 = vector.broadcast %cst_22 : bf16 to vector<18x1x64xbf16>
    %c0_23 = arith.constant 0 : index
    %c17_24 = arith.constant 17 : index
    %c0_25 = arith.constant 0 : index
    %22 = vector.load %arg14[%c0_23, %c17_24, %c0_25] : memref<18x18x64xbf16, #tpu.memory_space<vmem>>, vector<18x1x64xbf16>
    tpu.vector_store %arg14[%c0_23, %c17_24, %c0_25], %21 {strides = array<i32>} : memref<18x18x64xbf16, #tpu.memory_space<vmem>>, vector<18x1x64xbf16>,
    %c1 = arith.constant 1 : index
    %c1_26 = arith.constant 1 : index
    %c0_27 = arith.constant 0 : index
    %23 = vector.load %arg14[%c1, %c1_26, %c0_27] : memref<18x18x64xbf16, #tpu.memory_space<vmem>>, vector<16x16x64xbf16>
    tpu.vector_store %arg14[%c1, %c1_26, %c0_27], %14 {strides = array<i32>} : memref<18x18x64xbf16, #tpu.memory_space<vmem>>, vector<16x16x64xbf16>,
    %cst_28 = arith.constant 0.000000e+00 : f32
    %24 = vector.broadcast %cst_28 : f32 to vector<256x64xf32>
    %c0_29 = arith.constant 0 : index
    %c0_30 = arith.constant 0 : index
    %c0_31 = arith.constant 0 : index
    %25 = vector.load %arg14[%c0_29, %c0_30, %c0_31] : memref<18x18x64xbf16, #tpu.memory_space<vmem>>, vector<16x16x64xbf16>
    %26 = vector.shape_cast %25 : vector<16x16x64xbf16> to vector<256x64xbf16>
    %c0_32 = arith.constant 0 : index
    %c0_33 = arith.constant 0 : index
    %c0_34 = arith.constant 0 : index
    %c0_35 = arith.constant 0 : index
    %27 = vector.load %arg4[%c0_32, %c0_33, %c0_34, %c0_35] : memref<3x3x64x64xbf16, #tpu.memory_space<vmem>>, vector<1x1x64x64xbf16>
    %28 = vector.shape_cast %27 : vector<1x1x64x64xbf16> to vector<64x64xbf16>
    %cst_36 = arith.constant dense<0.000000e+00> : vector<256x64xf32>
    %29 = tpu.matmul %26, %28, %cst_36 {dimension_numbers = #tpu.dot_dimension_numbers<[1], [0], [0], [1], [0, 0, 1, 1], [], []>} : vector<256x64xbf16>, vector<64x64xbf16>, vector<256x64xf32> -> vector<256x64xf32>
    %30 = arith.addf %24, %29 : vector<256x64xf32>
    %c0_37 = arith.constant 0 : index
    %c1_38 = arith.constant 1 : index
    %c0_39 = arith.constant 0 : index
    %31 = vector.load %arg14[%c0_37, %c1_38, %c0_39] : memref<18x18x64xbf16, #tpu.memory_space<vmem>>, vector<16x16x64xbf16>
    %32 = vector.shape_cast %31 : vector<16x16x64xbf16> to vector<256x64xbf16>
    %c0_40 = arith.constant 0 : index
    %c1_41 = arith.constant 1 : index
    %c0_42 = arith.constant 0 : index
    %c0_43 = arith.constant 0 : index
    %33 = vector.load %arg4[%c0_40, %c1_41, %c0_42, %c0_43] : memref<3x3x64x64xbf16, #tpu.memory_space<vmem>>, vector<1x1x64x64xbf16>
    %34 = vector.shape_cast %33 : vector<1x1x64x64xbf16> to vector<64x64xbf16>
    %cst_44 = arith.constant dense<0.000000e+00> : vector<256x64xf32>
    %35 = tpu.matmul %32, %34, %cst_44 {dimension_numbers = #tpu.dot_dimension_numbers<[1], [0], [0], [1], [0, 0, 1, 1], [], []>} : vector<256x64xbf16>, vector<64x64xbf16>, vector<256x64xf32> -> vector<256x64xf32>
    %36 = arith.addf %30, %35 : vector<256x64xf32>
    %c0_45 = arith.constant 0 : index
    %c2 = arith.constant 2 : index
    %c0_46 = arith.constant 0 : index
    %37 = vector.load %arg14[%c0_45, %c2, %c0_46] : memref<18x18x64xbf16, #tpu.memory_space<vmem>>, vector<16x16x64xbf16>
    %38 = vector.shape_cast %37 : vector<16x16x64xbf16> to vector<256x64xbf16>
    %c0_47 = arith.constant 0 : index
    %c2_48 = arith.constant 2 : index
    %c0_49 = arith.constant 0 : index
    %c0_50 = arith.constant 0 : index
    %39 = vector.load %arg4[%c0_47, %c2_48, %c0_49, %c0_50] : memref<3x3x64x64xbf16, #tpu.memory_space<vmem>>, vector<1x1x64x64xbf16>
    %40 = vector.shape_cast %39 : vector<1x1x64x64xbf16> to vector<64x64xbf16>
    %cst_51 = arith.constant dense<0.000000e+00> : vector<256x64xf32>
    %41 = tpu.matmul %38, %40, %cst_51 {dimension_numbers = #tpu.dot_dimension_numbers<[1], [0], [0], [1], [0, 0, 1, 1], [], []>} : vector<256x64xbf16>, vector<64x64xbf16>, vector<256x64xf32> -> vector<256x64xf32>
    %42 = arith.addf %36, %41 : vector<256x64xf32>
    %c1_52 = arith.constant 1 : index
    %c0_53 = arith.constant 0 : index
    %c0_54 = arith.constant 0 : index
    %43 = vector.load %arg14[%c1_52, %c0_53, %c0_54] : memref<18x18x64xbf16, #tpu.memory_space<vmem>>, vector<16x16x64xbf16>
    %44 = vector.shape_cast %43 : vector<16x16x64xbf16> to vector<256x64xbf16>
    %c1_55 = arith.constant 1 : index
    %c0_56 = arith.constant 0 : index
    %c0_57 = arith.constant 0 : index
    %c0_58 = arith.constant 0 : index
    %45 = vector.load %arg4[%c1_55, %c0_56, %c0_57, %c0_58] : memref<3x3x64x64xbf16, #tpu.memory_space<vmem>>, vector<1x1x64x64xbf16>
    %46 = vector.shape_cast %45 : vector<1x1x64x64xbf16> to vector<64x64xbf16>
    %cst_59 = arith.constant dense<0.000000e+00> : vector<256x64xf32>
    %47 = tpu.matmul %44, %46, %cst_59 {dimension_numbers = #tpu.dot_dimension_numbers<[1], [0], [0], [1], [0, 0, 1, 1], [], []>} : vector<256x64xbf16>, vector<64x64xbf16>, vector<256x64xf32> -> vector<256x64xf32>
    %48 = arith.addf %42, %47 : vector<256x64xf32>
    %c1_60 = arith.constant 1 : index
    %c1_61 = arith.constant 1 : index
    %c0_62 = arith.constant 0 : index
    %49 = vector.load %arg14[%c1_60, %c1_61, %c0_62] : memref<18x18x64xbf16, #tpu.memory_space<vmem>>, vector<16x16x64xbf16>
    %50 = vector.shape_cast %49 : vector<16x16x64xbf16> to vector<256x64xbf16>
    %c1_63 = arith.constant 1 : index
    %c1_64 = arith.constant 1 : index
    %c0_65 = arith.constant 0 : index
    %c0_66 = arith.constant 0 : index
    %51 = vector.load %arg4[%c1_63, %c1_64, %c0_65, %c0_66] : memref<3x3x64x64xbf16, #tpu.memory_space<vmem>>, vector<1x1x64x64xbf16>
    %52 = vector.shape_cast %51 : vector<1x1x64x64xbf16> to vector<64x64xbf16>
    %cst_67 = arith.constant dense<0.000000e+00> : vector<256x64xf32>
    %53 = tpu.matmul %50, %52, %cst_67 {dimension_numbers = #tpu.dot_dimension_numbers<[1], [0], [0], [1], [0, 0, 1, 1], [], []>} : vector<256x64xbf16>, vector<64x64xbf16>, vector<256x64xf32> -> vector<256x64xf32>
    %54 = arith.addf %48, %53 : vector<256x64xf32>
    %c1_68 = arith.constant 1 : index
    %c2_69 = arith.constant 2 : index
    %c0_70 = arith.constant 0 : index
    %55 = vector.load %arg14[%c1_68, %c2_69, %c0_70] : memref<18x18x64xbf16, #tpu.memory_space<vmem>>, vector<16x16x64xbf16>
    %56 = vector.shape_cast %55 : vector<16x16x64xbf16> to vector<256x64xbf16>
    %c1_71 = arith.constant 1 : index
    %c2_72 = arith.constant 2 : index
    %c0_73 = arith.constant 0 : index
    %c0_74 = arith.constant 0 : index
    %57 = vector.load %arg4[%c1_71, %c2_72, %c0_73, %c0_74] : memref<3x3x64x64xbf16, #tpu.memory_space<vmem>>, vector<1x1x64x64xbf16>
    %58 = vector.shape_cast %57 : vector<1x1x64x64xbf16> to vector<64x64xbf16>
    %cst_75 = arith.constant dense<0.000000e+00> : vector<256x64xf32>
    %59 = tpu.matmul %56, %58, %cst_75 {dimension_numbers = #tpu.dot_dimension_numbers<[1], [0], [0], [1], [0, 0, 1, 1], [], []>} : vector<256x64xbf16>, vector<64x64xbf16>, vector<256x64xf32> -> vector<256x64xf32>
    %60 = arith.addf %54, %59 : vector<256x64xf32>
    %c2_76 = arith.constant 2 : index
    %c0_77 = arith.constant 0 : index
    %c0_78 = arith.constant 0 : index
    %61 = vector.load %arg14[%c2_76, %c0_77, %c0_78] : memref<18x18x64xbf16, #tpu.memory_space<vmem>>, vector<16x16x64xbf16>
    %62 = vector.shape_cast %61 : vector<16x16x64xbf16> to vector<256x64xbf16>
    %c2_79 = arith.constant 2 : index
    %c0_80 = arith.constant 0 : index
    %c0_81 = arith.constant 0 : index
    %c0_82 = arith.constant 0 : index
    %63 = vector.load %arg4[%c2_79, %c0_80, %c0_81, %c0_82] : memref<3x3x64x64xbf16, #tpu.memory_space<vmem>>, vector<1x1x64x64xbf16>
    %64 = vector.shape_cast %63 : vector<1x1x64x64xbf16> to vector<64x64xbf16>
    %cst_83 = arith.constant dense<0.000000e+00> : vector<256x64xf32>
    %65 = tpu.matmul %62, %64, %cst_83 {dimension_numbers = #tpu.dot_dimension_numbers<[1], [0], [0], [1], [0, 0, 1, 1], [], []>} : vector<256x64xbf16>, vector<64x64xbf16>, vector<256x64xf32> -> vector<256x64xf32>
    %66 = arith.addf %60, %65 : vector<256x64xf32>
    %c2_84 = arith.constant 2 : index
    %c1_85 = arith.constant 1 : index
    %c0_86 = arith.constant 0 : index
    %67 = vector.load %arg14[%c2_84, %c1_85, %c0_86] : memref<18x18x64xbf16, #tpu.memory_space<vmem>>, vector<16x16x64xbf16>
    %68 = vector.shape_cast %67 : vector<16x16x64xbf16> to vector<256x64xbf16>
    %c2_87 = arith.constant 2 : index
    %c1_88 = arith.constant 1 : index
    %c0_89 = arith.constant 0 : index
    %c0_90 = arith.constant 0 : index
    %69 = vector.load %arg4[%c2_87, %c1_88, %c0_89, %c0_90] : memref<3x3x64x64xbf16, #tpu.memory_space<vmem>>, vector<1x1x64x64xbf16>
    %70 = vector.shape_cast %69 : vector<1x1x64x64xbf16> to vector<64x64xbf16>
    %cst_91 = arith.constant dense<0.000000e+00> : vector<256x64xf32>
    %71 = tpu.matmul %68, %70, %cst_91 {dimension_numbers = #tpu.dot_dimension_numbers<[1], [0], [0], [1], [0, 0, 1, 1], [], []>} : vector<256x64xbf16>, vector<64x64xbf16>, vector<256x64xf32> -> vector<256x64xf32>
    %72 = arith.addf %66, %71 : vector<256x64xf32>
    %c2_92 = arith.constant 2 : index
    %c2_93 = arith.constant 2 : index
    %c0_94 = arith.constant 0 : index
    %73 = vector.load %arg14[%c2_92, %c2_93, %c0_94] : memref<18x18x64xbf16, #tpu.memory_space<vmem>>, vector<16x16x64xbf16>
    %74 = vector.shape_cast %73 : vector<16x16x64xbf16> to vector<256x64xbf16>
    %c2_95 = arith.constant 2 : index
    %c2_96 = arith.constant 2 : index
    %c0_97 = arith.constant 0 : index
    %c0_98 = arith.constant 0 : index
    %75 = vector.load %arg4[%c2_95, %c2_96, %c0_97, %c0_98] : memref<3x3x64x64xbf16, #tpu.memory_space<vmem>>, vector<1x1x64x64xbf16>
    %76 = vector.shape_cast %75 : vector<1x1x64x64xbf16> to vector<64x64xbf16>
    %cst_99 = arith.constant dense<0.000000e+00> : vector<256x64xf32>
    %77 = tpu.matmul %74, %76, %cst_99 {dimension_numbers = #tpu.dot_dimension_numbers<[1], [0], [0], [1], [0, 0, 1, 1], [], []>} : vector<256x64xbf16>, vector<64x64xbf16>, vector<256x64xf32> -> vector<256x64xf32>
    %78 = arith.addf %72, %77 : vector<256x64xf32>
    %c0_100 = arith.constant 0 : index
    %c0_101 = arith.constant 0 : index
    %79 = vector.load %arg5[%c0_100, %c0_101] : memref<1x64xf32, #tpu.memory_space<vmem>>, vector<1x64xf32>
    %80 = vector.broadcast %79 : vector<1x64xf32> to vector<256x64xf32>
    %81 = arith.addf %78, %80 : vector<256x64xf32>
    %cst_102 = arith.constant 0.000000e+00 : f32
    %82 = vector.broadcast %cst_102 : f32 to vector<256x64xf32>
    %83 = arith.maximumf %81, %82 : vector<256x64xf32>
    %84 = vector.shape_cast %83 : vector<256x64xf32> to vector<16x16x64xf32>
    %85 = arith.truncf %84 : vector<16x16x64xf32> to vector<16x16x64xbf16>
    %c0_103 = arith.constant 0 : index
    %c0_104 = arith.constant 0 : index
    %c0_105 = arith.constant 0 : index
    %c0_106 = arith.constant 0 : index
    %86 = vector.load %arg11[%c0_103, %c0_104, %c0_105, %c0_106] : memref<1x16x16x64xbf16, #tpu.memory_space<vmem>>, vector<1x16x16x64xbf16>
    %87 = vector.shape_cast %86 : vector<1x16x16x64xbf16> to vector<16x16x64xbf16>
    %88 = vector.shape_cast %85 : vector<16x16x64xbf16> to vector<1x16x16x64xbf16>
    tpu.vector_store %arg11[%c0_103, %c0_104, %c0_105, %c0_106], %88 {strides = array<i32>} : memref<1x16x16x64xbf16, #tpu.memory_space<vmem>>, vector<1x16x16x64xbf16>,
    %89 = vector.shape_cast %84 : vector<16x16x64xf32> to vector<8x2x8x2x64xf32>
    %cst_107 = arith.constant dense<0xFF800000> : vector<8x2x8x64xf32>
    %90 = vector.multi_reduction <maximumf>, %89, %cst_107 [3] : vector<8x2x8x2x64xf32> to vector<8x2x8x64xf32>
    %cst_108 = arith.constant dense<0xFF800000> : vector<8x8x64xf32>
    %91 = vector.multi_reduction <maximumf>, %90, %cst_108 [1] : vector<8x2x8x64xf32> to vector<8x8x64xf32>
    %92 = arith.truncf %91 : vector<8x8x64xf32> to vector<8x8x64xbf16>
    %cst_109 = arith.constant 0.000000e+00 : bf16
    %93 = vector.broadcast %cst_109 : bf16 to vector<1x10x64xbf16>
    %c0_110 = arith.constant 0 : index
    %c0_111 = arith.constant 0 : index
    %c0_112 = arith.constant 0 : index
    %94 = vector.load %arg15[%c0_110, %c0_111, %c0_112] : memref<10x10x64xbf16, #tpu.memory_space<vmem>>, vector<1x10x64xbf16>
    tpu.vector_store %arg15[%c0_110, %c0_111, %c0_112], %93 {strides = array<i32>} : memref<10x10x64xbf16, #tpu.memory_space<vmem>>, vector<1x10x64xbf16>,
    %cst_113 = arith.constant 0.000000e+00 : bf16
    %95 = vector.broadcast %cst_113 : bf16 to vector<1x10x64xbf16>
    %c9 = arith.constant 9 : index
    %c0_114 = arith.constant 0 : index
    %c0_115 = arith.constant 0 : index
    %96 = vector.load %arg15[%c9, %c0_114, %c0_115] : memref<10x10x64xbf16, #tpu.memory_space<vmem>>, vector<1x10x64xbf16>
    tpu.vector_store %arg15[%c9, %c0_114, %c0_115], %95 {strides = array<i32>} : memref<10x10x64xbf16, #tpu.memory_space<vmem>>, vector<1x10x64xbf16>,
    %cst_116 = arith.constant 0.000000e+00 : bf16
    %97 = vector.broadcast %cst_116 : bf16 to vector<10x1x64xbf16>
    %c0_117 = arith.constant 0 : index
    %c0_118 = arith.constant 0 : index
    %c0_119 = arith.constant 0 : index
    %98 = vector.load %arg15[%c0_117, %c0_118, %c0_119] : memref<10x10x64xbf16, #tpu.memory_space<vmem>>, vector<10x1x64xbf16>
    tpu.vector_store %arg15[%c0_117, %c0_118, %c0_119], %97 {strides = array<i32>} : memref<10x10x64xbf16, #tpu.memory_space<vmem>>, vector<10x1x64xbf16>,
    %cst_120 = arith.constant 0.000000e+00 : bf16
    %99 = vector.broadcast %cst_120 : bf16 to vector<10x1x64xbf16>
    %c0_121 = arith.constant 0 : index
    %c9_122 = arith.constant 9 : index
    %c0_123 = arith.constant 0 : index
    %100 = vector.load %arg15[%c0_121, %c9_122, %c0_123] : memref<10x10x64xbf16, #tpu.memory_space<vmem>>, vector<10x1x64xbf16>
    tpu.vector_store %arg15[%c0_121, %c9_122, %c0_123], %99 {strides = array<i32>} : memref<10x10x64xbf16, #tpu.memory_space<vmem>>, vector<10x1x64xbf16>,
    %c1_124 = arith.constant 1 : index
    %c1_125 = arith.constant 1 : index
    %c0_126 = arith.constant 0 : index
    %101 = vector.load %arg15[%c1_124, %c1_125, %c0_126] : memref<10x10x64xbf16, #tpu.memory_space<vmem>>, vector<8x8x64xbf16>
    tpu.vector_store %arg15[%c1_124, %c1_125, %c0_126], %92 {strides = array<i32>} : memref<10x10x64xbf16, #tpu.memory_space<vmem>>, vector<8x8x64xbf16>,
    %cst_127 = arith.constant 0.000000e+00 : f32
    %102 = vector.broadcast %cst_127 : f32 to vector<64x128xf32>
    %c0_128 = arith.constant 0 : index
    %c0_129 = arith.constant 0 : index
    %c0_130 = arith.constant 0 : index
    %103 = vector.load %arg15[%c0_128, %c0_129, %c0_130] : memref<10x10x64xbf16, #tpu.memory_space<vmem>>, vector<8x8x64xbf16>
    %104 = vector.shape_cast %103 : vector<8x8x64xbf16> to vector<64x64xbf16>
    %c0_131 = arith.constant 0 : index
    %c0_132 = arith.constant 0 : index
    %c0_133 = arith.constant 0 : index
    %c0_134 = arith.constant 0 : index
    %105 = vector.load %arg6[%c0_131, %c0_132, %c0_133, %c0_134] : memref<3x3x64x128xbf16, #tpu.memory_space<vmem>>, vector<1x1x64x128xbf16>
    %106 = vector.shape_cast %105 : vector<1x1x64x128xbf16> to vector<64x128xbf16>
    %cst_135 = arith.constant dense<0.000000e+00> : vector<64x128xf32>
    %107 = tpu.matmul %104, %106, %cst_135 {dimension_numbers = #tpu.dot_dimension_numbers<[1], [0], [0], [1], [0, 0, 1, 1], [], []>} : vector<64x64xbf16>, vector<64x128xbf16>, vector<64x128xf32> -> vector<64x128xf32>
    %108 = arith.addf %102, %107 : vector<64x128xf32>
    %c0_136 = arith.constant 0 : index
    %c1_137 = arith.constant 1 : index
    %c0_138 = arith.constant 0 : index
    %109 = vector.load %arg15[%c0_136, %c1_137, %c0_138] : memref<10x10x64xbf16, #tpu.memory_space<vmem>>, vector<8x8x64xbf16>
    %110 = vector.shape_cast %109 : vector<8x8x64xbf16> to vector<64x64xbf16>
    %c0_139 = arith.constant 0 : index
    %c1_140 = arith.constant 1 : index
    %c0_141 = arith.constant 0 : index
    %c0_142 = arith.constant 0 : index
    %111 = vector.load %arg6[%c0_139, %c1_140, %c0_141, %c0_142] : memref<3x3x64x128xbf16, #tpu.memory_space<vmem>>, vector<1x1x64x128xbf16>
    %112 = vector.shape_cast %111 : vector<1x1x64x128xbf16> to vector<64x128xbf16>
    %cst_143 = arith.constant dense<0.000000e+00> : vector<64x128xf32>
    %113 = tpu.matmul %110, %112, %cst_143 {dimension_numbers = #tpu.dot_dimension_numbers<[1], [0], [0], [1], [0, 0, 1, 1], [], []>} : vector<64x64xbf16>, vector<64x128xbf16>, vector<64x128xf32> -> vector<64x128xf32>
    %114 = arith.addf %108, %113 : vector<64x128xf32>
    %c0_144 = arith.constant 0 : index
    %c2_145 = arith.constant 2 : index
    %c0_146 = arith.constant 0 : index
    %115 = vector.load %arg15[%c0_144, %c2_145, %c0_146] : memref<10x10x64xbf16, #tpu.memory_space<vmem>>, vector<8x8x64xbf16>
    %116 = vector.shape_cast %115 : vector<8x8x64xbf16> to vector<64x64xbf16>
    %c0_147 = arith.constant 0 : index
    %c2_148 = arith.constant 2 : index
    %c0_149 = arith.constant 0 : index
    %c0_150 = arith.constant 0 : index
    %117 = vector.load %arg6[%c0_147, %c2_148, %c0_149, %c0_150] : memref<3x3x64x128xbf16, #tpu.memory_space<vmem>>, vector<1x1x64x128xbf16>
    %118 = vector.shape_cast %117 : vector<1x1x64x128xbf16> to vector<64x128xbf16>
    %cst_151 = arith.constant dense<0.000000e+00> : vector<64x128xf32>
    %119 = tpu.matmul %116, %118, %cst_151 {dimension_numbers = #tpu.dot_dimension_numbers<[1], [0], [0], [1], [0, 0, 1, 1], [], []>} : vector<64x64xbf16>, vector<64x128xbf16>, vector<64x128xf32> -> vector<64x128xf32>
    %120 = arith.addf %114, %119 : vector<64x128xf32>
    %c1_152 = arith.constant 1 : index
    %c0_153 = arith.constant 0 : index
    %c0_154 = arith.constant 0 : index
    %121 = vector.load %arg15[%c1_152, %c0_153, %c0_154] : memref<10x10x64xbf16, #tpu.memory_space<vmem>>, vector<8x8x64xbf16>
    %122 = vector.shape_cast %121 : vector<8x8x64xbf16> to vector<64x64xbf16>
    %c1_155 = arith.constant 1 : index
    %c0_156 = arith.constant 0 : index
    %c0_157 = arith.constant 0 : index
    %c0_158 = arith.constant 0 : index
    %123 = vector.load %arg6[%c1_155, %c0_156, %c0_157, %c0_158] : memref<3x3x64x128xbf16, #tpu.memory_space<vmem>>, vector<1x1x64x128xbf16>
    %124 = vector.shape_cast %123 : vector<1x1x64x128xbf16> to vector<64x128xbf16>
    %cst_159 = arith.constant dense<0.000000e+00> : vector<64x128xf32>
    %125 = tpu.matmul %122, %124, %cst_159 {dimension_numbers = #tpu.dot_dimension_numbers<[1], [0], [0], [1], [0, 0, 1, 1], [], []>} : vector<64x64xbf16>, vector<64x128xbf16>, vector<64x128xf32> -> vector<64x128xf32>
    %126 = arith.addf %120, %125 : vector<64x128xf32>
    %c1_160 = arith.constant 1 : index
    %c1_161 = arith.constant 1 : index
    %c0_162 = arith.constant 0 : index
    %127 = vector.load %arg15[%c1_160, %c1_161, %c0_162] : memref<10x10x64xbf16, #tpu.memory_space<vmem>>, vector<8x8x64xbf16>
    %128 = vector.shape_cast %127 : vector<8x8x64xbf16> to vector<64x64xbf16>
    %c1_163 = arith.constant 1 : index
    %c1_164 = arith.constant 1 : index
    %c0_165 = arith.constant 0 : index
    %c0_166 = arith.constant 0 : index
    %129 = vector.load %arg6[%c1_163, %c1_164, %c0_165, %c0_166] : memref<3x3x64x128xbf16, #tpu.memory_space<vmem>>, vector<1x1x64x128xbf16>
    %130 = vector.shape_cast %129 : vector<1x1x64x128xbf16> to vector<64x128xbf16>
    %cst_167 = arith.constant dense<0.000000e+00> : vector<64x128xf32>
    %131 = tpu.matmul %128, %130, %cst_167 {dimension_numbers = #tpu.dot_dimension_numbers<[1], [0], [0], [1], [0, 0, 1, 1], [], []>} : vector<64x64xbf16>, vector<64x128xbf16>, vector<64x128xf32> -> vector<64x128xf32>
    %132 = arith.addf %126, %131 : vector<64x128xf32>
    %c1_168 = arith.constant 1 : index
    %c2_169 = arith.constant 2 : index
    %c0_170 = arith.constant 0 : index
    %133 = vector.load %arg15[%c1_168, %c2_169, %c0_170] : memref<10x10x64xbf16, #tpu.memory_space<vmem>>, vector<8x8x64xbf16>
    %134 = vector.shape_cast %133 : vector<8x8x64xbf16> to vector<64x64xbf16>
    %c1_171 = arith.constant 1 : index
    %c2_172 = arith.constant 2 : index
    %c0_173 = arith.constant 0 : index
    %c0_174 = arith.constant 0 : index
    %135 = vector.load %arg6[%c1_171, %c2_172, %c0_173, %c0_174] : memref<3x3x64x128xbf16, #tpu.memory_space<vmem>>, vector<1x1x64x128xbf16>
    %136 = vector.shape_cast %135 : vector<1x1x64x128xbf16> to vector<64x128xbf16>
    %cst_175 = arith.constant dense<0.000000e+00> : vector<64x128xf32>
    %137 = tpu.matmul %134, %136, %cst_175 {dimension_numbers = #tpu.dot_dimension_numbers<[1], [0], [0], [1], [0, 0, 1, 1], [], []>} : vector<64x64xbf16>, vector<64x128xbf16>, vector<64x128xf32> -> vector<64x128xf32>
    %138 = arith.addf %132, %137 : vector<64x128xf32>
    %c2_176 = arith.constant 2 : index
    %c0_177 = arith.constant 0 : index
    %c0_178 = arith.constant 0 : index
    %139 = vector.load %arg15[%c2_176, %c0_177, %c0_178] : memref<10x10x64xbf16, #tpu.memory_space<vmem>>, vector<8x8x64xbf16>
    %140 = vector.shape_cast %139 : vector<8x8x64xbf16> to vector<64x64xbf16>
    %c2_179 = arith.constant 2 : index
    %c0_180 = arith.constant 0 : index
    %c0_181 = arith.constant 0 : index
    %c0_182 = arith.constant 0 : index
    %141 = vector.load %arg6[%c2_179, %c0_180, %c0_181, %c0_182] : memref<3x3x64x128xbf16, #tpu.memory_space<vmem>>, vector<1x1x64x128xbf16>
    %142 = vector.shape_cast %141 : vector<1x1x64x128xbf16> to vector<64x128xbf16>
    %cst_183 = arith.constant dense<0.000000e+00> : vector<64x128xf32>
    %143 = tpu.matmul %140, %142, %cst_183 {dimension_numbers = #tpu.dot_dimension_numbers<[1], [0], [0], [1], [0, 0, 1, 1], [], []>} : vector<64x64xbf16>, vector<64x128xbf16>, vector<64x128xf32> -> vector<64x128xf32>
    %144 = arith.addf %138, %143 : vector<64x128xf32>
    %c2_184 = arith.constant 2 : index
    %c1_185 = arith.constant 1 : index
    %c0_186 = arith.constant 0 : index
    %145 = vector.load %arg15[%c2_184, %c1_185, %c0_186] : memref<10x10x64xbf16, #tpu.memory_space<vmem>>, vector<8x8x64xbf16>
    %146 = vector.shape_cast %145 : vector<8x8x64xbf16> to vector<64x64xbf16>
    %c2_187 = arith.constant 2 : index
    %c1_188 = arith.constant 1 : index
    %c0_189 = arith.constant 0 : index
    %c0_190 = arith.constant 0 : index
    %147 = vector.load %arg6[%c2_187, %c1_188, %c0_189, %c0_190] : memref<3x3x64x128xbf16, #tpu.memory_space<vmem>>, vector<1x1x64x128xbf16>
    %148 = vector.shape_cast %147 : vector<1x1x64x128xbf16> to vector<64x128xbf16>
    %cst_191 = arith.constant dense<0.000000e+00> : vector<64x128xf32>
    %149 = tpu.matmul %146, %148, %cst_191 {dimension_numbers = #tpu.dot_dimension_numbers<[1], [0], [0], [1], [0, 0, 1, 1], [], []>} : vector<64x64xbf16>, vector<64x128xbf16>, vector<64x128xf32> -> vector<64x128xf32>
    %150 = arith.addf %144, %149 : vector<64x128xf32>
    %c2_192 = arith.constant 2 : index
    %c2_193 = arith.constant 2 : index
    %c0_194 = arith.constant 0 : index
    %151 = vector.load %arg15[%c2_192, %c2_193, %c0_194] : memref<10x10x64xbf16, #tpu.memory_space<vmem>>, vector<8x8x64xbf16>
    %152 = vector.shape_cast %151 : vector<8x8x64xbf16> to vector<64x64xbf16>
    %c2_195 = arith.constant 2 : index
    %c2_196 = arith.constant 2 : index
    %c0_197 = arith.constant 0 : index
    %c0_198 = arith.constant 0 : index
    %153 = vector.load %arg6[%c2_195, %c2_196, %c0_197, %c0_198] : memref<3x3x64x128xbf16, #tpu.memory_space<vmem>>, vector<1x1x64x128xbf16>
    %154 = vector.shape_cast %153 : vector<1x1x64x128xbf16> to vector<64x128xbf16>
    %cst_199 = arith.constant dense<0.000000e+00> : vector<64x128xf32>
    %155 = tpu.matmul %152, %154, %cst_199 {dimension_numbers = #tpu.dot_dimension_numbers<[1], [0], [0], [1], [0, 0, 1, 1], [], []>} : vector<64x64xbf16>, vector<64x128xbf16>, vector<64x128xf32> -> vector<64x128xf32>
    %156 = arith.addf %150, %155 : vector<64x128xf32>
    %c0_200 = arith.constant 0 : index
    %c0_201 = arith.constant 0 : index
    %157 = vector.load %arg7[%c0_200, %c0_201] : memref<1x128xf32, #tpu.memory_space<vmem>>, vector<1x128xf32>
    %158 = vector.broadcast %157 : vector<1x128xf32> to vector<64x128xf32>
    %159 = arith.addf %156, %158 : vector<64x128xf32>
    %cst_202 = arith.constant 0.000000e+00 : f32
    %160 = vector.broadcast %cst_202 : f32 to vector<64x128xf32>
    %161 = arith.maximumf %159, %160 : vector<64x128xf32>
    %162 = vector.shape_cast %161 : vector<64x128xf32> to vector<8x8x128xf32>
    %163 = arith.truncf %162 : vector<8x8x128xf32> to vector<8x8x128xbf16>
    %c0_203 = arith.constant 0 : index
    %c0_204 = arith.constant 0 : index
    %c0_205 = arith.constant 0 : index
    %c0_206 = arith.constant 0 : index
    %164 = vector.load %arg12[%c0_203, %c0_204, %c0_205, %c0_206] : memref<1x8x8x128xbf16, #tpu.memory_space<vmem>>, vector<1x8x8x128xbf16>
    %165 = vector.shape_cast %164 : vector<1x8x8x128xbf16> to vector<8x8x128xbf16>
    %166 = vector.shape_cast %163 : vector<8x8x128xbf16> to vector<1x8x8x128xbf16>
    tpu.vector_store %arg12[%c0_203, %c0_204, %c0_205, %c0_206], %166 {strides = array<i32>} : memref<1x8x8x128xbf16, #tpu.memory_space<vmem>>, vector<1x8x8x128xbf16>,
    %167 = arith.truncf %162 : vector<8x8x128xf32> to vector<8x8x128xbf16>
    %cst_207 = arith.constant 0.000000e+00 : bf16
    %168 = vector.broadcast %cst_207 : bf16 to vector<1x10x128xbf16>
    %c0_208 = arith.constant 0 : index
    %c0_209 = arith.constant 0 : index
    %c0_210 = arith.constant 0 : index
    %169 = vector.load %arg16[%c0_208, %c0_209, %c0_210] : memref<10x10x128xbf16, #tpu.memory_space<vmem>>, vector<1x10x128xbf16>
    tpu.vector_store %arg16[%c0_208, %c0_209, %c0_210], %168 {strides = array<i32>} : memref<10x10x128xbf16, #tpu.memory_space<vmem>>, vector<1x10x128xbf16>,
    %cst_211 = arith.constant 0.000000e+00 : bf16
    %170 = vector.broadcast %cst_211 : bf16 to vector<1x10x128xbf16>
    %c9_212 = arith.constant 9 : index
    %c0_213 = arith.constant 0 : index
    %c0_214 = arith.constant 0 : index
    %171 = vector.load %arg16[%c9_212, %c0_213, %c0_214] : memref<10x10x128xbf16, #tpu.memory_space<vmem>>, vector<1x10x128xbf16>
    tpu.vector_store %arg16[%c9_212, %c0_213, %c0_214], %170 {strides = array<i32>} : memref<10x10x128xbf16, #tpu.memory_space<vmem>>, vector<1x10x128xbf16>,
    %cst_215 = arith.constant 0.000000e+00 : bf16
    %172 = vector.broadcast %cst_215 : bf16 to vector<10x1x128xbf16>
    %c0_216 = arith.constant 0 : index
    %c0_217 = arith.constant 0 : index
    %c0_218 = arith.constant 0 : index
    %173 = vector.load %arg16[%c0_216, %c0_217, %c0_218] : memref<10x10x128xbf16, #tpu.memory_space<vmem>>, vector<10x1x128xbf16>
    tpu.vector_store %arg16[%c0_216, %c0_217, %c0_218], %172 {strides = array<i32>} : memref<10x10x128xbf16, #tpu.memory_space<vmem>>, vector<10x1x128xbf16>,
    %cst_219 = arith.constant 0.000000e+00 : bf16
    %174 = vector.broadcast %cst_219 : bf16 to vector<10x1x128xbf16>
    %c0_220 = arith.constant 0 : index
    %c9_221 = arith.constant 9 : index
    %c0_222 = arith.constant 0 : index
    %175 = vector.load %arg16[%c0_220, %c9_221, %c0_222] : memref<10x10x128xbf16, #tpu.memory_space<vmem>>, vector<10x1x128xbf16>
    tpu.vector_store %arg16[%c0_220, %c9_221, %c0_222], %174 {strides = array<i32>} : memref<10x10x128xbf16, #tpu.memory_space<vmem>>, vector<10x1x128xbf16>,
    %c1_223 = arith.constant 1 : index
    %c1_224 = arith.constant 1 : index
    %c0_225 = arith.constant 0 : index
    %176 = vector.load %arg16[%c1_223, %c1_224, %c0_225] : memref<10x10x128xbf16, #tpu.memory_space<vmem>>, vector<8x8x128xbf16>
    tpu.vector_store %arg16[%c1_223, %c1_224, %c0_225], %167 {strides = array<i32>} : memref<10x10x128xbf16, #tpu.memory_space<vmem>>, vector<8x8x128xbf16>,
    %cst_226 = arith.constant 0.000000e+00 : f32
    %177 = vector.broadcast %cst_226 : f32 to vector<64x128xf32>
    %c0_227 = arith.constant 0 : index
    %c0_228 = arith.constant 0 : index
    %c0_229 = arith.constant 0 : index
    %178 = vector.load %arg16[%c0_227, %c0_228, %c0_229] : memref<10x10x128xbf16, #tpu.memory_space<vmem>>, vector<8x8x128xbf16>
    %179 = vector.shape_cast %178 : vector<8x8x128xbf16> to vector<64x128xbf16>
    %c0_230 = arith.constant 0 : index
    %c0_231 = arith.constant 0 : index
    %c0_232 = arith.constant 0 : index
    %c0_233 = arith.constant 0 : index
    %180 = vector.load %arg8[%c0_230, %c0_231, %c0_232, %c0_233] : memref<3x3x128x128xbf16, #tpu.memory_space<vmem>>, vector<1x1x128x128xbf16>
    %181 = vector.shape_cast %180 : vector<1x1x128x128xbf16> to vector<128x128xbf16>
    %cst_234 = arith.constant dense<0.000000e+00> : vector<64x128xf32>
    %182 = tpu.matmul %179, %181, %cst_234 {dimension_numbers = #tpu.dot_dimension_numbers<[1], [0], [0], [1], [0, 0, 1, 1], [], []>} : vector<64x128xbf16>, vector<128x128xbf16>, vector<64x128xf32> -> vector<64x128xf32>
    %183 = arith.addf %177, %182 : vector<64x128xf32>
    %c0_235 = arith.constant 0 : index
    %c1_236 = arith.constant 1 : index
    %c0_237 = arith.constant 0 : index
    %184 = vector.load %arg16[%c0_235, %c1_236, %c0_237] : memref<10x10x128xbf16, #tpu.memory_space<vmem>>, vector<8x8x128xbf16>
    %185 = vector.shape_cast %184 : vector<8x8x128xbf16> to vector<64x128xbf16>
    %c0_238 = arith.constant 0 : index
    %c1_239 = arith.constant 1 : index
    %c0_240 = arith.constant 0 : index
    %c0_241 = arith.constant 0 : index
    %186 = vector.load %arg8[%c0_238, %c1_239, %c0_240, %c0_241] : memref<3x3x128x128xbf16, #tpu.memory_space<vmem>>, vector<1x1x128x128xbf16>
    %187 = vector.shape_cast %186 : vector<1x1x128x128xbf16> to vector<128x128xbf16>
    %cst_242 = arith.constant dense<0.000000e+00> : vector<64x128xf32>
    %188 = tpu.matmul %185, %187, %cst_242 {dimension_numbers = #tpu.dot_dimension_numbers<[1], [0], [0], [1], [0, 0, 1, 1], [], []>} : vector<64x128xbf16>, vector<128x128xbf16>, vector<64x128xf32> -> vector<64x128xf32>
    %189 = arith.addf %183, %188 : vector<64x128xf32>
    %c0_243 = arith.constant 0 : index
    %c2_244 = arith.constant 2 : index
    %c0_245 = arith.constant 0 : index
    %190 = vector.load %arg16[%c0_243, %c2_244, %c0_245] : memref<10x10x128xbf16, #tpu.memory_space<vmem>>, vector<8x8x128xbf16>
    %191 = vector.shape_cast %190 : vector<8x8x128xbf16> to vector<64x128xbf16>
    %c0_246 = arith.constant 0 : index
    %c2_247 = arith.constant 2 : index
    %c0_248 = arith.constant 0 : index
    %c0_249 = arith.constant 0 : index
    %192 = vector.load %arg8[%c0_246, %c2_247, %c0_248, %c0_249] : memref<3x3x128x128xbf16, #tpu.memory_space<vmem>>, vector<1x1x128x128xbf16>
    %193 = vector.shape_cast %192 : vector<1x1x128x128xbf16> to vector<128x128xbf16>
    %cst_250 = arith.constant dense<0.000000e+00> : vector<64x128xf32>
    %194 = tpu.matmul %191, %193, %cst_250 {dimension_numbers = #tpu.dot_dimension_numbers<[1], [0], [0], [1], [0, 0, 1, 1], [], []>} : vector<64x128xbf16>, vector<128x128xbf16>, vector<64x128xf32> -> vector<64x128xf32>
    %195 = arith.addf %189, %194 : vector<64x128xf32>
    %c1_251 = arith.constant 1 : index
    %c0_252 = arith.constant 0 : index
    %c0_253 = arith.constant 0 : index
    %196 = vector.load %arg16[%c1_251, %c0_252, %c0_253] : memref<10x10x128xbf16, #tpu.memory_space<vmem>>, vector<8x8x128xbf16>
    %197 = vector.shape_cast %196 : vector<8x8x128xbf16> to vector<64x128xbf16>
    %c1_254 = arith.constant 1 : index
    %c0_255 = arith.constant 0 : index
    %c0_256 = arith.constant 0 : index
    %c0_257 = arith.constant 0 : index
    %198 = vector.load %arg8[%c1_254, %c0_255, %c0_256, %c0_257] : memref<3x3x128x128xbf16, #tpu.memory_space<vmem>>, vector<1x1x128x128xbf16>
    %199 = vector.shape_cast %198 : vector<1x1x128x128xbf16> to vector<128x128xbf16>
    %cst_258 = arith.constant dense<0.000000e+00> : vector<64x128xf32>
    %200 = tpu.matmul %197, %199, %cst_258 {dimension_numbers = #tpu.dot_dimension_numbers<[1], [0], [0], [1], [0, 0, 1, 1], [], []>} : vector<64x128xbf16>, vector<128x128xbf16>, vector<64x128xf32> -> vector<64x128xf32>
    %201 = arith.addf %195, %200 : vector<64x128xf32>
    %c1_259 = arith.constant 1 : index
    %c1_260 = arith.constant 1 : index
    %c0_261 = arith.constant 0 : index
    %202 = vector.load %arg16[%c1_259, %c1_260, %c0_261] : memref<10x10x128xbf16, #tpu.memory_space<vmem>>, vector<8x8x128xbf16>
    %203 = vector.shape_cast %202 : vector<8x8x128xbf16> to vector<64x128xbf16>
    %c1_262 = arith.constant 1 : index
    %c1_263 = arith.constant 1 : index
    %c0_264 = arith.constant 0 : index
    %c0_265 = arith.constant 0 : index
    %204 = vector.load %arg8[%c1_262, %c1_263, %c0_264, %c0_265] : memref<3x3x128x128xbf16, #tpu.memory_space<vmem>>, vector<1x1x128x128xbf16>
    %205 = vector.shape_cast %204 : vector<1x1x128x128xbf16> to vector<128x128xbf16>
    %cst_266 = arith.constant dense<0.000000e+00> : vector<64x128xf32>
    %206 = tpu.matmul %203, %205, %cst_266 {dimension_numbers = #tpu.dot_dimension_numbers<[1], [0], [0], [1], [0, 0, 1, 1], [], []>} : vector<64x128xbf16>, vector<128x128xbf16>, vector<64x128xf32> -> vector<64x128xf32>
    %207 = arith.addf %201, %206 : vector<64x128xf32>
    %c1_267 = arith.constant 1 : index
    %c2_268 = arith.constant 2 : index
    %c0_269 = arith.constant 0 : index
    %208 = vector.load %arg16[%c1_267, %c2_268, %c0_269] : memref<10x10x128xbf16, #tpu.memory_space<vmem>>, vector<8x8x128xbf16>
    %209 = vector.shape_cast %208 : vector<8x8x128xbf16> to vector<64x128xbf16>
    %c1_270 = arith.constant 1 : index
    %c2_271 = arith.constant 2 : index
    %c0_272 = arith.constant 0 : index
    %c0_273 = arith.constant 0 : index
    %210 = vector.load %arg8[%c1_270, %c2_271, %c0_272, %c0_273] : memref<3x3x128x128xbf16, #tpu.memory_space<vmem>>, vector<1x1x128x128xbf16>
    %211 = vector.shape_cast %210 : vector<1x1x128x128xbf16> to vector<128x128xbf16>
    %cst_274 = arith.constant dense<0.000000e+00> : vector<64x128xf32>
    %212 = tpu.matmul %209, %211, %cst_274 {dimension_numbers = #tpu.dot_dimension_numbers<[1], [0], [0], [1], [0, 0, 1, 1], [], []>} : vector<64x128xbf16>, vector<128x128xbf16>, vector<64x128xf32> -> vector<64x128xf32>
    %213 = arith.addf %207, %212 : vector<64x128xf32>
    %c2_275 = arith.constant 2 : index
    %c0_276 = arith.constant 0 : index
    %c0_277 = arith.constant 0 : index
    %214 = vector.load %arg16[%c2_275, %c0_276, %c0_277] : memref<10x10x128xbf16, #tpu.memory_space<vmem>>, vector<8x8x128xbf16>
    %215 = vector.shape_cast %214 : vector<8x8x128xbf16> to vector<64x128xbf16>
    %c2_278 = arith.constant 2 : index
    %c0_279 = arith.constant 0 : index
    %c0_280 = arith.constant 0 : index
    %c0_281 = arith.constant 0 : index
    %216 = vector.load %arg8[%c2_278, %c0_279, %c0_280, %c0_281] : memref<3x3x128x128xbf16, #tpu.memory_space<vmem>>, vector<1x1x128x128xbf16>
    %217 = vector.shape_cast %216 : vector<1x1x128x128xbf16> to vector<128x128xbf16>
    %cst_282 = arith.constant dense<0.000000e+00> : vector<64x128xf32>
    %218 = tpu.matmul %215, %217, %cst_282 {dimension_numbers = #tpu.dot_dimension_numbers<[1], [0], [0], [1], [0, 0, 1, 1], [], []>} : vector<64x128xbf16>, vector<128x128xbf16>, vector<64x128xf32> -> vector<64x128xf32>
    %219 = arith.addf %213, %218 : vector<64x128xf32>
    %c2_283 = arith.constant 2 : index
    %c1_284 = arith.constant 1 : index
    %c0_285 = arith.constant 0 : index
    %220 = vector.load %arg16[%c2_283, %c1_284, %c0_285] : memref<10x10x128xbf16, #tpu.memory_space<vmem>>, vector<8x8x128xbf16>
    %221 = vector.shape_cast %220 : vector<8x8x128xbf16> to vector<64x128xbf16>
    %c2_286 = arith.constant 2 : index
    %c1_287 = arith.constant 1 : index
    %c0_288 = arith.constant 0 : index
    %c0_289 = arith.constant 0 : index
    %222 = vector.load %arg8[%c2_286, %c1_287, %c0_288, %c0_289] : memref<3x3x128x128xbf16, #tpu.memory_space<vmem>>, vector<1x1x128x128xbf16>
    %223 = vector.shape_cast %222 : vector<1x1x128x128xbf16> to vector<128x128xbf16>
    %cst_290 = arith.constant dense<0.000000e+00> : vector<64x128xf32>
    %224 = tpu.matmul %221, %223, %cst_290 {dimension_numbers = #tpu.dot_dimension_numbers<[1], [0], [0], [1], [0, 0, 1, 1], [], []>} : vector<64x128xbf16>, vector<128x128xbf16>, vector<64x128xf32> -> vector<64x128xf32>
    %225 = arith.addf %219, %224 : vector<64x128xf32>
    %c2_291 = arith.constant 2 : index
    %c2_292 = arith.constant 2 : index
    %c0_293 = arith.constant 0 : index
    %226 = vector.load %arg16[%c2_291, %c2_292, %c0_293] : memref<10x10x128xbf16, #tpu.memory_space<vmem>>, vector<8x8x128xbf16>
    %227 = vector.shape_cast %226 : vector<8x8x128xbf16> to vector<64x128xbf16>
    %c2_294 = arith.constant 2 : index
    %c2_295 = arith.constant 2 : index
    %c0_296 = arith.constant 0 : index
    %c0_297 = arith.constant 0 : index
    %228 = vector.load %arg8[%c2_294, %c2_295, %c0_296, %c0_297] : memref<3x3x128x128xbf16, #tpu.memory_space<vmem>>, vector<1x1x128x128xbf16>
    %229 = vector.shape_cast %228 : vector<1x1x128x128xbf16> to vector<128x128xbf16>
    %cst_298 = arith.constant dense<0.000000e+00> : vector<64x128xf32>
    %230 = tpu.matmul %227, %229, %cst_298 {dimension_numbers = #tpu.dot_dimension_numbers<[1], [0], [0], [1], [0, 0, 1, 1], [], []>} : vector<64x128xbf16>, vector<128x128xbf16>, vector<64x128xf32> -> vector<64x128xf32>
    %231 = arith.addf %225, %230 : vector<64x128xf32>
    %c0_299 = arith.constant 0 : index
    %c0_300 = arith.constant 0 : index
    %232 = vector.load %arg9[%c0_299, %c0_300] : memref<1x128xf32, #tpu.memory_space<vmem>>, vector<1x128xf32>
    %233 = vector.broadcast %232 : vector<1x128xf32> to vector<64x128xf32>
    %234 = arith.addf %231, %233 : vector<64x128xf32>
    %cst_301 = arith.constant 0.000000e+00 : f32
    %235 = vector.broadcast %cst_301 : f32 to vector<64x128xf32>
    %236 = arith.maximumf %234, %235 : vector<64x128xf32>
    %237 = vector.shape_cast %236 : vector<64x128xf32> to vector<8x8x128xf32>
    %238 = arith.truncf %237 : vector<8x8x128xf32> to vector<8x8x128xbf16>
    %c0_302 = arith.constant 0 : index
    %c0_303 = arith.constant 0 : index
    %c0_304 = arith.constant 0 : index
    %c0_305 = arith.constant 0 : index
    %239 = vector.load %arg13[%c0_302, %c0_303, %c0_304, %c0_305] : memref<1x8x8x128xbf16, #tpu.memory_space<vmem>>, vector<1x8x8x128xbf16>
    %240 = vector.shape_cast %239 : vector<1x8x8x128xbf16> to vector<8x8x128xbf16>
    %241 = vector.shape_cast %238 : vector<8x8x128xbf16> to vector<1x8x8x128xbf16>
    tpu.vector_store %arg13[%c0_302, %c0_303, %c0_304, %c0_305], %241 {strides = array<i32>} : memref<1x8x8x128xbf16, #tpu.memory_space<vmem>>, vector<1x8x8x128xbf16>,
    return
  }
  func.func @transform_0(%arg0: i32) -> (i32, i32, i32) {
    %c0_i32 = arith.constant 0 : i32
    %c0_i32_0 = arith.constant 0 : i32
    %c0_i32_1 = arith.constant 0 : i32
    return %arg0, %c0_i32, %c0_i32_0 : i32, i32, i32
  }
  func.func @transform_1(%arg0: i32) -> (i32, i32) {
    %c0_i32 = arith.constant 0 : i32
    %c0_i32_0 = arith.constant 0 : i32
    %c0_i32_1 = arith.constant 0 : i32
    return %c0_i32, %c0_i32_0 : i32, i32
  }
  func.func @transform_2(%arg0: i32) -> (i32, i32) {
    %c0_i32 = arith.constant 0 : i32
    %c0_i32_0 = arith.constant 0 : i32
    %c0_i32_1 = arith.constant 0 : i32
    return %c0_i32, %c0_i32_0 : i32, i32
  }
  func.func @transform_3(%arg0: i32) -> (i32, i32, i32, i32) {
    %c0_i32 = arith.constant 0 : i32
    %c0_i32_0 = arith.constant 0 : i32
    %c0_i32_1 = arith.constant 0 : i32
    %c0_i32_2 = arith.constant 0 : i32
    %c0_i32_3 = arith.constant 0 : i32
    return %c0_i32, %c0_i32_0, %c0_i32_1, %c0_i32_2 : i32, i32, i32, i32
  }
  func.func @transform_4(%arg0: i32) -> (i32, i32) {
    %c0_i32 = arith.constant 0 : i32
    %c0_i32_0 = arith.constant 0 : i32
    %c0_i32_1 = arith.constant 0 : i32
    return %c0_i32, %c0_i32_0 : i32, i32
  }
  func.func @transform_5(%arg0: i32) -> (i32, i32, i32, i32) {
    %c0_i32 = arith.constant 0 : i32
    %c0_i32_0 = arith.constant 0 : i32
    %c0_i32_1 = arith.constant 0 : i32
    %c0_i32_2 = arith.constant 0 : i32
    %c0_i32_3 = arith.constant 0 : i32
    return %c0_i32, %c0_i32_0, %c0_i32_1, %c0_i32_2 : i32, i32, i32, i32
  }
  func.func @transform_6(%arg0: i32) -> (i32, i32) {
    %c0_i32 = arith.constant 0 : i32
    %c0_i32_0 = arith.constant 0 : i32
    %c0_i32_1 = arith.constant 0 : i32
    return %c0_i32, %c0_i32_0 : i32, i32
  }
  func.func @transform_7(%arg0: i32) -> (i32, i32, i32, i32) {
    %c0_i32 = arith.constant 0 : i32
    %c0_i32_0 = arith.constant 0 : i32
    %c0_i32_1 = arith.constant 0 : i32
    %c0_i32_2 = arith.constant 0 : i32
    %c0_i32_3 = arith.constant 0 : i32
    return %c0_i32, %c0_i32_0, %c0_i32_1, %c0_i32_2 : i32, i32, i32, i32
  }
  func.func @transform_8(%arg0: i32) -> (i32, i32) {
    %c0_i32 = arith.constant 0 : i32
    %c0_i32_0 = arith.constant 0 : i32
    %c0_i32_1 = arith.constant 0 : i32
    return %c0_i32, %c0_i32_0 : i32, i32
  }
  func.func @transform_9(%arg0: i32) -> (i32, i32, i32, i32) {
    %c0_i32 = arith.constant 0 : i32
    %c0_i32_0 = arith.constant 0 : i32
    %c0_i32_1 = arith.constant 0 : i32
    %c0_i32_2 = arith.constant 0 : i32
    return %arg0, %c0_i32, %c0_i32_0, %c0_i32_1 : i32, i32, i32, i32
  }
  func.func @transform_10(%arg0: i32) -> (i32, i32, i32, i32) {
    %c0_i32 = arith.constant 0 : i32
    %c0_i32_0 = arith.constant 0 : i32
    %c0_i32_1 = arith.constant 0 : i32
    %c0_i32_2 = arith.constant 0 : i32
    return %arg0, %c0_i32, %c0_i32_0, %c0_i32_1 : i32, i32, i32, i32
  }
  func.func @transform_11(%arg0: i32) -> (i32, i32, i32, i32) {
    %c0_i32 = arith.constant 0 : i32
    %c0_i32_0 = arith.constant 0 : i32
    %c0_i32_1 = arith.constant 0 : i32
    %c0_i32_2 = arith.constant 0 : i32
    return %arg0, %c0_i32, %c0_i32_0, %c0_i32_1 : i32, i32, i32, i32
  }
  func.func @transform_12(%arg0: i32) -> (i32, i32, i32, i32) {
    %c0_i32 = arith.constant 0 : i32
    %c0_i32_0 = arith.constant 0 : i32
    %c0_i32_1 = arith.constant 0 : i32
    %c0_i32_2 = arith.constant 0 : i32
    return %arg0, %c0_i32, %c0_i32_0, %c0_i32_1 : i32, i32, i32, i32
  }
}

</mosaic_0001>

<llo_original>
// kernel: vgg_forward.1
$region0: #{vgg_forward.1}
  #allocation0 [shape = 'u32[]', space=smem, size = 0x4, offset = 0x4, fixed_abs, tag = 'smem constant byte address 0x4 - core index']
  #allocation1 [shape = 'u32[144,128]{1,0:T(1,128)}', space=vmem, size = 0x12000, scoped, tag = 'internal scratch']
  #allocation2 [shape = 'bf16[18,18,64]{2,1,0:T(8,128)(2,1)}', space=vmem, size = 0x1b000, scoped, tag = 'scratch operand']
  #allocation3 [shape = 'bf16[10,10,64]{2,1,0:T(8,128)(2,1)}', space=vmem, size = 0xa000, scoped, tag = 'scratch operand']
  #allocation4 [shape = 'bf16[10,10,128]{2,1,0:T(8,128)(2,1)}', space=vmem, size = 0xa000, scoped, tag = 'scratch operand']
  %s0 = inlined_call_operand.vmem [shape: bf16[2,256,32], index: 0, kind: input, shape index: {}]
  %s1 = inlined_call_operand.vmem [shape: bf16[32,64], index: 1, kind: input, shape index: {}]
  %s2 = inlined_call_operand.vmem [shape: f32[1,64], index: 2, kind: input, shape index: {}]
  %s3 = inlined_call_operand.vmem [shape: bf16[3,3,64,64], index: 3, kind: input, shape index: {}]
  %s4 = inlined_call_operand.vmem [shape: f32[1,64], index: 4, kind: input, shape index: {}]
  %s5 = inlined_call_operand.vmem [shape: bf16[3,3,64,128], index: 5, kind: input, shape index: {}]
  %s6 = inlined_call_operand.vmem [shape: f32[1,128], index: 6, kind: input, shape index: {}]
  %s7 = inlined_call_operand.vmem [shape: bf16[3,3,128,128], index: 7, kind: input, shape index: {}]
  %s8 = inlined_call_operand.vmem [shape: f32[1,128], index: 8, kind: input, shape index: {}]
  %s9 = inlined_call_operand.vmem [shape: bf16[2,16,16,64], index: 9, kind: output, shape index: {0}]
  %s10 = inlined_call_operand.vmem [shape: bf16[2,16,16,64], index: 10, kind: output, shape index: {1}]
  %s11 = inlined_call_operand.vmem [shape: bf16[2,8,8,128], index: 11, kind: output, shape index: {2}]
  %s12 = inlined_call_operand.vmem [shape: bf16[2,8,8,128], index: 12, kind: output, shape index: {3}]
  %13 = xla_tuple %s9, %s10, %s11, %s12
  %s14 = sld [smem:[#allocation0]]
  $region93: #{vgg_forward.1} parent=0
    _
  %s16 = ssub.s32 1, %s14
  %s17 = scalar_select 0, %s16, %s14
  loop: start=0, step=1, limit=4
  $region2: #{vgg_forward.1} parent=0 // loop_pre_header
    _
  $region3: #{vgg_forward.1} parent=0 // loop_header
    %s19 = sphi 0, %s23
    %p20 = scmp.ge.s32.totalorder %s19, 4
    %s29 = sphi 0, %s31
    %s32 = sphi 0, %s29
    %s33 = sphi 0, %s32
    %s49 = sphi 0, %s33
    %s53 = sphi 0, %s53
    %s55 = sphi 0, %s53
    %s56 = sphi 0, %s55
    %s70 = sphi 0, %s56
    %s74 = sphi 0, %s74
    %s76 = sphi 0, %s74
    %s77 = sphi 0, %s76
    %s91 = sphi 0, %s77
    %s95 = sphi 0, %s95
    %s97 = sphi 0, %s95
    %s98 = sphi 0, %s97
    %s112 = sphi 0, %s98
    %s116 = sphi 0, %s116
    %s118 = sphi 0, %s116
    %s119 = sphi 0, %s118
    %s133 = sphi 0, %s119
    %s137 = sphi 0, %s137
    %s139 = sphi 0, %s137
    %s140 = sphi 0, %s139
    %s154 = sphi 0, %s140
    %s158 = sphi 0, %s158
    %s160 = sphi 0, %s158
    %s161 = sphi 0, %s160
    %s175 = sphi 0, %s161
    %s179 = sphi 0, %s179
    %s181 = sphi 0, %s179
    %s182 = sphi 0, %s181
    %s196 = sphi 0, %s182
    %s200 = sphi 0, %s200
    %s202 = sphi 0, %s200
    %s203 = sphi 0, %s202
    %s217 = sphi 0, %s203
    %s223 = sphi 0, %s225
    %s226 = sphi 0, %s223
    %s227 = sphi 0, %s226
    %s243 = sphi 0, %s227
    %s249 = sphi 0, %s251
    %s252 = sphi 0, %s249
    %s253 = sphi 0, %s252
    %s269 = sphi 0, %s253
    %s275 = sphi 0, %s277
    %s278 = sphi 0, %s275
    %s279 = sphi 0, %s278
    %s295 = sphi 0, %s279
    %s301 = sphi 0, %s303
    %s304 = sphi 0, %s301
    %s305 = sphi 0, %s304
    %s321 = sphi 0, %s305
  $region4: #{vgg_forward.1} parent=0 // loop_header_branch
    %22 = sbr.rel (%p20) target = $region8
  $region5: #{vgg_forward.1} parent=0 // loop_body
    %s24 = ssub.s32 %s19, 1
    %s25 = ssub.s32 %s19, 2
    %s26 = sadd.s32 %s19, 1
    %s27 = ssub.s32 %s19, %s26
    %p28 = scmp.eq.s32.totalorder %s27, 0
    %s30 = sadd.s32 %s29, 1
    %s31 = scalar_select %p28, %s29, %s30
    %p34 = pneg %p28
    %p35 = scmp.eq.s32.totalorder %s19, 1
    %p36 = por %p34, %p35
    %p37 = scmp.ne.s32.totalorder %s29, %s32
    %p38 = scmp.eq.s32.totalorder %s19, 0
    %p39 = por %p37, %p38
    %p40 = scmp.ne.s32.totalorder %s29, %s32
    %p41 = scmp.eq.s32.totalorder %s24, 1
    %p42 = por %p40, %p41
    %p43 = scmp.ne.s32.totalorder %s32, %s33
    %p44 = scmp.eq.s32.totalorder %s24, 0
    %p45 = por %p43, %p44
    %p46 = scmp.ne.s32.totalorder %s32, %s33
    %p47 = scmp.eq.s32.totalorder %s25, 1
    %p48 = por %p46, %p47
    %p50 = scmp.ne.s32.totalorder %s33, %s49
    %p51 = scmp.eq.s32.totalorder %s25, 0
    %p52 = por %p50, %p51
    %s54 = sadd.s32 %s53, 1
    %p57 = scmp.eq.s32.totalorder %s19, 1
    %p58 = scmp.ne.s32.totalorder %s53, %s55
    %p59 = scmp.eq.s32.totalorder %s19, 0
    %p60 = por %p58, %p59
    %p61 = scmp.ne.s32.totalorder %s53, %s55
    %p62 = scmp.eq.s32.totalorder %s24, 1
    %p63 = por %p61, %p62
    %p64 = scmp.ne.s32.totalorder %s55, %s56
    %p65 = scmp.eq.s32.totalorder %s24, 0
    %p66 = por %p64, %p65
    %p67 = scmp.ne.s32.totalorder %s55, %s56
    %p68 = scmp.eq.s32.totalorder %s25, 1
    %p69 = por %p67, %p68
    %p71 = scmp.ne.s32.totalorder %s56, %s70
    %p72 = scmp.eq.s32.totalorder %s25, 0
    %p73 = por %p71, %p72
    %s75 = sadd.s32 %s74, 1
    %p78 = scmp.eq.s32.totalorder %s19, 1
    %p79 = scmp.ne.s32.totalorder %s74, %s76
    %p80 = scmp.eq.s32.totalorder %s19, 0
    %p81 = por %p79, %p80
    %p82 = scmp.ne.s32.totalorder %s74, %s76
    %p83 = scmp.eq.s32.totalorder %s24, 1
    %p84 = por %p82, %p83
    %p85 = scmp.ne.s32.totalorder %s76, %s77
    %p86 = scmp.eq.s32.totalorder %s24, 0
    %p87 = por %p85, %p86
    %p88 = scmp.ne.s32.totalorder %s76, %s77
    %p89 = scmp.eq.s32.totalorder %s25, 1
    %p90 = por %p88, %p89
    %p92 = scmp.ne.s32.totalorder %s77, %s91
    %p93 = scmp.eq.s32.totalorder %s25, 0
    %p94 = por %p92, %p93
    %s96 = sadd.s32 %s95, 1
    %p99 = scmp.eq.s32.totalorder %s19, 1
    %p100 = scmp.ne.s32.totalorder %s95, %s97
    %p101 = scmp.eq.s32.totalorder %s19, 0
    %p102 = por %p100, %p101
    %p103 = scmp.ne.s32.totalorder %s95, %s97
    %p104 = scmp.eq.s32.totalorder %s24, 1
    %p105 = por %p103, %p104
    %p106 = scmp.ne.s32.totalorder %s97, %s98
    %p107 = scmp.eq.s32.totalorder %s24, 0
    %p108 = por %p106, %p107
    %p109 = scmp.ne.s32.totalorder %s97, %s98
    %p110 = scmp.eq.s32.totalorder %s25, 1
    %p111 = por %p109, %p110
    %p113 = scmp.ne.s32.totalorder %s98, %s112
    %p114 = scmp.eq.s32.totalorder %s25, 0
    %p115 = por %p113, %p114
    %s117 = sadd.s32 %s116, 1
    %p120 = scmp.eq.s32.totalorder %s19, 1
    %p121 = scmp.ne.s32.totalorder %s116, %s118
    %p122 = scmp.eq.s32.totalorder %s19, 0
    %p123 = por %p121, %p122
    %p124 = scmp.ne.s32.totalorder %s116, %s118
    %p125 = scmp.eq.s32.totalorder %s24, 1
    %p126 = por %p124, %p125
    %p127 = scmp.ne.s32.totalorder %s118, %s119
    %p128 = scmp.eq.s32.totalorder %s24, 0
    %p129 = por %p127, %p128
    %p130 = scmp.ne.s32.totalorder %s118, %s119
    %p131 = scmp.eq.s32.totalorder %s25, 1
    %p132 = por %p130, %p131
    %p134 = scmp.ne.s32.totalorder %s119, %s133
    %p135 = scmp.eq.s32.totalorder %s25, 0
    %p136 = por %p134, %p135
    %s138 = sadd.s32 %s137, 1
    %p141 = scmp.eq.s32.totalorder %s19, 1
    %p142 = scmp.ne.s32.totalorder %s137, %s139
    %p143 = scmp.eq.s32.totalorder %s19, 0
    %p144 = por %p142, %p143
    %p145 = scmp.ne.s32.totalorder %s137, %s139
    %p146 = scmp.eq.s32.totalorder %s24, 1
    %p147 = por %p145, %p146
    %p148 = scmp.ne.s32.totalorder %s139, %s140
    %p149 = scmp.eq.s32.totalorder %s24, 0
    %p150 = por %p148, %p149
    %p151 = scmp.ne.s32.totalorder %s139, %s140
    %p152 = scmp.eq.s32.totalorder %s25, 1
    %p153 = por %p151, %p152
    %p155 = scmp.ne.s32.totalorder %s140, %s154
    %p156 = scmp.eq.s32.totalorder %s25, 0
    %p157 = por %p155, %p156
    %s159 = sadd.s32 %s158, 1
    %p162 = scmp.eq.s32.totalorder %s19, 1
    %p163 = scmp.ne.s32.totalorder %s158, %s160
    %p164 = scmp.eq.s32.totalorder %s19, 0
    %p165 = por %p163, %p164
    %p166 = scmp.ne.s32.totalorder %s158, %s160
    %p167 = scmp.eq.s32.totalorder %s24, 1
    %p168 = por %p166, %p167
    %p169 = scmp.ne.s32.totalorder %s160, %s161
    %p170 = scmp.eq.s32.totalorder %s24, 0
    %p171 = por %p169, %p170
    %p172 = scmp.ne.s32.totalorder %s160, %s161
    %p173 = scmp.eq.s32.totalorder %s25, 1
    %p174 = por %p172, %p173
    %p176 = scmp.ne.s32.totalorder %s161, %s175
    %p177 = scmp.eq.s32.totalorder %s25, 0
    %p178 = por %p176, %p177
    %s180 = sadd.s32 %s179, 1
    %p183 = scmp.eq.s32.totalorder %s19, 1
    %p184 = scmp.ne.s32.totalorder %s179, %s181
    %p185 = scmp.eq.s32.totalorder %s19, 0
    %p186 = por %p184, %p185
    %p187 = scmp.ne.s32.totalorder %s179, %s181
    %p188 = scmp.eq.s32.totalorder %s24, 1
    %p189 = por %p187, %p188
    %p190 = scmp.ne.s32.totalorder %s181, %s182
    %p191 = scmp.eq.s32.totalorder %s24, 0
    %p192 = por %p190, %p191
    %p193 = scmp.ne.s32.totalorder %s181, %s182
    %p194 = scmp.eq.s32.totalorder %s25, 1
    %p195 = por %p193, %p194
    %p197 = scmp.ne.s32.totalorder %s182, %s196
    %p198 = scmp.eq.s32.totalorder %s25, 0
    %p199 = por %p197, %p198
    %s201 = sadd.s32 %s200, 1
    %p204 = scmp.eq.s32.totalorder %s19, 1
    %p205 = scmp.ne.s32.totalorder %s200, %s202
    %p206 = scmp.eq.s32.totalorder %s19, 0
    %p207 = por %p205, %p206
    %p208 = scmp.ne.s32.totalorder %s200, %s202
    %p209 = scmp.eq.s32.totalorder %s24, 1
    %p210 = por %p208, %p209
    %p211 = scmp.ne.s32.totalorder %s202, %s203
    %p212 = scmp.eq.s32.totalorder %s24, 0
    %p213 = por %p211, %p212
    %p214 = scmp.ne.s32.totalorder %s202, %s203
    %p215 = scmp.eq.s32.totalorder %s25, 1
    %p216 = por %p214, %p215
    %p218 = scmp.ne.s32.totalorder %s203, %s217
    %p219 = scmp.eq.s32.totalorder %s25, 0
    %p220 = por %p218, %p219
    %s221 = ssub.s32 %s19, %s26
    %p222 = scmp.eq.s32.totalorder %s221, 0
    %s224 = sadd.s32 %s223, 1
    %s225 = scalar_select %p222, %s223, %s224
    %p228 = pneg %p222
    %p229 = scmp.eq.s32.totalorder %s19, 1
    %p230 = por %p228, %p229
    %p231 = scmp.ne.s32.totalorder %s223, %s226
    %p232 = scmp.eq.s32.totalorder %s19, 0
    %p233 = por %p231, %p232
    %p234 = scmp.ne.s32.totalorder %s223, %s226
    %p235 = scmp.eq.s32.totalorder %s24, 1
    %p236 = por %p234, %p235
    %p237 = scmp.ne.s32.totalorder %s226, %s227
    %p238 = scmp.eq.s32.totalorder %s24, 0
    %p239 = por %p237, %p238
    %p240 = scmp.ne.s32.totalorder %s226, %s227
    %p241 = scmp.eq.s32.totalorder %s25, 1
    %p242 = por %p240, %p241
    %p244 = scmp.ne.s32.totalorder %s227, %s243
    %p245 = scmp.eq.s32.totalorder %s25, 0
    %p246 = por %p244, %p245
    %s247 = ssub.s32 %s19, %s26
    %p248 = scmp.eq.s32.totalorder %s247, 0
    %s250 = sadd.s32 %s249, 1
    %s251 = scalar_select %p248, %s249, %s250
    %p254 = pneg %p248
    %p255 = scmp.eq.s32.totalorder %s19, 1
    %p256 = por %p254, %p255
    %p257 = scmp.ne.s32.totalorder %s249, %s252
    %p258 = scmp.eq.s32.totalorder %s19, 0
    %p259 = por %p257, %p258
    %p260 = scmp.ne.s32.totalorder %s249, %s252
    %p261 = scmp.eq.s32.totalorder %s24, 1
    %p262 = por %p260, %p261
    %p263 = scmp.ne.s32.totalorder %s252, %s253
    %p264 = scmp.eq.s32.totalorder %s24, 0
    %p265 = por %p263, %p264
    %p266 = scmp.ne.s32.totalorder %s252, %s253
    %p267 = scmp.eq.s32.totalorder %s25, 1
    %p268 = por %p266, %p267
    %p270 = scmp.ne.s32.totalorder %s253, %s269
    %p271 = scmp.eq.s32.totalorder %s25, 0
    %p272 = por %p270, %p271
    %s273 = ssub.s32 %s19, %s26
    %p274 = scmp.eq.s32.totalorder %s273, 0
    %s276 = sadd.s32 %s275, 1
    %s277 = scalar_select %p274, %s275, %s276
    %p280 = pneg %p274
    %p281 = scmp.eq.s32.totalorder %s19, 1
    %p282 = por %p280, %p281
    %p283 = scmp.ne.s32.totalorder %s275, %s278
    %p284 = scmp.eq.s32.totalorder %s19, 0
    %p285 = por %p283, %p284
    %p286 = scmp.ne.s32.totalorder %s275, %s278
    %p287 = scmp.eq.s32.totalorder %s24, 1
    %p288 = por %p286, %p287
    %p289 = scmp.ne.s32.totalorder %s278, %s279
    %p290 = scmp.eq.s32.totalorder %s24, 0
    %p291 = por %p289, %p290
    %p292 = scmp.ne.s32.totalorder %s278, %s279
    %p293 = scmp.eq.s32.totalorder %s25, 1
    %p294 = por %p292, %p293
    %p296 = scmp.ne.s32.totalorder %s279, %s295
    %p297 = scmp.eq.s32.totalorder %s25, 0
    %p298 = por %p296, %p297
    %s299 = ssub.s32 %s19, %s26
    %p300 = scmp.eq.s32.totalorder %s299, 0
    %s302 = sadd.s32 %s301, 1
    %s303 = scalar_select %p300, %s301, %s302
    %p306 = pneg %p300
    %p307 = scmp.eq.s32.totalorder %s19, 1
    %p308 = por %p306, %p307
    %p309 = scmp.ne.s32.totalorder %s301, %s304
    %p310 = scmp.eq.s32.totalorder %s19, 0
    %p311 = por %p309, %p310
    %p312 = scmp.ne.s32.totalorder %s301, %s304
    %p313 = scmp.eq.s32.totalorder %s24, 1
    %p314 = por %p312, %p313
    %p315 = scmp.ne.s32.totalorder %s304, %s305
    %p316 = scmp.eq.s32.totalorder %s24, 0
    %p317 = por %p315, %p316
    %p318 = scmp.ne.s32.totalorder %s304, %s305
    %p319 = scmp.eq.s32.totalorder %s25, 1
    %p320 = por %p318, %p319
    %p322 = scmp.ne.s32.totalorder %s305, %s321
    %p323 = scmp.eq.s32.totalorder %s25, 0
    %p324 = por %p322, %p323
    %p325 = scmp.le.s32.totalorder 1, %s19
    %p326 = scmp.lt.s32.totalorder %s19, 3
    %p327 = pnand %p325, %p326
    %p328 = pneg %p327
    // Predicated region
    $region9: #{vgg_forward.1} parent=5 // pred_check
      _
    $region10: #{vgg_forward.1} parent=5 // pred_check_branch
      %330 = sbr.rel (%p327) target = $region12
    $region11: #{vgg_forward.1} parent=5 // pred_region
      %s331 = ssub.s32 %s19, 1
      // Predicated region
      $region13: #{vgg_forward.1} parent=11 // pred_check
        %p332 = pneg %p66
      $region14: #{vgg_forward.1} parent=11 // pred_check_branch
        %334 = sbr.rel (%p332) target = $region16
      $region15: #{vgg_forward.1} parent=11 // pred_region
        _
      $region16: #{vgg_forward.1} parent=11 // pred_fallthru
        _
      // Predicated region
      $region17: #{vgg_forward.1} parent=11 // pred_check
        %p335 = pneg %p87
      $region18: #{vgg_forward.1} parent=11 // pred_check_branch
        %337 = sbr.rel (%p335) target = $region20
      $region19: #{vgg_forward.1} parent=11 // pred_region
        _
      $region20: #{vgg_forward.1} parent=11 // pred_fallthru
        _
      // Predicated region
      $region21: #{vgg_forward.1} parent=11 // pred_check
        %p338 = pneg %p108
      $region22: #{vgg_forward.1} parent=11 // pred_check_branch
        %340 = sbr.rel (%p338) target = $region24
      $region23: #{vgg_forward.1} parent=11 // pred_region
        _
      $region24: #{vgg_forward.1} parent=11 // pred_fallthru
        _
      // Predicated region
      $region25: #{vgg_forward.1} parent=11 // pred_check
        %p341 = pneg %p129
      $region26: #{vgg_forward.1} parent=11 // pred_check_branch
        %343 = sbr.rel (%p341) target = $region28
      $region27: #{vgg_forward.1} parent=11 // pred_region
        _
      $region28: #{vgg_forward.1} parent=11 // pred_fallthru
        _
      // Predicated region
      $region29: #{vgg_forward.1} parent=11 // pred_check
        %p344 = pneg %p150
      $region30: #{vgg_forward.1} parent=11 // pred_check_branch
        %346 = sbr.rel (%p344) target = $region32
      $region31: #{vgg_forward.1} parent=11 // pred_region
        _
      $region32: #{vgg_forward.1} parent=11 // pred_fallthru
        _
      // Predicated region
      $region33: #{vgg_forward.1} parent=11 // pred_check
        %p347 = pneg %p171
      $region34: #{vgg_forward.1} parent=11 // pred_check_branch
        %349 = sbr.rel (%p347) target = $region36
      $region35: #{vgg_forward.1} parent=11 // pred_region
        _
      $region36: #{vgg_forward.1} parent=11 // pred_fallthru
        _
      // Predicated region
      $region37: #{vgg_forward.1} parent=11 // pred_check
        %p350 = pneg %p192
      $region38: #{vgg_forward.1} parent=11 // pred_check_branch
        %352 = sbr.rel (%p350) target = $region40
      $region39: #{vgg_forward.1} parent=11 // pred_region
        _
      $region40: #{vgg_forward.1} parent=11 // pred_fallthru
        _
      // Predicated region
      $region41: #{vgg_forward.1} parent=11 // pred_check
        %p353 = pneg %p213
      $region42: #{vgg_forward.1} parent=11 // pred_check_branch
        %355 = sbr.rel (%p353) target = $region44
      $region43: #{vgg_forward.1} parent=11 // pred_region
        _
      $region44: #{vgg_forward.1} parent=11 // pred_fallthru
        _
    $region12: #{vgg_forward.1} parent=5 // pred_fallthru
      _
    %p356 = scmp.lt.s32.totalorder %s19, 2
    // Predicated region
    $region45: #{vgg_forward.1} parent=5 // pred_check
      %p357 = pneg %p356
    $region46: #{vgg_forward.1} parent=5 // pred_check_branch
      %359 = sbr.rel (%p357) target = $region48
    $region47: #{vgg_forward.1} parent=5 // pred_region
      // Predicated region
      $region49: #{vgg_forward.1} parent=47 // pred_check
        %p360 = pneg %p39
      $region50: #{vgg_forward.1} parent=47 // pred_check_branch
        %362 = sbr.rel (%p360) target = $region52
      $region51: #{vgg_forward.1} parent=47 // pred_region
        %p363 = scmp.lt.s32.totalorder %s19, 1
        %s364 = scalar_select %p363, %s19, 1
        %s365 = smul.addr %s364, 32
        %s366 = smul.addr %s365, 4
        %s367 = scalar_lea.vmem %s0, %s366
      $region52: #{vgg_forward.1} parent=47 // pred_fallthru
        _
    $region48: #{vgg_forward.1} parent=5 // pred_fallthru
      _
    %p368 = scmp.le.s32.totalorder 1, %s19
    %p369 = scmp.lt.s32.totalorder %s19, 3
    %p370 = pnand %p368, %p369
    %p371 = pneg %p370
    // Predicated region
    $region53: #{vgg_forward.1} parent=5 // pred_check
      _
    $region54: #{vgg_forward.1} parent=5 // pred_check_branch
      %373 = sbr.rel (%p370) target = $region56
    $region55: #{vgg_forward.1} parent=5 // pred_region
      %s374 = ssub.s32 %s19, 1
      %p375 = scmp.lt.s32.totalorder %s24, 1
      %s376 = scalar_select %p375, %s24, 1
      %s377 = smul.addr %s376, 32
      %s378 = smul.addr %s377, 4
      %s379 = scalar_lea.vmem %s0, %s378
      %p380 = pneg %p45
      %p381 = pneg %p42
      %p382 = pneg %p66
      %p383 = pneg %p63
      %p384 = pneg %p87
      %p385 = pneg %p84
      %p386 = pneg %p108
      %p387 = pneg %p105
      %p388 = pneg %p129
      %p389 = pneg %p126
      %p390 = pneg %p150
      %p391 = pneg %p147
      %p392 = pneg %p171
      %p393 = pneg %p168
      %p394 = pneg %p192
      %p395 = pneg %p189
      %p396 = pneg %p213
      %p397 = pneg %p210
      %p398 = pneg %p239
      %p399 = pneg %p236
      %p400 = scmp.lt.s32.totalorder %s24, 1
      %s401 = scalar_select %p400, %s24, 1
      %s402 = smul.addr %s401, 32
      %s403 = smul.addr %s402, 4
      %s404 = scalar_lea.vmem %s9, %s403
      %p405 = pneg %p265
      %p406 = pneg %p262
      %p407 = scmp.lt.s32.totalorder %s24, 1
      %s408 = scalar_select %p407, %s24, 1
      %s409 = smul.addr %s408, 32
      %s410 = smul.addr %s409, 4
      %s411 = scalar_lea.vmem %s10, %s410
      %p412 = pneg %p291
      %p413 = pneg %p288
      %p414 = scmp.lt.s32.totalorder %s24, 1
      %s415 = scalar_select %p414, %s24, 1
      %s416 = smul.addr %s415, 8
      %s417 = smul.addr %s416, 4
      %s418 = scalar_lea.vmem %s11, %s417
      %p419 = pneg %p317
      %p420 = pneg %p314
      %p421 = scmp.lt.s32.totalorder %s24, 1
      %s422 = scalar_select %p421, %s24, 1
      %s423 = smul.addr %s422, 8
      %s424 = smul.addr %s423, 4
      %s425 = scalar_lea.vmem %s12, %s424
      %p426 = scmp.lt.s32.totalorder %s24, 1
      %s427 = scalar_select %p426, %s24, 1
      %s428 = smul.addr %s427, 32
      %s429 = smul.addr %s428, 4
      %s430 = scalar_lea.vmem %s0, %s429
      %p431 = scmp.lt.s32.totalorder %s24, 1
      %s432 = scalar_select %p431, %s24, 1
      %s433 = smul.addr %s432, 32
      %s434 = smul.addr %s433, 4
      %s435 = scalar_lea.vmem %s9, %s434
      %p436 = scmp.lt.s32.totalorder %s24, 1
      %s437 = scalar_select %p436, %s24, 1
      %s438 = smul.addr %s437, 32
      %s439 = smul.addr %s438, 4
      %s440 = scalar_lea.vmem %s10, %s439
      %p441 = scmp.lt.s32.totalorder %s24, 1
      %s442 = scalar_select %p441, %s24, 1
      %s443 = smul.addr %s442, 8
      %s444 = smul.addr %s443, 4
      %s445 = scalar_lea.vmem %s11, %s444
      %p446 = scmp.lt.s32.totalorder %s24, 1
      %s447 = scalar_select %p446, %s24, 1
      %s448 = smul.addr %s447, 8
      %s449 = smul.addr %s448, 4
      %s450 = scalar_lea.vmem %s12, %s449
      %v452 = vld [vmem:[%s430] sm:$0xf]
      %v453 = vld [vmem:[%s430 + $0x4] sm:$0xf]
      %v454 = vld [vmem:[%s430 + $0x8] sm:$0xf]
      %v455 = vld [vmem:[%s430 + $0xc] sm:$0xf]
      %v456 = vld [vmem:[%s430 + $0x10] sm:$0xf]
      %v457 = vld [vmem:[%s430 + $0x14] sm:$0xf]
      %v458 = vld [vmem:[%s430 + $0x18] sm:$0xf]
      %v459 = vld [vmem:[%s430 + $0x1c] sm:$0xf]
      %v460 = vld [vmem:[%s430 + $0x20] sm:$0xf]
      %v461 = vld [vmem:[%s430 + $0x24] sm:$0xf]
      %v462 = vld [vmem:[%s430 + $0x28] sm:$0xf]
      %v463 = vld [vmem:[%s430 + $0x2c] sm:$0xf]
      %v464 = vld [vmem:[%s430 + $0x30] sm:$0xf]
      %v465 = vld [vmem:[%s430 + $0x34] sm:$0xf]
      %v466 = vld [vmem:[%s430 + $0x38] sm:$0xf]
      %v467 = vld [vmem:[%s430 + $0x3c] sm:$0xf]
      %v468 = vld [vmem:[%s430 + $0x40] sm:$0xf]
      %v469 = vld [vmem:[%s430 + $0x44] sm:$0xf]
      %v470 = vld [vmem:[%s430 + $0x48] sm:$0xf]
      %v471 = vld [vmem:[%s430 + $0x4c] sm:$0xf]
      %v472 = vld [vmem:[%s430 + $0x50] sm:$0xf]
      %v473 = vld [vmem:[%s430 + $0x54] sm:$0xf]
      %v474 = vld [vmem:[%s430 + $0x58] sm:$0xf]
      %v475 = vld [vmem:[%s430 + $0x5c] sm:$0xf]
      %v476 = vld [vmem:[%s430 + $0x60] sm:$0xf]
      %v477 = vld [vmem:[%s430 + $0x64] sm:$0xf]
      %v478 = vld [vmem:[%s430 + $0x68] sm:$0xf]
      %v479 = vld [vmem:[%s430 + $0x6c] sm:$0xf]
      %v480 = vld [vmem:[%s430 + $0x70] sm:$0xf]
      %v481 = vld [vmem:[%s430 + $0x74] sm:$0xf]
      %v482 = vld [vmem:[%s430 + $0x78] sm:$0xf]
      %v483 = vld [vmem:[%s430 + $0x7c] sm:$0xf]
      %v484 = vld [vmem:[%s1] sm:$0xf]
      %v485 = vld [vmem:[%s1 + $0x4] sm:$0xf]
      %v486 = vld [vmem:[%s1 + $0x8] sm:$0xf]
      %v487 = vld [vmem:[%s1 + $0xc] sm:$0xf]
      %v488 = vld [vmem:[%s2] sm:$0x1]
      %v490 = vlaneseq
      %v491 = vshrl.u32 %v490, 7
      %v492 = vsub.s32 0, %v491
      %v493 = vrot.slane %v488, %v492
      %v527 = vunpack.c.l.b16 %v452
      %v528 = vunpack.c.l.b16 %v453
      %v529 = vunpack.c.l.b16 %v454
      %v530 = vunpack.c.l.b16 %v455
      %v531 = vunpack.c.l.b16 %v456
      %v532 = vunpack.c.l.b16 %v457
      %v533 = vunpack.c.l.b16 %v458
      %v534 = vunpack.c.l.b16 %v459
      %v535 = vunpack.c.l.b16 %v460
      %v536 = vunpack.c.l.b16 %v461
      %v537 = vunpack.c.l.b16 %v462
      %v538 = vunpack.c.l.b16 %v463
      %v539 = vunpack.c.l.b16 %v464
      %v540 = vunpack.c.l.b16 %v465
      %v541 = vunpack.c.l.b16 %v466
      %v542 = vunpack.c.l.b16 %v467
      %v543 = vunpack.c.l.b16 %v468
      %v544 = vunpack.c.l.b16 %v469
      %v545 = vunpack.c.l.b16 %v470
      %v546 = vunpack.c.l.b16 %v471
      %v547 = vunpack.c.l.b16 %v472
      %v548 = vunpack.c.l.b16 %v473
      %v549 = vunpack.c.l.b16 %v474
      %v550 = vunpack.c.l.b16 %v475
      %v551 = vunpack.c.l.b16 %v476
      %v552 = vunpack.c.l.b16 %v477
      %v553 = vunpack.c.l.b16 %v478
      %v554 = vunpack.c.l.b16 %v479
      %v555 = vunpack.c.l.b16 %v480
      %v556 = vunpack.c.l.b16 %v481
      %v557 = vunpack.c.l.b16 %v482
      %v558 = vunpack.c.l.b16 %v483
      %v559 = vpack.c.b16 %v528, %v527
      %v560 = vpack.c.b16 %v530, %v529
      %v561 = vpack.c.b16 %v532, %v531
      %v562 = vpack.c.b16 %v534, %v533
      %v563 = vpack.c.b16 %v536, %v535
      %v564 = vpack.c.b16 %v538, %v537
      %v565 = vpack.c.b16 %v540, %v539
      %v566 = vpack.c.b16 %v542, %v541
      %v567 = vpack.c.b16 %v544, %v543
      %v568 = vpack.c.b16 %v546, %v545
      %v569 = vpack.c.b16 %v548, %v547
      %v570 = vpack.c.b16 %v550, %v549
      %v571 = vpack.c.b16 %v552, %v551
      %v572 = vpack.c.b16 %v554, %v553
      %v573 = vpack.c.b16 %v556, %v555
      %v574 = vpack.c.b16 %v558, %v557
      %v579 = vunpack.c.l.b16 %v484
      %v580 = vunpack.c.l.b16 %v485
      %v581 = vunpack.c.l.b16 %v486
      %v582 = vunpack.c.l.b16 %v487
      %v583 = vpack.c.b16 %v580, %v579
      %v584 = vpack.c.b16 %v582, %v581
      %vm587 = vcmask 261120
      %v589 = vsel %vm587, %v559, 0
      %v592 = vsel %vm587, %v560, 0
      %v595 = vsel %vm587, %v561, 0
      %v598 = vsel %vm587, %v562, 0
      %v601 = vsel %vm587, %v563, 0
      %v604 = vsel %vm587, %v564, 0
      %v607 = vsel %vm587, %v565, 0
      %v610 = vsel %vm587, %v566, 0
      %v613 = vsel %vm587, %v567, 0
      %v616 = vsel %vm587, %v568, 0
      %v619 = vsel %vm587, %v569, 0
      %v622 = vsel %vm587, %v570, 0
      %v625 = vsel %vm587, %v571, 0
      %v628 = vsel %vm587, %v572, 0
      %v631 = vsel %vm587, %v573, 0
      %v634 = vsel %vm587, %v574, 0
      %636 = vmatprep.subr.bf16.mxu0 0
      %637 = vmatpush1.bf16.msra.mxu0 %v583
      %638 = vmatprep.subr.bf16.mxu0 0
      %639 = vmatpush1.bf16.msra.mxu0 %v584
      %640 = vmatprep.subr.bf16.mxu0 0
      %641 = vmatpush1.bf16.msra.mxu0 0
      %642 = vmatprep.subr.bf16.mxu0 0
      %643 = vmatpush1.bf16.msra.mxu0 0
      %644 = vmatprep.subr.bf16.mxu0 0
      %645 = vmatpush1.bf16.msra.mxu0 0
      %646 = vmatprep.subr.bf16.mxu0 0
      %647 = vmatpush1.bf16.msra.mxu0 0
      %648 = vmatprep.subr.bf16.mxu0 0
      %649 = vmatpush1.bf16.msra.mxu0 0
      %650 = vmatprep.subr.bf16.mxu0 0
      %651 = vmatpush1.bf16.msra.mxu0 0
      %652 = vmatprep.subr.bf16.mxu0 0
      %653 = vmatpush1.bf16.msra.mxu0 0
      %654 = vmatprep.subr.bf16.mxu0 0
      %655 = vmatpush1.bf16.msra.mxu0 0
      %656 = vmatprep.subr.bf16.mxu0 0
      %657 = vmatpush1.bf16.msra.mxu0 0
      %658 = vmatprep.subr.bf16.mxu0 0
      %659 = vmatpush1.bf16.msra.mxu0 0
      %660 = vmatprep.subr.bf16.mxu0 0
      %661 = vmatpush1.bf16.msra.mxu0 0
      %662 = vmatprep.subr.bf16.mxu0 0
      %663 = vmatpush1.bf16.msra.mxu0 0
      %664 = vmatprep.subr.bf16.mxu0 0
      %665 = vmatpush1.bf16.msra.mxu0 0
      %666 = vmatprep.subr.bf16.mxu0 0
      %667 = vmatpush1.bf16.msra.mxu0 0
      %668 = vmatprep.mubr.bf16.mxu0 0
      %669 = vmatmul.mubr.bf16.gmra.mrb[0].mxu0 %v589
      %v670 = vpop.f32.mrb[0].mxu0
      %v671 = vadd.f32 %v493, %v670
      %v672 = vpop.f32.mrb[0].mxu0
      %v673 = vpop.f32.mrb[0].mxu0
      %v674 = vadd.f32 %v493, %v673
      %v675 = vpop.f32.mrb[0].mxu0
      %676 = vmatprep.mubr.bf16.mxu0 0
      %677 = vmatmul.mubr.bf16.gmra.mrb[0].mxu0 %v592
      %v678 = vpop.f32.mrb[0].mxu0
      %v679 = vadd.f32 %v493, %v678
      %v680 = vpop.f32.mrb[0].mxu0
      %v681 = vpop.f32.mrb[0].mxu0
      %v682 = vadd.f32 %v493, %v681
      %v683 = vpop.f32.mrb[0].mxu0
      %684 = vmatprep.mubr.bf16.mxu0 0
      %685 = vmatmul.mubr.bf16.gmra.mrb[0].mxu0 %v595
      %v686 = vpop.f32.mrb[0].mxu0
      %v687 = vadd.f32 %v493, %v686
      %v688 = vpop.f32.mrb[0].mxu0
      %v689 = vpop.f32.mrb[0].mxu0
      %v690 = vadd.f32 %v493, %v689
      %v691 = vpop.f32.mrb[0].mxu0
      %692 = vmatprep.mubr.bf16.mxu0 0
      %693 = vmatmul.mubr.bf16.gmra.mrb[0].mxu0 %v598
      %v694 = vpop.f32.mrb[0].mxu0
      %v695 = vadd.f32 %v493, %v694
      %v696 = vpop.f32.mrb[0].mxu0
      %v697 = vpop.f32.mrb[0].mxu0
      %v698 = vadd.f32 %v493, %v697
      %v699 = vpop.f32.mrb[0].mxu0
      %700 = vmatprep.mubr.bf16.mxu0 0
      %701 = vmatmul.mubr.bf16.gmra.mrb[0].mxu0 %v601
      %v702 = vpop.f32.mrb[0].mxu0
      %v703 = vadd.f32 %v493, %v702
      %v704 = vpop.f32.mrb[0].mxu0
      %v705 = vpop.f32.mrb[0].mxu0
      %v706 = vadd.f32 %v493, %v705
      %v707 = vpop.f32.mrb[0].mxu0
      %708 = vmatprep.mubr.bf16.mxu0 0
      %709 = vmatmul.mubr.bf16.gmra.mrb[0].mxu0 %v604
      %v710 = vpop.f32.mrb[0].mxu0
      %v711 = vadd.f32 %v493, %v710
      %v712 = vpop.f32.mrb[0].mxu0
      %v713 = vpop.f32.mrb[0].mxu0
      %v714 = vadd.f32 %v493, %v713
      %v715 = vpop.f32.mrb[0].mxu0
      %716 = vmatprep.mubr.bf16.mxu0 0
      %717 = vmatmul.mubr.bf16.gmra.mrb[0].mxu0 %v607
      %v718 = vpop.f32.mrb[0].mxu0
      %v719 = vadd.f32 %v493, %v718
      %v720 = vpop.f32.mrb[0].mxu0
      %v721 = vpop.f32.mrb[0].mxu0
      %v722 = vadd.f32 %v493, %v721
      %v723 = vpop.f32.mrb[0].mxu0
      %724 = vmatprep.mubr.bf16.mxu0 0
      %725 = vmatmul.mubr.bf16.gmra.mrb[0].mxu0 %v610
      %v726 = vpop.f32.mrb[0].mxu0
      %v727 = vadd.f32 %v493, %v726
      %v728 = vpop.f32.mrb[0].mxu0
      %v729 = vpop.f32.mrb[0].mxu0
      %v730 = vadd.f32 %v493, %v729
      %v731 = vpop.f32.mrb[0].mxu0
      %732 = vmatprep.mubr.bf16.mxu0 0
      %733 = vmatmul.mubr.bf16.gmra.mrb[0].mxu0 %v613
      %v734 = vpop.f32.mrb[0].mxu0
      %v735 = vadd.f32 %v493, %v734
      %v736 = vpop.f32.mrb[0].mxu0
      %v737 = vpop.f32.mrb[0].mxu0
      %v738 = vadd.f32 %v493, %v737
      %v739 = vpop.f32.mrb[0].mxu0
      %740 = vmatprep.mubr.bf16.mxu0 0
      %741 = vmatmul.mubr.bf16.gmra.mrb[0].mxu0 %v616
      %v742 = vpop.f32.mrb[0].mxu0
      %v743 = vadd.f32 %v493, %v742
      %v744 = vpop.f32.mrb[0].mxu0
      %v745 = vpop.f32.mrb[0].mxu0
      %v746 = vadd.f32 %v493, %v745
      %v747 = vpop.f32.mrb[0].mxu0
      %748 = vmatprep.mubr.bf16.mxu0 0
      %749 = vmatmul.mubr.bf16.gmra.mrb[0].mxu0 %v619
      %v750 = vpop.f32.mrb[0].mxu0
      %v751 = vadd.f32 %v493, %v750
      %v752 = vpop.f32.mrb[0].mxu0
      %v753 = vpop.f32.mrb[0].mxu0
      %v754 = vadd.f32 %v493, %v753
      %v755 = vpop.f32.mrb[0].mxu0
      %756 = vmatprep.mubr.bf16.mxu0 0
      %757 = vmatmul.mubr.bf16.gmra.mrb[0].mxu0 %v622
      %v758 = vpop.f32.mrb[0].mxu0
      %v759 = vadd.f32 %v493, %v758
      %v760 = vpop.f32.mrb[0].mxu0
      %v761 = vpop.f32.mrb[0].mxu0
      %v762 = vadd.f32 %v493, %v761
      %v763 = vpop.f32.mrb[0].mxu0
      %764 = vmatprep.mubr.bf16.mxu0 0
      %765 = vmatmul.mubr.bf16.gmra.mrb[0].mxu0 %v625
      %v766 = vpop.f32.mrb[0].mxu0
      %v767 = vadd.f32 %v493, %v766
      %v768 = vpop.f32.mrb[0].mxu0
      %v769 = vpop.f32.mrb[0].mxu0
      %v770 = vadd.f32 %v493, %v769
      %v771 = vpop.f32.mrb[0].mxu0
      %772 = vmatprep.mubr.bf16.mxu0 0
      %773 = vmatmul.mubr.bf16.gmra.mrb[0].mxu0 %v628
      %v774 = vpop.f32.mrb[0].mxu0
      %v775 = vadd.f32 %v493, %v774
      %v776 = vpop.f32.mrb[0].mxu0
      %v777 = vpop.f32.mrb[0].mxu0
      %v778 = vadd.f32 %v493, %v777
      %v779 = vpop.f32.mrb[0].mxu0
      %780 = vmatprep.mubr.bf16.mxu0 0
      %781 = vmatmul.mubr.bf16.gmra.mrb[0].mxu0 %v631
      %v782 = vpop.f32.mrb[0].mxu0
      %v783 = vadd.f32 %v493, %v782
      %v784 = vpop.f32.mrb[0].mxu0
      %v785 = vpop.f32.mrb[0].mxu0
      %v786 = vadd.f32 %v493, %v785
      %v787 = vpop.f32.mrb[0].mxu0
      %788 = vmatprep.mubr.bf16.mxu0 0
      %789 = vmatmul.mubr.bf16.gmra.mrb[0].mxu0 %v634
      %v790 = vpop.f32.mrb[0].mxu0
      %v791 = vadd.f32 %v493, %v790
      %v792 = vpop.f32.mrb[0].mxu0
      %v793 = vpop.f32.mrb[0].mxu0
      %v794 = vadd.f32 %v493, %v793
      %v795 = vpop.f32.mrb[0].mxu0
      %796 = vdwg.mxu0
      %v797 = vmax.f32 %v671, 0.0
      %v798 = vmax.f32 %v674, 0.0
      %v799 = vmax.f32 %v679, 0.0
      %v800 = vmax.f32 %v682, 0.0
      %v801 = vmax.f32 %v687, 0.0
      %v802 = vmax.f32 %v690, 0.0
      %v803 = vmax.f32 %v695, 0.0
      %v804 = vmax.f32 %v698, 0.0
      %v805 = vmax.f32 %v703, 0.0
      %v806 = vmax.f32 %v706, 0.0
      %v807 = vmax.f32 %v711, 0.0
      %v808 = vmax.f32 %v714, 0.0
      %v809 = vmax.f32 %v719, 0.0
      %v810 = vmax.f32 %v722, 0.0
      %v811 = vmax.f32 %v727, 0.0
      %v812 = vmax.f32 %v730, 0.0
      %v813 = vmax.f32 %v735, 0.0
      %v814 = vmax.f32 %v738, 0.0
      %v815 = vmax.f32 %v743, 0.0
      %v816 = vmax.f32 %v746, 0.0
      %v817 = vmax.f32 %v751, 0.0
      %v818 = vmax.f32 %v754, 0.0
      %v819 = vmax.f32 %v759, 0.0
      %v820 = vmax.f32 %v762, 0.0
      %v821 = vmax.f32 %v767, 0.0
      %v822 = vmax.f32 %v770, 0.0
      %v823 = vmax.f32 %v775, 0.0
      %v824 = vmax.f32 %v778, 0.0
      %v825 = vmax.f32 %v783, 0.0
      %v826 = vmax.f32 %v786, 0.0
      %v827 = vmax.f32 %v791, 0.0
      %v828 = vmax.f32 %v794, 0.0
      %v829 = vpack.c.bf16 %v798, %v797
      %v830 = vpack.c.bf16 %v800, %v799
      %v831 = vpack.c.bf16 %v802, %v801
      %v832 = vpack.c.bf16 %v804, %v803
      %v833 = vpack.c.bf16 %v806, %v805
      %v834 = vpack.c.bf16 %v808, %v807
      %v835 = vpack.c.bf16 %v810, %v809
      %v836 = vpack.c.bf16 %v812, %v811
      %v837 = vpack.c.bf16 %v814, %v813
      %v838 = vpack.c.bf16 %v816, %v815
      %v839 = vpack.c.bf16 %v818, %v817
      %v840 = vpack.c.bf16 %v820, %v819
      %v841 = vpack.c.bf16 %v822, %v821
      %v842 = vpack.c.bf16 %v824, %v823
      %v843 = vpack.c.bf16 %v826, %v825
      %v844 = vpack.c.bf16 %v828, %v827
      %v861 = vunpack.c.l.b16 %v829
      %v862 = vunpack.c.h.b16 %v829
      %v863 = vunpack.c.l.b16 %v830
      %v864 = vunpack.c.h.b16 %v830
      %v865 = vunpack.c.l.b16 %v831
      %v866 = vunpack.c.h.b16 %v831
      %v867 = vunpack.c.l.b16 %v832
      %v868 = vunpack.c.h.b16 %v832
      %v869 = vunpack.c.l.b16 %v833
      %v870 = vunpack.c.h.b16 %v833
      %v871 = vunpack.c.l.b16 %v834
      %v872 = vunpack.c.h.b16 %v834
      %v873 = vunpack.c.l.b16 %v835
      %v874 = vunpack.c.h.b16 %v835
      %v875 = vunpack.c.l.b16 %v836
      %v876 = vunpack.c.h.b16 %v836
      %v877 = vunpack.c.l.b16 %v837
      %v878 = vunpack.c.h.b16 %v837
      %v879 = vunpack.c.l.b16 %v838
      %v880 = vunpack.c.h.b16 %v838
      %v881 = vunpack.c.l.b16 %v839
      %v882 = vunpack.c.h.b16 %v839
      %v883 = vunpack.c.l.b16 %v840
      %v884 = vunpack.c.h.b16 %v840
      %v885 = vunpack.c.l.b16 %v841
      %v886 = vunpack.c.h.b16 %v841
      %v887 = vunpack.c.l.b16 %v842
      %v888 = vunpack.c.h.b16 %v842
      %v889 = vunpack.c.l.b16 %v843
      %v890 = vunpack.c.h.b16 %v843
      %v891 = vunpack.c.l.b16 %v844
      %v892 = vunpack.c.h.b16 %v844
      %v893 = vpack.c.b16 %v861, %v861
      %v894 = vpack.c.b16 %v862, %v862
      %v895 = vpack.c.b16 %v863, %v863
      %v896 = vpack.c.b16 %v864, %v864
      %v897 = vpack.c.b16 %v865, %v865
      %v898 = vpack.c.b16 %v866, %v866
      %v899 = vpack.c.b16 %v867, %v867
      %v900 = vpack.c.b16 %v868, %v868
      %v901 = vpack.c.b16 %v869, %v869
      %v902 = vpack.c.b16 %v870, %v870
      %v903 = vpack.c.b16 %v871, %v871
      %v904 = vpack.c.b16 %v872, %v872
      %v905 = vpack.c.b16 %v873, %v873
      %v906 = vpack.c.b16 %v874, %v874
      %v907 = vpack.c.b16 %v875, %v875
      %v908 = vpack.c.b16 %v876, %v876
      %v909 = vpack.c.b16 %v877, %v877
      %v910 = vpack.c.b16 %v878, %v878
      %v911 = vpack.c.b16 %v879, %v879
      %v912 = vpack.c.b16 %v880, %v880
      %v913 = vpack.c.b16 %v881, %v881
      %v914 = vpack.c.b16 %v882, %v882
      %v915 = vpack.c.b16 %v883, %v883
      %v916 = vpack.c.b16 %v884, %v884
      %v917 = vpack.c.b16 %v885, %v885
      %v918 = vpack.c.b16 %v886, %v886
      %v919 = vpack.c.b16 %v887, %v887
      %v920 = vpack.c.b16 %v888, %v888
      %v921 = vpack.c.b16 %v889, %v889
      %v922 = vpack.c.b16 %v890, %v890
      %v923 = vpack.c.b16 %v891, %v891
      %v924 = vpack.c.b16 %v892, %v892
      %vm957 = vcmask 519168
      %958 = vst.msk [vmem:[%s435] sm:$0xf] %vm957, %v893
      %959 = vst.msk [vmem:[%s435 + $0x4] sm:$0xf] %vm957, %v894
      %960 = vst.msk [vmem:[%s435 + $0x8] sm:$0xf] %vm957, %v895
      %961 = vst.msk [vmem:[%s435 + $0xc] sm:$0xf] %vm957, %v896
      %962 = vst.msk [vmem:[%s435 + $0x10] sm:$0xf] %vm957, %v897
      %963 = vst.msk [vmem:[%s435 + $0x14] sm:$0xf] %vm957, %v898
      %964 = vst.msk [vmem:[%s435 + $0x18] sm:$0xf] %vm957, %v899
      %965 = vst.msk [vmem:[%s435 + $0x1c] sm:$0xf] %vm957, %v900
      %966 = vst.msk [vmem:[%s435 + $0x20] sm:$0xf] %vm957, %v901
      %967 = vst.msk [vmem:[%s435 + $0x24] sm:$0xf] %vm957, %v902
      %968 = vst.msk [vmem:[%s435 + $0x28] sm:$0xf] %vm957, %v903
      %969 = vst.msk [vmem:[%s435 + $0x2c] sm:$0xf] %vm957, %v904
      %970 = vst.msk [vmem:[%s435 + $0x30] sm:$0xf] %vm957, %v905
      %971 = vst.msk [vmem:[%s435 + $0x34] sm:$0xf] %vm957, %v906
      %972 = vst.msk [vmem:[%s435 + $0x38] sm:$0xf] %vm957, %v907
      %973 = vst.msk [vmem:[%s435 + $0x3c] sm:$0xf] %vm957, %v908
      %974 = vst.msk [vmem:[%s435 + $0x40] sm:$0xf] %vm957, %v909
      %975 = vst.msk [vmem:[%s435 + $0x44] sm:$0xf] %vm957, %v910
      %976 = vst.msk [vmem:[%s435 + $0x48] sm:$0xf] %vm957, %v911
      %977 = vst.msk [vmem:[%s435 + $0x4c] sm:$0xf] %vm957, %v912
      %978 = vst.msk [vmem:[%s435 + $0x50] sm:$0xf] %vm957, %v913
      %979 = vst.msk [vmem:[%s435 + $0x54] sm:$0xf] %vm957, %v914
      %980 = vst.msk [vmem:[%s435 + $0x58] sm:$0xf] %vm957, %v915
      %981 = vst.msk [vmem:[%s435 + $0x5c] sm:$0xf] %vm957, %v916
      %982 = vst.msk [vmem:[%s435 + $0x60] sm:$0xf] %vm957, %v917
      %983 = vst.msk [vmem:[%s435 + $0x64] sm:$0xf] %vm957, %v918
      %984 = vst.msk [vmem:[%s435 + $0x68] sm:$0xf] %vm957, %v919
      %985 = vst.msk [vmem:[%s435 + $0x6c] sm:$0xf] %vm957, %v920
      %986 = vst.msk [vmem:[%s435 + $0x70] sm:$0xf] %vm957, %v921
      %987 = vst.msk [vmem:[%s435 + $0x74] sm:$0xf] %vm957, %v922
      %988 = vst.msk [vmem:[%s435 + $0x78] sm:$0xf] %vm957, %v923
      %989 = vst.msk [vmem:[%s435 + $0x7c] sm:$0xf] %vm957, %v924
      %990 = vst.msk [vmem:[#allocation2] sm:$0xf] %vm957, 0
      %991 = vst.msk [vmem:[#allocation2 + $0x4] sm:$0xf] %vm957, 0
      %vm992 = vcmask 516096
      %993 = vst.msk [vmem:[#allocation2 + $0x8] sm:$0x1] %vm992, 0
      %s994 = scalar_lea.vmem [#allocation2], 204
      %995 = vst.msk [vmem:[%s994] sm:$0xf] %vm957, 0
      %996 = vst.msk [vmem:[%s994 + $0x4] sm:$0xf] %vm957, 0
      %997 = vst.msk [vmem:[%s994 + $0x8] sm:$0x1] %vm992, 0
      %vm998 = vcmask 516096
      %vm999 = vsmask.f32 256
      %vm1000 = vmand %vm998, %vm999
      %v1001 = vld [vmem:[#allocation2] sm:$0x1]
      %v1002 = vsel %vm1000, 0, %v1001
      %1003 = vst [vmem:[#allocation2] sm:$0x1] %v1002
      %v1004 = vld [vmem:[#allocation2 + $0xc] sm:$0x1]
      %v1005 = vsel %vm1000, 0, %v1004
      %1006 = vst [vmem:[#allocation2 + $0xc] sm:$0x1] %v1005
      %v1007 = vld [vmem:[#allocation2 + $0x18] sm:$0x1]
      %v1008 = vsel %vm1000, 0, %v1007
      %1009 = vst [vmem:[#allocation2 + $0x18] sm:$0x1] %v1008
      %v1010 = vld [vmem:[#allocation2 + $0x24] sm:$0x1]
      %v1011 = vsel %vm1000, 0, %v1010
      %1012 = vst [vmem:[#allocation2 + $0x24] sm:$0x1] %v1011
      %v1013 = vld [vmem:[#allocation2 + $0x30] sm:$0x1]
      %v1014 = vsel %vm1000, 0, %v1013
      %1015 = vst [vmem:[#allocation2 + $0x30] sm:$0x1] %v1014
      %v1016 = vld [vmem:[#allocation2 + $0x3c] sm:$0x1]
      %v1017 = vsel %vm1000, 0, %v1016
      %1018 = vst [vmem:[#allocation2 + $0x3c] sm:$0x1] %v1017
      %v1019 = vld [vmem:[#allocation2 + $0x48] sm:$0x1]
      %v1020 = vsel %vm1000, 0, %v1019
      %1021 = vst [vmem:[#allocation2 + $0x48] sm:$0x1] %v1020
      %v1022 = vld [vmem:[#allocation2 + $0x54] sm:$0x1]
      %v1023 = vsel %vm1000, 0, %v1022
      %1024 = vst [vmem:[#allocation2 + $0x54] sm:$0x1] %v1023
      %v1025 = vld [vmem:[#allocation2 + $0x60] sm:$0x1]
      %v1026 = vsel %vm1000, 0, %v1025
      %1027 = vst [vmem:[#allocation2 + $0x60] sm:$0x1] %v1026
      %v1028 = vld [vmem:[#allocation2 + $0x6c] sm:$0x1]
      %v1029 = vsel %vm1000, 0, %v1028
      %1030 = vst [vmem:[#allocation2 + $0x6c] sm:$0x1] %v1029
      %v1031 = vld [vmem:[#allocation2 + $0x78] sm:$0x1]
      %v1032 = vsel %vm1000, 0, %v1031
      %1033 = vst [vmem:[#allocation2 + $0x78] sm:$0x1] %v1032
      %v1034 = vld [vmem:[#allocation2 + $0x84] sm:$0x1]
      %v1035 = vsel %vm1000, 0, %v1034
      %1036 = vst [vmem:[#allocation2 + $0x84] sm:$0x1] %v1035
      %v1037 = vld [vmem:[#allocation2 + $0x90] sm:$0x1]
      %v1038 = vsel %vm1000, 0, %v1037
      %1039 = vst [vmem:[#allocation2 + $0x90] sm:$0x1] %v1038
      %v1040 = vld [vmem:[#allocation2 + $0x9c] sm:$0x1]
      %v1041 = vsel %vm1000, 0, %v1040
      %1042 = vst [vmem:[#allocation2 + $0x9c] sm:$0x1] %v1041
      %v1043 = vld [vmem:[#allocation2 + $0xa8] sm:$0x1]
      %v1044 = vsel %vm1000, 0, %v1043
      %1045 = vst [vmem:[#allocation2 + $0xa8] sm:$0x1] %v1044
      %v1046 = vld [vmem:[#allocation2 + $0xb4] sm:$0x1]
      %v1047 = vsel %vm1000, 0, %v1046
      %1048 = vst [vmem:[#allocation2 + $0xb4] sm:$0x1] %v1047
      %v1049 = vld [vmem:[#allocation2 + $0xc0] sm:$0x1]
      %v1050 = vsel %vm1000, 0, %v1049
      %1051 = vst [vmem:[#allocation2 + $0xc0] sm:$0x1] %v1050
      %v1052 = vld [vmem:[#allocation2 + $0xcc] sm:$0x1]
      %v1053 = vsel %vm1000, 0, %v1052
      %1054 = vst [vmem:[#allocation2 + $0xcc] sm:$0x1] %v1053
      %vm1055 = vsmask.f32 7938
      %vm1056 = vmand %vm998, %vm1055
      %v1057 = vld [vmem:[#allocation2 + $0x8] sm:$0x1]
      %v1058 = vsel %vm1056, 0, %v1057
      %1059 = vst [vmem:[#allocation2 + $0x8] sm:$0x1] %v1058
      %v1060 = vld [vmem:[#allocation2 + $0x14] sm:$0x1]
      %v1061 = vsel %vm1056, 0, %v1060
      %1062 = vst [vmem:[#allocation2 + $0x14] sm:$0x1] %v1061
      %v1063 = vld [vmem:[#allocation2 + $0x20] sm:$0x1]
      %v1064 = vsel %vm1056, 0, %v1063
      %1065 = vst [vmem:[#allocation2 + $0x20] sm:$0x1] %v1064
      %v1066 = vld [vmem:[#allocation2 + $0x2c] sm:$0x1]
      %v1067 = vsel %vm1056, 0, %v1066
      %1068 = vst [vmem:[#allocation2 + $0x2c] sm:$0x1] %v1067
      %v1069 = vld [vmem:[#allocation2 + $0x38] sm:$0x1]
      %v1070 = vsel %vm1056, 0, %v1069
      %1071 = vst [vmem:[#allocation2 + $0x38] sm:$0x1] %v1070
      %v1072 = vld [vmem:[#allocation2 + $0x44] sm:$0x1]
      %v1073 = vsel %vm1056, 0, %v1072
      %1074 = vst [vmem:[#allocation2 + $0x44] sm:$0x1] %v1073
      %v1075 = vld [vmem:[#allocation2 + $0x50] sm:$0x1]
      %v1076 = vsel %vm1056, 0, %v1075
      %1077 = vst [vmem:[#allocation2 + $0x50] sm:$0x1] %v1076
      %v1078 = vld [vmem:[#allocation2 + $0x5c] sm:$0x1]
      %v1079 = vsel %vm1056, 0, %v1078
      %1080 = vst [vmem:[#allocation2 + $0x5c] sm:$0x1] %v1079
      %v1081 = vld [vmem:[#allocation2 + $0x68] sm:$0x1]
      %v1082 = vsel %vm1056, 0, %v1081
      %1083 = vst [vmem:[#allocation2 + $0x68] sm:$0x1] %v1082
      %v1084 = vld [vmem:[#allocation2 + $0x74] sm:$0x1]
      %v1085 = vsel %vm1056, 0, %v1084
      %1086 = vst [vmem:[#allocation2 + $0x74] sm:$0x1] %v1085
      %v1087 = vld [vmem:[#allocation2 + $0x80] sm:$0x1]
      %v1088 = vsel %vm1056, 0, %v1087
      %1089 = vst [vmem:[#allocation2 + $0x80] sm:$0x1] %v1088
      %v1090 = vld [vmem:[#allocation2 + $0x8c] sm:$0x1]
      %v1091 = vsel %vm1056, 0, %v1090
      %1092 = vst [vmem:[#allocation2 + $0x8c] sm:$0x1] %v1091
      %v1093 = vld [vmem:[#allocation2 + $0x98] sm:$0x1]
      %v1094 = vsel %vm1056, 0, %v1093
      %1095 = vst [vmem:[#allocation2 + $0x98] sm:$0x1] %v1094
      %v1096 = vld [vmem:[#allocation2 + $0xa4] sm:$0x1]
      %v1097 = vsel %vm1056, 0, %v1096
      %1098 = vst [vmem:[#allocation2 + $0xa4] sm:$0x1] %v1097
      %v1099 = vld [vmem:[#allocation2 + $0xb0] sm:$0x1]
      %v1100 = vsel %vm1056, 0, %v1099
      %1101 = vst [vmem:[#allocation2 + $0xb0] sm:$0x1] %v1100
      %v1102 = vld [vmem:[#allocation2 + $0xbc] sm:$0x1]
      %v1103 = vsel %vm1056, 0, %v1102
      %1104 = vst [vmem:[#allocation2 + $0xbc] sm:$0x1] %v1103
      %v1105 = vld [vmem:[#allocation2 + $0xc8] sm:$0x1]
      %v1106 = vsel %vm1056, 0, %v1105
      %1107 = vst [vmem:[#allocation2 + $0xc8] sm:$0x1] %v1106
      %v1108 = vld [vmem:[#allocation2 + $0xd4] sm:$0x1]
      %v1109 = vsel %vm1056, 0, %v1108
      %1110 = vst [vmem:[#allocation2 + $0xd4] sm:$0x1] %v1109
      %vm1111 = vsmask.f32 4368
      %vm1112 = vmor %vm999, %vm1111
      %v1114 = vshrl.u32 %v893, 16
      %v1116 = vrot.slane %v1114, 7
      %v1117 = vshll.u32 %v893, 16
      %v1119 = vor.u32 %v1116, %v1117
      %v1120 = vrot.slane %v1116, 4
      %v1122 = vshrl.u32 %v894, 16
      %v1124 = vrot.slane %v1122, 7
      %v1125 = vshll.u32 %v894, 16
      %v1127 = vor.u32 %v1124, %v1125
      %v1128 = vsel %vm1112, %v1120, %v1127
      %v1129 = vrot.slane %v1124, 4
      %v1131 = vshrl.u32 %v895, 16
      %v1133 = vrot.slane %v1131, 7
      %v1134 = vshll.u32 %v895, 16
      %v1136 = vor.u32 %v1133, %v1134
      %v1137 = vrot.slane %v1133, 4
      %v1139 = vshrl.u32 %v896, 16
      %v1141 = vrot.slane %v1139, 7
      %v1142 = vshll.u32 %v896, 16
      %v1144 = vor.u32 %v1141, %v1142
      %v1145 = vsel %vm1112, %v1137, %v1144
      %v1146 = vrot.slane %v1141, 4
      %v1148 = vshrl.u32 %v897, 16
      %v1150 = vrot.slane %v1148, 7
      %v1151 = vshll.u32 %v897, 16
      %v1153 = vor.u32 %v1150, %v1151
      %v1154 = vrot.slane %v1150, 4
      %v1156 = vshrl.u32 %v898, 16
      %v1158 = vrot.slane %v1156, 7
      %v1159 = vshll.u32 %v898, 16
      %v1161 = vor.u32 %v1158, %v1159
      %v1162 = vsel %vm1112, %v1154, %v1161
      %v1163 = vrot.slane %v1158, 4
      %v1165 = vshrl.u32 %v899, 16
      %v1167 = vrot.slane %v1165, 7
      %v1168 = vshll.u32 %v899, 16
      %v1170 = vor.u32 %v1167, %v1168
      %v1171 = vrot.slane %v1167, 4
      %v1173 = vshrl.u32 %v900, 16
      %v1175 = vrot.slane %v1173, 7
      %v1176 = vshll.u32 %v900, 16
      %v1178 = vor.u32 %v1175, %v1176
      %v1179 = vsel %vm1112, %v1171, %v1178
      %v1180 = vrot.slane %v1175, 4
      %v1182 = vshrl.u32 %v901, 16
      %v1184 = vrot.slane %v1182, 7
      %v1185 = vshll.u32 %v901, 16
      %v1187 = vor.u32 %v1184, %v1185
      %v1188 = vrot.slane %v1184, 4
      %v1190 = vshrl.u32 %v902, 16
      %v1192 = vrot.slane %v1190, 7
      %v1193 = vshll.u32 %v902, 16
      %v1195 = vor.u32 %v1192, %v1193
      %v1196 = vsel %vm1112, %v1188, %v1195
      %v1197 = vrot.slane %v1192, 4
      %v1199 = vshrl.u32 %v903, 16
      %v1201 = vrot.slane %v1199, 7
      %v1202 = vshll.u32 %v903, 16
      %v1204 = vor.u32 %v1201, %v1202
      %v1205 = vrot.slane %v1201, 4
      %v1207 = vshrl.u32 %v904, 16
      %v1209 = vrot.slane %v1207, 7
      %v1210 = vshll.u32 %v904, 16
      %v1212 = vor.u32 %v1209, %v1210
      %v1213 = vsel %vm1112, %v1205, %v1212
      %v1214 = vrot.slane %v1209, 4
      %v1216 = vshrl.u32 %v905, 16
      %v1218 = vrot.slane %v1216, 7
      %v1219 = vshll.u32 %v905, 16
      %v1221 = vor.u32 %v1218, %v1219
      %v1222 = vrot.slane %v1218, 4
      %v1224 = vshrl.u32 %v906, 16
      %v1226 = vrot.slane %v1224, 7
      %v1227 = vshll.u32 %v906, 16
      %v1229 = vor.u32 %v1226, %v1227
      %v1230 = vsel %vm1112, %v1222, %v1229
      %v1231 = vrot.slane %v1226, 4
      %v1233 = vshrl.u32 %v907, 16
      %v1235 = vrot.slane %v1233, 7
      %v1236 = vshll.u32 %v907, 16
      %v1238 = vor.u32 %v1235, %v1236
      %v1239 = vrot.slane %v1235, 4
      %v1241 = vshrl.u32 %v908, 16
      %v1243 = vrot.slane %v1241, 7
      %v1244 = vshll.u32 %v908, 16
      %v1246 = vor.u32 %v1243, %v1244
      %v1247 = vsel %vm1112, %v1239, %v1246
      %v1248 = vrot.slane %v1243, 4
      %v1250 = vshrl.u32 %v909, 16
      %v1252 = vrot.slane %v1250, 7
      %v1253 = vshll.u32 %v909, 16
      %v1255 = vor.u32 %v1252, %v1253
      %v1256 = vrot.slane %v1252, 4
      %v1258 = vshrl.u32 %v910, 16
      %v1260 = vrot.slane %v1258, 7
      %v1261 = vshll.u32 %v910, 16
      %v1263 = vor.u32 %v1260, %v1261
      %v1264 = vsel %vm1112, %v1256, %v1263
      %v1265 = vrot.slane %v1260, 4
      %v1267 = vshrl.u32 %v911, 16
      %v1269 = vrot.slane %v1267, 7
      %v1270 = vshll.u32 %v911, 16
      %v1272 = vor.u32 %v1269, %v1270
      %v1273 = vrot.slane %v1269, 4
      %v1275 = vshrl.u32 %v912, 16
      %v1277 = vrot.slane %v1275, 7
      %v1278 = vshll.u32 %v912, 16
      %v1280 = vor.u32 %v1277, %v1278
      %v1281 = vsel %vm1112, %v1273, %v1280
      %v1282 = vrot.slane %v1277, 4
      %v1284 = vshrl.u32 %v913, 16
      %v1286 = vrot.slane %v1284, 7
      %v1287 = vshll.u32 %v913, 16
      %v1289 = vor.u32 %v1286, %v1287
      %v1290 = vrot.slane %v1286, 4
      %v1292 = vshrl.u32 %v914, 16
      %v1294 = vrot.slane %v1292, 7
      %v1295 = vshll.u32 %v914, 16
      %v1297 = vor.u32 %v1294, %v1295
      %v1298 = vsel %vm1112, %v1290, %v1297
      %v1299 = vrot.slane %v1294, 4
      %v1301 = vshrl.u32 %v915, 16
      %v1303 = vrot.slane %v1301, 7
      %v1304 = vshll.u32 %v915, 16
      %v1306 = vor.u32 %v1303, %v1304
      %v1307 = vrot.slane %v1303, 4
      %v1309 = vshrl.u32 %v916, 16
      %v1311 = vrot.slane %v1309, 7
      %v1312 = vshll.u32 %v916, 16
      %v1314 = vor.u32 %v1311, %v1312
      %v1315 = vsel %vm1112, %v1307, %v1314
      %v1316 = vrot.slane %v1311, 4
      %v1318 = vshrl.u32 %v917, 16
      %v1320 = vrot.slane %v1318, 7
      %v1321 = vshll.u32 %v917, 16
      %v1323 = vor.u32 %v1320, %v1321
      %v1324 = vrot.slane %v1320, 4
      %v1326 = vshrl.u32 %v918, 16
      %v1328 = vrot.slane %v1326, 7
      %v1329 = vshll.u32 %v918, 16
      %v1331 = vor.u32 %v1328, %v1329
      %v1332 = vsel %vm1112, %v1324, %v1331
      %v1333 = vrot.slane %v1328, 4
      %v1335 = vshrl.u32 %v919, 16
      %v1337 = vrot.slane %v1335, 7
      %v1338 = vshll.u32 %v919, 16
      %v1340 = vor.u32 %v1337, %v1338
      %v1341 = vrot.slane %v1337, 4
      %v1343 = vshrl.u32 %v920, 16
      %v1345 = vrot.slane %v1343, 7
      %v1346 = vshll.u32 %v920, 16
      %v1348 = vor.u32 %v1345, %v1346
      %v1349 = vsel %vm1112, %v1341, %v1348
      %v1350 = vrot.slane %v1345, 4
      %v1352 = vshrl.u32 %v921, 16
      %v1354 = vrot.slane %v1352, 7
      %v1355 = vshll.u32 %v921, 16
      %v1357 = vor.u32 %v1354, %v1355
      %v1358 = vrot.slane %v1354, 4
      %v1360 = vshrl.u32 %v922, 16
      %v1362 = vrot.slane %v1360, 7
      %v1363 = vshll.u32 %v922, 16
      %v1365 = vor.u32 %v1362, %v1363
      %v1366 = vsel %vm1112, %v1358, %v1365
      %v1367 = vrot.slane %v1362, 4
      %v1369 = vshrl.u32 %v923, 16
      %v1371 = vrot.slane %v1369, 7
      %v1372 = vshll.u32 %v923, 16
      %v1374 = vor.u32 %v1371, %v1372
      %v1375 = vrot.slane %v1371, 4
      %v1377 = vshrl.u32 %v924, 16
      %v1379 = vrot.slane %v1377, 7
      %v1380 = vshll.u32 %v924, 16
      %v1382 = vor.u32 %v1379, %v1380
      %v1383 = vsel %vm1112, %v1375, %v1382
      %v1384 = vrot.slane %v1379, 4
      %s1433 = scalar_lea.vmem [#allocation2], 12
      %vm1434 = vcmask 519168
      %vm1435 = vmand %vm1434, %vm1055
      %v1436 = vld [vmem:[%s1433] sm:$0xf]
      %v1437 = vsel %vm1435, %v1119, %v1436
      %1438 = vst [vmem:[%s1433] sm:$0xf] %v1437
      %1439 = vst.msk [vmem:[%s1433 + $0x4] sm:$0xf] %vm957, %v1128
      %v1440 = vld [vmem:[%s1433 + $0x8] sm:$0x1]
      %v1441 = vsel %vm1000, %v1129, %v1440
      %1442 = vst [vmem:[%s1433 + $0x8] sm:$0x1] %v1441
      %v1443 = vld [vmem:[%s1433 + $0xc] sm:$0xf]
      %v1444 = vsel %vm1435, %v1136, %v1443
      %1445 = vst [vmem:[%s1433 + $0xc] sm:$0xf] %v1444
      %1446 = vst.msk [vmem:[%s1433 + $0x10] sm:$0xf] %vm957, %v1145
      %v1447 = vld [vmem:[%s1433 + $0x14] sm:$0x1]
      %v1448 = vsel %vm1000, %v1146, %v1447
      %1449 = vst [vmem:[%s1433 + $0x14] sm:$0x1] %v1448
      %v1450 = vld [vmem:[%s1433 + $0x18] sm:$0xf]
      %v1451 = vsel %vm1435, %v1153, %v1450
      %1452 = vst [vmem:[%s1433 + $0x18] sm:$0xf] %v1451
      %1453 = vst.msk [vmem:[%s1433 + $0x1c] sm:$0xf] %vm957, %v1162
      %v1454 = vld [vmem:[%s1433 + $0x20] sm:$0x1]
      %v1455 = vsel %vm1000, %v1163, %v1454
      %1456 = vst [vmem:[%s1433 + $0x20] sm:$0x1] %v1455
      %v1457 = vld [vmem:[%s1433 + $0x24] sm:$0xf]
      %v1458 = vsel %vm1435, %v1170, %v1457
      %1459 = vst [vmem:[%s1433 + $0x24] sm:$0xf] %v1458
      %1460 = vst.msk [vmem:[%s1433 + $0x28] sm:$0xf] %vm957, %v1179
      %v1461 = vld [vmem:[%s1433 + $0x2c] sm:$0x1]
      %v1462 = vsel %vm1000, %v1180, %v1461
      %1463 = vst [vmem:[%s1433 + $0x2c] sm:$0x1] %v1462
      %v1464 = vld [vmem:[%s1433 + $0x30] sm:$0xf]
      %v1465 = vsel %vm1435, %v1187, %v1464
      %1466 = vst [vmem:[%s1433 + $0x30] sm:$0xf] %v1465
      %1467 = vst.msk [vmem:[%s1433 + $0x34] sm:$0xf] %vm957, %v1196
      %v1468 = vld [vmem:[%s1433 + $0x38] sm:$0x1]
      %v1469 = vsel %vm1000, %v1197, %v1468
      %1470 = vst [vmem:[%s1433 + $0x38] sm:$0x1] %v1469
      %v1471 = vld [vmem:[%s1433 + $0x3c] sm:$0xf]
      %v1472 = vsel %vm1435, %v1204, %v1471
      %1473 = vst [vmem:[%s1433 + $0x3c] sm:$0xf] %v1472
      %1474 = vst.msk [vmem:[%s1433 + $0x40] sm:$0xf] %vm957, %v1213
      %v1475 = vld [vmem:[%s1433 + $0x44] sm:$0x1]
      %v1476 = vsel %vm1000, %v1214, %v1475
      %1477 = vst [vmem:[%s1433 + $0x44] sm:$0x1] %v1476
      %v1478 = vld [vmem:[%s1433 + $0x48] sm:$0xf]
      %v1479 = vsel %vm1435, %v1221, %v1478
      %1480 = vst [vmem:[%s1433 + $0x48] sm:$0xf] %v1479
      %1481 = vst.msk [vmem:[%s1433 + $0x4c] sm:$0xf] %vm957, %v1230
      %v1482 = vld [vmem:[%s1433 + $0x50] sm:$0x1]
      %v1483 = vsel %vm1000, %v1231, %v1482
      %1484 = vst [vmem:[%s1433 + $0x50] sm:$0x1] %v1483
      %v1485 = vld [vmem:[%s1433 + $0x54] sm:$0xf]
      %v1486 = vsel %vm1435, %v1238, %v1485
      %1487 = vst [vmem:[%s1433 + $0x54] sm:$0xf] %v1486
      %1488 = vst.msk [vmem:[%s1433 + $0x58] sm:$0xf] %vm957, %v1247
      %v1489 = vld [vmem:[%s1433 + $0x5c] sm:$0x1]
      %v1490 = vsel %vm1000, %v1248, %v1489
      %1491 = vst [vmem:[%s1433 + $0x5c] sm:$0x1] %v1490
      %v1492 = vld [vmem:[%s1433 + $0x60] sm:$0xf]
      %v1493 = vsel %vm1435, %v1255, %v1492
      %1494 = vst [vmem:[%s1433 + $0x60] sm:$0xf] %v1493
      %1495 = vst.msk [vmem:[%s1433 + $0x64] sm:$0xf] %vm957, %v1264
      %v1496 = vld [vmem:[%s1433 + $0x68] sm:$0x1]
      %v1497 = vsel %vm1000, %v1265, %v1496
      %1498 = vst [vmem:[%s1433 + $0x68] sm:$0x1] %v1497
      %v1499 = vld [vmem:[%s1433 + $0x6c] sm:$0xf]
      %v1500 = vsel %vm1435, %v1272, %v1499
      %1501 = vst [vmem:[%s1433 + $0x6c] sm:$0xf] %v1500
      %1502 = vst.msk [vmem:[%s1433 + $0x70] sm:$0xf] %vm957, %v1281
      %v1503 = vld [vmem:[%s1433 + $0x74] sm:$0x1]
      %v1504 = vsel %vm1000, %v1282, %v1503
      %1505 = vst [vmem:[%s1433 + $0x74] sm:$0x1] %v1504
      %v1506 = vld [vmem:[%s1433 + $0x78] sm:$0xf]
      %v1507 = vsel %vm1435, %v1289, %v1506
      %1508 = vst [vmem:[%s1433 + $0x78] sm:$0xf] %v1507
      %1509 = vst.msk [vmem:[%s1433 + $0x7c] sm:$0xf] %vm957, %v1298
      %v1510 = vld [vmem:[%s1433 + $0x80] sm:$0x1]
      %v1511 = vsel %vm1000, %v1299, %v1510
      %1512 = vst [vmem:[%s1433 + $0x80] sm:$0x1] %v1511
      %v1513 = vld [vmem:[%s1433 + $0x84] sm:$0xf]
      %v1514 = vsel %vm1435, %v1306, %v1513
      %1515 = vst [vmem:[%s1433 + $0x84] sm:$0xf] %v1514
      %1516 = vst.msk [vmem:[%s1433 + $0x88] sm:$0xf] %vm957, %v1315
      %v1517 = vld [vmem:[%s1433 + $0x8c] sm:$0x1]
      %v1518 = vsel %vm1000, %v1316, %v1517
      %1519 = vst [vmem:[%s1433 + $0x8c] sm:$0x1] %v1518
      %v1520 = vld [vmem:[%s1433 + $0x90] sm:$0xf]
      %v1521 = vsel %vm1435, %v1323, %v1520
      %1522 = vst [vmem:[%s1433 + $0x90] sm:$0xf] %v1521
      %1523 = vst.msk [vmem:[%s1433 + $0x94] sm:$0xf] %vm957, %v1332
      %v1524 = vld [vmem:[%s1433 + $0x98] sm:$0x1]
      %v1525 = vsel %vm1000, %v1333, %v1524
      %1526 = vst [vmem:[%s1433 + $0x98] sm:$0x1] %v1525
      %v1527 = vld [vmem:[%s1433 + $0x9c] sm:$0xf]
      %v1528 = vsel %vm1435, %v1340, %v1527
      %1529 = vst [vmem:[%s1433 + $0x9c] sm:$0xf] %v1528
      %1530 = vst.msk [vmem:[%s1433 + $0xa0] sm:$0xf] %vm957, %v1349
      %v1531 = vld [vmem:[%s1433 + $0xa4] sm:$0x1]
      %v1532 = vsel %vm1000, %v1350, %v1531
      %1533 = vst [vmem:[%s1433 + $0xa4] sm:$0x1] %v1532
      %v1534 = vld [vmem:[%s1433 + $0xa8] sm:$0xf]
      %v1535 = vsel %vm1435, %v1357, %v1534
      %1536 = vst [vmem:[%s1433 + $0xa8] sm:$0xf] %v1535
      %1537 = vst.msk [vmem:[%s1433 + $0xac] sm:$0xf] %vm957, %v1366
      %v1538 = vld [vmem:[%s1433 + $0xb0] sm:$0x1]
      %v1539 = vsel %vm1000, %v1367, %v1538
      %1540 = vst [vmem:[%s1433 + $0xb0] sm:$0x1] %v1539
      %v1541 = vld [vmem:[%s1433 + $0xb4] sm:$0xf]
      %v1542 = vsel %vm1435, %v1374, %v1541
      %1543 = vst [vmem:[%s1433 + $0xb4] sm:$0xf] %v1542
      %1544 = vst.msk [vmem:[%s1433 + $0xb8] sm:$0xf] %vm957, %v1383
      %v1545 = vld [vmem:[%s1433 + $0xbc] sm:$0x1]
      %v1546 = vsel %vm1000, %v1384, %v1545
      %1547 = vst [vmem:[%s1433 + $0xbc] sm:$0x1] %v1546
      %v1548 = vld [vmem:[#allocation2] sm:$0xf]
      %v1549 = vld [vmem:[#allocation2 + $0x4] sm:$0xf]
      %v1550 = vld [vmem:[#allocation2 + $0xc] sm:$0xf]
      %v1551 = vld [vmem:[#allocation2 + $0x10] sm:$0xf]
      %v1552 = vld [vmem:[#allocation2 + $0x18] sm:$0xf]
      %v1553 = vld [vmem:[#allocation2 + $0x1c] sm:$0xf]
      %v1554 = vld [vmem:[#allocation2 + $0x24] sm:$0xf]
      %v1555 = vld [vmem:[#allocation2 + $0x28] sm:$0xf]
      %v1556 = vld [vmem:[#allocation2 + $0x30] sm:$0xf]
      %v1557 = vld [vmem:[#allocation2 + $0x34] sm:$0xf]
      %v1558 = vld [vmem:[#allocation2 + $0x3c] sm:$0xf]
      %v1559 = vld [vmem:[#allocation2 + $0x40] sm:$0xf]
      %v1560 = vld [vmem:[#allocation2 + $0x48] sm:$0xf]
      %v1561 = vld [vmem:[#allocation2 + $0x4c] sm:$0xf]
      %v1562 = vld [vmem:[#allocation2 + $0x54] sm:$0xf]
      %v1563 = vld [vmem:[#allocation2 + $0x58] sm:$0xf]
      %v1564 = vld [vmem:[#allocation2 + $0x60] sm:$0xf]
      %v1565 = vld [vmem:[#allocation2 + $0x64] sm:$0xf]
      %v1566 = vld [vmem:[#allocation2 + $0x6c] sm:$0xf]
      %v1567 = vld [vmem:[#allocation2 + $0x70] sm:$0xf]
      %v1568 = vld [vmem:[#allocation2 + $0x78] sm:$0xf]
      %v1569 = vld [vmem:[#allocation2 + $0x7c] sm:$0xf]
      %v1570 = vld [vmem:[#allocation2 + $0x84] sm:$0xf]
      %v1571 = vld [vmem:[#allocation2 + $0x88] sm:$0xf]
      %v1572 = vld [vmem:[#allocation2 + $0x90] sm:$0xf]
      %v1573 = vld [vmem:[#allocation2 + $0x94] sm:$0xf]
      %v1574 = vld [vmem:[#allocation2 + $0x9c] sm:$0xf]
      %v1575 = vld [vmem:[#allocation2 + $0xa0] sm:$0xf]
      %v1576 = vld [vmem:[#allocation2 + $0xa8] sm:$0xf]
      %v1577 = vld [vmem:[#allocation2 + $0xac] sm:$0xf]
      %v1578 = vld [vmem:[#allocation2 + $0xb4] sm:$0xf]
      %v1579 = vld [vmem:[#allocation2 + $0xb8] sm:$0xf]
      %v1580 = vld [vmem:[%s3] sm:$0xf]
      %v1581 = vld [vmem:[%s3 + $0x4] sm:$0xf]
      %v1582 = vld [vmem:[%s3 + $0x8] sm:$0xf]
      %v1583 = vld [vmem:[%s3 + $0xc] sm:$0xf]
      %v1584 = vld [vmem:[%s3 + $0x10] sm:$0xf]
      %v1585 = vld [vmem:[%s3 + $0x14] sm:$0xf]
      %v1586 = vld [vmem:[%s3 + $0x18] sm:$0xf]
      %v1587 = vld [vmem:[%s3 + $0x1c] sm:$0xf]
      %v1588 = vld [vmem:[#allocation2 + $0x8] sm:$0x1]
      %v1589 = vld [vmem:[#allocation2 + $0x14] sm:$0x1]
      %v1590 = vld [vmem:[#allocation2 + $0x20] sm:$0x1]
      %v1591 = vld [vmem:[#allocation2 + $0x2c] sm:$0x1]
      %v1592 = vld [vmem:[#allocation2 + $0x38] sm:$0x1]
      %v1593 = vld [vmem:[#allocation2 + $0x44] sm:$0x1]
      %v1594 = vld [vmem:[#allocation2 + $0x50] sm:$0x1]
      %v1595 = vld [vmem:[#allocation2 + $0x5c] sm:$0x1]
      %v1596 = vld [vmem:[#allocation2 + $0x68] sm:$0x1]
      %v1597 = vld [vmem:[#allocation2 + $0x74] sm:$0x1]
      %v1598 = vld [vmem:[#allocation2 + $0x80] sm:$0x1]
      %v1599 = vld [vmem:[#allocation2 + $0x8c] sm:$0x1]
      %v1600 = vld [vmem:[#allocation2 + $0x98] sm:$0x1]
      %v1601 = vld [vmem:[#allocation2 + $0xa4] sm:$0x1]
      %v1602 = vld [vmem:[#allocation2 + $0xb0] sm:$0x1]
      %v1603 = vld [vmem:[#allocation2 + $0xbc] sm:$0x1]
      %vm1604 = vsmask.f32 3328
      %vm1605 = vsmask.f32 7440
      %vm1606 = vmor %vm1604, %vm1605
      %v1608 = vshrl.u32 %v1548, 16
      %v1610 = vrot.slane %v1608, 4
      %v1611 = vshll.u32 %v1548, 16
      %v1613 = vrot.slane %v1611, 5
      %v1614 = vor.u32 %v1610, %v1613
      %v1615 = vrot.slane %v1614, 4
      %v1617 = vshll.u32 %v1549, 16
      %v1619 = vrot.slane %v1617, 5
      %v1620 = vsel %vm1606, %v1615, %v1619
      %v1621 = vshrl.u32 %v1549, 16
      %v1623 = vrot.slane %v1621, 4
      %v1624 = vor.u32 %v1623, %v1619
      %v1625 = vrot.slane %v1624, 4
      %v1627 = vshll.u32 %v1588, 16
      %v1629 = vrot.slane %v1627, 5
      %v1630 = vsel %vm1606, %v1625, %v1629
      %v1632 = vshrl.u32 %v1550, 16
      %v1634 = vrot.slane %v1632, 4
      %v1635 = vshll.u32 %v1550, 16
      %v1637 = vrot.slane %v1635, 5
      %v1638 = vor.u32 %v1634, %v1637
      %v1639 = vrot.slane %v1638, 4
      %v1641 = vshll.u32 %v1551, 16
      %v1643 = vrot.slane %v1641, 5
      %v1644 = vsel %vm1606, %v1639, %v1643
      %v1645 = vshrl.u32 %v1551, 16
      %v1647 = vrot.slane %v1645, 4
      %v1648 = vor.u32 %v1647, %v1643
      %v1649 = vrot.slane %v1648, 4
      %v1651 = vshll.u32 %v1589, 16
      %v1653 = vrot.slane %v1651, 5
      %v1654 = vsel %vm1606, %v1649, %v1653
      %v1656 = vshrl.u32 %v1552, 16
      %v1658 = vrot.slane %v1656, 4
      %v1659 = vshll.u32 %v1552, 16
      %v1661 = vrot.slane %v1659, 5
      %v1662 = vor.u32 %v1658, %v1661
      %v1663 = vrot.slane %v1662, 4
      %v1665 = vshll.u32 %v1553, 16
      %v1667 = vrot.slane %v1665, 5
      %v1668 = vsel %vm1606, %v1663, %v1667
      %v1669 = vshrl.u32 %v1553, 16
      %v1671 = vrot.slane %v1669, 4
      %v1672 = vor.u32 %v1671, %v1667
      %v1673 = vrot.slane %v1672, 4
      %v1675 = vshll.u32 %v1590, 16
      %v1677 = vrot.slane %v1675, 5
      %v1678 = vsel %vm1606, %v1673, %v1677
      %v1680 = vshrl.u32 %v1554, 16
      %v1682 = vrot.slane %v1680, 4
      %v1683 = vshll.u32 %v1554, 16
      %v1685 = vrot.slane %v1683, 5
      %v1686 = vor.u32 %v1682, %v1685
      %v1687 = vrot.slane %v1686, 4
      %v1689 = vshll.u32 %v1555, 16
      %v1691 = vrot.slane %v1689, 5
      %v1692 = vsel %vm1606, %v1687, %v1691
      %v1693 = vshrl.u32 %v1555, 16
      %v1695 = vrot.slane %v1693, 4
      %v1696 = vor.u32 %v1695, %v1691
      %v1697 = vrot.slane %v1696, 4
      %v1699 = vshll.u32 %v1591, 16
      %v1701 = vrot.slane %v1699, 5
      %v1702 = vsel %vm1606, %v1697, %v1701
      %v1704 = vshrl.u32 %v1556, 16
      %v1706 = vrot.slane %v1704, 4
      %v1707 = vshll.u32 %v1556, 16
      %v1709 = vrot.slane %v1707, 5
      %v1710 = vor.u32 %v1706, %v1709
      %v1711 = vrot.slane %v1710, 4
      %v1713 = vshll.u32 %v1557, 16
      %v1715 = vrot.slane %v1713, 5
      %v1716 = vsel %vm1606, %v1711, %v1715
      %v1717 = vshrl.u32 %v1557, 16
      %v1719 = vrot.slane %v1717, 4
      %v1720 = vor.u32 %v1719, %v1715
      %v1721 = vrot.slane %v1720, 4
      %v1723 = vshll.u32 %v1592, 16
      %v1725 = vrot.slane %v1723, 5
      %v1726 = vsel %vm1606, %v1721, %v1725
      %v1728 = vshrl.u32 %v1558, 16
      %v1730 = vrot.slane %v1728, 4
      %v1731 = vshll.u32 %v1558, 16
      %v1733 = vrot.slane %v1731, 5
      %v1734 = vor.u32 %v1730, %v1733
      %v1735 = vrot.slane %v1734, 4
      %v1737 = vshll.u32 %v1559, 16
      %v1739 = vrot.slane %v1737, 5
      %v1740 = vsel %vm1606, %v1735, %v1739
      %v1741 = vshrl.u32 %v1559, 16
      %v1743 = vrot.slane %v1741, 4
      %v1744 = vor.u32 %v1743, %v1739
      %v1745 = vrot.slane %v1744, 4
      %v1747 = vshll.u32 %v1593, 16
      %v1749 = vrot.slane %v1747, 5
      %v1750 = vsel %vm1606, %v1745, %v1749
      %v1752 = vshrl.u32 %v1560, 16
      %v1754 = vrot.slane %v1752, 4
      %v1755 = vshll.u32 %v1560, 16
      %v1757 = vrot.slane %v1755, 5
      %v1758 = vor.u32 %v1754, %v1757
      %v1759 = vrot.slane %v1758, 4
      %v1761 = vshll.u32 %v1561, 16
      %v1763 = vrot.slane %v1761, 5
      %v1764 = vsel %vm1606, %v1759, %v1763
      %v1765 = vshrl.u32 %v1561, 16
      %v1767 = vrot.slane %v1765, 4
      %v1768 = vor.u32 %v1767, %v1763
      %v1769 = vrot.slane %v1768, 4
      %v1771 = vshll.u32 %v1594, 16
      %v1773 = vrot.slane %v1771, 5
      %v1774 = vsel %vm1606, %v1769, %v1773
      %v1776 = vshrl.u32 %v1562, 16
      %v1778 = vrot.slane %v1776, 4
      %v1779 = vshll.u32 %v1562, 16
      %v1781 = vrot.slane %v1779, 5
      %v1782 = vor.u32 %v1778, %v1781
      %v1783 = vrot.slane %v1782, 4
      %v1785 = vshll.u32 %v1563, 16
      %v1787 = vrot.slane %v1785, 5
      %v1788 = vsel %vm1606, %v1783, %v1787
      %v1789 = vshrl.u32 %v1563, 16
      %v1791 = vrot.slane %v1789, 4
      %v1792 = vor.u32 %v1791, %v1787
      %v1793 = vrot.slane %v1792, 4
      %v1795 = vshll.u32 %v1595, 16
      %v1797 = vrot.slane %v1795, 5
      %v1798 = vsel %vm1606, %v1793, %v1797
      %v1800 = vshrl.u32 %v1564, 16
      %v1802 = vrot.slane %v1800, 4
      %v1803 = vshll.u32 %v1564, 16
      %v1805 = vrot.slane %v1803, 5
      %v1806 = vor.u32 %v1802, %v1805
      %v1807 = vrot.slane %v1806, 4
      %v1809 = vshll.u32 %v1565, 16
      %v1811 = vrot.slane %v1809, 5
      %v1812 = vsel %vm1606, %v1807, %v1811
      %v1813 = vshrl.u32 %v1565, 16
      %v1815 = vrot.slane %v1813, 4
      %v1816 = vor.u32 %v1815, %v1811
      %v1817 = vrot.slane %v1816, 4
      %v1819 = vshll.u32 %v1596, 16
      %v1821 = vrot.slane %v1819, 5
      %v1822 = vsel %vm1606, %v1817, %v1821
      %v1824 = vshrl.u32 %v1566, 16
      %v1826 = vrot.slane %v1824, 4
      %v1827 = vshll.u32 %v1566, 16
      %v1829 = vrot.slane %v1827, 5
      %v1830 = vor.u32 %v1826, %v1829
      %v1831 = vrot.slane %v1830, 4
      %v1833 = vshll.u32 %v1567, 16
      %v1835 = vrot.slane %v1833, 5
      %v1836 = vsel %vm1606, %v1831, %v1835
      %v1837 = vshrl.u32 %v1567, 16
      %v1839 = vrot.slane %v1837, 4
      %v1840 = vor.u32 %v1839, %v1835
      %v1841 = vrot.slane %v1840, 4
      %v1843 = vshll.u32 %v1597, 16
      %v1845 = vrot.slane %v1843, 5
      %v1846 = vsel %vm1606, %v1841, %v1845
      %v1848 = vshrl.u32 %v1568, 16
      %v1850 = vrot.slane %v1848, 4
      %v1851 = vshll.u32 %v1568, 16
      %v1853 = vrot.slane %v1851, 5
      %v1854 = vor.u32 %v1850, %v1853
      %v1855 = vrot.slane %v1854, 4
      %v1857 = vshll.u32 %v1569, 16
      %v1859 = vrot.slane %v1857, 5
      %v1860 = vsel %vm1606, %v1855, %v1859
      %v1861 = vshrl.u32 %v1569, 16
      %v1863 = vrot.slane %v1861, 4
      %v1864 = vor.u32 %v1863, %v1859
      %v1865 = vrot.slane %v1864, 4
      %v1867 = vshll.u32 %v1598, 16
      %v1869 = vrot.slane %v1867, 5
      %v1870 = vsel %vm1606, %v1865, %v1869
      %v1872 = vshrl.u32 %v1570, 16
      %v1874 = vrot.slane %v1872, 4
      %v1875 = vshll.u32 %v1570, 16
      %v1877 = vrot.slane %v1875, 5
      %v1878 = vor.u32 %v1874, %v1877
      %v1879 = vrot.slane %v1878, 4
      %v1881 = vshll.u32 %v1571, 16
      %v1883 = vrot.slane %v1881, 5
      %v1884 = vsel %vm1606, %v1879, %v1883
      %v1885 = vshrl.u32 %v1571, 16
      %v1887 = vrot.slane %v1885, 4
      %v1888 = vor.u32 %v1887, %v1883
      %v1889 = vrot.slane %v1888, 4
      %v1891 = vshll.u32 %v1599, 16
      %v1893 = vrot.slane %v1891, 5
      %v1894 = vsel %vm1606, %v1889, %v1893
      %v1896 = vshrl.u32 %v1572, 16
      %v1898 = vrot.slane %v1896, 4
      %v1899 = vshll.u32 %v1572, 16
      %v1901 = vrot.slane %v1899, 5
      %v1902 = vor.u32 %v1898, %v1901
      %v1903 = vrot.slane %v1902, 4
      %v1905 = vshll.u32 %v1573, 16
      %v1907 = vrot.slane %v1905, 5
      %v1908 = vsel %vm1606, %v1903, %v1907
      %v1909 = vshrl.u32 %v1573, 16
      %v1911 = vrot.slane %v1909, 4
      %v1912 = vor.u32 %v1911, %v1907
      %v1913 = vrot.slane %v1912, 4
      %v1915 = vshll.u32 %v1600, 16
      %v1917 = vrot.slane %v1915, 5
      %v1918 = vsel %vm1606, %v1913, %v1917
      %v1920 = vshrl.u32 %v1574, 16
      %v1922 = vrot.slane %v1920, 4
      %v1923 = vshll.u32 %v1574, 16
      %v1925 = vrot.slane %v1923, 5
      %v1926 = vor.u32 %v1922, %v1925
      %v1927 = vrot.slane %v1926, 4
      %v1929 = vshll.u32 %v1575, 16
      %v1931 = vrot.slane %v1929, 5
      %v1932 = vsel %vm1606, %v1927, %v1931
      %v1933 = vshrl.u32 %v1575, 16
      %v1935 = vrot.slane %v1933, 4
      %v1936 = vor.u32 %v1935, %v1931
      %v1937 = vrot.slane %v1936, 4
      %v1939 = vshll.u32 %v1601, 16
      %v1941 = vrot.slane %v1939, 5
      %v1942 = vsel %vm1606, %v1937, %v1941
      %v1944 = vshrl.u32 %v1576, 16
      %v1946 = vrot.slane %v1944, 4
      %v1947 = vshll.u32 %v1576, 16
      %v1949 = vrot.slane %v1947, 5
      %v1950 = vor.u32 %v1946, %v1949
      %v1951 = vrot.slane %v1950, 4
      %v1953 = vshll.u32 %v1577, 16
      %v1955 = vrot.slane %v1953, 5
      %v1956 = vsel %vm1606, %v1951, %v1955
      %v1957 = vshrl.u32 %v1577, 16
      %v1959 = vrot.slane %v1957, 4
      %v1960 = vor.u32 %v1959, %v1955
      %v1961 = vrot.slane %v1960, 4
      %v1963 = vshll.u32 %v1602, 16
      %v1965 = vrot.slane %v1963, 5
      %v1966 = vsel %vm1606, %v1961, %v1965
      %v1968 = vshrl.u32 %v1578, 16
      %v1970 = vrot.slane %v1968, 4
      %v1971 = vshll.u32 %v1578, 16
      %v1973 = vrot.slane %v1971, 5
      %v1974 = vor.u32 %v1970, %v1973
      %v1975 = vrot.slane %v1974, 4
      %v1977 = vshll.u32 %v1579, 16
      %v1979 = vrot.slane %v1977, 5
      %v1980 = vsel %vm1606, %v1975, %v1979
      %v1981 = vshrl.u32 %v1579, 16
      %v1983 = vrot.slane %v1981, 4
      %v1984 = vor.u32 %v1983, %v1979
      %v1985 = vrot.slane %v1984, 4
      %v1987 = vshll.u32 %v1603, 16
      %v1989 = vrot.slane %v1987, 5
      %v1990 = vsel %vm1606, %v1985, %v1989
      %s1991 = scalar_lea.vmem %s3, 32
      %v1992 = vld [vmem:[%s1991] sm:$0xf]
      %v1993 = vld [vmem:[%s1991 + $0x4] sm:$0xf]
      %v1994 = vld [vmem:[%s1991 + $0x8] sm:$0xf]
      %v1995 = vld [vmem:[%s1991 + $0xc] sm:$0xf]
      %v1996 = vld [vmem:[%s1991 + $0x10] sm:$0xf]
      %v1997 = vld [vmem:[%s1991 + $0x14] sm:$0xf]
      %v1998 = vld [vmem:[%s1991 + $0x18] sm:$0xf]
      %v1999 = vld [vmem:[%s1991 + $0x1c] sm:$0xf]
      %v2000 = vunpack.c.l.b16 %v1620
      %v2001 = vunpack.c.l.b16 %v1630
      %v2002 = vunpack.c.l.b16 %v1644
      %v2003 = vunpack.c.l.b16 %v1654
      %v2004 = vunpack.c.l.b16 %v1668
      %v2005 = vunpack.c.l.b16 %v1678
      %v2006 = vunpack.c.l.b16 %v1692
      %v2007 = vunpack.c.l.b16 %v1702
      %v2008 = vunpack.c.l.b16 %v1716
      %v2009 = vunpack.c.l.b16 %v1726
      %v2010 = vunpack.c.l.b16 %v1740
      %v2011 = vunpack.c.l.b16 %v1750
      %v2012 = vunpack.c.l.b16 %v1764
      %v2013 = vunpack.c.l.b16 %v1774
      %v2014 = vunpack.c.l.b16 %v1788
      %v2015 = vunpack.c.l.b16 %v1798
      %v2016 = vunpack.c.l.b16 %v1812
      %v2017 = vunpack.c.l.b16 %v1822
      %v2018 = vunpack.c.l.b16 %v1836
      %v2019 = vunpack.c.l.b16 %v1846
      %v2020 = vunpack.c.l.b16 %v1860
      %v2021 = vunpack.c.l.b16 %v1870
      %v2022 = vunpack.c.l.b16 %v1884
      %v2023 = vunpack.c.l.b16 %v1894
      %v2024 = vunpack.c.l.b16 %v1908
      %v2025 = vunpack.c.l.b16 %v1918
      %v2026 = vunpack.c.l.b16 %v1932
      %v2027 = vunpack.c.l.b16 %v1942
      %v2028 = vunpack.c.l.b16 %v1956
      %v2029 = vunpack.c.l.b16 %v1966
      %v2030 = vunpack.c.l.b16 %v1980
      %v2031 = vunpack.c.l.b16 %v1990
      %v2032 = vpack.c.b16 %v2001, %v2000
      %v2033 = vpack.c.b16 %v2003, %v2002
      %v2034 = vpack.c.b16 %v2005, %v2004
      %v2035 = vpack.c.b16 %v2007, %v2006
      %v2036 = vpack.c.b16 %v2009, %v2008
      %v2037 = vpack.c.b16 %v2011, %v2010
      %v2038 = vpack.c.b16 %v2013, %v2012
      %v2039 = vpack.c.b16 %v2015, %v2014
      %v2040 = vpack.c.b16 %v2017, %v2016
      %v2041 = vpack.c.b16 %v2019, %v2018
      %v2042 = vpack.c.b16 %v2021, %v2020
      %v2043 = vpack.c.b16 %v2023, %v2022
      %v2044 = vpack.c.b16 %v2025, %v2024
      %v2045 = vpack.c.b16 %v2027, %v2026
      %v2046 = vpack.c.b16 %v2029, %v2028
      %v2047 = vpack.c.b16 %v2031, %v2030
      %v2056 = vunpack.c.l.b16 %v1992
      %v2057 = vunpack.c.l.b16 %v1993
      %v2058 = vunpack.c.l.b16 %v1994
      %v2059 = vunpack.c.l.b16 %v1995
      %v2060 = vunpack.c.l.b16 %v1996
      %v2061 = vunpack.c.l.b16 %v1997
      %v2062 = vunpack.c.l.b16 %v1998
      %v2063 = vunpack.c.l.b16 %v1999
      %v2064 = vpack.c.b16 %v2057, %v2056
      %v2065 = vpack.c.b16 %v2059, %v2058
      %v2066 = vpack.c.b16 %v2061, %v2060
      %v2067 = vpack.c.b16 %v2063, %v2062
      %vm2072 = vcmask 523264
      %v2074 = vsel %vm2072, %v2032, 0
      %v2077 = vsel %vm2072, %v2033, 0
      %v2080 = vsel %vm2072, %v2034, 0
      %v2083 = vsel %vm2072, %v2035, 0
      %v2086 = vsel %vm2072, %v2036, 0
      %v2089 = vsel %vm2072, %v2037, 0
      %v2092 = vsel %vm2072, %v2038, 0
      %v2095 = vsel %vm2072, %v2039, 0
      %v2098 = vsel %vm2072, %v2040, 0
      %v2101 = vsel %vm2072, %v2041, 0
      %v2104 = vsel %vm2072, %v2042, 0
      %v2107 = vsel %vm2072, %v2043, 0
      %v2110 = vsel %vm2072, %v2044, 0
      %v2113 = vsel %vm2072, %v2045, 0
      %v2116 = vsel %vm2072, %v2046, 0
      %v2119 = vsel %vm2072, %v2047, 0
      %2121 = vmatprep.subr.bf16.mxu0 0
      %2122 = vmatpush1.bf16.msra.mxu0 %v2064
      %2123 = vmatprep.subr.bf16.mxu0 0
      %2124 = vmatpush1.bf16.msra.mxu0 %v2065
      %2125 = vmatprep.subr.bf16.mxu0 0
      %2126 = vmatpush1.bf16.msra.mxu0 %v2066
      %2127 = vmatprep.subr.bf16.mxu0 0
      %2128 = vmatpush1.bf16.msra.mxu0 %v2067
      %2129 = vmatprep.subr.bf16.mxu0 0
      %2130 = vmatpush1.bf16.msra.mxu0 0
      %2131 = vmatprep.subr.bf16.mxu0 0
      %2132 = vmatpush1.bf16.msra.mxu0 0
      %2133 = vmatprep.subr.bf16.mxu0 0
      %2134 = vmatpush1.bf16.msra.mxu0 0
      %2135 = vmatprep.subr.bf16.mxu0 0
      %2136 = vmatpush1.bf16.msra.mxu0 0
      %2137 = vmatprep.subr.bf16.mxu0 0
      %2138 = vmatpush1.bf16.msra.mxu0 0
      %2139 = vmatprep.subr.bf16.mxu0 0
      %2140 = vmatpush1.bf16.msra.mxu0 0
      %2141 = vmatprep.subr.bf16.mxu0 0
      %2142 = vmatpush1.bf16.msra.mxu0 0
      %2143 = vmatprep.subr.bf16.mxu0 0
      %2144 = vmatpush1.bf16.msra.mxu0 0
      %2145 = vmatprep.subr.bf16.mxu0 0
      %2146 = vmatpush1.bf16.msra.mxu0 0
      %2147 = vmatprep.subr.bf16.mxu0 0
      %2148 = vmatpush1.bf16.msra.mxu0 0
      %2149 = vmatprep.subr.bf16.mxu0 0
      %2150 = vmatpush1.bf16.msra.mxu0 0
      %2151 = vmatprep.subr.bf16.mxu0 0
      %2152 = vmatpush1.bf16.msra.mxu0 0
      %2153 = vmatprep.mubr.bf16.mxu0 0
      %2154 = vmatmul.mubr.bf16.gmra.mrb[0].mxu0 %v2074
      %v2155 = vpop.f32.mrb[0].mxu0
      %v2156 = vadd.f32 0.0, %v2155
      %v2157 = vpop.f32.mrb[0].mxu0
      %v2158 = vpop.f32.mrb[0].mxu0
      %v2159 = vadd.f32 0.0, %v2158
      %v2160 = vpop.f32.mrb[0].mxu0
      %2161 = vmatprep.mubr.bf16.mxu0 0
      %2162 = vmatmul.mubr.bf16.gmra.mrb[0].mxu0 %v2077
      %v2163 = vpop.f32.mrb[0].mxu0
      %v2164 = vadd.f32 0.0, %v2163
      %v2165 = vpop.f32.mrb[0].mxu0
      %v2166 = vpop.f32.mrb[0].mxu0
      %v2167 = vadd.f32 0.0, %v2166
      %v2168 = vpop.f32.mrb[0].mxu0
      %2169 = vmatprep.mubr.bf16.mxu0 0
      %2170 = vmatmul.mubr.bf16.gmra.mrb[0].mxu0 %v2080
      %v2171 = vpop.f32.mrb[0].mxu0
      %v2172 = vadd.f32 0.0, %v2171
      %v2173 = vpop.f32.mrb[0].mxu0
      %v2174 = vpop.f32.mrb[0].mxu0
      %v2175 = vadd.f32 0.0, %v2174
      %v2176 = vpop.f32.mrb[0].mxu0
      %2177 = vmatprep.mubr.bf16.mxu0 0
      %2178 = vmatmul.mubr.bf16.gmra.mrb[0].mxu0 %v2083
      %v2179 = vpop.f32.mrb[0].mxu0
      %v2180 = vadd.f32 0.0, %v2179
      %v2181 = vpop.f32.mrb[0].mxu0
      %v2182 = vpop.f32.mrb[0].mxu0
      %v2183 = vadd.f32 0.0, %v2182
      %v2184 = vpop.f32.mrb[0].mxu0
      %2185 = vmatprep.mubr.bf16.mxu0 0
      %2186 = vmatmul.mubr.bf16.gmra.mrb[0].mxu0 %v2086
      %v2187 = vpop.f32.mrb[0].mxu0
      %v2188 = vadd.f32 0.0, %v2187
      %v2189 = vpop.f32.mrb[0].mxu0
      %v2190 = vpop.f32.mrb[0].mxu0
      %v2191 = vadd.f32 0.0, %v2190
      %v2192 = vpop.f32.mrb[0].mxu0
      %2193 = vmatprep.mubr.bf16.mxu0 0
      %2194 = vmatmul.mubr.bf16.gmra.mrb[0].mxu0 %v2089
      %v2195 = vpop.f32.mrb[0].mxu0
      %v2196 = vadd.f32 0.0, %v2195
      %v2197 = vpop.f32.mrb[0].mxu0
      %v2198 = vpop.f32.mrb[0].mxu0
      %v2199 = vadd.f32 0.0, %v2198
      %v2200 = vpop.f32.mrb[0].mxu0
      %2201 = vmatprep.mubr.bf16.mxu0 0
      %2202 = vmatmul.mubr.bf16.gmra.mrb[0].mxu0 %v2092
      %v2203 = vpop.f32.mrb[0].mxu0
      %v2204 = vadd.f32 0.0, %v2203
      %v2205 = vpop.f32.mrb[0].mxu0
      %v2206 = vpop.f32.mrb[0].mxu0
      %v2207 = vadd.f32 0.0, %v2206
      %v2208 = vpop.f32.mrb[0].mxu0
      %2209 = vmatprep.mubr.bf16.mxu0 0
      %2210 = vmatmul.mubr.bf16.gmra.mrb[0].mxu0 %v2095
      %v2211 = vpop.f32.mrb[0].mxu0
      %v2212 = vadd.f32 0.0, %v2211
      %v2213 = vpop.f32.mrb[0].mxu0
      %v2214 = vpop.f32.mrb[0].mxu0
      %v2215 = vadd.f32 0.0, %v2214
      %v2216 = vpop.f32.mrb[0].mxu0
      %2217 = vmatprep.mubr.bf16.mxu0 0
      %2218 = vmatmul.mubr.bf16.gmra.mrb[0].mxu0 %v2098
      %v2219 = vpop.f32.mrb[0].mxu0
      %v2220 = vadd.f32 0.0, %v2219
      %v2221 = vpop.f32.mrb[0].mxu0
      %v2222 = vpop.f32.mrb[0].mxu0
      %v2223 = vadd.f32 0.0, %v2222
      %v2224 = vpop.f32.mrb[0].mxu0
      %2225 = vmatprep.mubr.bf16.mxu0 0
      %2226 = vmatmul.mubr.bf16.gmra.mrb[0].mxu0 %v2101
      %v2227 = vpop.f32.mrb[0].mxu0
      %v2228 = vadd.f32 0.0, %v2227
      %v2229 = vpop.f32.mrb[0].mxu0
      %v2230 = vpop.f32.mrb[0].mxu0
      %v2231 = vadd.f32 0.0, %v2230
      %v2232 = vpop.f32.mrb[0].mxu0
      %2233 = vmatprep.mubr.bf16.mxu0 0
      %2234 = vmatmul.mubr.bf16.gmra.mrb[0].mxu0 %v2104
      %v2235 = vpop.f32.mrb[0].mxu0
      %v2236 = vadd.f32 0.0, %v2235
      %v2237 = vpop.f32.mrb[0].mxu0
      %v2238 = vpop.f32.mrb[0].mxu0
      %v2239 = vadd.f32 0.0, %v2238
      %v2240 = vpop.f32.mrb[0].mxu0
      %2241 = vmatprep.mubr.bf16.mxu0 0
      %2242 = vmatmul.mubr.bf16.gmra.mrb[0].mxu0 %v2107
      %v2243 = vpop.f32.mrb[0].mxu0
      %v2244 = vadd.f32 0.0, %v2243
      %v2245 = vpop.f32.mrb[0].mxu0
      %v2246 = vpop.f32.mrb[0].mxu0
      %v2247 = vadd.f32 0.0, %v2246
      %v2248 = vpop.f32.mrb[0].mxu0
      %2249 = vmatprep.mubr.bf16.mxu0 0
      %2250 = vmatmul.mubr.bf16.gmra.mrb[0].mxu0 %v2110
      %v2251 = vpop.f32.mrb[0].mxu0
      %v2252 = vadd.f32 0.0, %v2251
      %v2253 = vpop.f32.mrb[0].mxu0
      %v2254 = vpop.f32.mrb[0].mxu0
      %v2255 = vadd.f32 0.0, %v2254
      %v2256 = vpop.f32.mrb[0].mxu0
      %2257 = vmatprep.mubr.bf16.mxu0 0
      %2258 = vmatmul.mubr.bf16.gmra.mrb[0].mxu0 %v2113
      %v2259 = vpop.f32.mrb[0].mxu0
      %v2260 = vadd.f32 0.0, %v2259
      %v2261 = vpop.f32.mrb[0].mxu0
      %v2262 = vpop.f32.mrb[0].mxu0
      %v2263 = vadd.f32 0.0, %v2262
      %v2264 = vpop.f32.mrb[0].mxu0
      %2265 = vmatprep.mubr.bf16.mxu0 0
      %2266 = vmatmul.mubr.bf16.gmra.mrb[0].mxu0 %v2116
      %v2267 = vpop.f32.mrb[0].mxu0
      %v2268 = vadd.f32 0.0, %v2267
      %v2269 = vpop.f32.mrb[0].mxu0
      %v2270 = vpop.f32.mrb[0].mxu0
      %v2271 = vadd.f32 0.0, %v2270
      %v2272 = vpop.f32.mrb[0].mxu0
      %2273 = vmatprep.mubr.bf16.mxu0 0
      %2274 = vmatmul.mubr.bf16.gmra.mrb[0].mxu0 %v2119
      %v2275 = vpop.f32.mrb[0].mxu0
      %v2276 = vadd.f32 0.0, %v2275
      %v2277 = vpop.f32.mrb[0].mxu0
      %v2278 = vpop.f32.mrb[0].mxu0
      %v2279 = vadd.f32 0.0, %v2278
      %v2280 = vpop.f32.mrb[0].mxu0
      %2281 = vdwg.mxu0
      %v2314 = vunpack.c.l.b16 %v1548
      %v2315 = vunpack.c.l.b16 %v1549
      %v2316 = vunpack.c.l.b16 %v1550
      %v2317 = vunpack.c.l.b16 %v1551
      %v2318 = vunpack.c.l.b16 %v1552
      %v2319 = vunpack.c.l.b16 %v1553
      %v2320 = vunpack.c.l.b16 %v1554
      %v2321 = vunpack.c.l.b16 %v1555
      %v2322 = vunpack.c.l.b16 %v1556
      %v2323 = vunpack.c.l.b16 %v1557
      %v2324 = vunpack.c.l.b16 %v1558
      %v2325 = vunpack.c.l.b16 %v1559
      %v2326 = vunpack.c.l.b16 %v1560
      %v2327 = vunpack.c.l.b16 %v1561
      %v2328 = vunpack.c.l.b16 %v1562
      %v2329 = vunpack.c.l.b16 %v1563
      %v2330 = vunpack.c.l.b16 %v1564
      %v2331 = vunpack.c.l.b16 %v1565
      %v2332 = vunpack.c.l.b16 %v1566
      %v2333 = vunpack.c.l.b16 %v1567
      %v2334 = vunpack.c.l.b16 %v1568
      %v2335 = vunpack.c.l.b16 %v1569
      %v2336 = vunpack.c.l.b16 %v1570
      %v2337 = vunpack.c.l.b16 %v1571
      %v2338 = vunpack.c.l.b16 %v1572
      %v2339 = vunpack.c.l.b16 %v1573
      %v2340 = vunpack.c.l.b16 %v1574
      %v2341 = vunpack.c.l.b16 %v1575
      %v2342 = vunpack.c.l.b16 %v1576
      %v2343 = vunpack.c.l.b16 %v1577
      %v2344 = vunpack.c.l.b16 %v1578
      %v2345 = vunpack.c.l.b16 %v1579
      %v2346 = vpack.c.b16 %v2315, %v2314
      %v2347 = vpack.c.b16 %v2317, %v2316
      %v2348 = vpack.c.b16 %v2319, %v2318
      %v2349 = vpack.c.b16 %v2321, %v2320
      %v2350 = vpack.c.b16 %v2323, %v2322
      %v2351 = vpack.c.b16 %v2325, %v2324
      %v2352 = vpack.c.b16 %v2327, %v2326
      %v2353 = vpack.c.b16 %v2329, %v2328
      %v2354 = vpack.c.b16 %v2331, %v2330
      %v2355 = vpack.c.b16 %v2333, %v2332
      %v2356 = vpack.c.b16 %v2335, %v2334
      %v2357 = vpack.c.b16 %v2337, %v2336
      %v2358 = vpack.c.b16 %v2339, %v2338
      %v2359 = vpack.c.b16 %v2341, %v2340
      %v2360 = vpack.c.b16 %v2343, %v2342
      %v2361 = vpack.c.b16 %v2345, %v2344
      %v2370 = vunpack.c.l.b16 %v1580
      %v2371 = vunpack.c.l.b16 %v1581
      %v2372 = vunpack.c.l.b16 %v1582
      %v2373 = vunpack.c.l.b16 %v1583
      %v2374 = vunpack.c.l.b16 %v1584
      %v2375 = vunpack.c.l.b16 %v1585
      %v2376 = vunpack.c.l.b16 %v1586
      %v2377 = vunpack.c.l.b16 %v1587
      %v2378 = vpack.c.b16 %v2371, %v2370
      %v2379 = vpack.c.b16 %v2373, %v2372
      %v2380 = vpack.c.b16 %v2375, %v2374
      %v2381 = vpack.c.b16 %v2377, %v2376
      %v2387 = vsel %vm2072, %v2346, 0
      %v2390 = vsel %vm2072, %v2347, 0
      %v2393 = vsel %vm2072, %v2348, 0
      %v2396 = vsel %vm2072, %v2349, 0
      %v2399 = vsel %vm2072, %v2350, 0
      %v2402 = vsel %vm2072, %v2351, 0
      %v2405 = vsel %vm2072, %v2352, 0
      %v2408 = vsel %vm2072, %v2353, 0
      %v2411 = vsel %vm2072, %v2354, 0
      %v2414 = vsel %vm2072, %v2355, 0
      %v2417 = vsel %vm2072, %v2356, 0
      %v2420 = vsel %vm2072, %v2357, 0
      %v2423 = vsel %vm2072, %v2358, 0
      %v2426 = vsel %vm2072, %v2359, 0
      %v2429 = vsel %vm2072, %v2360, 0
      %v2432 = vsel %vm2072, %v2361, 0
      %2434 = vmatprep.subr.bf16.mxu0 0
      %2435 = vmatpush1.bf16.msra.mxu0 %v2378
      %2436 = vmatprep.subr.bf16.mxu0 0
      %2437 = vmatpush1.bf16.msra.mxu0 %v2379
      %2438 = vmatprep.subr.bf16.mxu0 0
      %2439 = vmatpush1.bf16.msra.mxu0 %v2380
      %2440 = vmatprep.subr.bf16.mxu0 0
      %2441 = vmatpush1.bf16.msra.mxu0 %v2381
      %2442 = vmatprep.subr.bf16.mxu0 0
      %2443 = vmatpush1.bf16.msra.mxu0 0
      %2444 = vmatprep.subr.bf16.mxu0 0
      %2445 = vmatpush1.bf16.msra.mxu0 0
      %2446 = vmatprep.subr.bf16.mxu0 0
      %2447 = vmatpush1.bf16.msra.mxu0 0
      %2448 = vmatprep.subr.bf16.mxu0 0
      %2449 = vmatpush1.bf16.msra.mxu0 0
      %2450 = vmatprep.subr.bf16.mxu0 0
      %2451 = vmatpush1.bf16.msra.mxu0 0
      %2452 = vmatprep.subr.bf16.mxu0 0
      %2453 = vmatpush1.bf16.msra.mxu0 0
      %2454 = vmatprep.subr.bf16.mxu0 0
      %2455 = vmatpush1.bf16.msra.mxu0 0
      %2456 = vmatprep.subr.bf16.mxu0 0
      %2457 = vmatpush1.bf16.msra.mxu0 0
      %2458 = vmatprep.subr.bf16.mxu0 0
      %2459 = vmatpush1.bf16.msra.mxu0 0
      %2460 = vmatprep.subr.bf16.mxu0 0
      %2461 = vmatpush1.bf16.msra.mxu0 0
      %2462 = vmatprep.subr.bf16.mxu0 0
      %2463 = vmatpush1.bf16.msra.mxu0 0
      %2464 = vmatprep.subr.bf16.mxu0 0
      %2465 = vmatpush1.bf16.msra.mxu0 0
      %2466 = vmatprep.mubr.bf16.mxu0 0
      %2467 = vmatmul.mubr.bf16.gmra.mrb[0].mxu0 %v2387
      %v2468 = vpop.f32.mrb[0].mxu0
      %v2469 = vadd.f32 %v2156, %v2468
      %v2470 = vpop.f32.mrb[0].mxu0
      %v2471 = vpop.f32.mrb[0].mxu0
      %v2472 = vadd.f32 %v2159, %v2471
      %v2473 = vpop.f32.mrb[0].mxu0
      %2474 = vmatprep.mubr.bf16.mxu0 0
      %2475 = vmatmul.mubr.bf16.gmra.mrb[0].mxu0 %v2390
      %v2476 = vpop.f32.mrb[0].mxu0
      %v2477 = vadd.f32 %v2164, %v2476
      %v2478 = vpop.f32.mrb[0].mxu0
      %v2479 = vpop.f32.mrb[0].mxu0
      %v2480 = vadd.f32 %v2167, %v2479
      %v2481 = vpop.f32.mrb[0].mxu0
      %2482 = vmatprep.mubr.bf16.mxu0 0
      %2483 = vmatmul.mubr.bf16.gmra.mrb[0].mxu0 %v2393
      %v2484 = vpop.f32.mrb[0].mxu0
      %v2485 = vadd.f32 %v2172, %v2484
      %v2486 = vpop.f32.mrb[0].mxu0
      %v2487 = vpop.f32.mrb[0].mxu0
      %v2488 = vadd.f32 %v2175, %v2487
      %v2489 = vpop.f32.mrb[0].mxu0
      %2490 = vmatprep.mubr.bf16.mxu0 0
      %2491 = vmatmul.mubr.bf16.gmra.mrb[0].mxu0 %v2396
      %v2492 = vpop.f32.mrb[0].mxu0
      %v2493 = vadd.f32 %v2180, %v2492
      %v2494 = vpop.f32.mrb[0].mxu0
      %v2495 = vpop.f32.mrb[0].mxu0
      %v2496 = vadd.f32 %v2183, %v2495
      %v2497 = vpop.f32.mrb[0].mxu0
      %2498 = vmatprep.mubr.bf16.mxu0 0
      %2499 = vmatmul.mubr.bf16.gmra.mrb[0].mxu0 %v2399
      %v2500 = vpop.f32.mrb[0].mxu0
      %v2501 = vadd.f32 %v2188, %v2500
      %v2502 = vpop.f32.mrb[0].mxu0
      %v2503 = vpop.f32.mrb[0].mxu0
      %v2504 = vadd.f32 %v2191, %v2503
      %v2505 = vpop.f32.mrb[0].mxu0
      %2506 = vmatprep.mubr.bf16.mxu0 0
      %2507 = vmatmul.mubr.bf16.gmra.mrb[0].mxu0 %v2402
      %v2508 = vpop.f32.mrb[0].mxu0
      %v2509 = vadd.f32 %v2196, %v2508
      %v2510 = vpop.f32.mrb[0].mxu0
      %v2511 = vpop.f32.mrb[0].mxu0
      %v2512 = vadd.f32 %v2199, %v2511
      %v2513 = vpop.f32.mrb[0].mxu0
      %2514 = vmatprep.mubr.bf16.mxu0 0
      %2515 = vmatmul.mubr.bf16.gmra.mrb[0].mxu0 %v2405
      %v2516 = vpop.f32.mrb[0].mxu0
      %v2517 = vadd.f32 %v2204, %v2516
      %v2518 = vpop.f32.mrb[0].mxu0
      %v2519 = vpop.f32.mrb[0].mxu0
      %v2520 = vadd.f32 %v2207, %v2519
      %v2521 = vpop.f32.mrb[0].mxu0
      %2522 = vmatprep.mubr.bf16.mxu0 0
      %2523 = vmatmul.mubr.bf16.gmra.mrb[0].mxu0 %v2408
      %v2524 = vpop.f32.mrb[0].mxu0
      %v2525 = vadd.f32 %v2212, %v2524
      %v2526 = vpop.f32.mrb[0].mxu0
      %v2527 = vpop.f32.mrb[0].mxu0
      %v2528 = vadd.f32 %v2215, %v2527
      %v2529 = vpop.f32.mrb[0].mxu0
      %2530 = vmatprep.mubr.bf16.mxu0 0
      %2531 = vmatmul.mubr.bf16.gmra.mrb[0].mxu0 %v2411
      %v2532 = vpop.f32.mrb[0].mxu0
      %v2533 = vadd.f32 %v2220, %v2532
      %v2534 = vpop.f32.mrb[0].mxu0
      %v2535 = vpop.f32.mrb[0].mxu0
      %v2536 = vadd.f32 %v2223, %v2535
      %v2537 = vpop.f32.mrb[0].mxu0
      %2538 = vmatprep.mubr.bf16.mxu0 0
      %2539 = vmatmul.mubr.bf16.gmra.mrb[0].mxu0 %v2414
      %v2540 = vpop.f32.mrb[0].mxu0
      %v2541 = vadd.f32 %v2228, %v2540
      %v2542 = vpop.f32.mrb[0].mxu0
      %v2543 = vpop.f32.mrb[0].mxu0
      %v2544 = vadd.f32 %v2231, %v2543
      %v2545 = vpop.f32.mrb[0].mxu0
      %2546 = vmatprep.mubr.bf16.mxu0 0
      %2547 = vmatmul.mubr.bf16.gmra.mrb[0].mxu0 %v2417
      %v2548 = vpop.f32.mrb[0].mxu0
      %v2549 = vadd.f32 %v2236, %v2548
      %v2550 = vpop.f32.mrb[0].mxu0
      %v2551 = vpop.f32.mrb[0].mxu0
      %v2552 = vadd.f32 %v2239, %v2551
      %v2553 = vpop.f32.mrb[0].mxu0
      %2554 = vmatprep.mubr.bf16.mxu0 0
      %2555 = vmatmul.mubr.bf16.gmra.mrb[0].mxu0 %v2420
      %v2556 = vpop.f32.mrb[0].mxu0
      %v2557 = vadd.f32 %v2244, %v2556
      %v2558 = vpop.f32.mrb[0].mxu0
      %v2559 = vpop.f32.mrb[0].mxu0
      %v2560 = vadd.f32 %v2247, %v2559
      %v2561 = vpop.f32.mrb[0].mxu0
      %2562 = vmatprep.mubr.bf16.mxu0 0
      %2563 = vmatmul.mubr.bf16.gmra.mrb[0].mxu0 %v2423
      %v2564 = vpop.f32.mrb[0].mxu0
      %v2565 = vadd.f32 %v2252, %v2564
      %v2566 = vpop.f32.mrb[0].mxu0
      %v2567 = vpop.f32.mrb[0].mxu0
      %v2568 = vadd.f32 %v2255, %v2567
      %v2569 = vpop.f32.mrb[0].mxu0
      %2570 = vmatprep.mubr.bf16.mxu0 0
      %2571 = vmatmul.mubr.bf16.gmra.mrb[0].mxu0 %v2426
      %v2572 = vpop.f32.mrb[0].mxu0
      %v2573 = vadd.f32 %v2260, %v2572
      %v2574 = vpop.f32.mrb[0].mxu0
      %v2575 = vpop.f32.mrb[0].mxu0
      %v2576 = vadd.f32 %v2263, %v2575
      %v2577 = vpop.f32.mrb[0].mxu0
      %2578 = vmatprep.mubr.bf16.mxu0 0
      %2579 = vmatmul.mubr.bf16.gmra.mrb[0].mxu0 %v2429
      %v2580 = vpop.f32.mrb[0].mxu0
      %v2581 = vadd.f32 %v2268, %v2580
      %v2582 = vpop.f32.mrb[0].mxu0
      %v2583 = vpop.f32.mrb[0].mxu0
      %v2584 = vadd.f32 %v2271, %v2583
      %v2585 = vpop.f32.mrb[0].mxu0
      %2586 = vmatprep.mubr.bf16.mxu0 0
      %2587 = vmatmul.mubr.bf16.gmra.mrb[0].mxu0 %v2432
      %v2588 = vpop.f32.mrb[0].mxu0
      %v2589 = vadd.f32 %v2276, %v2588
      %v2590 = vpop.f32.mrb[0].mxu0
      %v2591 = vpop.f32.mrb[0].mxu0
      %v2592 = vadd.f32 %v2279, %v2591
      %v2593 = vpop.f32.mrb[0].mxu0
      %2594 = vdwg.mxu0
      %v2595 = vld [vmem:[#allocation2] sm:$0xe]
      %v2596 = vld [vmem:[#allocation2 + $0xc] sm:$0xe]
      %v2597 = vld [vmem:[#allocation2 + $0x18] sm:$0xe]
      %v2598 = vld [vmem:[#allocation2 + $0x24] sm:$0xe]
      %v2599 = vld [vmem:[#allocation2 + $0x30] sm:$0xe]
      %v2600 = vld [vmem:[#allocation2 + $0x3c] sm:$0xe]
      %v2601 = vld [vmem:[#allocation2 + $0x48] sm:$0xe]
      %v2602 = vld [vmem:[#allocation2 + $0x54] sm:$0xe]
      %v2603 = vld [vmem:[#allocation2 + $0x60] sm:$0xe]
      %v2604 = vld [vmem:[#allocation2 + $0x6c] sm:$0xe]
      %v2605 = vld [vmem:[#allocation2 + $0x78] sm:$0xe]
      %v2606 = vld [vmem:[#allocation2 + $0x84] sm:$0xe]
      %v2607 = vld [vmem:[#allocation2 + $0x90] sm:$0xe]
      %v2608 = vld [vmem:[#allocation2 + $0x9c] sm:$0xe]
      %v2609 = vld [vmem:[#allocation2 + $0xa8] sm:$0xe]
      %v2610 = vld [vmem:[#allocation2 + $0xb4] sm:$0xe]
      %vm2643 = vcmask 1042432
      %vm2644 = vcmask 1046532
      %vm2645 = vmor %vm2643, %vm2644
      %v2646 = vrot.slane %v2595, 5
      %v2647 = vrot.slane %v2646, 4
      %v2648 = vrot.slane %v1549, 5
      %v2649 = vsel %vm2645, %v2647, %v2648
      %v2650 = vrot.slane %v2648, 4
      %v2651 = vrot.slane %v1588, 5
      %v2652 = vsel %vm2645, %v2650, %v2651
      %v2653 = vrot.slane %v2596, 5
      %v2654 = vrot.slane %v2653, 4
      %v2655 = vrot.slane %v1551, 5
      %v2656 = vsel %vm2645, %v2654, %v2655
      %v2657 = vrot.slane %v2655, 4
      %v2658 = vrot.slane %v1589, 5
      %v2659 = vsel %vm2645, %v2657, %v2658
      %v2660 = vrot.slane %v2597, 5
      %v2661 = vrot.slane %v2660, 4
      %v2662 = vrot.slane %v1553, 5
      %v2663 = vsel %vm2645, %v2661, %v2662
      %v2664 = vrot.slane %v2662, 4
      %v2665 = vrot.slane %v1590, 5
      %v2666 = vsel %vm2645, %v2664, %v2665
      %v2667 = vrot.slane %v2598, 5
      %v2668 = vrot.slane %v2667, 4
      %v2669 = vrot.slane %v1555, 5
      %v2670 = vsel %vm2645, %v2668, %v2669
      %v2671 = vrot.slane %v2669, 4
      %v2672 = vrot.slane %v1591, 5
      %v2673 = vsel %vm2645, %v2671, %v2672
      %v2674 = vrot.slane %v2599, 5
      %v2675 = vrot.slane %v2674, 4
      %v2676 = vrot.slane %v1557, 5
      %v2677 = vsel %vm2645, %v2675, %v2676
      %v2678 = vrot.slane %v2676, 4
      %v2679 = vrot.slane %v1592, 5
      %v2680 = vsel %vm2645, %v2678, %v2679
      %v2681 = vrot.slane %v2600, 5
      %v2682 = vrot.slane %v2681, 4
      %v2683 = vrot.slane %v1559, 5
      %v2684 = vsel %vm2645, %v2682, %v2683
      %v2685 = vrot.slane %v2683, 4
      %v2686 = vrot.slane %v1593, 5
      %v2687 = vsel %vm2645, %v2685, %v2686
      %v2688 = vrot.slane %v2601, 5
      %v2689 = vrot.slane %v2688, 4
      %v2690 = vrot.slane %v1561, 5
      %v2691 = vsel %vm2645, %v2689, %v2690
      %v2692 = vrot.slane %v2690, 4
      %v2693 = vrot.slane %v1594, 5
      %v2694 = vsel %vm2645, %v2692, %v2693
      %v2695 = vrot.slane %v2602, 5
      %v2696 = vrot.slane %v2695, 4
      %v2697 = vrot.slane %v1563, 5
      %v2698 = vsel %vm2645, %v2696, %v2697
      %v2699 = vrot.slane %v2697, 4
      %v2700 = vrot.slane %v1595, 5
      %v2701 = vsel %vm2645, %v2699, %v2700
      %v2702 = vrot.slane %v2603, 5
      %v2703 = vrot.slane %v2702, 4
      %v2704 = vrot.slane %v1565, 5
      %v2705 = vsel %vm2645, %v2703, %v2704
      %v2706 = vrot.slane %v2704, 4
      %v2707 = vrot.slane %v1596, 5
      %v2708 = vsel %vm2645, %v2706, %v2707
      %v2709 = vrot.slane %v2604, 5
      %v2710 = vrot.slane %v2709, 4
      %v2711 = vrot.slane %v1567, 5
      %v2712 = vsel %vm2645, %v2710, %v2711
      %v2713 = vrot.slane %v2711, 4
      %v2714 = vrot.slane %v1597, 5
      %v2715 = vsel %vm2645, %v2713, %v2714
      %v2716 = vrot.slane %v2605, 5
      %v2717 = vrot.slane %v2716, 4
      %v2718 = vrot.slane %v1569, 5
      %v2719 = vsel %vm2645, %v2717, %v2718
      %v2720 = vrot.slane %v2718, 4
      %v2721 = vrot.slane %v1598, 5
      %v2722 = vsel %vm2645, %v2720, %v2721
      %v2723 = vrot.slane %v2606, 5
      %v2724 = vrot.slane %v2723, 4
      %v2725 = vrot.slane %v1571, 5
      %v2726 = vsel %vm2645, %v2724, %v2725
      %v2727 = vrot.slane %v2725, 4
      %v2728 = vrot.slane %v1599, 5
      %v2729 = vsel %vm2645, %v2727, %v2728
      %v2730 = vrot.slane %v2607, 5
      %v2731 = vrot.slane %v2730, 4
      %v2732 = vrot.slane %v1573, 5
      %v2733 = vsel %vm2645, %v2731, %v2732
      %v2734 = vrot.slane %v2732, 4
      %v2735 = vrot.slane %v1600, 5
      %v2736 = vsel %vm2645, %v2734, %v2735
      %v2737 = vrot.slane %v2608, 5
      %v2738 = vrot.slane %v2737, 4
      %v2739 = vrot.slane %v1575, 5
      %v2740 = vsel %vm2645, %v2738, %v2739
      %v2741 = vrot.slane %v2739, 4
      %v2742 = vrot.slane %v1601, 5
      %v2743 = vsel %vm2645, %v2741, %v2742
      %v2744 = vrot.slane %v2609, 5
      %v2745 = vrot.slane %v2744, 4
      %v2746 = vrot.slane %v1577, 5
      %v2747 = vsel %vm2645, %v2745, %v2746
      %v2748 = vrot.slane %v2746, 4
      %v2749 = vrot.slane %v1602, 5
      %v2750 = vsel %vm2645, %v2748, %v2749
      %v2751 = vrot.slane %v2610, 5
      %v2752 = vrot.slane %v2751, 4
      %v2753 = vrot.slane %v1579, 5
      %v2754 = vsel %vm2645, %v2752, %v2753
      %v2755 = vrot.slane %v2753, 4
      %v2756 = vrot.slane %v1603, 5
      %v2757 = vsel %vm2645, %v2755, %v2756
      %s2758 = scalar_lea.vmem %s3, 64
      %v2759 = vld [vmem:[%s2758] sm:$0xf]
      %v2760 = vld [vmem:[%s2758 + $0x4] sm:$0xf]
      %v2761 = vld [vmem:[%s2758 + $0x8] sm:$0xf]
      %v2762 = vld [vmem:[%s2758 + $0xc] sm:$0xf]
      %v2763 = vld [vmem:[%s2758 + $0x10] sm:$0xf]
      %v2764 = vld [vmem:[%s2758 + $0x14] sm:$0xf]
      %v2765 = vld [vmem:[%s2758 + $0x18] sm:$0xf]
      %v2766 = vld [vmem:[%s2758 + $0x1c] sm:$0xf]
      %v2767 = vunpack.c.l.b16 %v2649
      %v2768 = vunpack.c.l.b16 %v2652
      %v2769 = vunpack.c.l.b16 %v2656
      %v2770 = vunpack.c.l.b16 %v2659
      %v2771 = vunpack.c.l.b16 %v2663
      %v2772 = vunpack.c.l.b16 %v2666
      %v2773 = vunpack.c.l.b16 %v2670
      %v2774 = vunpack.c.l.b16 %v2673
      %v2775 = vunpack.c.l.b16 %v2677
      %v2776 = vunpack.c.l.b16 %v2680
      %v2777 = vunpack.c.l.b16 %v2684
      %v2778 = vunpack.c.l.b16 %v2687
      %v2779 = vunpack.c.l.b16 %v2691
      %v2780 = vunpack.c.l.b16 %v2694
      %v2781 = vunpack.c.l.b16 %v2698
      %v2782 = vunpack.c.l.b16 %v2701
      %v2783 = vunpack.c.l.b16 %v2705
      %v2784 = vunpack.c.l.b16 %v2708
      %v2785 = vunpack.c.l.b16 %v2712
      %v2786 = vunpack.c.l.b16 %v2715
      %v2787 = vunpack.c.l.b16 %v2719
      %v2788 = vunpack.c.l.b16 %v2722
      %v2789 = vunpack.c.l.b16 %v2726
      %v2790 = vunpack.c.l.b16 %v2729
      %v2791 = vunpack.c.l.b16 %v2733
      %v2792 = vunpack.c.l.b16 %v2736
      %v2793 = vunpack.c.l.b16 %v2740
      %v2794 = vunpack.c.l.b16 %v2743
      %v2795 = vunpack.c.l.b16 %v2747
      %v2796 = vunpack.c.l.b16 %v2750
      %v2797 = vunpack.c.l.b16 %v2754
      %v2798 = vunpack.c.l.b16 %v2757
      %v2799 = vpack.c.b16 %v2768, %v2767
      %v2800 = vpack.c.b16 %v2770, %v2769
      %v2801 = vpack.c.b16 %v2772, %v2771
      %v2802 = vpack.c.b16 %v2774, %v2773
      %v2803 = vpack.c.b16 %v2776, %v2775
      %v2804 = vpack.c.b16 %v2778, %v2777
      %v2805 = vpack.c.b16 %v2780, %v2779
      %v2806 = vpack.c.b16 %v2782, %v2781
      %v2807 = vpack.c.b16 %v2784, %v2783
      %v2808 = vpack.c.b16 %v2786, %v2785
      %v2809 = vpack.c.b16 %v2788, %v2787
      %v2810 = vpack.c.b16 %v2790, %v2789
      %v2811 = vpack.c.b16 %v2792, %v2791
      %v2812 = vpack.c.b16 %v2794, %v2793
      %v2813 = vpack.c.b16 %v2796, %v2795
      %v2814 = vpack.c.b16 %v2798, %v2797
      %v2823 = vunpack.c.l.b16 %v2759
      %v2824 = vunpack.c.l.b16 %v2760
      %v2825 = vunpack.c.l.b16 %v2761
      %v2826 = vunpack.c.l.b16 %v2762
      %v2827 = vunpack.c.l.b16 %v2763
      %v2828 = vunpack.c.l.b16 %v2764
      %v2829 = vunpack.c.l.b16 %v2765
      %v2830 = vunpack.c.l.b16 %v2766
      %v2831 = vpack.c.b16 %v2824, %v2823
      %v2832 = vpack.c.b16 %v2826, %v2825
      %v2833 = vpack.c.b16 %v2828, %v2827
      %v2834 = vpack.c.b16 %v2830, %v2829
      %v2840 = vsel %vm2072, %v2799, 0
      %v2843 = vsel %vm2072, %v2800, 0
      %v2846 = vsel %vm2072, %v2801, 0
      %v2849 = vsel %vm2072, %v2802, 0
      %v2852 = vsel %vm2072, %v2803, 0
      %v2855 = vsel %vm2072, %v2804, 0
      %v2858 = vsel %vm2072, %v2805, 0
      %v2861 = vsel %vm2072, %v2806, 0
      %v2864 = vsel %vm2072, %v2807, 0
      %v2867 = vsel %vm2072, %v2808, 0
      %v2870 = vsel %vm2072, %v2809, 0
      %v2873 = vsel %vm2072, %v2810, 0
      %v2876 = vsel %vm2072, %v2811, 0
      %v2879 = vsel %vm2072, %v2812, 0
      %v2882 = vsel %vm2072, %v2813, 0
      %v2885 = vsel %vm2072, %v2814, 0
      %2887 = vmatprep.subr.bf16.mxu0 0
      %2888 = vmatpush1.bf16.msra.mxu0 %v2831
      %2889 = vmatprep.subr.bf16.mxu0 0
      %2890 = vmatpush1.bf16.msra.mxu0 %v2832
      %2891 = vmatprep.subr.bf16.mxu0 0
      %2892 = vmatpush1.bf16.msra.mxu0 %v2833
      %2893 = vmatprep.subr.bf16.mxu0 0
      %2894 = vmatpush1.bf16.msra.mxu0 %v2834
      %2895 = vmatprep.subr.bf16.mxu0 0
      %2896 = vmatpush1.bf16.msra.mxu0 0
      %2897 = vmatprep.subr.bf16.mxu0 0
      %2898 = vmatpush1.bf16.msra.mxu0 0
      %2899 = vmatprep.subr.bf16.mxu0 0
      %2900 = vmatpush1.bf16.msra.mxu0 0
      %2901 = vmatprep.subr.bf16.mxu0 0
      %2902 = vmatpush1.bf16.msra.mxu0 0
      %2903 = vmatprep.subr.bf16.mxu0 0
      %2904 = vmatpush1.bf16.msra.mxu0 0
      %2905 = vmatprep.subr.bf16.mxu0 0
      %2906 = vmatpush1.bf16.msra.mxu0 0
      %2907 = vmatprep.subr.bf16.mxu0 0
      %2908 = vmatpush1.bf16.msra.mxu0 0
      %2909 = vmatprep.subr.bf16.mxu0 0
      %2910 = vmatpush1.bf16.msra.mxu0 0
      %2911 = vmatprep.subr.bf16.mxu0 0
      %2912 = vmatpush1.bf16.msra.mxu0 0
      %2913 = vmatprep.subr.bf16.mxu0 0
      %2914 = vmatpush1.bf16.msra.mxu0 0
      %2915 = vmatprep.subr.bf16.mxu0 0
      %2916 = vmatpush1.bf16.msra.mxu0 0
      %2917 = vmatprep.subr.bf16.mxu0 0
      %2918 = vmatpush1.bf16.msra.mxu0 0
      %2919 = vmatprep.mubr.bf16.mxu0 0
      %2920 = vmatmul.mubr.bf16.gmra.mrb[0].mxu0 %v2840
      %v2921 = vpop.f32.mrb[0].mxu0
      %v2922 = vadd.f32 0.0, %v2921
      %v2923 = vpop.f32.mrb[0].mxu0
      %v2924 = vpop.f32.mrb[0].mxu0
      %v2925 = vadd.f32 0.0, %v2924
      %v2926 = vpop.f32.mrb[0].mxu0
      %2927 = vmatprep.mubr.bf16.mxu0 0
      %2928 = vmatmul.mubr.bf16.gmra.mrb[0].mxu0 %v2843
      %v2929 = vpop.f32.mrb[0].mxu0
      %v2930 = vadd.f32 0.0, %v2929
      %v2931 = vpop.f32.mrb[0].mxu0
      %v2932 = vpop.f32.mrb[0].mxu0
      %v2933 = vadd.f32 0.0, %v2932
      %v2934 = vpop.f32.mrb[0].mxu0
      %2935 = vmatprep.mubr.bf16.mxu0 0
      %2936 = vmatmul.mubr.bf16.gmra.mrb[0].mxu0 %v2846
      %v2937 = vpop.f32.mrb[0].mxu0
      %v2938 = vadd.f32 0.0, %v2937
      %v2939 = vpop.f32.mrb[0].mxu0
      %v2940 = vpop.f32.mrb[0].mxu0
      %v2941 = vadd.f32 0.0, %v2940
      %v2942 = vpop.f32.mrb[0].mxu0
      %2943 = vmatprep.mubr.bf16.mxu0 0
      %2944 = vmatmul.mubr.bf16.gmra.mrb[0].mxu0 %v2849
      %v2945 = vpop.f32.mrb[0].mxu0
      %v2946 = vadd.f32 0.0, %v2945
      %v2947 = vpop.f32.mrb[0].mxu0
      %v2948 = vpop.f32.mrb[0].mxu0
      %v2949 = vadd.f32 0.0, %v2948
      %v2950 = vpop.f32.mrb[0].mxu0
      %2951 = vmatprep.mubr.bf16.mxu0 0
      %2952 = vmatmul.mubr.bf16.gmra.mrb[0].mxu0 %v2852
      %v2953 = vpop.f32.mrb[0].mxu0
      %v2954 = vadd.f32 0.0, %v2953
      %v2955 = vpop.f32.mrb[0].mxu0
      %v2956 = vpop.f32.mrb[0].mxu0
      %v2957 = vadd.f32 0.0, %v2956
      %v2958 = vpop.f32.mrb[0].mxu0
      %2959 = vmatprep.mubr.bf16.mxu0 0
      %2960 = vmatmul.mubr.bf16.gmra.mrb[0].mxu0 %v2855
      %v2961 = vpop.f32.mrb[0].mxu0
      %v2962 = vadd.f32 0.0, %v2961
      %v2963 = vpop.f32.mrb[0].mxu0
      %v2964 = vpop.f32.mrb[0].mxu0
      %v2965 = vadd.f32 0.0, %v2964
      %v2966 = vpop.f32.mrb[0].mxu0
      %2967 = vmatprep.mubr.bf16.mxu0 0
      %2968 = vmatmul.mubr.bf16.gmra.mrb[0].mxu0 %v2858
      %v2969 = vpop.f32.mrb[0].mxu0
      %v2970 = vadd.f32 0.0, %v2969
      %v2971 = vpop.f32.mrb[0].mxu0
      %v2972 = vpop.f32.mrb[0].mxu0
      %v2973 = vadd.f32 0.0, %v2972
      %v2974 = vpop.f32.mrb[0].mxu0
      %2975 = vmatprep.mubr.bf16.mxu0 0
      %2976 = vmatmul.mubr.bf16.gmra.mrb[0].mxu0 %v2861
      %v2977 = vpop.f32.mrb[0].mxu0
      %v2978 = vadd.f32 0.0, %v2977
      %v2979 = vpop.f32.mrb[0].mxu0
      %v2980 = vpop.f32.mrb[0].mxu0
      %v2981 = vadd.f32 0.0, %v2980
      %v2982 = vpop.f32.mrb[0].mxu0
      %2983 = vmatprep.mubr.bf16.mxu0 0
      %2984 = vmatmul.mubr.bf16.gmra.mrb[0].mxu0 %v2864
      %v2985 = vpop.f32.mrb[0].mxu0
      %v2986 = vadd.f32 0.0, %v2985
      %v2987 = vpop.f32.mrb[0].mxu0
      %v2988 = vpop.f32.mrb[0].mxu0
      %v2989 = vadd.f32 0.0, %v2988
      %v2990 = vpop.f32.mrb[0].mxu0
      %2991 = vmatprep.mubr.bf16.mxu0 0
      %2992 = vmatmul.mubr.bf16.gmra.mrb[0].mxu0 %v2867
      %v2993 = vpop.f32.mrb[0].mxu0
      %v2994 = vadd.f32 0.0, %v2993
      %v2995 = vpop.f32.mrb[0].mxu0
      %v2996 = vpop.f32.mrb[0].mxu0
      %v2997 = vadd.f32 0.0, %v2996
      %v2998 = vpop.f32.mrb[0].mxu0
      %2999 = vmatprep.mubr.bf16.mxu0 0
      %3000 = vmatmul.mubr.bf16.gmra.mrb[0].mxu0 %v2870
      %v3001 = vpop.f32.mrb[0].mxu0
      %v3002 = vadd.f32 0.0, %v3001
      %v3003 = vpop.f32.mrb[0].mxu0
      %v3004 = vpop.f32.mrb[0].mxu0
      %v3005 = vadd.f32 0.0, %v3004
      %v3006 = vpop.f32.mrb[0].mxu0
      %3007 = vmatprep.mubr.bf16.mxu0 0
      %3008 = vmatmul.mubr.bf16.gmra.mrb[0].mxu0 %v2873
      %v3009 = vpop.f32.mrb[0].mxu0
      %v3010 = vadd.f32 0.0, %v3009
      %v3011 = vpop.f32.mrb[0].mxu0
      %v3012 = vpop.f32.mrb[0].mxu0
      %v3013 = vadd.f32 0.0, %v3012
      %v3014 = vpop.f32.mrb[0].mxu0
      %3015 = vmatprep.mubr.bf16.mxu0 0
      %3016 = vmatmul.mubr.bf16.gmra.mrb[0].mxu0 %v2876
      %v3017 = vpop.f32.mrb[0].mxu0
      %v3018 = vadd.f32 0.0, %v3017
      %v3019 = vpop.f32.mrb[0].mxu0
      %v3020 = vpop.f32.mrb[0].mxu0
      %v3021 = vadd.f32 0.0, %v3020
      %v3022 = vpop.f32.mrb[0].mxu0
      %3023 = vmatprep.mubr.bf16.mxu0 0
      %3024 = vmatmul.mubr.bf16.gmra.mrb[0].mxu0 %v2879
      %v3025 = vpop.f32.mrb[0].mxu0
      %v3026 = vadd.f32 0.0, %v3025
      %v3027 = vpop.f32.mrb[0].mxu0
      %v3028 = vpop.f32.mrb[0].mxu0
      %v3029 = vadd.f32 0.0, %v3028
      %v3030 = vpop.f32.mrb[0].mxu0
      %3031 = vmatprep.mubr.bf16.mxu0 0
      %3032 = vmatmul.mubr.bf16.gmra.mrb[0].mxu0 %v2882
      %v3033 = vpop.f32.mrb[0].mxu0
      %v3034 = vadd.f32 0.0, %v3033
      %v3035 = vpop.f32.mrb[0].mxu0
      %v3036 = vpop.f32.mrb[0].mxu0
      %v3037 = vadd.f32 0.0, %v3036
      %v3038 = vpop.f32.mrb[0].mxu0
      %3039 = vmatprep.mubr.bf16.mxu0 0
      %3040 = vmatmul.mubr.bf16.gmra.mrb[0].mxu0 %v2885
      %v3041 = vpop.f32.mrb[0].mxu0
      %v3042 = vadd.f32 0.0, %v3041
      %v3043 = vpop.f32.mrb[0].mxu0
      %v3044 = vpop.f32.mrb[0].mxu0
      %v3045 = vadd.f32 0.0, %v3044
      %v3046 = vpop.f32.mrb[0].mxu0
      %3047 = vdwg.mxu0
      %v3048 = vadd.f32 %v2469, %v2922
      %v3049 = vadd.f32 %v2472, %v2925
      %v3050 = vadd.f32 %v2477, %v2930
      %v3051 = vadd.f32 %v2480, %v2933
      %v3052 = vadd.f32 %v2485, %v2938
      %v3053 = vadd.f32 %v2488, %v2941
      %v3054 = vadd.f32 %v2493, %v2946
      %v3055 = vadd.f32 %v2496, %v2949
      %v3056 = vadd.f32 %v2501, %v2954
      %v3057 = vadd.f32 %v2504, %v2957
      %v3058 = vadd.f32 %v2509, %v2962
      %v3059 = vadd.f32 %v2512, %v2965
      %v3060 = vadd.f32 %v2517, %v2970
      %v3061 = vadd.f32 %v2520, %v2973
      %v3062 = vadd.f32 %v2525, %v2978
      %v3063 = vadd.f32 %v2528, %v2981
      %v3064 = vadd.f32 %v2533, %v2986
      %v3065 = vadd.f32 %v2536, %v2989
      %v3066 = vadd.f32 %v2541, %v2994
      %v3067 = vadd.f32 %v2544, %v2997
      %v3068 = vadd.f32 %v2549, %v3002
      %v3069 = vadd.f32 %v2552, %v3005
      %v3070 = vadd.f32 %v2557, %v3010
      %v3071 = vadd.f32 %v2560, %v3013
      %v3072 = vadd.f32 %v2565, %v3018
      %v3073 = vadd.f32 %v2568, %v3021
      %v3074 = vadd.f32 %v2573, %v3026
      %v3075 = vadd.f32 %v2576, %v3029
      %v3076 = vadd.f32 %v2581, %v3034
      %v3077 = vadd.f32 %v2584, %v3037
      %v3078 = vadd.f32 %v2589, %v3042
      %v3079 = vadd.f32 %v2592, %v3045
      %v3080 = vld [vmem:[%s1433] sm:$0xf]
      %v3081 = vld [vmem:[%s1433 + $0x4] sm:$0xf]
      %v3082 = vld [vmem:[%s1433 + $0xc] sm:$0xf]
      %v3083 = vld [vmem:[%s1433 + $0x10] sm:$0xf]
      %v3084 = vld [vmem:[%s1433 + $0x18] sm:$0xf]
      %v3085 = vld [vmem:[%s1433 + $0x1c] sm:$0xf]
      %v3086 = vld [vmem:[%s1433 + $0x24] sm:$0xf]
      %v3087 = vld [vmem:[%s1433 + $0x28] sm:$0xf]
      %v3088 = vld [vmem:[%s1433 + $0x30] sm:$0xf]
      %v3089 = vld [vmem:[%s1433 + $0x34] sm:$0xf]
      %v3090 = vld [vmem:[%s1433 + $0x3c] sm:$0xf]
      %v3091 = vld [vmem:[%s1433 + $0x40] sm:$0xf]
      %v3092 = vld [vmem:[%s1433 + $0x48] sm:$0xf]
      %v3093 = vld [vmem:[%s1433 + $0x4c] sm:$0xf]
      %v3094 = vld [vmem:[%s1433 + $0x54] sm:$0xf]
      %v3095 = vld [vmem:[%s1433 + $0x58] sm:$0xf]
      %v3096 = vld [vmem:[%s1433 + $0x60] sm:$0xf]
      %v3097 = vld [vmem:[%s1433 + $0x64] sm:$0xf]
      %v3098 = vld [vmem:[%s1433 + $0x6c] sm:$0xf]
      %v3099 = vld [vmem:[%s1433 + $0x70] sm:$0xf]
      %v3100 = vld [vmem:[%s1433 + $0x78] sm:$0xf]
      %v3101 = vld [vmem:[%s1433 + $0x7c] sm:$0xf]
      %v3102 = vld [vmem:[%s1433 + $0x84] sm:$0xf]
      %v3103 = vld [vmem:[%s1433 + $0x88] sm:$0xf]
      %v3104 = vld [vmem:[%s1433 + $0x90] sm:$0xf]
      %v3105 = vld [vmem:[%s1433 + $0x94] sm:$0xf]
      %v3106 = vld [vmem:[%s1433 + $0x9c] sm:$0xf]
      %v3107 = vld [vmem:[%s1433 + $0xa0] sm:$0xf]
      %v3108 = vld [vmem:[%s1433 + $0xa8] sm:$0xf]
      %v3109 = vld [vmem:[%s1433 + $0xac] sm:$0xf]
      %v3110 = vld [vmem:[%s1433 + $0xb4] sm:$0xf]
      %v3111 = vld [vmem:[%s1433 + $0xb8] sm:$0xf]
      %s3112 = scalar_lea.vmem %s3, 96
      %v3113 = vld [vmem:[%s3112] sm:$0xf]
      %v3114 = vld [vmem:[%s3112 + $0x4] sm:$0xf]
      %v3115 = vld [vmem:[%s3112 + $0x8] sm:$0xf]
      %v3116 = vld [vmem:[%s3112 + $0xc] sm:$0xf]
      %v3117 = vld [vmem:[%s3112 + $0x10] sm:$0xf]
      %v3118 = vld [vmem:[%s3112 + $0x14] sm:$0xf]
      %v3119 = vld [vmem:[%s3112 + $0x18] sm:$0xf]
      %v3120 = vld [vmem:[%s3112 + $0x1c] sm:$0xf]
      %v3153 = vunpack.c.l.b16 %v3080
      %v3154 = vunpack.c.l.b16 %v3081
      %v3155 = vunpack.c.l.b16 %v3082
      %v3156 = vunpack.c.l.b16 %v3083
      %v3157 = vunpack.c.l.b16 %v3084
      %v3158 = vunpack.c.l.b16 %v3085
      %v3159 = vunpack.c.l.b16 %v3086
      %v3160 = vunpack.c.l.b16 %v3087
      %v3161 = vunpack.c.l.b16 %v3088
      %v3162 = vunpack.c.l.b16 %v3089
      %v3163 = vunpack.c.l.b16 %v3090
      %v3164 = vunpack.c.l.b16 %v3091
      %v3165 = vunpack.c.l.b16 %v3092
      %v3166 = vunpack.c.l.b16 %v3093
      %v3167 = vunpack.c.l.b16 %v3094
      %v3168 = vunpack.c.l.b16 %v3095
      %v3169 = vunpack.c.l.b16 %v3096
      %v3170 = vunpack.c.l.b16 %v3097
      %v3171 = vunpack.c.l.b16 %v3098
      %v3172 = vunpack.c.l.b16 %v3099
      %v3173 = vunpack.c.l.b16 %v3100
      %v3174 = vunpack.c.l.b16 %v3101
      %v3175 = vunpack.c.l.b16 %v3102
      %v3176 = vunpack.c.l.b16 %v3103
      %v3177 = vunpack.c.l.b16 %v3104
      %v3178 = vunpack.c.l.b16 %v3105
      %v3179 = vunpack.c.l.b16 %v3106
      %v3180 = vunpack.c.l.b16 %v3107
      %v3181 = vunpack.c.l.b16 %v3108
      %v3182 = vunpack.c.l.b16 %v3109
      %v3183 = vunpack.c.l.b16 %v3110
      %v3184 = vunpack.c.l.b16 %v3111
      %v3185 = vpack.c.b16 %v3154, %v3153
      %v3186 = vpack.c.b16 %v3156, %v3155
      %v3187 = vpack.c.b16 %v3158, %v3157
      %v3188 = vpack.c.b16 %v3160, %v3159
      %v3189 = vpack.c.b16 %v3162, %v3161
      %v3190 = vpack.c.b16 %v3164, %v3163
      %v3191 = vpack.c.b16 %v3166, %v3165
      %v3192 = vpack.c.b16 %v3168, %v3167
      %v3193 = vpack.c.b16 %v3170, %v3169
      %v3194 = vpack.c.b16 %v3172, %v3171
      %v3195 = vpack.c.b16 %v3174, %v3173
      %v3196 = vpack.c.b16 %v3176, %v3175
      %v3197 = vpack.c.b16 %v3178, %v3177
      %v3198 = vpack.c.b16 %v3180, %v3179
      %v3199 = vpack.c.b16 %v3182, %v3181
      %v3200 = vpack.c.b16 %v3184, %v3183
      %v3209 = vunpack.c.l.b16 %v3113
      %v3210 = vunpack.c.l.b16 %v3114
      %v3211 = vunpack.c.l.b16 %v3115
      %v3212 = vunpack.c.l.b16 %v3116
      %v3213 = vunpack.c.l.b16 %v3117
      %v3214 = vunpack.c.l.b16 %v3118
      %v3215 = vunpack.c.l.b16 %v3119
      %v3216 = vunpack.c.l.b16 %v3120
      %v3217 = vpack.c.b16 %v3210, %v3209
      %v3218 = vpack.c.b16 %v3212, %v3211
      %v3219 = vpack.c.b16 %v3214, %v3213
      %v3220 = vpack.c.b16 %v3216, %v3215
      %v3226 = vsel %vm2072, %v3185, 0
      %v3229 = vsel %vm2072, %v3186, 0
      %v3232 = vsel %vm2072, %v3187, 0
      %v3235 = vsel %vm2072, %v3188, 0
      %v3238 = vsel %vm2072, %v3189, 0
      %v3241 = vsel %vm2072, %v3190, 0
      %v3244 = vsel %vm2072, %v3191, 0
      %v3247 = vsel %vm2072, %v3192, 0
      %v3250 = vsel %vm2072, %v3193, 0
      %v3253 = vsel %vm2072, %v3194, 0
      %v3256 = vsel %vm2072, %v3195, 0
      %v3259 = vsel %vm2072, %v3196, 0
      %v3262 = vsel %vm2072, %v3197, 0
      %v3265 = vsel %vm2072, %v3198, 0
      %v3268 = vsel %vm2072, %v3199, 0
      %v3271 = vsel %vm2072, %v3200, 0
      %3273 = vmatprep.subr.bf16.mxu0 0
      %3274 = vmatpush1.bf16.msra.mxu0 %v3217
      %3275 = vmatprep.subr.bf16.mxu0 0
      %3276 = vmatpush1.bf16.msra.mxu0 %v3218
      %3277 = vmatprep.subr.bf16.mxu0 0
      %3278 = vmatpush1.bf16.msra.mxu0 %v3219
      %3279 = vmatprep.subr.bf16.mxu0 0
      %3280 = vmatpush1.bf16.msra.mxu0 %v3220
      %3281 = vmatprep.subr.bf16.mxu0 0
      %3282 = vmatpush1.bf16.msra.mxu0 0
      %3283 = vmatprep.subr.bf16.mxu0 0
      %3284 = vmatpush1.bf16.msra.mxu0 0
      %3285 = vmatprep.subr.bf16.mxu0 0
      %3286 = vmatpush1.bf16.msra.mxu0 0
      %3287 = vmatprep.subr.bf16.mxu0 0
      %3288 = vmatpush1.bf16.msra.mxu0 0
      %3289 = vmatprep.subr.bf16.mxu0 0
      %3290 = vmatpush1.bf16.msra.mxu0 0
      %3291 = vmatprep.subr.bf16.mxu0 0
      %3292 = vmatpush1.bf16.msra.mxu0 0
      %3293 = vmatprep.subr.bf16.mxu0 0
      %3294 = vmatpush1.bf16.msra.mxu0 0
      %3295 = vmatprep.subr.bf16.mxu0 0
      %3296 = vmatpush1.bf16.msra.mxu0 0
      %3297 = vmatprep.subr.bf16.mxu0 0
      %3298 = vmatpush1.bf16.msra.mxu0 0
      %3299 = vmatprep.subr.bf16.mxu0 0
      %3300 = vmatpush1.bf16.msra.mxu0 0
      %3301 = vmatprep.subr.bf16.mxu0 0
      %3302 = vmatpush1.bf16.msra.mxu0 0
      %3303 = vmatprep.subr.bf16.mxu0 0
      %3304 = vmatpush1.bf16.msra.mxu0 0
      %3305 = vmatprep.mubr.bf16.mxu0 0
      %3306 = vmatmul.mubr.bf16.gmra.mrb[0].mxu0 %v3226
      %v3307 = vpop.f32.mrb[0].mxu0
      %v3308 = vadd.f32 0.0, %v3307
      %v3309 = vpop.f32.mrb[0].mxu0
      %v3310 = vpop.f32.mrb[0].mxu0
      %v3311 = vadd.f32 0.0, %v3310
      %v3312 = vpop.f32.mrb[0].mxu0
      %3313 = vmatprep.mubr.bf16.mxu0 0
      %3314 = vmatmul.mubr.bf16.gmra.mrb[0].mxu0 %v3229
      %v3315 = vpop.f32.mrb[0].mxu0
      %v3316 = vadd.f32 0.0, %v3315
      %v3317 = vpop.f32.mrb[0].mxu0
      %v3318 = vpop.f32.mrb[0].mxu0
      %v3319 = vadd.f32 0.0, %v3318
      %v3320 = vpop.f32.mrb[0].mxu0
      %3321 = vmatprep.mubr.bf16.mxu0 0
      %3322 = vmatmul.mubr.bf16.gmra.mrb[0].mxu0 %v3232
      %v3323 = vpop.f32.mrb[0].mxu0
      %v3324 = vadd.f32 0.0, %v3323
      %v3325 = vpop.f32.mrb[0].mxu0
      %v3326 = vpop.f32.mrb[0].mxu0
      %v3327 = vadd.f32 0.0, %v3326
      %v3328 = vpop.f32.mrb[0].mxu0
      %3329 = vmatprep.mubr.bf16.mxu0 0
      %3330 = vmatmul.mubr.bf16.gmra.mrb[0].mxu0 %v3235
      %v3331 = vpop.f32.mrb[0].mxu0
      %v3332 = vadd.f32 0.0, %v3331
      %v3333 = vpop.f32.mrb[0].mxu0
      %v3334 = vpop.f32.mrb[0].mxu0
      %v3335 = vadd.f32 0.0, %v3334
      %v3336 = vpop.f32.mrb[0].mxu0
      %3337 = vmatprep.mubr.bf16.mxu0 0
      %3338 = vmatmul.mubr.bf16.gmra.mrb[0].mxu0 %v3238
      %v3339 = vpop.f32.mrb[0].mxu0
      %v3340 = vadd.f32 0.0, %v3339
      %v3341 = vpop.f32.mrb[0].mxu0
      %v3342 = vpop.f32.mrb[0].mxu0
      %v3343 = vadd.f32 0.0, %v3342
      %v3344 = vpop.f32.mrb[0].mxu0
      %3345 = vmatprep.mubr.bf16.mxu0 0
      %3346 = vmatmul.mubr.bf16.gmra.mrb[0].mxu0 %v3241
      %v3347 = vpop.f32.mrb[0].mxu0
      %v3348 = vadd.f32 0.0, %v3347
      %v3349 = vpop.f32.mrb[0].mxu0
      %v3350 = vpop.f32.mrb[0].mxu0
      %v3351 = vadd.f32 0.0, %v3350
      %v3352 = vpop.f32.mrb[0].mxu0
      %3353 = vmatprep.mubr.bf16.mxu0 0
      %3354 = vmatmul.mubr.bf16.gmra.mrb[0].mxu0 %v3244
      %v3355 = vpop.f32.mrb[0].mxu0
      %v3356 = vadd.f32 0.0, %v3355
      %v3357 = vpop.f32.mrb[0].mxu0
      %v3358 = vpop.f32.mrb[0].mxu0
      %v3359 = vadd.f32 0.0, %v3358
      %v3360 = vpop.f32.mrb[0].mxu0
      %3361 = vmatprep.mubr.bf16.mxu0 0
      %3362 = vmatmul.mubr.bf16.gmra.mrb[0].mxu0 %v3247
      %v3363 = vpop.f32.mrb[0].mxu0
      %v3364 = vadd.f32 0.0, %v3363
      %v3365 = vpop.f32.mrb[0].mxu0
      %v3366 = vpop.f32.mrb[0].mxu0
      %v3367 = vadd.f32 0.0, %v3366
      %v3368 = vpop.f32.mrb[0].mxu0
      %3369 = vmatprep.mubr.bf16.mxu0 0
      %3370 = vmatmul.mubr.bf16.gmra.mrb[0].mxu0 %v3250
      %v3371 = vpop.f32.mrb[0].mxu0
      %v3372 = vadd.f32 0.0, %v3371
      %v3373 = vpop.f32.mrb[0].mxu0
      %v3374 = vpop.f32.mrb[0].mxu0
      %v3375 = vadd.f32 0.0, %v3374
      %v3376 = vpop.f32.mrb[0].mxu0
      %3377 = vmatprep.mubr.bf16.mxu0 0
      %3378 = vmatmul.mubr.bf16.gmra.mrb[0].mxu0 %v3253
      %v3379 = vpop.f32.mrb[0].mxu0
      %v3380 = vadd.f32 0.0, %v3379
      %v3381 = vpop.f32.mrb[0].mxu0
      %v3382 = vpop.f32.mrb[0].mxu0
      %v3383 = vadd.f32 0.0, %v3382
      %v3384 = vpop.f32.mrb[0].mxu0
      %3385 = vmatprep.mubr.bf16.mxu0 0
      %3386 = vmatmul.mubr.bf16.gmra.mrb[0].mxu0 %v3256
      %v3387 = vpop.f32.mrb[0].mxu0
      %v3388 = vadd.f32 0.0, %v3387
      %v3389 = vpop.f32.mrb[0].mxu0
      %v3390 = vpop.f32.mrb[0].mxu0
      %v3391 = vadd.f32 0.0, %v3390
      %v3392 = vpop.f32.mrb[0].mxu0
      %3393 = vmatprep.mubr.bf16.mxu0 0
      %3394 = vmatmul.mubr.bf16.gmra.mrb[0].mxu0 %v3259
      %v3395 = vpop.f32.mrb[0].mxu0
      %v3396 = vadd.f32 0.0, %v3395
      %v3397 = vpop.f32.mrb[0].mxu0
      %v3398 = vpop.f32.mrb[0].mxu0
      %v3399 = vadd.f32 0.0, %v3398
      %v3400 = vpop.f32.mrb[0].mxu0
      %3401 = vmatprep.mubr.bf16.mxu0 0
      %3402 = vmatmul.mubr.bf16.gmra.mrb[0].mxu0 %v3262
      %v3403 = vpop.f32.mrb[0].mxu0
      %v3404 = vadd.f32 0.0, %v3403
      %v3405 = vpop.f32.mrb[0].mxu0
      %v3406 = vpop.f32.mrb[0].mxu0
      %v3407 = vadd.f32 0.0, %v3406
      %v3408 = vpop.f32.mrb[0].mxu0
      %3409 = vmatprep.mubr.bf16.mxu0 0
      %3410 = vmatmul.mubr.bf16.gmra.mrb[0].mxu0 %v3265
      %v3411 = vpop.f32.mrb[0].mxu0
      %v3412 = vadd.f32 0.0, %v3411
      %v3413 = vpop.f32.mrb[0].mxu0
      %v3414 = vpop.f32.mrb[0].mxu0
      %v3415 = vadd.f32 0.0, %v3414
      %v3416 = vpop.f32.mrb[0].mxu0
      %3417 = vmatprep.mubr.bf16.mxu0 0
      %3418 = vmatmul.mubr.bf16.gmra.mrb[0].mxu0 %v3268
      %v3419 = vpop.f32.mrb[0].mxu0
      %v3420 = vadd.f32 0.0, %v3419
      %v3421 = vpop.f32.mrb[0].mxu0
      %v3422 = vpop.f32.mrb[0].mxu0
      %v3423 = vadd.f32 0.0, %v3422
      %v3424 = vpop.f32.mrb[0].mxu0
      %3425 = vmatprep.mubr.bf16.mxu0 0
      %3426 = vmatmul.mubr.bf16.gmra.mrb[0].mxu0 %v3271
      %v3427 = vpop.f32.mrb[0].mxu0
      %v3428 = vadd.f32 0.0, %v3427
      %v3429 = vpop.f32.mrb[0].mxu0
      %v3430 = vpop.f32.mrb[0].mxu0
      %v3431 = vadd.f32 0.0, %v3430
      %v3432 = vpop.f32.mrb[0].mxu0
      %3433 = vdwg.mxu0
      %v3434 = vadd.f32 %v3048, %v3308
      %v3435 = vadd.f32 %v3049, %v3311
      %v3436 = vadd.f32 %v3050, %v3316
      %v3437 = vadd.f32 %v3051, %v3319
      %v3438 = vadd.f32 %v3052, %v3324
      %v3439 = vadd.f32 %v3053, %v3327
      %v3440 = vadd.f32 %v3054, %v3332
      %v3441 = vadd.f32 %v3055, %v3335
      %v3442 = vadd.f32 %v3056, %v3340
      %v3443 = vadd.f32 %v3057, %v3343
      %v3444 = vadd.f32 %v3058, %v3348
      %v3445 = vadd.f32 %v3059, %v3351
      %v3446 = vadd.f32 %v3060, %v3356
      %v3447 = vadd.f32 %v3061, %v3359
      %v3448 = vadd.f32 %v3062, %v3364
      %v3449 = vadd.f32 %v3063, %v3367
      %v3450 = vadd.f32 %v3064, %v3372
      %v3451 = vadd.f32 %v3065, %v3375
      %v3452 = vadd.f32 %v3066, %v3380
      %v3453 = vadd.f32 %v3067, %v3383
      %v3454 = vadd.f32 %v3068, %v3388
      %v3455 = vadd.f32 %v3069, %v3391
      %v3456 = vadd.f32 %v3070, %v3396
      %v3457 = vadd.f32 %v3071, %v3399
      %v3458 = vadd.f32 %v3072, %v3404
      %v3459 = vadd.f32 %v3073, %v3407
      %v3460 = vadd.f32 %v3074, %v3412
      %v3461 = vadd.f32 %v3075, %v3415
      %v3462 = vadd.f32 %v3076, %v3420
      %v3463 = vadd.f32 %v3077, %v3423
      %v3464 = vadd.f32 %v3078, %v3428
      %v3465 = vadd.f32 %v3079, %v3431
      %v3466 = vld [vmem:[%s1433] sm:$0xf]
      %v3467 = vld [vmem:[%s1433 + $0x4] sm:$0xf]
      %v3468 = vld [vmem:[%s1433 + $0x8] sm:$0x1]
      %v3469 = vld [vmem:[%s1433 + $0xc] sm:$0xf]
      %v3470 = vld [vmem:[%s1433 + $0x10] sm:$0xf]
      %v3471 = vld [vmem:[%s1433 + $0x14] sm:$0x1]
      %v3472 = vld [vmem:[%s1433 + $0x18] sm:$0xf]
      %v3473 = vld [vmem:[%s1433 + $0x1c] sm:$0xf]
      %v3474 = vld [vmem:[%s1433 + $0x20] sm:$0x1]
      %v3475 = vld [vmem:[%s1433 + $0x24] sm:$0xf]
      %v3476 = vld [vmem:[%s1433 + $0x28] sm:$0xf]
      %v3477 = vld [vmem:[%s1433 + $0x2c] sm:$0x1]
      %v3478 = vld [vmem:[%s1433 + $0x30] sm:$0xf]
      %v3479 = vld [vmem:[%s1433 + $0x34] sm:$0xf]
      %v3480 = vld [vmem:[%s1433 + $0x38] sm:$0x1]
      %v3481 = vld [vmem:[%s1433 + $0x3c] sm:$0xf]
      %v3482 = vld [vmem:[%s1433 + $0x40] sm:$0xf]
      %v3483 = vld [vmem:[%s1433 + $0x44] sm:$0x1]
      %v3484 = vld [vmem:[%s1433 + $0x48] sm:$0xf]
      %v3485 = vld [vmem:[%s1433 + $0x4c] sm:$0xf]
      %v3486 = vld [vmem:[%s1433 + $0x50] sm:$0x1]
      %v3487 = vld [vmem:[%s1433 + $0x54] sm:$0xf]
      %v3488 = vld [vmem:[%s1433 + $0x58] sm:$0xf]
      %v3489 = vld [vmem:[%s1433 + $0x5c] sm:$0x1]
      %v3490 = vld [vmem:[%s1433 + $0x60] sm:$0xf]
      %v3491 = vld [vmem:[%s1433 + $0x64] sm:$0xf]
      %v3492 = vld [vmem:[%s1433 + $0x68] sm:$0x1]
      %v3493 = vld [vmem:[%s1433 + $0x6c] sm:$0xf]
      %v3494 = vld [vmem:[%s1433 + $0x70] sm:$0xf]
      %v3495 = vld [vmem:[%s1433 + $0x74] sm:$0x1]
      %v3496 = vld [vmem:[%s1433 + $0x78] sm:$0xf]
      %v3497 = vld [vmem:[%s1433 + $0x7c] sm:$0xf]
      %v3498 = vld [vmem:[%s1433 + $0x80] sm:$0x1]
      %v3499 = vld [vmem:[%s1433 + $0x84] sm:$0xf]
      %v3500 = vld [vmem:[%s1433 + $0x88] sm:$0xf]
      %v3501 = vld [vmem:[%s1433 + $0x8c] sm:$0x1]
      %v3502 = vld [vmem:[%s1433 + $0x90] sm:$0xf]
      %v3503 = vld [vmem:[%s1433 + $0x94] sm:$0xf]
      %v3504 = vld [vmem:[%s1433 + $0x98] sm:$0x1]
      %v3505 = vld [vmem:[%s1433 + $0x9c] sm:$0xf]
      %v3506 = vld [vmem:[%s1433 + $0xa0] sm:$0xf]
      %v3507 = vld [vmem:[%s1433 + $0xa4] sm:$0x1]
      %v3508 = vld [vmem:[%s1433 + $0xa8] sm:$0xf]
      %v3509 = vld [vmem:[%s1433 + $0xac] sm:$0xf]
      %v3510 = vld [vmem:[%s1433 + $0xb0] sm:$0x1]
      %v3511 = vld [vmem:[%s1433 + $0xb4] sm:$0xf]
      %v3512 = vld [vmem:[%s1433 + $0xb8] sm:$0xf]
      %v3513 = vld [vmem:[%s1433 + $0xbc] sm:$0x1]
      %v3515 = vshrl.u32 %v3466, 16
      %v3517 = vrot.slane %v3515, 4
      %v3518 = vshll.u32 %v3466, 16
      %v3520 = vrot.slane %v3518, 5
      %v3521 = vor.u32 %v3517, %v3520
      %v3522 = vrot.slane %v3521, 4
      %v3524 = vshll.u32 %v3467, 16
      %v3526 = vrot.slane %v3524, 5
      %v3527 = vsel %vm1606, %v3522, %v3526
      %v3528 = vshrl.u32 %v3467, 16
      %v3530 = vrot.slane %v3528, 4
      %v3531 = vor.u32 %v3530, %v3526
      %v3532 = vrot.slane %v3531, 4
      %v3534 = vshll.u32 %v3468, 16
      %v3536 = vrot.slane %v3534, 5
      %v3537 = vsel %vm1606, %v3532, %v3536
      %v3539 = vshrl.u32 %v3469, 16
      %v3541 = vrot.slane %v3539, 4
      %v3542 = vshll.u32 %v3469, 16
      %v3544 = vrot.slane %v3542, 5
      %v3545 = vor.u32 %v3541, %v3544
      %v3546 = vrot.slane %v3545, 4
      %v3548 = vshll.u32 %v3470, 16
      %v3550 = vrot.slane %v3548, 5
      %v3551 = vsel %vm1606, %v3546, %v3550
      %v3552 = vshrl.u32 %v3470, 16
      %v3554 = vrot.slane %v3552, 4
      %v3555 = vor.u32 %v3554, %v3550
      %v3556 = vrot.slane %v3555, 4
      %v3558 = vshll.u32 %v3471, 16
      %v3560 = vrot.slane %v3558, 5
      %v3561 = vsel %vm1606, %v3556, %v3560
      %v3563 = vshrl.u32 %v3472, 16
      %v3565 = vrot.slane %v3563, 4
      %v3566 = vshll.u32 %v3472, 16
      %v3568 = vrot.slane %v3566, 5
      %v3569 = vor.u32 %v3565, %v3568
      %v3570 = vrot.slane %v3569, 4
      %v3572 = vshll.u32 %v3473, 16
      %v3574 = vrot.slane %v3572, 5
      %v3575 = vsel %vm1606, %v3570, %v3574
      %v3576 = vshrl.u32 %v3473, 16
      %v3578 = vrot.slane %v3576, 4
      %v3579 = vor.u32 %v3578, %v3574
      %v3580 = vrot.slane %v3579, 4
      %v3582 = vshll.u32 %v3474, 16
      %v3584 = vrot.slane %v3582, 5
      %v3585 = vsel %vm1606, %v3580, %v3584
      %v3587 = vshrl.u32 %v3475, 16
      %v3589 = vrot.slane %v3587, 4
      %v3590 = vshll.u32 %v3475, 16
      %v3592 = vrot.slane %v3590, 5
      %v3593 = vor.u32 %v3589, %v3592
      %v3594 = vrot.slane %v3593, 4
      %v3596 = vshll.u32 %v3476, 16
      %v3598 = vrot.slane %v3596, 5
      %v3599 = vsel %vm1606, %v3594, %v3598
      %v3600 = vshrl.u32 %v3476, 16
      %v3602 = vrot.slane %v3600, 4
      %v3603 = vor.u32 %v3602, %v3598
      %v3604 = vrot.slane %v3603, 4
      %v3606 = vshll.u32 %v3477, 16
      %v3608 = vrot.slane %v3606, 5
      %v3609 = vsel %vm1606, %v3604, %v3608
      %v3611 = vshrl.u32 %v3478, 16
      %v3613 = vrot.slane %v3611, 4
      %v3614 = vshll.u32 %v3478, 16
      %v3616 = vrot.slane %v3614, 5
      %v3617 = vor.u32 %v3613, %v3616
      %v3618 = vrot.slane %v3617, 4
      %v3620 = vshll.u32 %v3479, 16
      %v3622 = vrot.slane %v3620, 5
      %v3623 = vsel %vm1606, %v3618, %v3622
      %v3624 = vshrl.u32 %v3479, 16
      %v3626 = vrot.slane %v3624, 4
      %v3627 = vor.u32 %v3626, %v3622
      %v3628 = vrot.slane %v3627, 4
      %v3630 = vshll.u32 %v3480, 16
      %v3632 = vrot.slane %v3630, 5
      %v3633 = vsel %vm1606, %v3628, %v3632
      %v3635 = vshrl.u32 %v3481, 16
      %v3637 = vrot.slane %v3635, 4
      %v3638 = vshll.u32 %v3481, 16
      %v3640 = vrot.slane %v3638, 5
      %v3641 = vor.u32 %v3637, %v3640
      %v3642 = vrot.slane %v3641, 4
      %v3644 = vshll.u32 %v3482, 16
      %v3646 = vrot.slane %v3644, 5
      %v3647 = vsel %vm1606, %v3642, %v3646
      %v3648 = vshrl.u32 %v3482, 16
      %v3650 = vrot.slane %v3648, 4
      %v3651 = vor.u32 %v3650, %v3646
      %v3652 = vrot.slane %v3651, 4
      %v3654 = vshll.u32 %v3483, 16
      %v3656 = vrot.slane %v3654, 5
      %v3657 = vsel %vm1606, %v3652, %v3656
      %v3659 = vshrl.u32 %v3484, 16
      %v3661 = vrot.slane %v3659, 4
      %v3662 = vshll.u32 %v3484, 16
      %v3664 = vrot.slane %v3662, 5
      %v3665 = vor.u32 %v3661, %v3664
      %v3666 = vrot.slane %v3665, 4
      %v3668 = vshll.u32 %v3485, 16
      %v3670 = vrot.slane %v3668, 5
      %v3671 = vsel %vm1606, %v3666, %v3670
      %v3672 = vshrl.u32 %v3485, 16
      %v3674 = vrot.slane %v3672, 4
      %v3675 = vor.u32 %v3674, %v3670
      %v3676 = vrot.slane %v3675, 4
      %v3678 = vshll.u32 %v3486, 16
      %v3680 = vrot.slane %v3678, 5
      %v3681 = vsel %vm1606, %v3676, %v3680
      %v3683 = vshrl.u32 %v3487, 16
      %v3685 = vrot.slane %v3683, 4
      %v3686 = vshll.u32 %v3487, 16
      %v3688 = vrot.slane %v3686, 5
      %v3689 = vor.u32 %v3685, %v3688
      %v3690 = vrot.slane %v3689, 4
      %v3692 = vshll.u32 %v3488, 16
      %v3694 = vrot.slane %v3692, 5
      %v3695 = vsel %vm1606, %v3690, %v3694
      %v3696 = vshrl.u32 %v3488, 16
      %v3698 = vrot.slane %v3696, 4
      %v3699 = vor.u32 %v3698, %v3694
      %v3700 = vrot.slane %v3699, 4
      %v3702 = vshll.u32 %v3489, 16
      %v3704 = vrot.slane %v3702, 5
      %v3705 = vsel %vm1606, %v3700, %v3704
      %v3707 = vshrl.u32 %v3490, 16
      %v3709 = vrot.slane %v3707, 4
      %v3710 = vshll.u32 %v3490, 16
      %v3712 = vrot.slane %v3710, 5
      %v3713 = vor.u32 %v3709, %v3712
      %v3714 = vrot.slane %v3713, 4
      %v3716 = vshll.u32 %v3491, 16
      %v3718 = vrot.slane %v3716, 5
      %v3719 = vsel %vm1606, %v3714, %v3718
      %v3720 = vshrl.u32 %v3491, 16
      %v3722 = vrot.slane %v3720, 4
      %v3723 = vor.u32 %v3722, %v3718
      %v3724 = vrot.slane %v3723, 4
      %v3726 = vshll.u32 %v3492, 16
      %v3728 = vrot.slane %v3726, 5
      %v3729 = vsel %vm1606, %v3724, %v3728
      %v3731 = vshrl.u32 %v3493, 16
      %v3733 = vrot.slane %v3731, 4
      %v3734 = vshll.u32 %v3493, 16
      %v3736 = vrot.slane %v3734, 5
      %v3737 = vor.u32 %v3733, %v3736
      %v3738 = vrot.slane %v3737, 4
      %v3740 = vshll.u32 %v3494, 16
      %v3742 = vrot.slane %v3740, 5
      %v3743 = vsel %vm1606, %v3738, %v3742
      %v3744 = vshrl.u32 %v3494, 16
      %v3746 = vrot.slane %v3744, 4
      %v3747 = vor.u32 %v3746, %v3742
      %v3748 = vrot.slane %v3747, 4
      %v3750 = vshll.u32 %v3495, 16
      %v3752 = vrot.slane %v3750, 5
      %v3753 = vsel %vm1606, %v3748, %v3752
      %v3755 = vshrl.u32 %v3496, 16
      %v3757 = vrot.slane %v3755, 4
      %v3758 = vshll.u32 %v3496, 16
      %v3760 = vrot.slane %v3758, 5
      %v3761 = vor.u32 %v3757, %v3760
      %v3762 = vrot.slane %v3761, 4
      %v3764 = vshll.u32 %v3497, 16
      %v3766 = vrot.slane %v3764, 5
      %v3767 = vsel %vm1606, %v3762, %v3766
      %v3768 = vshrl.u32 %v3497, 16
      %v3770 = vrot.slane %v3768, 4
      %v3771 = vor.u32 %v3770, %v3766
      %v3772 = vrot.slane %v3771, 4
      %v3774 = vshll.u32 %v3498, 16
      %v3776 = vrot.slane %v3774, 5
      %v3777 = vsel %vm1606, %v3772, %v3776
      %v3779 = vshrl.u32 %v3499, 16
      %v3781 = vrot.slane %v3779, 4
      %v3782 = vshll.u32 %v3499, 16
      %v3784 = vrot.slane %v3782, 5
      %v3785 = vor.u32 %v3781, %v3784
      %v3786 = vrot.slane %v3785, 4
      %v3788 = vshll.u32 %v3500, 16
      %v3790 = vrot.slane %v3788, 5
      %v3791 = vsel %vm1606, %v3786, %v3790
      %v3792 = vshrl.u32 %v3500, 16
      %v3794 = vrot.slane %v3792, 4
      %v3795 = vor.u32 %v3794, %v3790
      %v3796 = vrot.slane %v3795, 4
      %v3798 = vshll.u32 %v3501, 16
      %v3800 = vrot.slane %v3798, 5
      %v3801 = vsel %vm1606, %v3796, %v3800
      %v3803 = vshrl.u32 %v3502, 16
      %v3805 = vrot.slane %v3803, 4
      %v3806 = vshll.u32 %v3502, 16
      %v3808 = vrot.slane %v3806, 5
      %v3809 = vor.u32 %v3805, %v3808
      %v3810 = vrot.slane %v3809, 4
      %v3812 = vshll.u32 %v3503, 16
      %v3814 = vrot.slane %v3812, 5
      %v3815 = vsel %vm1606, %v3810, %v3814
      %v3816 = vshrl.u32 %v3503, 16
      %v3818 = vrot.slane %v3816, 4
      %v3819 = vor.u32 %v3818, %v3814
      %v3820 = vrot.slane %v3819, 4
      %v3822 = vshll.u32 %v3504, 16
      %v3824 = vrot.slane %v3822, 5
      %v3825 = vsel %vm1606, %v3820, %v3824
      %v3827 = vshrl.u32 %v3505, 16
      %v3829 = vrot.slane %v3827, 4
      %v3830 = vshll.u32 %v3505, 16
      %v3832 = vrot.slane %v3830, 5
      %v3833 = vor.u32 %v3829, %v3832
      %v3834 = vrot.slane %v3833, 4
      %v3836 = vshll.u32 %v3506, 16
      %v3838 = vrot.slane %v3836, 5
      %v3839 = vsel %vm1606, %v3834, %v3838
      %v3840 = vshrl.u32 %v3506, 16
      %v3842 = vrot.slane %v3840, 4
      %v3843 = vor.u32 %v3842, %v3838
      %v3844 = vrot.slane %v3843, 4
      %v3846 = vshll.u32 %v3507, 16
      %v3848 = vrot.slane %v3846, 5
      %v3849 = vsel %vm1606, %v3844, %v3848
      %v3851 = vshrl.u32 %v3508, 16
      %v3853 = vrot.slane %v3851, 4
      %v3854 = vshll.u32 %v3508, 16
      %v3856 = vrot.slane %v3854, 5
      %v3857 = vor.u32 %v3853, %v3856
      %v3858 = vrot.slane %v3857, 4
      %v3860 = vshll.u32 %v3509, 16
      %v3862 = vrot.slane %v3860, 5
      %v3863 = vsel %vm1606, %v3858, %v3862
      %v3864 = vshrl.u32 %v3509, 16
      %v3866 = vrot.slane %v3864, 4
      %v3867 = vor.u32 %v3866, %v3862
      %v3868 = vrot.slane %v3867, 4
      %v3870 = vshll.u32 %v3510, 16
      %v3872 = vrot.slane %v3870, 5
      %v3873 = vsel %vm1606, %v3868, %v3872
      %v3875 = vshrl.u32 %v3511, 16
      %v3877 = vrot.slane %v3875, 4
      %v3878 = vshll.u32 %v3511, 16
      %v3880 = vrot.slane %v3878, 5
      %v3881 = vor.u32 %v3877, %v3880
      %v3882 = vrot.slane %v3881, 4
      %v3884 = vshll.u32 %v3512, 16
      %v3886 = vrot.slane %v3884, 5
      %v3887 = vsel %vm1606, %v3882, %v3886
      %v3888 = vshrl.u32 %v3512, 16
      %v3890 = vrot.slane %v3888, 4
      %v3891 = vor.u32 %v3890, %v3886
      %v3892 = vrot.slane %v3891, 4
      %v3894 = vshll.u32 %v3513, 16
      %v3896 = vrot.slane %v3894, 5
      %v3897 = vsel %vm1606, %v3892, %v3896
      %s3898 = scalar_lea.vmem %s3, 128
      %v3899 = vld [vmem:[%s3898] sm:$0xf]
      %v3900 = vld [vmem:[%s3898 + $0x4] sm:$0xf]
      %v3901 = vld [vmem:[%s3898 + $0x8] sm:$0xf]
      %v3902 = vld [vmem:[%s3898 + $0xc] sm:$0xf]
      %v3903 = vld [vmem:[%s3898 + $0x10] sm:$0xf]
      %v3904 = vld [vmem:[%s3898 + $0x14] sm:$0xf]
      %v3905 = vld [vmem:[%s3898 + $0x18] sm:$0xf]
      %v3906 = vld [vmem:[%s3898 + $0x1c] sm:$0xf]
      %v3907 = vunpack.c.l.b16 %v3527
      %v3908 = vunpack.c.l.b16 %v3537
      %v3909 = vunpack.c.l.b16 %v3551
      %v3910 = vunpack.c.l.b16 %v3561
      %v3911 = vunpack.c.l.b16 %v3575
      %v3912 = vunpack.c.l.b16 %v3585
      %v3913 = vunpack.c.l.b16 %v3599
      %v3914 = vunpack.c.l.b16 %v3609
      %v3915 = vunpack.c.l.b16 %v3623
      %v3916 = vunpack.c.l.b16 %v3633
      %v3917 = vunpack.c.l.b16 %v3647
      %v3918 = vunpack.c.l.b16 %v3657
      %v3919 = vunpack.c.l.b16 %v3671
      %v3920 = vunpack.c.l.b16 %v3681
      %v3921 = vunpack.c.l.b16 %v3695
      %v3922 = vunpack.c.l.b16 %v3705
      %v3923 = vunpack.c.l.b16 %v3719
      %v3924 = vunpack.c.l.b16 %v3729
      %v3925 = vunpack.c.l.b16 %v3743
      %v3926 = vunpack.c.l.b16 %v3753
      %v3927 = vunpack.c.l.b16 %v3767
      %v3928 = vunpack.c.l.b16 %v3777
      %v3929 = vunpack.c.l.b16 %v3791
      %v3930 = vunpack.c.l.b16 %v3801
      %v3931 = vunpack.c.l.b16 %v3815
      %v3932 = vunpack.c.l.b16 %v3825
      %v3933 = vunpack.c.l.b16 %v3839
      %v3934 = vunpack.c.l.b16 %v3849
      %v3935 = vunpack.c.l.b16 %v3863
      %v3936 = vunpack.c.l.b16 %v3873
      %v3937 = vunpack.c.l.b16 %v3887
      %v3938 = vunpack.c.l.b16 %v3897
      %v3939 = vpack.c.b16 %v3908, %v3907
      %v3940 = vpack.c.b16 %v3910, %v3909
      %v3941 = vpack.c.b16 %v3912, %v3911
      %v3942 = vpack.c.b16 %v3914, %v3913
      %v3943 = vpack.c.b16 %v3916, %v3915
      %v3944 = vpack.c.b16 %v3918, %v3917
      %v3945 = vpack.c.b16 %v3920, %v3919
      %v3946 = vpack.c.b16 %v3922, %v3921
      %v3947 = vpack.c.b16 %v3924, %v3923
      %v3948 = vpack.c.b16 %v3926, %v3925
      %v3949 = vpack.c.b16 %v3928, %v3927
      %v3950 = vpack.c.b16 %v3930, %v3929
      %v3951 = vpack.c.b16 %v3932, %v3931
      %v3952 = vpack.c.b16 %v3934, %v3933
      %v3953 = vpack.c.b16 %v3936, %v3935
      %v3954 = vpack.c.b16 %v3938, %v3937
      %v3963 = vunpack.c.l.b16 %v3899
      %v3964 = vunpack.c.l.b16 %v3900
      %v3965 = vunpack.c.l.b16 %v3901
      %v3966 = vunpack.c.l.b16 %v3902
      %v3967 = vunpack.c.l.b16 %v3903
      %v3968 = vunpack.c.l.b16 %v3904
      %v3969 = vunpack.c.l.b16 %v3905
      %v3970 = vunpack.c.l.b16 %v3906
      %v3971 = vpack.c.b16 %v3964, %v3963
      %v3972 = vpack.c.b16 %v3966, %v3965
      %v3973 = vpack.c.b16 %v3968, %v3967
      %v3974 = vpack.c.b16 %v3970, %v3969
      %v3980 = vsel %vm2072, %v3939, 0
      %v3983 = vsel %vm2072, %v3940, 0
      %v3986 = vsel %vm2072, %v3941, 0
      %v3989 = vsel %vm2072, %v3942, 0
      %v3992 = vsel %vm2072, %v3943, 0
      %v3995 = vsel %vm2072, %v3944, 0
      %v3998 = vsel %vm2072, %v3945, 0
      %v4001 = vsel %vm2072, %v3946, 0
      %v4004 = vsel %vm2072, %v3947, 0
      %v4007 = vsel %vm2072, %v3948, 0
      %v4010 = vsel %vm2072, %v3949, 0
      %v4013 = vsel %vm2072, %v3950, 0
      %v4016 = vsel %vm2072, %v3951, 0
      %v4019 = vsel %vm2072, %v3952, 0
      %v4022 = vsel %vm2072, %v3953, 0
      %v4025 = vsel %vm2072, %v3954, 0
      %4027 = vmatprep.subr.bf16.mxu0 0
      %4028 = vmatpush1.bf16.msra.mxu0 %v3971
      %4029 = vmatprep.subr.bf16.mxu0 0
      %4030 = vmatpush1.bf16.msra.mxu0 %v3972
      %4031 = vmatprep.subr.bf16.mxu0 0
      %4032 = vmatpush1.bf16.msra.mxu0 %v3973
      %4033 = vmatprep.subr.bf16.mxu0 0
      %4034 = vmatpush1.bf16.msra.mxu0 %v3974
      %4035 = vmatprep.subr.bf16.mxu0 0
      %4036 = vmatpush1.bf16.msra.mxu0 0
      %4037 = vmatprep.subr.bf16.mxu0 0
      %4038 = vmatpush1.bf16.msra.mxu0 0
      %4039 = vmatprep.subr.bf16.mxu0 0
      %4040 = vmatpush1.bf16.msra.mxu0 0
      %4041 = vmatprep.subr.bf16.mxu0 0
      %4042 = vmatpush1.bf16.msra.mxu0 0
      %4043 = vmatprep.subr.bf16.mxu0 0
      %4044 = vmatpush1.bf16.msra.mxu0 0
      %4045 = vmatprep.subr.bf16.mxu0 0
      %4046 = vmatpush1.bf16.msra.mxu0 0
      %4047 = vmatprep.subr.bf16.mxu0 0
      %4048 = vmatpush1.bf16.msra.mxu0 0
      %4049 = vmatprep.subr.bf16.mxu0 0
      %4050 = vmatpush1.bf16.msra.mxu0 0
      %4051 = vmatprep.subr.bf16.mxu0 0
      %4052 = vmatpush1.bf16.msra.mxu0 0
      %4053 = vmatprep.subr.bf16.mxu0 0
      %4054 = vmatpush1.bf16.msra.mxu0 0
      %4055 = vmatprep.subr.bf16.mxu0 0
      %4056 = vmatpush1.bf16.msra.mxu0 0
      %4057 = vmatprep.subr.bf16.mxu0 0
      %4058 = vmatpush1.bf16.msra.mxu0 0
      %4059 = vmatprep.mubr.bf16.mxu0 0
      %4060 = vmatmul.mubr.bf16.gmra.mrb[0].mxu0 %v3980
      %v4061 = vpop.f32.mrb[0].mxu0
      %v4062 = vadd.f32 0.0, %v4061
      %v4063 = vpop.f32.mrb[0].mxu0
      %v4064 = vpop.f32.mrb[0].mxu0
      %v4065 = vadd.f32 0.0, %v4064
      %v4066 = vpop.f32.mrb[0].mxu0
      %4067 = vmatprep.mubr.bf16.mxu0 0
      %4068 = vmatmul.mubr.bf16.gmra.mrb[0].mxu0 %v3983
      %v4069 = vpop.f32.mrb[0].mxu0
      %v4070 = vadd.f32 0.0, %v4069
      %v4071 = vpop.f32.mrb[0].mxu0
      %v4072 = vpop.f32.mrb[0].mxu0
      %v4073 = vadd.f32 0.0, %v4072
      %v4074 = vpop.f32.mrb[0].mxu0
      %4075 = vmatprep.mubr.bf16.mxu0 0
      %4076 = vmatmul.mubr.bf16.gmra.mrb[0].mxu0 %v3986
      %v4077 = vpop.f32.mrb[0].mxu0
      %v4078 = vadd.f32 0.0, %v4077
      %v4079 = vpop.f32.mrb[0].mxu0
      %v4080 = vpop.f32.mrb[0].mxu0
      %v4081 = vadd.f32 0.0, %v4080
      %v4082 = vpop.f32.mrb[0].mxu0
      %4083 = vmatprep.mubr.bf16.mxu0 0
      %4084 = vmatmul.mubr.bf16.gmra.mrb[0].mxu0 %v3989
      %v4085 = vpop.f32.mrb[0].mxu0
      %v4086 = vadd.f32 0.0, %v4085
      %v4087 = vpop.f32.mrb[0].mxu0
      %v4088 = vpop.f32.mrb[0].mxu0
      %v4089 = vadd.f32 0.0, %v4088
      %v4090 = vpop.f32.mrb[0].mxu0
      %4091 = vmatprep.mubr.bf16.mxu0 0
      %4092 = vmatmul.mubr.bf16.gmra.mrb[0].mxu0 %v3992
      %v4093 = vpop.f32.mrb[0].mxu0
      %v4094 = vadd.f32 0.0, %v4093
      %v4095 = vpop.f32.mrb[0].mxu0
      %v4096 = vpop.f32.mrb[0].mxu0
      %v4097 = vadd.f32 0.0, %v4096
      %v4098 = vpop.f32.mrb[0].mxu0
      %4099 = vmatprep.mubr.bf16.mxu0 0
      %4100 = vmatmul.mubr.bf16.gmra.mrb[0].mxu0 %v3995
      %v4101 = vpop.f32.mrb[0].mxu0
      %v4102 = vadd.f32 0.0, %v4101
      %v4103 = vpop.f32.mrb[0].mxu0
      %v4104 = vpop.f32.mrb[0].mxu0
      %v4105 = vadd.f32 0.0, %v4104
      %v4106 = vpop.f32.mrb[0].mxu0
      %4107 = vmatprep.mubr.bf16.mxu0 0
      %4108 = vmatmul.mubr.bf16.gmra.mrb[0].mxu0 %v3998
      %v4109 = vpop.f32.mrb[0].mxu0
      %v4110 = vadd.f32 0.0, %v4109
      %v4111 = vpop.f32.mrb[0].mxu0
      %v4112 = vpop.f32.mrb[0].mxu0
      %v4113 = vadd.f32 0.0, %v4112
      %v4114 = vpop.f32.mrb[0].mxu0
      %4115 = vmatprep.mubr.bf16.mxu0 0
      %4116 = vmatmul.mubr.bf16.gmra.mrb[0].mxu0 %v4001
      %v4117 = vpop.f32.mrb[0].mxu0
      %v4118 = vadd.f32 0.0, %v4117
      %v4119 = vpop.f32.mrb[0].mxu0
      %v4120 = vpop.f32.mrb[0].mxu0
      %v4121 = vadd.f32 0.0, %v4120
      %v4122 = vpop.f32.mrb[0].mxu0
      %4123 = vmatprep.mubr.bf16.mxu0 0
      %4124 = vmatmul.mubr.bf16.gmra.mrb[0].mxu0 %v4004
      %v4125 = vpop.f32.mrb[0].mxu0
      %v4126 = vadd.f32 0.0, %v4125
      %v4127 = vpop.f32.mrb[0].mxu0
      %v4128 = vpop.f32.mrb[0].mxu0
      %v4129 = vadd.f32 0.0, %v4128
      %v4130 = vpop.f32.mrb[0].mxu0
      %4131 = vmatprep.mubr.bf16.mxu0 0
      %4132 = vmatmul.mubr.bf16.gmra.mrb[0].mxu0 %v4007
      %v4133 = vpop.f32.mrb[0].mxu0
      %v4134 = vadd.f32 0.0, %v4133
      %v4135 = vpop.f32.mrb[0].mxu0
      %v4136 = vpop.f32.mrb[0].mxu0
      %v4137 = vadd.f32 0.0, %v4136
      %v4138 = vpop.f32.mrb[0].mxu0
      %4139 = vmatprep.mubr.bf16.mxu0 0
      %4140 = vmatmul.mubr.bf16.gmra.mrb[0].mxu0 %v4010
      %v4141 = vpop.f32.mrb[0].mxu0
      %v4142 = vadd.f32 0.0, %v4141
      %v4143 = vpop.f32.mrb[0].mxu0
      %v4144 = vpop.f32.mrb[0].mxu0
      %v4145 = vadd.f32 0.0, %v4144
      %v4146 = vpop.f32.mrb[0].mxu0
      %4147 = vmatprep.mubr.bf16.mxu0 0
      %4148 = vmatmul.mubr.bf16.gmra.mrb[0].mxu0 %v4013
      %v4149 = vpop.f32.mrb[0].mxu0
      %v4150 = vadd.f32 0.0, %v4149
      %v4151 = vpop.f32.mrb[0].mxu0
      %v4152 = vpop.f32.mrb[0].mxu0
      %v4153 = vadd.f32 0.0, %v4152
      %v4154 = vpop.f32.mrb[0].mxu0
      %4155 = vmatprep.mubr.bf16.mxu0 0
      %4156 = vmatmul.mubr.bf16.gmra.mrb[0].mxu0 %v4016
      %v4157 = vpop.f32.mrb[0].mxu0
      %v4158 = vadd.f32 0.0, %v4157
      %v4159 = vpop.f32.mrb[0].mxu0
      %v4160 = vpop.f32.mrb[0].mxu0
      %v4161 = vadd.f32 0.0, %v4160
      %v4162 = vpop.f32.mrb[0].mxu0
      %4163 = vmatprep.mubr.bf16.mxu0 0
      %4164 = vmatmul.mubr.bf16.gmra.mrb[0].mxu0 %v4019
      %v4165 = vpop.f32.mrb[0].mxu0
      %v4166 = vadd.f32 0.0, %v4165
      %v4167 = vpop.f32.mrb[0].mxu0
      %v4168 = vpop.f32.mrb[0].mxu0
      %v4169 = vadd.f32 0.0, %v4168
      %v4170 = vpop.f32.mrb[0].mxu0
      %4171 = vmatprep.mubr.bf16.mxu0 0
      %4172 = vmatmul.mubr.bf16.gmra.mrb[0].mxu0 %v4022
      %v4173 = vpop.f32.mrb[0].mxu0
      %v4174 = vadd.f32 0.0, %v4173
      %v4175 = vpop.f32.mrb[0].mxu0
      %v4176 = vpop.f32.mrb[0].mxu0
      %v4177 = vadd.f32 0.0, %v4176
      %v4178 = vpop.f32.mrb[0].mxu0
      %4179 = vmatprep.mubr.bf16.mxu0 0
      %4180 = vmatmul.mubr.bf16.gmra.mrb[0].mxu0 %v4025
      %v4181 = vpop.f32.mrb[0].mxu0
      %v4182 = vadd.f32 0.0, %v4181
      %v4183 = vpop.f32.mrb[0].mxu0
      %v4184 = vpop.f32.mrb[0].mxu0
      %v4185 = vadd.f32 0.0, %v4184
      %v4186 = vpop.f32.mrb[0].mxu0
      %4187 = vdwg.mxu0
      %v4188 = vadd.f32 %v3434, %v4062
      %v4189 = vadd.f32 %v3435, %v4065
      %v4190 = vadd.f32 %v3436, %v4070
      %v4191 = vadd.f32 %v3437, %v4073
      %v4192 = vadd.f32 %v3438, %v4078
      %v4193 = vadd.f32 %v3439, %v4081
      %v4194 = vadd.f32 %v3440, %v4086
      %v4195 = vadd.f32 %v3441, %v4089
      %v4196 = vadd.f32 %v3442, %v4094
      %v4197 = vadd.f32 %v3443, %v4097
      %v4198 = vadd.f32 %v3444, %v4102
      %v4199 = vadd.f32 %v3445, %v4105
      %v4200 = vadd.f32 %v3446, %v4110
      %v4201 = vadd.f32 %v3447, %v4113
      %v4202 = vadd.f32 %v3448, %v4118
      %v4203 = vadd.f32 %v3449, %v4121
      %v4204 = vadd.f32 %v3450, %v4126
      %v4205 = vadd.f32 %v3451, %v4129
      %v4206 = vadd.f32 %v3452, %v4134
      %v4207 = vadd.f32 %v3453, %v4137
      %v4208 = vadd.f32 %v3454, %v4142
      %v4209 = vadd.f32 %v3455, %v4145
      %v4210 = vadd.f32 %v3456, %v4150
      %v4211 = vadd.f32 %v3457, %v4153
      %v4212 = vadd.f32 %v3458, %v4158
      %v4213 = vadd.f32 %v3459, %v4161
      %v4214 = vadd.f32 %v3460, %v4166
      %v4215 = vadd.f32 %v3461, %v4169
      %v4216 = vadd.f32 %v3462, %v4174
      %v4217 = vadd.f32 %v3463, %v4177
      %v4218 = vadd.f32 %v3464, %v4182
      %v4219 = vadd.f32 %v3465, %v4185
      %v4220 = vld [vmem:[%s1433] sm:$0xe]
      %v4221 = vld [vmem:[%s1433 + $0xc] sm:$0xe]
      %v4222 = vld [vmem:[%s1433 + $0x18] sm:$0xe]
      %v4223 = vld [vmem:[%s1433 + $0x24] sm:$0xe]
      %v4224 = vld [vmem:[%s1433 + $0x30] sm:$0xe]
      %v4225 = vld [vmem:[%s1433 + $0x3c] sm:$0xe]
      %v4226 = vld [vmem:[%s1433 + $0x48] sm:$0xe]
      %v4227 = vld [vmem:[%s1433 + $0x54] sm:$0xe]
      %v4228 = vld [vmem:[%s1433 + $0x60] sm:$0xe]
      %v4229 = vld [vmem:[%s1433 + $0x6c] sm:$0xe]
      %v4230 = vld [vmem:[%s1433 + $0x78] sm:$0xe]
      %v4231 = vld [vmem:[%s1433 + $0x84] sm:$0xe]
      %v4232 = vld [vmem:[%s1433 + $0x90] sm:$0xe]
      %v4233 = vld [vmem:[%s1433 + $0x9c] sm:$0xe]
      %v4234 = vld [vmem:[%s1433 + $0xa8] sm:$0xe]
      %v4235 = vld [vmem:[%s1433 + $0xb4] sm:$0xe]
      %v4284 = vrot.slane %v4220, 5
      %v4285 = vrot.slane %v4284, 4
      %v4286 = vrot.slane %v3467, 5
      %v4287 = vsel %vm2645, %v4285, %v4286
      %v4288 = vrot.slane %v4286, 4
      %v4289 = vrot.slane %v3468, 5
      %v4290 = vsel %vm2645, %v4288, %v4289
      %v4291 = vrot.slane %v4221, 5
      %v4292 = vrot.slane %v4291, 4
      %v4293 = vrot.slane %v3470, 5
      %v4294 = vsel %vm2645, %v4292, %v4293
      %v4295 = vrot.slane %v4293, 4
      %v4296 = vrot.slane %v3471, 5
      %v4297 = vsel %vm2645, %v4295, %v4296
      %v4298 = vrot.slane %v4222, 5
      %v4299 = vrot.slane %v4298, 4
      %v4300 = vrot.slane %v3473, 5
      %v4301 = vsel %vm2645, %v4299, %v4300
      %v4302 = vrot.slane %v4300, 4
      %v4303 = vrot.slane %v3474, 5
      %v4304 = vsel %vm2645, %v4302, %v4303
      %v4305 = vrot.slane %v4223, 5
      %v4306 = vrot.slane %v4305, 4
      %v4307 = vrot.slane %v3476, 5
      %v4308 = vsel %vm2645, %v4306, %v4307
      %v4309 = vrot.slane %v4307, 4
      %v4310 = vrot.slane %v3477, 5
      %v4311 = vsel %vm2645, %v4309, %v4310
      %v4312 = vrot.slane %v4224, 5
      %v4313 = vrot.slane %v4312, 4
      %v4314 = vrot.slane %v3479, 5
      %v4315 = vsel %vm2645, %v4313, %v4314
      %v4316 = vrot.slane %v4314, 4
      %v4317 = vrot.slane %v3480, 5
      %v4318 = vsel %vm2645, %v4316, %v4317
      %v4319 = vrot.slane %v4225, 5
      %v4320 = vrot.slane %v4319, 4
      %v4321 = vrot.slane %v3482, 5
      %v4322 = vsel %vm2645, %v4320, %v4321
      %v4323 = vrot.slane %v4321, 4
      %v4324 = vrot.slane %v3483, 5
      %v4325 = vsel %vm2645, %v4323, %v4324
      %v4326 = vrot.slane %v4226, 5
      %v4327 = vrot.slane %v4326, 4
      %v4328 = vrot.slane %v3485, 5
      %v4329 = vsel %vm2645, %v4327, %v4328
      %v4330 = vrot.slane %v4328, 4
      %v4331 = vrot.slane %v3486, 5
      %v4332 = vsel %vm2645, %v4330, %v4331
      %v4333 = vrot.slane %v4227, 5
      %v4334 = vrot.slane %v4333, 4
      %v4335 = vrot.slane %v3488, 5
      %v4336 = vsel %vm2645, %v4334, %v4335
      %v4337 = vrot.slane %v4335, 4
      %v4338 = vrot.slane %v3489, 5
      %v4339 = vsel %vm2645, %v4337, %v4338
      %v4340 = vrot.slane %v4228, 5
      %v4341 = vrot.slane %v4340, 4
      %v4342 = vrot.slane %v3491, 5
      %v4343 = vsel %vm2645, %v4341, %v4342
      %v4344 = vrot.slane %v4342, 4
      %v4345 = vrot.slane %v3492, 5
      %v4346 = vsel %vm2645, %v4344, %v4345
      %v4347 = vrot.slane %v4229, 5
      %v4348 = vrot.slane %v4347, 4
      %v4349 = vrot.slane %v3494, 5
      %v4350 = vsel %vm2645, %v4348, %v4349
      %v4351 = vrot.slane %v4349, 4
      %v4352 = vrot.slane %v3495, 5
      %v4353 = vsel %vm2645, %v4351, %v4352
      %v4354 = vrot.slane %v4230, 5
      %v4355 = vrot.slane %v4354, 4
      %v4356 = vrot.slane %v3497, 5
      %v4357 = vsel %vm2645, %v4355, %v4356
      %v4358 = vrot.slane %v4356, 4
      %v4359 = vrot.slane %v3498, 5
      %v4360 = vsel %vm2645, %v4358, %v4359
      %v4361 = vrot.slane %v4231, 5
      %v4362 = vrot.slane %v4361, 4
      %v4363 = vrot.slane %v3500, 5
      %v4364 = vsel %vm2645, %v4362, %v4363
      %v4365 = vrot.slane %v4363, 4
      %v4366 = vrot.slane %v3501, 5
      %v4367 = vsel %vm2645, %v4365, %v4366
      %v4368 = vrot.slane %v4232, 5
      %v4369 = vrot.slane %v4368, 4
      %v4370 = vrot.slane %v3503, 5
      %v4371 = vsel %vm2645, %v4369, %v4370
      %v4372 = vrot.slane %v4370, 4
      %v4373 = vrot.slane %v3504, 5
      %v4374 = vsel %vm2645, %v4372, %v4373
      %v4375 = vrot.slane %v4233, 5
      %v4376 = vrot.slane %v4375, 4
      %v4377 = vrot.slane %v3506, 5
      %v4378 = vsel %vm2645, %v4376, %v4377
      %v4379 = vrot.slane %v4377, 4
      %v4380 = vrot.slane %v3507, 5
      %v4381 = vsel %vm2645, %v4379, %v4380
      %v4382 = vrot.slane %v4234, 5
      %v4383 = vrot.slane %v4382, 4
      %v4384 = vrot.slane %v3509, 5
      %v4385 = vsel %vm2645, %v4383, %v4384
      %v4386 = vrot.slane %v4384, 4
      %v4387 = vrot.slane %v3510, 5
      %v4388 = vsel %vm2645, %v4386, %v4387
      %v4389 = vrot.slane %v4235, 5
      %v4390 = vrot.slane %v4389, 4
      %v4391 = vrot.slane %v3512, 5
      %v4392 = vsel %vm2645, %v4390, %v4391
      %v4393 = vrot.slane %v4391, 4
      %v4394 = vrot.slane %v3513, 5
      %v4395 = vsel %vm2645, %v4393, %v4394
      %s4396 = scalar_lea.vmem %s3, 160
      %v4397 = vld [vmem:[%s4396] sm:$0xf]
      %v4398 = vld [vmem:[%s4396 + $0x4] sm:$0xf]
      %v4399 = vld [vmem:[%s4396 + $0x8] sm:$0xf]
      %v4400 = vld [vmem:[%s4396 + $0xc] sm:$0xf]
      %v4401 = vld [vmem:[%s4396 + $0x10] sm:$0xf]
      %v4402 = vld [vmem:[%s4396 + $0x14] sm:$0xf]
      %v4403 = vld [vmem:[%s4396 + $0x18] sm:$0xf]
      %v4404 = vld [vmem:[%s4396 + $0x1c] sm:$0xf]
      %v4405 = vunpack.c.l.b16 %v4287
      %v4406 = vunpack.c.l.b16 %v4290
      %v4407 = vunpack.c.l.b16 %v4294
      %v4408 = vunpack.c.l.b16 %v4297
      %v4409 = vunpack.c.l.b16 %v4301
      %v4410 = vunpack.c.l.b16 %v4304
      %v4411 = vunpack.c.l.b16 %v4308
      %v4412 = vunpack.c.l.b16 %v4311
      %v4413 = vunpack.c.l.b16 %v4315
      %v4414 = vunpack.c.l.b16 %v4318
      %v4415 = vunpack.c.l.b16 %v4322
      %v4416 = vunpack.c.l.b16 %v4325
      %v4417 = vunpack.c.l.b16 %v4329
      %v4418 = vunpack.c.l.b16 %v4332
      %v4419 = vunpack.c.l.b16 %v4336
      %v4420 = vunpack.c.l.b16 %v4339
      %v4421 = vunpack.c.l.b16 %v4343
      %v4422 = vunpack.c.l.b16 %v4346
      %v4423 = vunpack.c.l.b16 %v4350
      %v4424 = vunpack.c.l.b16 %v4353
      %v4425 = vunpack.c.l.b16 %v4357
      %v4426 = vunpack.c.l.b16 %v4360
      %v4427 = vunpack.c.l.b16 %v4364
      %v4428 = vunpack.c.l.b16 %v4367
      %v4429 = vunpack.c.l.b16 %v4371
      %v4430 = vunpack.c.l.b16 %v4374
      %v4431 = vunpack.c.l.b16 %v4378
      %v4432 = vunpack.c.l.b16 %v4381
      %v4433 = vunpack.c.l.b16 %v4385
      %v4434 = vunpack.c.l.b16 %v4388
      %v4435 = vunpack.c.l.b16 %v4392
      %v4436 = vunpack.c.l.b16 %v4395
      %v4437 = vpack.c.b16 %v4406, %v4405
      %v4438 = vpack.c.b16 %v4408, %v4407
      %v4439 = vpack.c.b16 %v4410, %v4409
      %v4440 = vpack.c.b16 %v4412, %v4411
      %v4441 = vpack.c.b16 %v4414, %v4413
      %v4442 = vpack.c.b16 %v4416, %v4415
      %v4443 = vpack.c.b16 %v4418, %v4417
      %v4444 = vpack.c.b16 %v4420, %v4419
      %v4445 = vpack.c.b16 %v4422, %v4421
      %v4446 = vpack.c.b16 %v4424, %v4423
      %v4447 = vpack.c.b16 %v4426, %v4425
      %v4448 = vpack.c.b16 %v4428, %v4427
      %v4449 = vpack.c.b16 %v4430, %v4429
      %v4450 = vpack.c.b16 %v4432, %v4431
      %v4451 = vpack.c.b16 %v4434, %v4433
      %v4452 = vpack.c.b16 %v4436, %v4435
      %v4461 = vunpack.c.l.b16 %v4397
      %v4462 = vunpack.c.l.b16 %v4398
      %v4463 = vunpack.c.l.b16 %v4399
      %v4464 = vunpack.c.l.b16 %v4400
      %v4465 = vunpack.c.l.b16 %v4401
      %v4466 = vunpack.c.l.b16 %v4402
      %v4467 = vunpack.c.l.b16 %v4403
      %v4468 = vunpack.c.l.b16 %v4404
      %v4469 = vpack.c.b16 %v4462, %v4461
      %v4470 = vpack.c.b16 %v4464, %v4463
      %v4471 = vpack.c.b16 %v4466, %v4465
      %v4472 = vpack.c.b16 %v4468, %v4467
      %v4478 = vsel %vm2072, %v4437, 0
      %v4481 = vsel %vm2072, %v4438, 0
      %v4484 = vsel %vm2072, %v4439, 0
      %v4487 = vsel %vm2072, %v4440, 0
      %v4490 = vsel %vm2072, %v4441, 0
      %v4493 = vsel %vm2072, %v4442, 0
      %v4496 = vsel %vm2072, %v4443, 0
      %v4499 = vsel %vm2072, %v4444, 0
      %v4502 = vsel %vm2072, %v4445, 0
      %v4505 = vsel %vm2072, %v4446, 0
      %v4508 = vsel %vm2072, %v4447, 0
      %v4511 = vsel %vm2072, %v4448, 0
      %v4514 = vsel %vm2072, %v4449, 0
      %v4517 = vsel %vm2072, %v4450, 0
      %v4520 = vsel %vm2072, %v4451, 0
      %v4523 = vsel %vm2072, %v4452, 0
      %4525 = vmatprep.subr.bf16.mxu0 0
      %4526 = vmatpush1.bf16.msra.mxu0 %v4469
      %4527 = vmatprep.subr.bf16.mxu0 0
      %4528 = vmatpush1.bf16.msra.mxu0 %v4470
      %4529 = vmatprep.subr.bf16.mxu0 0
      %4530 = vmatpush1.bf16.msra.mxu0 %v4471
      %4531 = vmatprep.subr.bf16.mxu0 0
      %4532 = vmatpush1.bf16.msra.mxu0 %v4472
      %4533 = vmatprep.subr.bf16.mxu0 0
      %4534 = vmatpush1.bf16.msra.mxu0 0
      %4535 = vmatprep.subr.bf16.mxu0 0
      %4536 = vmatpush1.bf16.msra.mxu0 0
      %4537 = vmatprep.subr.bf16.mxu0 0
      %4538 = vmatpush1.bf16.msra.mxu0 0
      %4539 = vmatprep.subr.bf16.mxu0 0
      %4540 = vmatpush1.bf16.msra.mxu0 0
      %4541 = vmatprep.subr.bf16.mxu0 0
      %4542 = vmatpush1.bf16.msra.mxu0 0
      %4543 = vmatprep.subr.bf16.mxu0 0
      %4544 = vmatpush1.bf16.msra.mxu0 0
      %4545 = vmatprep.subr.bf16.mxu0 0
      %4546 = vmatpush1.bf16.msra.mxu0 0
      %4547 = vmatprep.subr.bf16.mxu0 0
      %4548 = vmatpush1.bf16.msra.mxu0 0
      %4549 = vmatprep.subr.bf16.mxu0 0
      %4550 = vmatpush1.bf16.msra.mxu0 0
      %4551 = vmatprep.subr.bf16.mxu0 0
      %4552 = vmatpush1.bf16.msra.mxu0 0
      %4553 = vmatprep.subr.bf16.mxu0 0
      %4554 = vmatpush1.bf16.msra.mxu0 0
      %4555 = vmatprep.subr.bf16.mxu0 0
      %4556 = vmatpush1.bf16.msra.mxu0 0
      %4557 = vmatprep.mubr.bf16.mxu0 0
      %4558 = vmatmul.mubr.bf16.gmra.mrb[0].mxu0 %v4478
      %v4559 = vpop.f32.mrb[0].mxu0
      %v4560 = vadd.f32 0.0, %v4559
      %v4561 = vpop.f32.mrb[0].mxu0
      %v4562 = vpop.f32.mrb[0].mxu0
      %v4563 = vadd.f32 0.0, %v4562
      %v4564 = vpop.f32.mrb[0].mxu0
      %4565 = vmatprep.mubr.bf16.mxu0 0
      %4566 = vmatmul.mubr.bf16.gmra.mrb[0].mxu0 %v4481
      %v4567 = vpop.f32.mrb[0].mxu0
      %v4568 = vadd.f32 0.0, %v4567
      %v4569 = vpop.f32.mrb[0].mxu0
      %v4570 = vpop.f32.mrb[0].mxu0
      %v4571 = vadd.f32 0.0, %v4570
      %v4572 = vpop.f32.mrb[0].mxu0
      %4573 = vmatprep.mubr.bf16.mxu0 0
      %4574 = vmatmul.mubr.bf16.gmra.mrb[0].mxu0 %v4484
      %v4575 = vpop.f32.mrb[0].mxu0
      %v4576 = vadd.f32 0.0, %v4575
      %v4577 = vpop.f32.mrb[0].mxu0
      %v4578 = vpop.f32.mrb[0].mxu0
      %v4579 = vadd.f32 0.0, %v4578
      %v4580 = vpop.f32.mrb[0].mxu0
      %4581 = vmatprep.mubr.bf16.mxu0 0
      %4582 = vmatmul.mubr.bf16.gmra.mrb[0].mxu0 %v4487
      %v4583 = vpop.f32.mrb[0].mxu0
      %v4584 = vadd.f32 0.0, %v4583
      %v4585 = vpop.f32.mrb[0].mxu0
      %v4586 = vpop.f32.mrb[0].mxu0
      %v4587 = vadd.f32 0.0, %v4586
      %v4588 = vpop.f32.mrb[0].mxu0
      %4589 = vmatprep.mubr.bf16.mxu0 0
      %4590 = vmatmul.mubr.bf16.gmra.mrb[0].mxu0 %v4490
      %v4591 = vpop.f32.mrb[0].mxu0
      %v4592 = vadd.f32 0.0, %v4591
      %v4593 = vpop.f32.mrb[0].mxu0
      %v4594 = vpop.f32.mrb[0].mxu0
      %v4595 = vadd.f32 0.0, %v4594
      %v4596 = vpop.f32.mrb[0].mxu0
      %4597 = vmatprep.mubr.bf16.mxu0 0
      %4598 = vmatmul.mubr.bf16.gmra.mrb[0].mxu0 %v4493
      %v4599 = vpop.f32.mrb[0].mxu0
      %v4600 = vadd.f32 0.0, %v4599
      %v4601 = vpop.f32.mrb[0].mxu0
      %v4602 = vpop.f32.mrb[0].mxu0
      %v4603 = vadd.f32 0.0, %v4602
      %v4604 = vpop.f32.mrb[0].mxu0
      %4605 = vmatprep.mubr.bf16.mxu0 0
      %4606 = vmatmul.mubr.bf16.gmra.mrb[0].mxu0 %v4496
      %v4607 = vpop.f32.mrb[0].mxu0
      %v4608 = vadd.f32 0.0, %v4607
      %v4609 = vpop.f32.mrb[0].mxu0
      %v4610 = vpop.f32.mrb[0].mxu0
      %v4611 = vadd.f32 0.0, %v4610
      %v4612 = vpop.f32.mrb[0].mxu0
      %4613 = vmatprep.mubr.bf16.mxu0 0
      %4614 = vmatmul.mubr.bf16.gmra.mrb[0].mxu0 %v4499
      %v4615 = vpop.f32.mrb[0].mxu0
      %v4616 = vadd.f32 0.0, %v4615
      %v4617 = vpop.f32.mrb[0].mxu0
      %v4618 = vpop.f32.mrb[0].mxu0
      %v4619 = vadd.f32 0.0, %v4618
      %v4620 = vpop.f32.mrb[0].mxu0
      %4621 = vmatprep.mubr.bf16.mxu0 0
      %4622 = vmatmul.mubr.bf16.gmra.mrb[0].mxu0 %v4502
      %v4623 = vpop.f32.mrb[0].mxu0
      %v4624 = vadd.f32 0.0, %v4623
      %v4625 = vpop.f32.mrb[0].mxu0
      %v4626 = vpop.f32.mrb[0].mxu0
      %v4627 = vadd.f32 0.0, %v4626
      %v4628 = vpop.f32.mrb[0].mxu0
      %4629 = vmatprep.mubr.bf16.mxu0 0
      %4630 = vmatmul.mubr.bf16.gmra.mrb[0].mxu0 %v4505
      %v4631 = vpop.f32.mrb[0].mxu0
      %v4632 = vadd.f32 0.0, %v4631
      %v4633 = vpop.f32.mrb[0].mxu0
      %v4634 = vpop.f32.mrb[0].mxu0
      %v4635 = vadd.f32 0.0, %v4634
      %v4636 = vpop.f32.mrb[0].mxu0
      %4637 = vmatprep.mubr.bf16.mxu0 0
      %4638 = vmatmul.mubr.bf16.gmra.mrb[0].mxu0 %v4508
      %v4639 = vpop.f32.mrb[0].mxu0
      %v4640 = vadd.f32 0.0, %v4639
      %v4641 = vpop.f32.mrb[0].mxu0
      %v4642 = vpop.f32.mrb[0].mxu0
      %v4643 = vadd.f32 0.0, %v4642
      %v4644 = vpop.f32.mrb[0].mxu0
      %4645 = vmatprep.mubr.bf16.mxu0 0
      %4646 = vmatmul.mubr.bf16.gmra.mrb[0].mxu0 %v4511
      %v4647 = vpop.f32.mrb[0].mxu0
      %v4648 = vadd.f32 0.0, %v4647
      %v4649 = vpop.f32.mrb[0].mxu0
      %v4650 = vpop.f32.mrb[0].mxu0
      %v4651 = vadd.f32 0.0, %v4650
      %v4652 = vpop.f32.mrb[0].mxu0
      %4653 = vmatprep.mubr.bf16.mxu0 0
      %4654 = vmatmul.mubr.bf16.gmra.mrb[0].mxu0 %v4514
      %v4655 = vpop.f32.mrb[0].mxu0
      %v4656 = vadd.f32 0.0, %v4655
      %v4657 = vpop.f32.mrb[0].mxu0
      %v4658 = vpop.f32.mrb[0].mxu0
      %v4659 = vadd.f32 0.0, %v4658
      %v4660 = vpop.f32.mrb[0].mxu0
      %4661 = vmatprep.mubr.bf16.mxu0 0
      %4662 = vmatmul.mubr.bf16.gmra.mrb[0].mxu0 %v4517
      %v4663 = vpop.f32.mrb[0].mxu0
      %v4664 = vadd.f32 0.0, %v4663
      %v4665 = vpop.f32.mrb[0].mxu0
      %v4666 = vpop.f32.mrb[0].mxu0
      %v4667 = vadd.f32 0.0, %v4666
      %v4668 = vpop.f32.mrb[0].mxu0
      %4669 = vmatprep.mubr.bf16.mxu0 0
      %4670 = vmatmul.mubr.bf16.gmra.mrb[0].mxu0 %v4520
      %v4671 = vpop.f32.mrb[0].mxu0
      %v4672 = vadd.f32 0.0, %v4671
      %v4673 = vpop.f32.mrb[0].mxu0
      %v4674 = vpop.f32.mrb[0].mxu0
      %v4675 = vadd.f32 0.0, %v4674
      %v4676 = vpop.f32.mrb[0].mxu0
      %4677 = vmatprep.mubr.bf16.mxu0 0
      %4678 = vmatmul.mubr.bf16.gmra.mrb[0].mxu0 %v4523
      %v4679 = vpop.f32.mrb[0].mxu0
      %v4680 = vadd.f32 0.0, %v4679
      %v4681 = vpop.f32.mrb[0].mxu0
      %v4682 = vpop.f32.mrb[0].mxu0
      %v4683 = vadd.f32 0.0, %v4682
      %v4684 = vpop.f32.mrb[0].mxu0
      %4685 = vdwg.mxu0
      %v4686 = vadd.f32 %v4188, %v4560
      %v4687 = vadd.f32 %v4189, %v4563
      %v4688 = vadd.f32 %v4190, %v4568
      %v4689 = vadd.f32 %v4191, %v4571
      %v4690 = vadd.f32 %v4192, %v4576
      %v4691 = vadd.f32 %v4193, %v4579
      %v4692 = vadd.f32 %v4194, %v4584
      %v4693 = vadd.f32 %v4195, %v4587
      %v4694 = vadd.f32 %v4196, %v4592
      %v4695 = vadd.f32 %v4197, %v4595
      %v4696 = vadd.f32 %v4198, %v4600
      %v4697 = vadd.f32 %v4199, %v4603
      %v4698 = vadd.f32 %v4200, %v4608
      %v4699 = vadd.f32 %v4201, %v4611
      %v4700 = vadd.f32 %v4202, %v4616
      %v4701 = vadd.f32 %v4203, %v4619
      %v4702 = vadd.f32 %v4204, %v4624
      %v4703 = vadd.f32 %v4205, %v4627
      %v4704 = vadd.f32 %v4206, %v4632
      %v4705 = vadd.f32 %v4207, %v4635
      %v4706 = vadd.f32 %v4208, %v4640
      %v4707 = vadd.f32 %v4209, %v4643
      %v4708 = vadd.f32 %v4210, %v4648
      %v4709 = vadd.f32 %v4211, %v4651
      %v4710 = vadd.f32 %v4212, %v4656
      %v4711 = vadd.f32 %v4213, %v4659
      %v4712 = vadd.f32 %v4214, %v4664
      %v4713 = vadd.f32 %v4215, %v4667
      %v4714 = vadd.f32 %v4216, %v4672
      %v4715 = vadd.f32 %v4217, %v4675
      %v4716 = vadd.f32 %v4218, %v4680
      %v4717 = vadd.f32 %v4219, %v4683
      %s4718 = scalar_lea.vmem [#allocation2], 24
      %v4719 = vld [vmem:[%s4718] sm:$0xf]
      %v4720 = vld [vmem:[%s4718 + $0x4] sm:$0xf]
      %v4721 = vld [vmem:[%s4718 + $0xc] sm:$0xf]
      %v4722 = vld [vmem:[%s4718 + $0x10] sm:$0xf]
      %v4723 = vld [vmem:[%s4718 + $0x18] sm:$0xf]
      %v4724 = vld [vmem:[%s4718 + $0x1c] sm:$0xf]
      %v4725 = vld [vmem:[%s4718 + $0x24] sm:$0xf]
      %v4726 = vld [vmem:[%s4718 + $0x28] sm:$0xf]
      %v4727 = vld [vmem:[%s4718 + $0x30] sm:$0xf]
      %v4728 = vld [vmem:[%s4718 + $0x34] sm:$0xf]
      %v4729 = vld [vmem:[%s4718 + $0x3c] sm:$0xf]
      %v4730 = vld [vmem:[%s4718 + $0x40] sm:$0xf]
      %v4731 = vld [vmem:[%s4718 + $0x48] sm:$0xf]
      %v4732 = vld [vmem:[%s4718 + $0x4c] sm:$0xf]
      %v4733 = vld [vmem:[%s4718 + $0x54] sm:$0xf]
      %v4734 = vld [vmem:[%s4718 + $0x58] sm:$0xf]
      %v4735 = vld [vmem:[%s4718 + $0x60] sm:$0xf]
      %v4736 = vld [vmem:[%s4718 + $0x64] sm:$0xf]
      %v4737 = vld [vmem:[%s4718 + $0x6c] sm:$0xf]
      %v4738 = vld [vmem:[%s4718 + $0x70] sm:$0xf]
      %v4739 = vld [vmem:[%s4718 + $0x78] sm:$0xf]
      %v4740 = vld [vmem:[%s4718 + $0x7c] sm:$0xf]
      %v4741 = vld [vmem:[%s4718 + $0x84] sm:$0xf]
      %v4742 = vld [vmem:[%s4718 + $0x88] sm:$0xf]
      %v4743 = vld [vmem:[%s4718 + $0x90] sm:$0xf]
      %v4744 = vld [vmem:[%s4718 + $0x94] sm:$0xf]
      %v4745 = vld [vmem:[%s4718 + $0x9c] sm:$0xf]
      %v4746 = vld [vmem:[%s4718 + $0xa0] sm:$0xf]
      %v4747 = vld [vmem:[%s4718 + $0xa8] sm:$0xf]
      %v4748 = vld [vmem:[%s4718 + $0xac] sm:$0xf]
      %v4749 = vld [vmem:[%s4718 + $0xb4] sm:$0xf]
      %v4750 = vld [vmem:[%s4718 + $0xb8] sm:$0xf]
      %s4751 = scalar_lea.vmem %s3, 192
      %v4752 = vld [vmem:[%s4751] sm:$0xf]
      %v4753 = vld [vmem:[%s4751 + $0x4] sm:$0xf]
      %v4754 = vld [vmem:[%s4751 + $0x8] sm:$0xf]
      %v4755 = vld [vmem:[%s4751 + $0xc] sm:$0xf]
      %v4756 = vld [vmem:[%s4751 + $0x10] sm:$0xf]
      %v4757 = vld [vmem:[%s4751 + $0x14] sm:$0xf]
      %v4758 = vld [vmem:[%s4751 + $0x18] sm:$0xf]
      %v4759 = vld [vmem:[%s4751 + $0x1c] sm:$0xf]
      %v4792 = vunpack.c.l.b16 %v4719
      %v4793 = vunpack.c.l.b16 %v4720
      %v4794 = vunpack.c.l.b16 %v4721
      %v4795 = vunpack.c.l.b16 %v4722
      %v4796 = vunpack.c.l.b16 %v4723
      %v4797 = vunpack.c.l.b16 %v4724
      %v4798 = vunpack.c.l.b16 %v4725
      %v4799 = vunpack.c.l.b16 %v4726
      %v4800 = vunpack.c.l.b16 %v4727
      %v4801 = vunpack.c.l.b16 %v4728
      %v4802 = vunpack.c.l.b16 %v4729
      %v4803 = vunpack.c.l.b16 %v4730
      %v4804 = vunpack.c.l.b16 %v4731
      %v4805 = vunpack.c.l.b16 %v4732
      %v4806 = vunpack.c.l.b16 %v4733
      %v4807 = vunpack.c.l.b16 %v4734
      %v4808 = vunpack.c.l.b16 %v4735
      %v4809 = vunpack.c.l.b16 %v4736
      %v4810 = vunpack.c.l.b16 %v4737
      %v4811 = vunpack.c.l.b16 %v4738
      %v4812 = vunpack.c.l.b16 %v4739
      %v4813 = vunpack.c.l.b16 %v4740
      %v4814 = vunpack.c.l.b16 %v4741
      %v4815 = vunpack.c.l.b16 %v4742
      %v4816 = vunpack.c.l.b16 %v4743
      %v4817 = vunpack.c.l.b16 %v4744
      %v4818 = vunpack.c.l.b16 %v4745
      %v4819 = vunpack.c.l.b16 %v4746
      %v4820 = vunpack.c.l.b16 %v4747
      %v4821 = vunpack.c.l.b16 %v4748
      %v4822 = vunpack.c.l.b16 %v4749
      %v4823 = vunpack.c.l.b16 %v4750
      %v4824 = vpack.c.b16 %v4793, %v4792
      %v4825 = vpack.c.b16 %v4795, %v4794
      %v4826 = vpack.c.b16 %v4797, %v4796
      %v4827 = vpack.c.b16 %v4799, %v4798
      %v4828 = vpack.c.b16 %v4801, %v4800
      %v4829 = vpack.c.b16 %v4803, %v4802
      %v4830 = vpack.c.b16 %v4805, %v4804
      %v4831 = vpack.c.b16 %v4807, %v4806
      %v4832 = vpack.c.b16 %v4809, %v4808
      %v4833 = vpack.c.b16 %v4811, %v4810
      %v4834 = vpack.c.b16 %v4813, %v4812
      %v4835 = vpack.c.b16 %v4815, %v4814
      %v4836 = vpack.c.b16 %v4817, %v4816
      %v4837 = vpack.c.b16 %v4819, %v4818
      %v4838 = vpack.c.b16 %v4821, %v4820
      %v4839 = vpack.c.b16 %v4823, %v4822
      %v4848 = vunpack.c.l.b16 %v4752
      %v4849 = vunpack.c.l.b16 %v4753
      %v4850 = vunpack.c.l.b16 %v4754
      %v4851 = vunpack.c.l.b16 %v4755
      %v4852 = vunpack.c.l.b16 %v4756
      %v4853 = vunpack.c.l.b16 %v4757
      %v4854 = vunpack.c.l.b16 %v4758
      %v4855 = vunpack.c.l.b16 %v4759
      %v4856 = vpack.c.b16 %v4849, %v4848
      %v4857 = vpack.c.b16 %v4851, %v4850
      %v4858 = vpack.c.b16 %v4853, %v4852
      %v4859 = vpack.c.b16 %v4855, %v4854
      %v4865 = vsel %vm2072, %v4824, 0
      %v4868 = vsel %vm2072, %v4825, 0
      %v4871 = vsel %vm2072, %v4826, 0
      %v4874 = vsel %vm2072, %v4827, 0
      %v4877 = vsel %vm2072, %v4828, 0
      %v4880 = vsel %vm2072, %v4829, 0
      %v4883 = vsel %vm2072, %v4830, 0
      %v4886 = vsel %vm2072, %v4831, 0
      %v4889 = vsel %vm2072, %v4832, 0
      %v4892 = vsel %vm2072, %v4833, 0
      %v4895 = vsel %vm2072, %v4834, 0
      %v4898 = vsel %vm2072, %v4835, 0
      %v4901 = vsel %vm2072, %v4836, 0
      %v4904 = vsel %vm2072, %v4837, 0
      %v4907 = vsel %vm2072, %v4838, 0
      %v4910 = vsel %vm2072, %v4839, 0
      %4912 = vmatprep.subr.bf16.mxu0 0
      %4913 = vmatpush1.bf16.msra.mxu0 %v4856
      %4914 = vmatprep.subr.bf16.mxu0 0
      %4915 = vmatpush1.bf16.msra.mxu0 %v4857
      %4916 = vmatprep.subr.bf16.mxu0 0
      %4917 = vmatpush1.bf16.msra.mxu0 %v4858
      %4918 = vmatprep.subr.bf16.mxu0 0
      %4919 = vmatpush1.bf16.msra.mxu0 %v4859
      %4920 = vmatprep.subr.bf16.mxu0 0
      %4921 = vmatpush1.bf16.msra.mxu0 0
      %4922 = vmatprep.subr.bf16.mxu0 0
      %4923 = vmatpush1.bf16.msra.mxu0 0
      %4924 = vmatprep.subr.bf16.mxu0 0
      %4925 = vmatpush1.bf16.msra.mxu0 0
      %4926 = vmatprep.subr.bf16.mxu0 0
      %4927 = vmatpush1.bf16.msra.mxu0 0
      %4928 = vmatprep.subr.bf16.mxu0 0
      %4929 = vmatpush1.bf16.msra.mxu0 0
      %4930 = vmatprep.subr.bf16.mxu0 0
      %4931 = vmatpush1.bf16.msra.mxu0 0
      %4932 = vmatprep.subr.bf16.mxu0 0
      %4933 = vmatpush1.bf16.msra.mxu0 0
      %4934 = vmatprep.subr.bf16.mxu0 0
      %4935 = vmatpush1.bf16.msra.mxu0 0
      %4936 = vmatprep.subr.bf16.mxu0 0
      %4937 = vmatpush1.bf16.msra.mxu0 0
      %4938 = vmatprep.subr.bf16.mxu0 0
      %4939 = vmatpush1.bf16.msra.mxu0 0
      %4940 = vmatprep.subr.bf16.mxu0 0
      %4941 = vmatpush1.bf16.msra.mxu0 0
      %4942 = vmatprep.subr.bf16.mxu0 0
      %4943 = vmatpush1.bf16.msra.mxu0 0
      %4944 = vmatprep.mubr.bf16.mxu0 0
      %4945 = vmatmul.mubr.bf16.gmra.mrb[0].mxu0 %v4865
      %v4946 = vpop.f32.mrb[0].mxu0
      %v4947 = vadd.f32 0.0, %v4946
      %v4948 = vpop.f32.mrb[0].mxu0
      %v4949 = vpop.f32.mrb[0].mxu0
      %v4950 = vadd.f32 0.0, %v4949
      %v4951 = vpop.f32.mrb[0].mxu0
      %4952 = vmatprep.mubr.bf16.mxu0 0
      %4953 = vmatmul.mubr.bf16.gmra.mrb[0].mxu0 %v4868
      %v4954 = vpop.f32.mrb[0].mxu0
      %v4955 = vadd.f32 0.0, %v4954
      %v4956 = vpop.f32.mrb[0].mxu0
      %v4957 = vpop.f32.mrb[0].mxu0
      %v4958 = vadd.f32 0.0, %v4957
      %v4959 = vpop.f32.mrb[0].mxu0
      %4960 = vmatprep.mubr.bf16.mxu0 0
      %4961 = vmatmul.mubr.bf16.gmra.mrb[0].mxu0 %v4871
      %v4962 = vpop.f32.mrb[0].mxu0
      %v4963 = vadd.f32 0.0, %v4962
      %v4964 = vpop.f32.mrb[0].mxu0
      %v4965 = vpop.f32.mrb[0].mxu0
      %v4966 = vadd.f32 0.0, %v4965
      %v4967 = vpop.f32.mrb[0].mxu0
      %4968 = vmatprep.mubr.bf16.mxu0 0
      %4969 = vmatmul.mubr.bf16.gmra.mrb[0].mxu0 %v4874
      %v4970 = vpop.f32.mrb[0].mxu0
      %v4971 = vadd.f32 0.0, %v4970
      %v4972 = vpop.f32.mrb[0].mxu0
      %v4973 = vpop.f32.mrb[0].mxu0
      %v4974 = vadd.f32 0.0, %v4973
      %v4975 = vpop.f32.mrb[0].mxu0
      %4976 = vmatprep.mubr.bf16.mxu0 0
      %4977 = vmatmul.mubr.bf16.gmra.mrb[0].mxu0 %v4877
      %v4978 = vpop.f32.mrb[0].mxu0
      %v4979 = vadd.f32 0.0, %v4978
      %v4980 = vpop.f32.mrb[0].mxu0
      %v4981 = vpop.f32.mrb[0].mxu0
      %v4982 = vadd.f32 0.0, %v4981
      %v4983 = vpop.f32.mrb[0].mxu0
      %4984 = vmatprep.mubr.bf16.mxu0 0
      %4985 = vmatmul.mubr.bf16.gmra.mrb[0].mxu0 %v4880
      %v4986 = vpop.f32.mrb[0].mxu0
      %v4987 = vadd.f32 0.0, %v4986
      %v4988 = vpop.f32.mrb[0].mxu0
      %v4989 = vpop.f32.mrb[0].mxu0
      %v4990 = vadd.f32 0.0, %v4989
      %v4991 = vpop.f32.mrb[0].mxu0
      %4992 = vmatprep.mubr.bf16.mxu0 0
      %4993 = vmatmul.mubr.bf16.gmra.mrb[0].mxu0 %v4883
      %v4994 = vpop.f32.mrb[0].mxu0
      %v4995 = vadd.f32 0.0, %v4994
      %v4996 = vpop.f32.mrb[0].mxu0
      %v4997 = vpop.f32.mrb[0].mxu0
      %v4998 = vadd.f32 0.0, %v4997
      %v4999 = vpop.f32.mrb[0].mxu0
      %5000 = vmatprep.mubr.bf16.mxu0 0
      %5001 = vmatmul.mubr.bf16.gmra.mrb[0].mxu0 %v4886
      %v5002 = vpop.f32.mrb[0].mxu0
      %v5003 = vadd.f32 0.0, %v5002
      %v5004 = vpop.f32.mrb[0].mxu0
      %v5005 = vpop.f32.mrb[0].mxu0
      %v5006 = vadd.f32 0.0, %v5005
      %v5007 = vpop.f32.mrb[0].mxu0
      %5008 = vmatprep.mubr.bf16.mxu0 0
      %5009 = vmatmul.mubr.bf16.gmra.mrb[0].mxu0 %v4889
      %v5010 = vpop.f32.mrb[0].mxu0
      %v5011 = vadd.f32 0.0, %v5010
      %v5012 = vpop.f32.mrb[0].mxu0
      %v5013 = vpop.f32.mrb[0].mxu0
      %v5014 = vadd.f32 0.0, %v5013
      %v5015 = vpop.f32.mrb[0].mxu0
      %5016 = vmatprep.mubr.bf16.mxu0 0
      %5017 = vmatmul.mubr.bf16.gmra.mrb[0].mxu0 %v4892
      %v5018 = vpop.f32.mrb[0].mxu0
      %v5019 = vadd.f32 0.0, %v5018
      %v5020 = vpop.f32.mrb[0].mxu0
      %v5021 = vpop.f32.mrb[0].mxu0
      %v5022 = vadd.f32 0.0, %v5021
      %v5023 = vpop.f32.mrb[0].mxu0
      %5024 = vmatprep.mubr.bf16.mxu0 0
      %5025 = vmatmul.mubr.bf16.gmra.mrb[0].mxu0 %v4895
      %v5026 = vpop.f32.mrb[0].mxu0
      %v5027 = vadd.f32 0.0, %v5026
      %v5028 = vpop.f32.mrb[0].mxu0
      %v5029 = vpop.f32.mrb[0].mxu0
      %v5030 = vadd.f32 0.0, %v5029
      %v5031 = vpop.f32.mrb[0].mxu0
      %5032 = vmatprep.mubr.bf16.mxu0 0
      %5033 = vmatmul.mubr.bf16.gmra.mrb[0].mxu0 %v4898
      %v5034 = vpop.f32.mrb[0].mxu0
      %v5035 = vadd.f32 0.0, %v5034
      %v5036 = vpop.f32.mrb[0].mxu0
      %v5037 = vpop.f32.mrb[0].mxu0
      %v5038 = vadd.f32 0.0, %v5037
      %v5039 = vpop.f32.mrb[0].mxu0
      %5040 = vmatprep.mubr.bf16.mxu0 0
      %5041 = vmatmul.mubr.bf16.gmra.mrb[0].mxu0 %v4901
      %v5042 = vpop.f32.mrb[0].mxu0
      %v5043 = vadd.f32 0.0, %v5042
      %v5044 = vpop.f32.mrb[0].mxu0
      %v5045 = vpop.f32.mrb[0].mxu0
      %v5046 = vadd.f32 0.0, %v5045
      %v5047 = vpop.f32.mrb[0].mxu0
      %5048 = vmatprep.mubr.bf16.mxu0 0
      %5049 = vmatmul.mubr.bf16.gmra.mrb[0].mxu0 %v4904
      %v5050 = vpop.f32.mrb[0].mxu0
      %v5051 = vadd.f32 0.0, %v5050
      %v5052 = vpop.f32.mrb[0].mxu0
      %v5053 = vpop.f32.mrb[0].mxu0
      %v5054 = vadd.f32 0.0, %v5053
      %v5055 = vpop.f32.mrb[0].mxu0
      %5056 = vmatprep.mubr.bf16.mxu0 0
      %5057 = vmatmul.mubr.bf16.gmra.mrb[0].mxu0 %v4907
      %v5058 = vpop.f32.mrb[0].mxu0
      %v5059 = vadd.f32 0.0, %v5058
      %v5060 = vpop.f32.mrb[0].mxu0
      %v5061 = vpop.f32.mrb[0].mxu0
      %v5062 = vadd.f32 0.0, %v5061
      %v5063 = vpop.f32.mrb[0].mxu0
      %5064 = vmatprep.mubr.bf16.mxu0 0
      %5065 = vmatmul.mubr.bf16.gmra.mrb[0].mxu0 %v4910
      %v5066 = vpop.f32.mrb[0].mxu0
      %v5067 = vadd.f32 0.0, %v5066
      %v5068 = vpop.f32.mrb[0].mxu0
      %v5069 = vpop.f32.mrb[0].mxu0
      %v5070 = vadd.f32 0.0, %v5069
      %v5071 = vpop.f32.mrb[0].mxu0
      %5072 = vdwg.mxu0
      %v5073 = vadd.f32 %v4686, %v4947
      %v5074 = vadd.f32 %v4687, %v4950
      %v5075 = vadd.f32 %v4688, %v4955
      %v5076 = vadd.f32 %v4689, %v4958
      %v5077 = vadd.f32 %v4690, %v4963
      %v5078 = vadd.f32 %v4691, %v4966
      %v5079 = vadd.f32 %v4692, %v4971
      %v5080 = vadd.f32 %v4693, %v4974
      %v5081 = vadd.f32 %v4694, %v4979
      %v5082 = vadd.f32 %v4695, %v4982
      %v5083 = vadd.f32 %v4696, %v4987
      %v5084 = vadd.f32 %v4697, %v4990
      %v5085 = vadd.f32 %v4698, %v4995
      %v5086 = vadd.f32 %v4699, %v4998
      %v5087 = vadd.f32 %v4700, %v5003
      %v5088 = vadd.f32 %v4701, %v5006
      %v5089 = vadd.f32 %v4702, %v5011
      %v5090 = vadd.f32 %v4703, %v5014
      %v5091 = vadd.f32 %v4704, %v5019
      %v5092 = vadd.f32 %v4705, %v5022
      %v5093 = vadd.f32 %v4706, %v5027
      %v5094 = vadd.f32 %v4707, %v5030
      %v5095 = vadd.f32 %v4708, %v5035
      %v5096 = vadd.f32 %v4709, %v5038
      %v5097 = vadd.f32 %v4710, %v5043
      %v5098 = vadd.f32 %v4711, %v5046
      %v5099 = vadd.f32 %v4712, %v5051
      %v5100 = vadd.f32 %v4713, %v5054
      %v5101 = vadd.f32 %v4714, %v5059
      %v5102 = vadd.f32 %v4715, %v5062
      %v5103 = vadd.f32 %v4716, %v5067
      %v5104 = vadd.f32 %v4717, %v5070
      %v5105 = vld [vmem:[%s4718] sm:$0xf]
      %v5106 = vld [vmem:[%s4718 + $0x4] sm:$0xf]
      %v5107 = vld [vmem:[%s4718 + $0x8] sm:$0x1]
      %v5108 = vld [vmem:[%s4718 + $0xc] sm:$0xf]
      %v5109 = vld [vmem:[%s4718 + $0x10] sm:$0xf]
      %v5110 = vld [vmem:[%s4718 + $0x14] sm:$0x1]
      %v5111 = vld [vmem:[%s4718 + $0x18] sm:$0xf]
      %v5112 = vld [vmem:[%s4718 + $0x1c] sm:$0xf]
      %v5113 = vld [vmem:[%s4718 + $0x20] sm:$0x1]
      %v5114 = vld [vmem:[%s4718 + $0x24] sm:$0xf]
      %v5115 = vld [vmem:[%s4718 + $0x28] sm:$0xf]
      %v5116 = vld [vmem:[%s4718 + $0x2c] sm:$0x1]
      %v5117 = vld [vmem:[%s4718 + $0x30] sm:$0xf]
      %v5118 = vld [vmem:[%s4718 + $0x34] sm:$0xf]
      %v5119 = vld [vmem:[%s4718 + $0x38] sm:$0x1]
      %v5120 = vld [vmem:[%s4718 + $0x3c] sm:$0xf]
      %v5121 = vld [vmem:[%s4718 + $0x40] sm:$0xf]
      %v5122 = vld [vmem:[%s4718 + $0x44] sm:$0x1]
      %v5123 = vld [vmem:[%s4718 + $0x48] sm:$0xf]
      %v5124 = vld [vmem:[%s4718 + $0x4c] sm:$0xf]
      %v5125 = vld [vmem:[%s4718 + $0x50] sm:$0x1]
      %v5126 = vld [vmem:[%s4718 + $0x54] sm:$0xf]
      %v5127 = vld [vmem:[%s4718 + $0x58] sm:$0xf]
      %v5128 = vld [vmem:[%s4718 + $0x5c] sm:$0x1]
      %v5129 = vld [vmem:[%s4718 + $0x60] sm:$0xf]
      %v5130 = vld [vmem:[%s4718 + $0x64] sm:$0xf]
      %v5131 = vld [vmem:[%s4718 + $0x68] sm:$0x1]
      %v5132 = vld [vmem:[%s4718 + $0x6c] sm:$0xf]
      %v5133 = vld [vmem:[%s4718 + $0x70] sm:$0xf]
      %v5134 = vld [vmem:[%s4718 + $0x74] sm:$0x1]
      %v5135 = vld [vmem:[%s4718 + $0x78] sm:$0xf]
      %v5136 = vld [vmem:[%s4718 + $0x7c] sm:$0xf]
      %v5137 = vld [vmem:[%s4718 + $0x80] sm:$0x1]
      %v5138 = vld [vmem:[%s4718 + $0x84] sm:$0xf]
      %v5139 = vld [vmem:[%s4718 + $0x88] sm:$0xf]
      %v5140 = vld [vmem:[%s4718 + $0x8c] sm:$0x1]
      %v5141 = vld [vmem:[%s4718 + $0x90] sm:$0xf]
      %v5142 = vld [vmem:[%s4718 + $0x94] sm:$0xf]
      %v5143 = vld [vmem:[%s4718 + $0x98] sm:$0x1]
      %v5144 = vld [vmem:[%s4718 + $0x9c] sm:$0xf]
      %v5145 = vld [vmem:[%s4718 + $0xa0] sm:$0xf]
      %v5146 = vld [vmem:[%s4718 + $0xa4] sm:$0x1]
      %v5147 = vld [vmem:[%s4718 + $0xa8] sm:$0xf]
      %v5148 = vld [vmem:[%s4718 + $0xac] sm:$0xf]
      %v5149 = vld [vmem:[%s4718 + $0xb0] sm:$0x1]
      %v5150 = vld [vmem:[%s4718 + $0xb4] sm:$0xf]
      %v5151 = vld [vmem:[%s4718 + $0xb8] sm:$0xf]
      %v5152 = vld [vmem:[%s4718 + $0xbc] sm:$0x1]
      %v5154 = vshrl.u32 %v5105, 16
      %v5156 = vrot.slane %v5154, 4
      %v5157 = vshll.u32 %v5105, 16
      %v5159 = vrot.slane %v5157, 5
      %v5160 = vor.u32 %v5156, %v5159
      %v5161 = vrot.slane %v5160, 4
      %v5163 = vshll.u32 %v5106, 16
      %v5165 = vrot.slane %v5163, 5
      %v5166 = vsel %vm1606, %v5161, %v5165
      %v5167 = vshrl.u32 %v5106, 16
      %v5169 = vrot.slane %v5167, 4
      %v5170 = vor.u32 %v5169, %v5165
      %v5171 = vrot.slane %v5170, 4
      %v5173 = vshll.u32 %v5107, 16
      %v5175 = vrot.slane %v5173, 5
      %v5176 = vsel %vm1606, %v5171, %v5175
      %v5178 = vshrl.u32 %v5108, 16
      %v5180 = vrot.slane %v5178, 4
      %v5181 = vshll.u32 %v5108, 16
      %v5183 = vrot.slane %v5181, 5
      %v5184 = vor.u32 %v5180, %v5183
      %v5185 = vrot.slane %v5184, 4
      %v5187 = vshll.u32 %v5109, 16
      %v5189 = vrot.slane %v5187, 5
      %v5190 = vsel %vm1606, %v5185, %v5189
      %v5191 = vshrl.u32 %v5109, 16
      %v5193 = vrot.slane %v5191, 4
      %v5194 = vor.u32 %v5193, %v5189
      %v5195 = vrot.slane %v5194, 4
      %v5197 = vshll.u32 %v5110, 16
      %v5199 = vrot.slane %v5197, 5
      %v5200 = vsel %vm1606, %v5195, %v5199
      %v5202 = vshrl.u32 %v5111, 16
      %v5204 = vrot.slane %v5202, 4
      %v5205 = vshll.u32 %v5111, 16
      %v5207 = vrot.slane %v5205, 5
      %v5208 = vor.u32 %v5204, %v5207
      %v5209 = vrot.slane %v5208, 4
      %v5211 = vshll.u32 %v5112, 16
      %v5213 = vrot.slane %v5211, 5
      %v5214 = vsel %vm1606, %v5209, %v5213
      %v5215 = vshrl.u32 %v5112, 16
      %v5217 = vrot.slane %v5215, 4
      %v5218 = vor.u32 %v5217, %v5213
      %v5219 = vrot.slane %v5218, 4
      %v5221 = vshll.u32 %v5113, 16
      %v5223 = vrot.slane %v5221, 5
      %v5224 = vsel %vm1606, %v5219, %v5223
      %v5226 = vshrl.u32 %v5114, 16
      %v5228 = vrot.slane %v5226, 4
      %v5229 = vshll.u32 %v5114, 16
      %v5231 = vrot.slane %v5229, 5
      %v5232 = vor.u32 %v5228, %v5231
      %v5233 = vrot.slane %v5232, 4
      %v5235 = vshll.u32 %v5115, 16
      %v5237 = vrot.slane %v5235, 5
      %v5238 = vsel %vm1606, %v5233, %v5237
      %v5239 = vshrl.u32 %v5115, 16
      %v5241 = vrot.slane %v5239, 4
      %v5242 = vor.u32 %v5241, %v5237
      %v5243 = vrot.slane %v5242, 4
      %v5245 = vshll.u32 %v5116, 16
      %v5247 = vrot.slane %v5245, 5
      %v5248 = vsel %vm1606, %v5243, %v5247
      %v5250 = vshrl.u32 %v5117, 16
      %v5252 = vrot.slane %v5250, 4
      %v5253 = vshll.u32 %v5117, 16
      %v5255 = vrot.slane %v5253, 5
      %v5256 = vor.u32 %v5252, %v5255
      %v5257 = vrot.slane %v5256, 4
      %v5259 = vshll.u32 %v5118, 16
      %v5261 = vrot.slane %v5259, 5
      %v5262 = vsel %vm1606, %v5257, %v5261
      %v5263 = vshrl.u32 %v5118, 16
      %v5265 = vrot.slane %v5263, 4
      %v5266 = vor.u32 %v5265, %v5261
      %v5267 = vrot.slane %v5266, 4
      %v5269 = vshll.u32 %v5119, 16
      %v5271 = vrot.slane %v5269, 5
      %v5272 = vsel %vm1606, %v5267, %v5271
      %v5274 = vshrl.u32 %v5120, 16
      %v5276 = vrot.slane %v5274, 4
      %v5277 = vshll.u32 %v5120, 16
      %v5279 = vrot.slane %v5277, 5
      %v5280 = vor.u32 %v5276, %v5279
      %v5281 = vrot.slane %v5280, 4
      %v5283 = vshll.u32 %v5121, 16
      %v5285 = vrot.slane %v5283, 5
      %v5286 = vsel %vm1606, %v5281, %v5285
      %v5287 = vshrl.u32 %v5121, 16
      %v5289 = vrot.slane %v5287, 4
      %v5290 = vor.u32 %v5289, %v5285
      %v5291 = vrot.slane %v5290, 4
      %v5293 = vshll.u32 %v5122, 16
      %v5295 = vrot.slane %v5293, 5
      %v5296 = vsel %vm1606, %v5291, %v5295
      %v5298 = vshrl.u32 %v5123, 16
      %v5300 = vrot.slane %v5298, 4
      %v5301 = vshll.u32 %v5123, 16
      %v5303 = vrot.slane %v5301, 5
      %v5304 = vor.u32 %v5300, %v5303
      %v5305 = vrot.slane %v5304, 4
      %v5307 = vshll.u32 %v5124, 16
      %v5309 = vrot.slane %v5307, 5
      %v5310 = vsel %vm1606, %v5305, %v5309
      %v5311 = vshrl.u32 %v5124, 16
      %v5313 = vrot.slane %v5311, 4
      %v5314 = vor.u32 %v5313, %v5309
      %v5315 = vrot.slane %v5314, 4
      %v5317 = vshll.u32 %v5125, 16
      %v5319 = vrot.slane %v5317, 5
      %v5320 = vsel %vm1606, %v5315, %v5319
      %v5322 = vshrl.u32 %v5126, 16
      %v5324 = vrot.slane %v5322, 4
      %v5325 = vshll.u32 %v5126, 16
      %v5327 = vrot.slane %v5325, 5
      %v5328 = vor.u32 %v5324, %v5327
      %v5329 = vrot.slane %v5328, 4
      %v5331 = vshll.u32 %v5127, 16
      %v5333 = vrot.slane %v5331, 5
      %v5334 = vsel %vm1606, %v5329, %v5333
      %v5335 = vshrl.u32 %v5127, 16
      %v5337 = vrot.slane %v5335, 4
      %v5338 = vor.u32 %v5337, %v5333
      %v5339 = vrot.slane %v5338, 4
      %v5341 = vshll.u32 %v5128, 16
      %v5343 = vrot.slane %v5341, 5
      %v5344 = vsel %vm1606, %v5339, %v5343
      %v5346 = vshrl.u32 %v5129, 16
      %v5348 = vrot.slane %v5346, 4
      %v5349 = vshll.u32 %v5129, 16
      %v5351 = vrot.slane %v5349, 5
      %v5352 = vor.u32 %v5348, %v5351
      %v5353 = vrot.slane %v5352, 4
      %v5355 = vshll.u32 %v5130, 16
      %v5357 = vrot.slane %v5355, 5
      %v5358 = vsel %vm1606, %v5353, %v5357
      %v5359 = vshrl.u32 %v5130, 16
      %v5361 = vrot.slane %v5359, 4
      %v5362 = vor.u32 %v5361, %v5357
      %v5363 = vrot.slane %v5362, 4
      %v5365 = vshll.u32 %v5131, 16
      %v5367 = vrot.slane %v5365, 5
      %v5368 = vsel %vm1606, %v5363, %v5367
      %v5370 = vshrl.u32 %v5132, 16
      %v5372 = vrot.slane %v5370, 4
      %v5373 = vshll.u32 %v5132, 16
      %v5375 = vrot.slane %v5373, 5
      %v5376 = vor.u32 %v5372, %v5375
      %v5377 = vrot.slane %v5376, 4
      %v5379 = vshll.u32 %v5133, 16
      %v5381 = vrot.slane %v5379, 5
      %v5382 = vsel %vm1606, %v5377, %v5381
      %v5383 = vshrl.u32 %v5133, 16
      %v5385 = vrot.slane %v5383, 4
      %v5386 = vor.u32 %v5385, %v5381
      %v5387 = vrot.slane %v5386, 4
      %v5389 = vshll.u32 %v5134, 16
      %v5391 = vrot.slane %v5389, 5
      %v5392 = vsel %vm1606, %v5387, %v5391
      %v5394 = vshrl.u32 %v5135, 16
      %v5396 = vrot.slane %v5394, 4
      %v5397 = vshll.u32 %v5135, 16
      %v5399 = vrot.slane %v5397, 5
      %v5400 = vor.u32 %v5396, %v5399
      %v5401 = vrot.slane %v5400, 4
      %v5403 = vshll.u32 %v5136, 16
      %v5405 = vrot.slane %v5403, 5
      %v5406 = vsel %vm1606, %v5401, %v5405
      %v5407 = vshrl.u32 %v5136, 16
      %v5409 = vrot.slane %v5407, 4
      %v5410 = vor.u32 %v5409, %v5405
      %v5411 = vrot.slane %v5410, 4
      %v5413 = vshll.u32 %v5137, 16
      %v5415 = vrot.slane %v5413, 5
      %v5416 = vsel %vm1606, %v5411, %v5415
      %v5418 = vshrl.u32 %v5138, 16
      %v5420 = vrot.slane %v5418, 4
      %v5421 = vshll.u32 %v5138, 16
      %v5423 = vrot.slane %v5421, 5
      %v5424 = vor.u32 %v5420, %v5423
      %v5425 = vrot.slane %v5424, 4
      %v5427 = vshll.u32 %v5139, 16
      %v5429 = vrot.slane %v5427, 5
      %v5430 = vsel %vm1606, %v5425, %v5429
      %v5431 = vshrl.u32 %v5139, 16
      %v5433 = vrot.slane %v5431, 4
      %v5434 = vor.u32 %v5433, %v5429
      %v5435 = vrot.slane %v5434, 4
      %v5437 = vshll.u32 %v5140, 16
      %v5439 = vrot.slane %v5437, 5
      %v5440 = vsel %vm1606, %v5435, %v5439
      %v5442 = vshrl.u32 %v5141, 16
      %v5444 = vrot.slane %v5442, 4
      %v5445 = vshll.u32 %v5141, 16
      %v5447 = vrot.slane %v5445, 5
      %v5448 = vor.u32 %v5444, %v5447
      %v5449 = vrot.slane %v5448, 4
      %v5451 = vshll.u32 %v5142, 16
      %v5453 = vrot.slane %v5451, 5
      %v5454 = vsel %vm1606, %v5449, %v5453
      %v5455 = vshrl.u32 %v5142, 16
      %v5457 = vrot.slane %v5455, 4
      %v5458 = vor.u32 %v5457, %v5453
      %v5459 = vrot.slane %v5458, 4
      %v5461 = vshll.u32 %v5143, 16
      %v5463 = vrot.slane %v5461, 5
      %v5464 = vsel %vm1606, %v5459, %v5463
      %v5466 = vshrl.u32 %v5144, 16
      %v5468 = vrot.slane %v5466, 4
      %v5469 = vshll.u32 %v5144, 16
      %v5471 = vrot.slane %v5469, 5
      %v5472 = vor.u32 %v5468, %v5471
      %v5473 = vrot.slane %v5472, 4
      %v5475 = vshll.u32 %v5145, 16
      %v5477 = vrot.slane %v5475, 5
      %v5478 = vsel %vm1606, %v5473, %v5477
      %v5479 = vshrl.u32 %v5145, 16
      %v5481 = vrot.slane %v5479, 4
      %v5482 = vor.u32 %v5481, %v5477
      %v5483 = vrot.slane %v5482, 4
      %v5485 = vshll.u32 %v5146, 16
      %v5487 = vrot.slane %v5485, 5
      %v5488 = vsel %vm1606, %v5483, %v5487
      %v5490 = vshrl.u32 %v5147, 16
      %v5492 = vrot.slane %v5490, 4
      %v5493 = vshll.u32 %v5147, 16
      %v5495 = vrot.slane %v5493, 5
      %v5496 = vor.u32 %v5492, %v5495
      %v5497 = vrot.slane %v5496, 4
      %v5499 = vshll.u32 %v5148, 16
      %v5501 = vrot.slane %v5499, 5
      %v5502 = vsel %vm1606, %v5497, %v5501
      %v5503 = vshrl.u32 %v5148, 16
      %v5505 = vrot.slane %v5503, 4
      %v5506 = vor.u32 %v5505, %v5501
      %v5507 = vrot.slane %v5506, 4
      %v5509 = vshll.u32 %v5149, 16
      %v5511 = vrot.slane %v5509, 5
      %v5512 = vsel %vm1606, %v5507, %v5511
      %v5514 = vshrl.u32 %v5150, 16
      %v5516 = vrot.slane %v5514, 4
      %v5517 = vshll.u32 %v5150, 16
      %v5519 = vrot.slane %v5517, 5
      %v5520 = vor.u32 %v5516, %v5519
      %v5521 = vrot.slane %v5520, 4
      %v5523 = vshll.u32 %v5151, 16
      %v5525 = vrot.slane %v5523, 5
      %v5526 = vsel %vm1606, %v5521, %v5525
      %v5527 = vshrl.u32 %v5151, 16
      %v5529 = vrot.slane %v5527, 4
      %v5530 = vor.u32 %v5529, %v5525
      %v5531 = vrot.slane %v5530, 4
      %v5533 = vshll.u32 %v5152, 16
      %v5535 = vrot.slane %v5533, 5
      %v5536 = vsel %vm1606, %v5531, %v5535
      %s5537 = scalar_lea.vmem %s3, 224
      %v5538 = vld [vmem:[%s5537] sm:$0xf]
      %v5539 = vld [vmem:[%s5537 + $0x4] sm:$0xf]
      %v5540 = vld [vmem:[%s5537 + $0x8] sm:$0xf]
      %v5541 = vld [vmem:[%s5537 + $0xc] sm:$0xf]
      %v5542 = vld [vmem:[%s5537 + $0x10] sm:$0xf]
      %v5543 = vld [vmem:[%s5537 + $0x14] sm:$0xf]
      %v5544 = vld [vmem:[%s5537 + $0x18] sm:$0xf]
      %v5545 = vld [vmem:[%s5537 + $0x1c] sm:$0xf]
      %v5546 = vunpack.c.l.b16 %v5166
      %v5547 = vunpack.c.l.b16 %v5176
      %v5548 = vunpack.c.l.b16 %v5190
      %v5549 = vunpack.c.l.b16 %v5200
      %v5550 = vunpack.c.l.b16 %v5214
      %v5551 = vunpack.c.l.b16 %v5224
      %v5552 = vunpack.c.l.b16 %v5238
      %v5553 = vunpack.c.l.b16 %v5248
      %v5554 = vunpack.c.l.b16 %v5262
      %v5555 = vunpack.c.l.b16 %v5272
      %v5556 = vunpack.c.l.b16 %v5286
      %v5557 = vunpack.c.l.b16 %v5296
      %v5558 = vunpack.c.l.b16 %v5310
      %v5559 = vunpack.c.l.b16 %v5320
      %v5560 = vunpack.c.l.b16 %v5334
      %v5561 = vunpack.c.l.b16 %v5344
      %v5562 = vunpack.c.l.b16 %v5358
      %v5563 = vunpack.c.l.b16 %v5368
      %v5564 = vunpack.c.l.b16 %v5382
      %v5565 = vunpack.c.l.b16 %v5392
      %v5566 = vunpack.c.l.b16 %v5406
      %v5567 = vunpack.c.l.b16 %v5416
      %v5568 = vunpack.c.l.b16 %v5430
      %v5569 = vunpack.c.l.b16 %v5440
      %v5570 = vunpack.c.l.b16 %v5454
      %v5571 = vunpack.c.l.b16 %v5464
      %v5572 = vunpack.c.l.b16 %v5478
      %v5573 = vunpack.c.l.b16 %v5488
      %v5574 = vunpack.c.l.b16 %v5502
      %v5575 = vunpack.c.l.b16 %v5512
      %v5576 = vunpack.c.l.b16 %v5526
      %v5577 = vunpack.c.l.b16 %v5536
      %v5578 = vpack.c.b16 %v5547, %v5546
      %v5579 = vpack.c.b16 %v5549, %v5548
      %v5580 = vpack.c.b16 %v5551, %v5550
      %v5581 = vpack.c.b16 %v5553, %v5552
      %v5582 = vpack.c.b16 %v5555, %v5554
      %v5583 = vpack.c.b16 %v5557, %v5556
      %v5584 = vpack.c.b16 %v5559, %v5558
      %v5585 = vpack.c.b16 %v5561, %v5560
      %v5586 = vpack.c.b16 %v5563, %v5562
      %v5587 = vpack.c.b16 %v5565, %v5564
      %v5588 = vpack.c.b16 %v5567, %v5566
      %v5589 = vpack.c.b16 %v5569, %v5568
      %v5590 = vpack.c.b16 %v5571, %v5570
      %v5591 = vpack.c.b16 %v5573, %v5572
      %v5592 = vpack.c.b16 %v5575, %v5574
      %v5593 = vpack.c.b16 %v5577, %v5576
      %v5602 = vunpack.c.l.b16 %v5538
      %v5603 = vunpack.c.l.b16 %v5539
      %v5604 = vunpack.c.l.b16 %v5540
      %v5605 = vunpack.c.l.b16 %v5541
      %v5606 = vunpack.c.l.b16 %v5542
      %v5607 = vunpack.c.l.b16 %v5543
      %v5608 = vunpack.c.l.b16 %v5544
      %v5609 = vunpack.c.l.b16 %v5545
      %v5610 = vpack.c.b16 %v5603, %v5602
      %v5611 = vpack.c.b16 %v5605, %v5604
      %v5612 = vpack.c.b16 %v5607, %v5606
      %v5613 = vpack.c.b16 %v5609, %v5608
      %v5619 = vsel %vm2072, %v5578, 0
      %v5622 = vsel %vm2072, %v5579, 0
      %v5625 = vsel %vm2072, %v5580, 0
      %v5628 = vsel %vm2072, %v5581, 0
      %v5631 = vsel %vm2072, %v5582, 0
      %v5634 = vsel %vm2072, %v5583, 0
      %v5637 = vsel %vm2072, %v5584, 0
      %v5640 = vsel %vm2072, %v5585, 0
      %v5643 = vsel %vm2072, %v5586, 0
      %v5646 = vsel %vm2072, %v5587, 0
      %v5649 = vsel %vm2072, %v5588, 0
      %v5652 = vsel %vm2072, %v5589, 0
      %v5655 = vsel %vm2072, %v5590, 0
      %v5658 = vsel %vm2072, %v5591, 0
      %v5661 = vsel %vm2072, %v5592, 0
      %v5664 = vsel %vm2072, %v5593, 0
      %5666 = vmatprep.subr.bf16.mxu0 0
      %5667 = vmatpush1.bf16.msra.mxu0 %v5610
      %5668 = vmatprep.subr.bf16.mxu0 0
      %5669 = vmatpush1.bf16.msra.mxu0 %v5611
      %5670 = vmatprep.subr.bf16.mxu0 0
      %5671 = vmatpush1.bf16.msra.mxu0 %v5612
      %5672 = vmatprep.subr.bf16.mxu0 0
      %5673 = vmatpush1.bf16.msra.mxu0 %v5613
      %5674 = vmatprep.subr.bf16.mxu0 0
      %5675 = vmatpush1.bf16.msra.mxu0 0
      %5676 = vmatprep.subr.bf16.mxu0 0
      %5677 = vmatpush1.bf16.msra.mxu0 0
      %5678 = vmatprep.subr.bf16.mxu0 0
      %5679 = vmatpush1.bf16.msra.mxu0 0
      %5680 = vmatprep.subr.bf16.mxu0 0
      %5681 = vmatpush1.bf16.msra.mxu0 0
      %5682 = vmatprep.subr.bf16.mxu0 0
      %5683 = vmatpush1.bf16.msra.mxu0 0
      %5684 = vmatprep.subr.bf16.mxu0 0
      %5685 = vmatpush1.bf16.msra.mxu0 0
      %5686 = vmatprep.subr.bf16.mxu0 0
      %5687 = vmatpush1.bf16.msra.mxu0 0
      %5688 = vmatprep.subr.bf16.mxu0 0
      %5689 = vmatpush1.bf16.msra.mxu0 0
      %5690 = vmatprep.subr.bf16.mxu0 0
      %5691 = vmatpush1.bf16.msra.mxu0 0
      %5692 = vmatprep.subr.bf16.mxu0 0
      %5693 = vmatpush1.bf16.msra.mxu0 0
      %5694 = vmatprep.subr.bf16.mxu0 0
      %5695 = vmatpush1.bf16.msra.mxu0 0
      %5696 = vmatprep.subr.bf16.mxu0 0
      %5697 = vmatpush1.bf16.msra.mxu0 0
      %5698 = vmatprep.mubr.bf16.mxu0 0
      %5699 = vmatmul.mubr.bf16.gmra.mrb[0].mxu0 %v5619
      %v5700 = vpop.f32.mrb[0].mxu0
      %v5701 = vadd.f32 0.0, %v5700
      %v5702 = vpop.f32.mrb[0].mxu0
      %v5703 = vpop.f32.mrb[0].mxu0
      %v5704 = vadd.f32 0.0, %v5703
      %v5705 = vpop.f32.mrb[0].mxu0
      %5706 = vmatprep.mubr.bf16.mxu0 0
      %5707 = vmatmul.mubr.bf16.gmra.mrb[0].mxu0 %v5622
      %v5708 = vpop.f32.mrb[0].mxu0
      %v5709 = vadd.f32 0.0, %v5708
      %v5710 = vpop.f32.mrb[0].mxu0
      %v5711 = vpop.f32.mrb[0].mxu0
      %v5712 = vadd.f32 0.0, %v5711
      %v5713 = vpop.f32.mrb[0].mxu0
      %5714 = vmatprep.mubr.bf16.mxu0 0
      %5715 = vmatmul.mubr.bf16.gmra.mrb[0].mxu0 %v5625
      %v5716 = vpop.f32.mrb[0].mxu0
      %v5717 = vadd.f32 0.0, %v5716
      %v5718 = vpop.f32.mrb[0].mxu0
      %v5719 = vpop.f32.mrb[0].mxu0
      %v5720 = vadd.f32 0.0, %v5719
      %v5721 = vpop.f32.mrb[0].mxu0
      %5722 = vmatprep.mubr.bf16.mxu0 0
      %5723 = vmatmul.mubr.bf16.gmra.mrb[0].mxu0 %v5628
      %v5724 = vpop.f32.mrb[0].mxu0
      %v5725 = vadd.f32 0.0, %v5724
      %v5726 = vpop.f32.mrb[0].mxu0
      %v5727 = vpop.f32.mrb[0].mxu0
      %v5728 = vadd.f32 0.0, %v5727
      %v5729 = vpop.f32.mrb[0].mxu0
      %5730 = vmatprep.mubr.bf16.mxu0 0
      %5731 = vmatmul.mubr.bf16.gmra.mrb[0].mxu0 %v5631
      %v5732 = vpop.f32.mrb[0].mxu0
      %v5733 = vadd.f32 0.0, %v5732
      %v5734 = vpop.f32.mrb[0].mxu0
      %v5735 = vpop.f32.mrb[0].mxu0
      %v5736 = vadd.f32 0.0, %v5735
      %v5737 = vpop.f32.mrb[0].mxu0
      %5738 = vmatprep.mubr.bf16.mxu0 0
      %5739 = vmatmul.mubr.bf16.gmra.mrb[0].mxu0 %v5634
      %v5740 = vpop.f32.mrb[0].mxu0
      %v5741 = vadd.f32 0.0, %v5740
      %v5742 = vpop.f32.mrb[0].mxu0
      %v5743 = vpop.f32.mrb[0].mxu0
      %v5744 = vadd.f32 0.0, %v5743
      %v5745 = vpop.f32.mrb[0].mxu0
      %5746 = vmatprep.mubr.bf16.mxu0 0
      %5747 = vmatmul.mubr.bf16.gmra.mrb[0].mxu0 %v5637
      %v5748 = vpop.f32.mrb[0].mxu0
      %v5749 = vadd.f32 0.0, %v5748
      %v5750 = vpop.f32.mrb[0].mxu0
      %v5751 = vpop.f32.mrb[0].mxu0
      %v5752 = vadd.f32 0.0, %v5751
      %v5753 = vpop.f32.mrb[0].mxu0
      %5754 = vmatprep.mubr.bf16.mxu0 0
      %5755 = vmatmul.mubr.bf16.gmra.mrb[0].mxu0 %v5640
      %v5756 = vpop.f32.mrb[0].mxu0
      %v5757 = vadd.f32 0.0, %v5756
      %v5758 = vpop.f32.mrb[0].mxu0
      %v5759 = vpop.f32.mrb[0].mxu0
      %v5760 = vadd.f32 0.0, %v5759
      %v5761 = vpop.f32.mrb[0].mxu0
      %5762 = vmatprep.mubr.bf16.mxu0 0
      %5763 = vmatmul.mubr.bf16.gmra.mrb[0].mxu0 %v5643
      %v5764 = vpop.f32.mrb[0].mxu0
      %v5765 = vadd.f32 0.0, %v5764
      %v5766 = vpop.f32.mrb[0].mxu0
      %v5767 = vpop.f32.mrb[0].mxu0
      %v5768 = vadd.f32 0.0, %v5767
      %v5769 = vpop.f32.mrb[0].mxu0
      %5770 = vmatprep.mubr.bf16.mxu0 0
      %5771 = vmatmul.mubr.bf16.gmra.mrb[0].mxu0 %v5646
      %v5772 = vpop.f32.mrb[0].mxu0
      %v5773 = vadd.f32 0.0, %v5772
      %v5774 = vpop.f32.mrb[0].mxu0
      %v5775 = vpop.f32.mrb[0].mxu0
      %v5776 = vadd.f32 0.0, %v5775
      %v5777 = vpop.f32.mrb[0].mxu0
      %5778 = vmatprep.mubr.bf16.mxu0 0
      %5779 = vmatmul.mubr.bf16.gmra.mrb[0].mxu0 %v5649
      %v5780 = vpop.f32.mrb[0].mxu0
      %v5781 = vadd.f32 0.0, %v5780
      %v5782 = vpop.f32.mrb[0].mxu0
      %v5783 = vpop.f32.mrb[0].mxu0
      %v5784 = vadd.f32 0.0, %v5783
      %v5785 = vpop.f32.mrb[0].mxu0
      %5786 = vmatprep.mubr.bf16.mxu0 0
      %5787 = vmatmul.mubr.bf16.gmra.mrb[0].mxu0 %v5652
      %v5788 = vpop.f32.mrb[0].mxu0
      %v5789 = vadd.f32 0.0, %v5788
      %v5790 = vpop.f32.mrb[0].mxu0
      %v5791 = vpop.f32.mrb[0].mxu0
      %v5792 = vadd.f32 0.0, %v5791
      %v5793 = vpop.f32.mrb[0].mxu0
      %5794 = vmatprep.mubr.bf16.mxu0 0
      %5795 = vmatmul.mubr.bf16.gmra.mrb[0].mxu0 %v5655
      %v5796 = vpop.f32.mrb[0].mxu0
      %v5797 = vadd.f32 0.0, %v5796
      %v5798 = vpop.f32.mrb[0].mxu0
      %v5799 = vpop.f32.mrb[0].mxu0
      %v5800 = vadd.f32 0.0, %v5799
      %v5801 = vpop.f32.mrb[0].mxu0
      %5802 = vmatprep.mubr.bf16.mxu0 0
      %5803 = vmatmul.mubr.bf16.gmra.mrb[0].mxu0 %v5658
      %v5804 = vpop.f32.mrb[0].mxu0
      %v5805 = vadd.f32 0.0, %v5804
      %v5806 = vpop.f32.mrb[0].mxu0
      %v5807 = vpop.f32.mrb[0].mxu0
      %v5808 = vadd.f32 0.0, %v5807
      %v5809 = vpop.f32.mrb[0].mxu0
      %5810 = vmatprep.mubr.bf16.mxu0 0
      %5811 = vmatmul.mubr.bf16.gmra.mrb[0].mxu0 %v5661
      %v5812 = vpop.f32.mrb[0].mxu0
      %v5813 = vadd.f32 0.0, %v5812
      %v5814 = vpop.f32.mrb[0].mxu0
      %v5815 = vpop.f32.mrb[0].mxu0
      %v5816 = vadd.f32 0.0, %v5815
      %v5817 = vpop.f32.mrb[0].mxu0
      %5818 = vmatprep.mubr.bf16.mxu0 0
      %5819 = vmatmul.mubr.bf16.gmra.mrb[0].mxu0 %v5664
      %v5820 = vpop.f32.mrb[0].mxu0
      %v5821 = vadd.f32 0.0, %v5820
      %v5822 = vpop.f32.mrb[0].mxu0
      %v5823 = vpop.f32.mrb[0].mxu0
      %v5824 = vadd.f32 0.0, %v5823
      %v5825 = vpop.f32.mrb[0].mxu0
      %5826 = vdwg.mxu0
      %v5827 = vadd.f32 %v5073, %v5701
      %v5828 = vadd.f32 %v5074, %v5704
      %v5829 = vadd.f32 %v5075, %v5709
      %v5830 = vadd.f32 %v5076, %v5712
      %v5831 = vadd.f32 %v5077, %v5717
      %v5832 = vadd.f32 %v5078, %v5720
      %v5833 = vadd.f32 %v5079, %v5725
      %v5834 = vadd.f32 %v5080, %v5728
      %v5835 = vadd.f32 %v5081, %v5733
      %v5836 = vadd.f32 %v5082, %v5736
      %v5837 = vadd.f32 %v5083, %v5741
      %v5838 = vadd.f32 %v5084, %v5744
      %v5839 = vadd.f32 %v5085, %v5749
      %v5840 = vadd.f32 %v5086, %v5752
      %v5841 = vadd.f32 %v5087, %v5757
      %v5842 = vadd.f32 %v5088, %v5760
      %v5843 = vadd.f32 %v5089, %v5765
      %v5844 = vadd.f32 %v5090, %v5768
      %v5845 = vadd.f32 %v5091, %v5773
      %v5846 = vadd.f32 %v5092, %v5776
      %v5847 = vadd.f32 %v5093, %v5781
      %v5848 = vadd.f32 %v5094, %v5784
      %v5849 = vadd.f32 %v5095, %v5789
      %v5850 = vadd.f32 %v5096, %v5792
      %v5851 = vadd.f32 %v5097, %v5797
      %v5852 = vadd.f32 %v5098, %v5800
      %v5853 = vadd.f32 %v5099, %v5805
      %v5854 = vadd.f32 %v5100, %v5808
      %v5855 = vadd.f32 %v5101, %v5813
      %v5856 = vadd.f32 %v5102, %v5816
      %v5857 = vadd.f32 %v5103, %v5821
      %v5858 = vadd.f32 %v5104, %v5824
      %v5859 = vld [vmem:[%s4718] sm:$0xe]
      %v5860 = vld [vmem:[%s4718 + $0xc] sm:$0xe]
      %v5861 = vld [vmem:[%s4718 + $0x18] sm:$0xe]
      %v5862 = vld [vmem:[%s4718 + $0x24] sm:$0xe]
      %v5863 = vld [vmem:[%s4718 + $0x30] sm:$0xe]
      %v5864 = vld [vmem:[%s4718 + $0x3c] sm:$0xe]
      %v5865 = vld [vmem:[%s4718 + $0x48] sm:$0xe]
      %v5866 = vld [vmem:[%s4718 + $0x54] sm:$0xe]
      %v5867 = vld [vmem:[%s4718 + $0x60] sm:$0xe]
      %v5868 = vld [vmem:[%s4718 + $0x6c] sm:$0xe]
      %v5869 = vld [vmem:[%s4718 + $0x78] sm:$0xe]
      %v5870 = vld [vmem:[%s4718 + $0x84] sm:$0xe]
      %v5871 = vld [vmem:[%s4718 + $0x90] sm:$0xe]
      %v5872 = vld [vmem:[%s4718 + $0x9c] sm:$0xe]
      %v5873 = vld [vmem:[%s4718 + $0xa8] sm:$0xe]
      %v5874 = vld [vmem:[%s4718 + $0xb4] sm:$0xe]
      %v5923 = vrot.slane %v5859, 5
      %v5924 = vrot.slane %v5923, 4
      %v5925 = vrot.slane %v5106, 5
      %v5926 = vsel %vm2645, %v5924, %v5925
      %v5927 = vrot.slane %v5925, 4
      %v5928 = vrot.slane %v5107, 5
      %v5929 = vsel %vm2645, %v5927, %v5928
      %v5930 = vrot.slane %v5860, 5
      %v5931 = vrot.slane %v5930, 4
      %v5932 = vrot.slane %v5109, 5
      %v5933 = vsel %vm2645, %v5931, %v5932
      %v5934 = vrot.slane %v5932, 4
      %v5935 = vrot.slane %v5110, 5
      %v5936 = vsel %vm2645, %v5934, %v5935
      %v5937 = vrot.slane %v5861, 5
      %v5938 = vrot.slane %v5937, 4
      %v5939 = vrot.slane %v5112, 5
      %v5940 = vsel %vm2645, %v5938, %v5939
      %v5941 = vrot.slane %v5939, 4
      %v5942 = vrot.slane %v5113, 5
      %v5943 = vsel %vm2645, %v5941, %v5942
      %v5944 = vrot.slane %v5862, 5
      %v5945 = vrot.slane %v5944, 4
      %v5946 = vrot.slane %v5115, 5
      %v5947 = vsel %vm2645, %v5945, %v5946
      %v5948 = vrot.slane %v5946, 4
      %v5949 = vrot.slane %v5116, 5
      %v5950 = vsel %vm2645, %v5948, %v5949
      %v5951 = vrot.slane %v5863, 5
      %v5952 = vrot.slane %v5951, 4
      %v5953 = vrot.slane %v5118, 5
      %v5954 = vsel %vm2645, %v5952, %v5953
      %v5955 = vrot.slane %v5953, 4
      %v5956 = vrot.slane %v5119, 5
      %v5957 = vsel %vm2645, %v5955, %v5956
      %v5958 = vrot.slane %v5864, 5
      %v5959 = vrot.slane %v5958, 4
      %v5960 = vrot.slane %v5121, 5
      %v5961 = vsel %vm2645, %v5959, %v5960
      %v5962 = vrot.slane %v5960, 4
      %v5963 = vrot.slane %v5122, 5
      %v5964 = vsel %vm2645, %v5962, %v5963
      %v5965 = vrot.slane %v5865, 5
      %v5966 = vrot.slane %v5965, 4
      %v5967 = vrot.slane %v5124, 5
      %v5968 = vsel %vm2645, %v5966, %v5967
      %v5969 = vrot.slane %v5967, 4
      %v5970 = vrot.slane %v5125, 5
      %v5971 = vsel %vm2645, %v5969, %v5970
      %v5972 = vrot.slane %v5866, 5
      %v5973 = vrot.slane %v5972, 4
      %v5974 = vrot.slane %v5127, 5
      %v5975 = vsel %vm2645, %v5973, %v5974
      %v5976 = vrot.slane %v5974, 4
      %v5977 = vrot.slane %v5128, 5
      %v5978 = vsel %vm2645, %v5976, %v5977
      %v5979 = vrot.slane %v5867, 5
      %v5980 = vrot.slane %v5979, 4
      %v5981 = vrot.slane %v5130, 5
      %v5982 = vsel %vm2645, %v5980, %v5981
      %v5983 = vrot.slane %v5981, 4
      %v5984 = vrot.slane %v5131, 5
      %v5985 = vsel %vm2645, %v5983, %v5984
      %v5986 = vrot.slane %v5868, 5
      %v5987 = vrot.slane %v5986, 4
      %v5988 = vrot.slane %v5133, 5
      %v5989 = vsel %vm2645, %v5987, %v5988
      %v5990 = vrot.slane %v5988, 4
      %v5991 = vrot.slane %v5134, 5
      %v5992 = vsel %vm2645, %v5990, %v5991
      %v5993 = vrot.slane %v5869, 5
      %v5994 = vrot.slane %v5993, 4
      %v5995 = vrot.slane %v5136, 5
      %v5996 = vsel %vm2645, %v5994, %v5995
      %v5997 = vrot.slane %v5995, 4
      %v5998 = vrot.slane %v5137, 5
      %v5999 = vsel %vm2645, %v5997, %v5998
      %v6000 = vrot.slane %v5870, 5
      %v6001 = vrot.slane %v6000, 4
      %v6002 = vrot.slane %v5139, 5
      %v6003 = vsel %vm2645, %v6001, %v6002
      %v6004 = vrot.slane %v6002, 4
      %v6005 = vrot.slane %v5140, 5
      %v6006 = vsel %vm2645, %v6004, %v6005
      %v6007 = vrot.slane %v5871, 5
      %v6008 = vrot.slane %v6007, 4
      %v6009 = vrot.slane %v5142, 5
      %v6010 = vsel %vm2645, %v6008, %v6009
      %v6011 = vrot.slane %v6009, 4
      %v6012 = vrot.slane %v5143, 5
      %v6013 = vsel %vm2645, %v6011, %v6012
      %v6014 = vrot.slane %v5872, 5
      %v6015 = vrot.slane %v6014, 4
      %v6016 = vrot.slane %v5145, 5
      %v6017 = vsel %vm2645, %v6015, %v6016
      %v6018 = vrot.slane %v6016, 4
      %v6019 = vrot.slane %v5146, 5
      %v6020 = vsel %vm2645, %v6018, %v6019
      %v6021 = vrot.slane %v5873, 5
      %v6022 = vrot.slane %v6021, 4
      %v6023 = vrot.slane %v5148, 5
      %v6024 = vsel %vm2645, %v6022, %v6023
      %v6025 = vrot.slane %v6023, 4
      %v6026 = vrot.slane %v5149, 5
      %v6027 = vsel %vm2645, %v6025, %v6026
      %v6028 = vrot.slane %v5874, 5
      %v6029 = vrot.slane %v6028, 4
      %v6030 = vrot.slane %v5151, 5
      %v6031 = vsel %vm2645, %v6029, %v6030
      %v6032 = vrot.slane %v6030, 4
      %v6033 = vrot.slane %v5152, 5
      %v6034 = vsel %vm2645, %v6032, %v6033
      %s6035 = scalar_lea.vmem %s3, 256
      %v6036 = vld [vmem:[%s6035] sm:$0xf]
      %v6037 = vld [vmem:[%s6035 + $0x4] sm:$0xf]
      %v6038 = vld [vmem:[%s6035 + $0x8] sm:$0xf]
      %v6039 = vld [vmem:[%s6035 + $0xc] sm:$0xf]
      %v6040 = vld [vmem:[%s6035 + $0x10] sm:$0xf]
      %v6041 = vld [vmem:[%s6035 + $0x14] sm:$0xf]
      %v6042 = vld [vmem:[%s6035 + $0x18] sm:$0xf]
      %v6043 = vld [vmem:[%s6035 + $0x1c] sm:$0xf]
      %v6044 = vunpack.c.l.b16 %v5926
      %v6045 = vunpack.c.l.b16 %v5929
      %v6046 = vunpack.c.l.b16 %v5933
      %v6047 = vunpack.c.l.b16 %v5936
      %v6048 = vunpack.c.l.b16 %v5940
      %v6049 = vunpack.c.l.b16 %v5943
      %v6050 = vunpack.c.l.b16 %v5947
      %v6051 = vunpack.c.l.b16 %v5950
      %v6052 = vunpack.c.l.b16 %v5954
      %v6053 = vunpack.c.l.b16 %v5957
      %v6054 = vunpack.c.l.b16 %v5961
      %v6055 = vunpack.c.l.b16 %v5964
      %v6056 = vunpack.c.l.b16 %v5968
      %v6057 = vunpack.c.l.b16 %v5971
      %v6058 = vunpack.c.l.b16 %v5975
      %v6059 = vunpack.c.l.b16 %v5978
      %v6060 = vunpack.c.l.b16 %v5982
      %v6061 = vunpack.c.l.b16 %v5985
      %v6062 = vunpack.c.l.b16 %v5989
      %v6063 = vunpack.c.l.b16 %v5992
      %v6064 = vunpack.c.l.b16 %v5996
      %v6065 = vunpack.c.l.b16 %v5999
      %v6066 = vunpack.c.l.b16 %v6003
      %v6067 = vunpack.c.l.b16 %v6006
      %v6068 = vunpack.c.l.b16 %v6010
      %v6069 = vunpack.c.l.b16 %v6013
      %v6070 = vunpack.c.l.b16 %v6017
      %v6071 = vunpack.c.l.b16 %v6020
      %v6072 = vunpack.c.l.b16 %v6024
      %v6073 = vunpack.c.l.b16 %v6027
      %v6074 = vunpack.c.l.b16 %v6031
      %v6075 = vunpack.c.l.b16 %v6034
      %v6076 = vpack.c.b16 %v6045, %v6044
      %v6077 = vpack.c.b16 %v6047, %v6046
      %v6078 = vpack.c.b16 %v6049, %v6048
      %v6079 = vpack.c.b16 %v6051, %v6050
      %v6080 = vpack.c.b16 %v6053, %v6052
      %v6081 = vpack.c.b16 %v6055, %v6054
      %v6082 = vpack.c.b16 %v6057, %v6056
      %v6083 = vpack.c.b16 %v6059, %v6058
      %v6084 = vpack.c.b16 %v6061, %v6060
      %v6085 = vpack.c.b16 %v6063, %v6062
      %v6086 = vpack.c.b16 %v6065, %v6064
      %v6087 = vpack.c.b16 %v6067, %v6066
      %v6088 = vpack.c.b16 %v6069, %v6068
      %v6089 = vpack.c.b16 %v6071, %v6070
      %v6090 = vpack.c.b16 %v6073, %v6072
      %v6091 = vpack.c.b16 %v6075, %v6074
      %v6100 = vunpack.c.l.b16 %v6036
      %v6101 = vunpack.c.l.b16 %v6037
      %v6102 = vunpack.c.l.b16 %v6038
      %v6103 = vunpack.c.l.b16 %v6039
      %v6104 = vunpack.c.l.b16 %v6040
      %v6105 = vunpack.c.l.b16 %v6041
      %v6106 = vunpack.c.l.b16 %v6042
      %v6107 = vunpack.c.l.b16 %v6043
      %v6108 = vpack.c.b16 %v6101, %v6100
      %v6109 = vpack.c.b16 %v6103, %v6102
      %v6110 = vpack.c.b16 %v6105, %v6104
      %v6111 = vpack.c.b16 %v6107, %v6106
      %v6117 = vsel %vm2072, %v6076, 0
      %v6120 = vsel %vm2072, %v6077, 0
      %v6123 = vsel %vm2072, %v6078, 0
      %v6126 = vsel %vm2072, %v6079, 0
      %v6129 = vsel %vm2072, %v6080, 0
      %v6132 = vsel %vm2072, %v6081, 0
      %v6135 = vsel %vm2072, %v6082, 0
      %v6138 = vsel %vm2072, %v6083, 0
      %v6141 = vsel %vm2072, %v6084, 0
      %v6144 = vsel %vm2072, %v6085, 0
      %v6147 = vsel %vm2072, %v6086, 0
      %v6150 = vsel %vm2072, %v6087, 0
      %v6153 = vsel %vm2072, %v6088, 0
      %v6156 = vsel %vm2072, %v6089, 0
      %v6159 = vsel %vm2072, %v6090, 0
      %v6162 = vsel %vm2072, %v6091, 0
      %6164 = vmatprep.subr.bf16.mxu0 0
      %6165 = vmatpush1.bf16.msra.mxu0 %v6108
      %6166 = vmatprep.subr.bf16.mxu0 0
      %6167 = vmatpush1.bf16.msra.mxu0 %v6109
      %6168 = vmatprep.subr.bf16.mxu0 0
      %6169 = vmatpush1.bf16.msra.mxu0 %v6110
      %6170 = vmatprep.subr.bf16.mxu0 0
      %6171 = vmatpush1.bf16.msra.mxu0 %v6111
      %6172 = vmatprep.subr.bf16.mxu0 0
      %6173 = vmatpush1.bf16.msra.mxu0 0
      %6174 = vmatprep.subr.bf16.mxu0 0
      %6175 = vmatpush1.bf16.msra.mxu0 0
      %6176 = vmatprep.subr.bf16.mxu0 0
      %6177 = vmatpush1.bf16.msra.mxu0 0
      %6178 = vmatprep.subr.bf16.mxu0 0
      %6179 = vmatpush1.bf16.msra.mxu0 0
      %6180 = vmatprep.subr.bf16.mxu0 0
      %6181 = vmatpush1.bf16.msra.mxu0 0
      %6182 = vmatprep.subr.bf16.mxu0 0
      %6183 = vmatpush1.bf16.msra.mxu0 0
      %6184 = vmatprep.subr.bf16.mxu0 0
      %6185 = vmatpush1.bf16.msra.mxu0 0
      %6186 = vmatprep.subr.bf16.mxu0 0
      %6187 = vmatpush1.bf16.msra.mxu0 0
      %6188 = vmatprep.subr.bf16.mxu0 0
      %6189 = vmatpush1.bf16.msra.mxu0 0
      %6190 = vmatprep.subr.bf16.mxu0 0
      %6191 = vmatpush1.bf16.msra.mxu0 0
      %6192 = vmatprep.subr.bf16.mxu0 0
      %6193 = vmatpush1.bf16.msra.mxu0 0
      %6194 = vmatprep.subr.bf16.mxu0 0
      %6195 = vmatpush1.bf16.msra.mxu0 0
      %6196 = vmatprep.mubr.bf16.mxu0 0
      %6197 = vmatmul.mubr.bf16.gmra.mrb[0].mxu0 %v6117
      %v6198 = vpop.f32.mrb[0].mxu0
      %v6199 = vadd.f32 0.0, %v6198
      %v6200 = vpop.f32.mrb[0].mxu0
      %v6201 = vpop.f32.mrb[0].mxu0
      %v6202 = vadd.f32 0.0, %v6201
      %v6203 = vpop.f32.mrb[0].mxu0
      %6204 = vmatprep.mubr.bf16.mxu0 0
      %6205 = vmatmul.mubr.bf16.gmra.mrb[0].mxu0 %v6120
      %v6206 = vpop.f32.mrb[0].mxu0
      %v6207 = vadd.f32 0.0, %v6206
      %v6208 = vpop.f32.mrb[0].mxu0
      %v6209 = vpop.f32.mrb[0].mxu0
      %v6210 = vadd.f32 0.0, %v6209
      %v6211 = vpop.f32.mrb[0].mxu0
      %6212 = vmatprep.mubr.bf16.mxu0 0
      %6213 = vmatmul.mubr.bf16.gmra.mrb[0].mxu0 %v6123
      %v6214 = vpop.f32.mrb[0].mxu0
      %v6215 = vadd.f32 0.0, %v6214
      %v6216 = vpop.f32.mrb[0].mxu0
      %v6217 = vpop.f32.mrb[0].mxu0
      %v6218 = vadd.f32 0.0, %v6217
      %v6219 = vpop.f32.mrb[0].mxu0
      %6220 = vmatprep.mubr.bf16.mxu0 0
      %6221 = vmatmul.mubr.bf16.gmra.mrb[0].mxu0 %v6126
      %v6222 = vpop.f32.mrb[0].mxu0
      %v6223 = vadd.f32 0.0, %v6222
      %v6224 = vpop.f32.mrb[0].mxu0
      %v6225 = vpop.f32.mrb[0].mxu0
      %v6226 = vadd.f32 0.0, %v6225
      %v6227 = vpop.f32.mrb[0].mxu0
      %6228 = vmatprep.mubr.bf16.mxu0 0
      %6229 = vmatmul.mubr.bf16.gmra.mrb[0].mxu0 %v6129
      %v6230 = vpop.f32.mrb[0].mxu0
      %v6231 = vadd.f32 0.0, %v6230
      %v6232 = vpop.f32.mrb[0].mxu0
      %v6233 = vpop.f32.mrb[0].mxu0
      %v6234 = vadd.f32 0.0, %v6233
      %v6235 = vpop.f32.mrb[0].mxu0
      %6236 = vmatprep.mubr.bf16.mxu0 0
      %6237 = vmatmul.mubr.bf16.gmra.mrb[0].mxu0 %v6132
      %v6238 = vpop.f32.mrb[0].mxu0
      %v6239 = vadd.f32 0.0, %v6238
      %v6240 = vpop.f32.mrb[0].mxu0
      %v6241 = vpop.f32.mrb[0].mxu0
      %v6242 = vadd.f32 0.0, %v6241
      %v6243 = vpop.f32.mrb[0].mxu0
      %6244 = vmatprep.mubr.bf16.mxu0 0
      %6245 = vmatmul.mubr.bf16.gmra.mrb[0].mxu0 %v6135
      %v6246 = vpop.f32.mrb[0].mxu0
      %v6247 = vadd.f32 0.0, %v6246
      %v6248 = vpop.f32.mrb[0].mxu0
      %v6249 = vpop.f32.mrb[0].mxu0
      %v6250 = vadd.f32 0.0, %v6249
      %v6251 = vpop.f32.mrb[0].mxu0
      %6252 = vmatprep.mubr.bf16.mxu0 0
      %6253 = vmatmul.mubr.bf16.gmra.mrb[0].mxu0 %v6138
      %v6254 = vpop.f32.mrb[0].mxu0
      %v6255 = vadd.f32 0.0, %v6254
      %v6256 = vpop.f32.mrb[0].mxu0
      %v6257 = vpop.f32.mrb[0].mxu0
      %v6258 = vadd.f32 0.0, %v6257
      %v6259 = vpop.f32.mrb[0].mxu0
      %6260 = vmatprep.mubr.bf16.mxu0 0
      %6261 = vmatmul.mubr.bf16.gmra.mrb[0].mxu0 %v6141
      %v6262 = vpop.f32.mrb[0].mxu0
      %v6263 = vadd.f32 0.0, %v6262
      %v6264 = vpop.f32.mrb[0].mxu0
      %v6265 = vpop.f32.mrb[0].mxu0
      %v6266 = vadd.f32 0.0, %v6265
      %v6267 = vpop.f32.mrb[0].mxu0
      %6268 = vmatprep.mubr.bf16.mxu0 0
      %6269 = vmatmul.mubr.bf16.gmra.mrb[0].mxu0 %v6144
      %v6270 = vpop.f32.mrb[0].mxu0
      %v6271 = vadd.f32 0.0, %v6270
      %v6272 = vpop.f32.mrb[0].mxu0
      %v6273 = vpop.f32.mrb[0].mxu0
      %v6274 = vadd.f32 0.0, %v6273
      %v6275 = vpop.f32.mrb[0].mxu0
      %6276 = vmatprep.mubr.bf16.mxu0 0
      %6277 = vmatmul.mubr.bf16.gmra.mrb[0].mxu0 %v6147
      %v6278 = vpop.f32.mrb[0].mxu0
      %v6279 = vadd.f32 0.0, %v6278
      %v6280 = vpop.f32.mrb[0].mxu0
      %v6281 = vpop.f32.mrb[0].mxu0
      %v6282 = vadd.f32 0.0, %v6281
      %v6283 = vpop.f32.mrb[0].mxu0
      %6284 = vmatprep.mubr.bf16.mxu0 0
      %6285 = vmatmul.mubr.bf16.gmra.mrb[0].mxu0 %v6150
      %v6286 = vpop.f32.mrb[0].mxu0
      %v6287 = vadd.f32 0.0, %v6286
      %v6288 = vpop.f32.mrb[0].mxu0
      %v6289 = vpop.f32.mrb[0].mxu0
      %v6290 = vadd.f32 0.0, %v6289
      %v6291 = vpop.f32.mrb[0].mxu0
      %6292 = vmatprep.mubr.bf16.mxu0 0
      %6293 = vmatmul.mubr.bf16.gmra.mrb[0].mxu0 %v6153
      %v6294 = vpop.f32.mrb[0].mxu0
      %v6295 = vadd.f32 0.0, %v6294
      %v6296 = vpop.f32.mrb[0].mxu0
      %v6297 = vpop.f32.mrb[0].mxu0
      %v6298 = vadd.f32 0.0, %v6297
      %v6299 = vpop.f32.mrb[0].mxu0
      %6300 = vmatprep.mubr.bf16.mxu0 0
      %6301 = vmatmul.mubr.bf16.gmra.mrb[0].mxu0 %v6156
      %v6302 = vpop.f32.mrb[0].mxu0
      %v6303 = vadd.f32 0.0, %v6302
      %v6304 = vpop.f32.mrb[0].mxu0
      %v6305 = vpop.f32.mrb[0].mxu0
      %v6306 = vadd.f32 0.0, %v6305
      %v6307 = vpop.f32.mrb[0].mxu0
      %6308 = vmatprep.mubr.bf16.mxu0 0
      %6309 = vmatmul.mubr.bf16.gmra.mrb[0].mxu0 %v6159
      %v6310 = vpop.f32.mrb[0].mxu0
      %v6311 = vadd.f32 0.0, %v6310
      %v6312 = vpop.f32.mrb[0].mxu0
      %v6313 = vpop.f32.mrb[0].mxu0
      %v6314 = vadd.f32 0.0, %v6313
      %v6315 = vpop.f32.mrb[0].mxu0
      %6316 = vmatprep.mubr.bf16.mxu0 0
      %6317 = vmatmul.mubr.bf16.gmra.mrb[0].mxu0 %v6162
      %v6318 = vpop.f32.mrb[0].mxu0
      %v6319 = vadd.f32 0.0, %v6318
      %v6320 = vpop.f32.mrb[0].mxu0
      %v6321 = vpop.f32.mrb[0].mxu0
      %v6322 = vadd.f32 0.0, %v6321
      %v6323 = vpop.f32.mrb[0].mxu0
      %6324 = vdwg.mxu0
      %v6325 = vadd.f32 %v5827, %v6199
      %v6326 = vadd.f32 %v5828, %v6202
      %v6327 = vadd.f32 %v5829, %v6207
      %v6328 = vadd.f32 %v5830, %v6210
      %v6329 = vadd.f32 %v5831, %v6215
      %v6330 = vadd.f32 %v5832, %v6218
      %v6331 = vadd.f32 %v5833, %v6223
      %v6332 = vadd.f32 %v5834, %v6226
      %v6333 = vadd.f32 %v5835, %v6231
      %v6334 = vadd.f32 %v5836, %v6234
      %v6335 = vadd.f32 %v5837, %v6239
      %v6336 = vadd.f32 %v5838, %v6242
      %v6337 = vadd.f32 %v5839, %v6247
      %v6338 = vadd.f32 %v5840, %v6250
      %v6339 = vadd.f32 %v5841, %v6255
      %v6340 = vadd.f32 %v5842, %v6258
      %v6341 = vadd.f32 %v5843, %v6263
      %v6342 = vadd.f32 %v5844, %v6266
      %v6343 = vadd.f32 %v5845, %v6271
      %v6344 = vadd.f32 %v5846, %v6274
      %v6345 = vadd.f32 %v5847, %v6279
      %v6346 = vadd.f32 %v5848, %v6282
      %v6347 = vadd.f32 %v5849, %v6287
      %v6348 = vadd.f32 %v5850, %v6290
      %v6349 = vadd.f32 %v5851, %v6295
      %v6350 = vadd.f32 %v5852, %v6298
      %v6351 = vadd.f32 %v5853, %v6303
      %v6352 = vadd.f32 %v5854, %v6306
      %v6353 = vadd.f32 %v5855, %v6311
      %v6354 = vadd.f32 %v5856, %v6314
      %v6355 = vadd.f32 %v5857, %v6319
      %v6356 = vadd.f32 %v5858, %v6322
      %v6357 = vld [vmem:[%s4] sm:$0x1]
      %v6359 = vlaneseq
      %v6360 = vshrl.u32 %v6359, 7
      %v6361 = vsub.s32 0, %v6360
      %v6362 = vrot.slane %v6357, %v6361
      %v6364 = vadd.f32 %v6325, %v6362
      %v6365 = vadd.f32 %v6326, %v6362
      %v6366 = vadd.f32 %v6327, %v6362
      %v6367 = vadd.f32 %v6328, %v6362
      %v6368 = vadd.f32 %v6329, %v6362
      %v6369 = vadd.f32 %v6330, %v6362
      %v6370 = vadd.f32 %v6331, %v6362
      %v6371 = vadd.f32 %v6332, %v6362
      %v6372 = vadd.f32 %v6333, %v6362
      %v6373 = vadd.f32 %v6334, %v6362
      %v6374 = vadd.f32 %v6335, %v6362
      %v6375 = vadd.f32 %v6336, %v6362
      %v6376 = vadd.f32 %v6337, %v6362
      %v6377 = vadd.f32 %v6338, %v6362
      %v6378 = vadd.f32 %v6339, %v6362
      %v6379 = vadd.f32 %v6340, %v6362
      %v6380 = vadd.f32 %v6341, %v6362
      %v6381 = vadd.f32 %v6342, %v6362
      %v6382 = vadd.f32 %v6343, %v6362
      %v6383 = vadd.f32 %v6344, %v6362
      %v6384 = vadd.f32 %v6345, %v6362
      %v6385 = vadd.f32 %v6346, %v6362
      %v6386 = vadd.f32 %v6347, %v6362
      %v6387 = vadd.f32 %v6348, %v6362
      %v6388 = vadd.f32 %v6349, %v6362
      %v6389 = vadd.f32 %v6350, %v6362
      %v6390 = vadd.f32 %v6351, %v6362
      %v6391 = vadd.f32 %v6352, %v6362
      %v6392 = vadd.f32 %v6353, %v6362
      %v6393 = vadd.f32 %v6354, %v6362
      %v6394 = vadd.f32 %v6355, %v6362
      %v6395 = vadd.f32 %v6356, %v6362
      %v6396 = vmax.f32 %v6364, 0.0
      %v6397 = vmax.f32 %v6365, 0.0
      %v6398 = vmax.f32 %v6366, 0.0
      %v6399 = vmax.f32 %v6367, 0.0
      %v6400 = vmax.f32 %v6368, 0.0
      %v6401 = vmax.f32 %v6369, 0.0
      %v6402 = vmax.f32 %v6370, 0.0
      %v6403 = vmax.f32 %v6371, 0.0
      %v6404 = vmax.f32 %v6372, 0.0
      %v6405 = vmax.f32 %v6373, 0.0
      %v6406 = vmax.f32 %v6374, 0.0
      %v6407 = vmax.f32 %v6375, 0.0
      %v6408 = vmax.f32 %v6376, 0.0
      %v6409 = vmax.f32 %v6377, 0.0
      %v6410 = vmax.f32 %v6378, 0.0
      %v6411 = vmax.f32 %v6379, 0.0
      %v6412 = vmax.f32 %v6380, 0.0
      %v6413 = vmax.f32 %v6381, 0.0
      %v6414 = vmax.f32 %v6382, 0.0
      %v6415 = vmax.f32 %v6383, 0.0
      %v6416 = vmax.f32 %v6384, 0.0
      %v6417 = vmax.f32 %v6385, 0.0
      %v6418 = vmax.f32 %v6386, 0.0
      %v6419 = vmax.f32 %v6387, 0.0
      %v6420 = vmax.f32 %v6388, 0.0
      %v6421 = vmax.f32 %v6389, 0.0
      %v6422 = vmax.f32 %v6390, 0.0
      %v6423 = vmax.f32 %v6391, 0.0
      %v6424 = vmax.f32 %v6392, 0.0
      %v6425 = vmax.f32 %v6393, 0.0
      %v6426 = vmax.f32 %v6394, 0.0
      %v6427 = vmax.f32 %v6395, 0.0
      %v6428 = vpack.c.bf16 %v6397, %v6396
      %v6429 = vpack.c.bf16 %v6399, %v6398
      %v6430 = vpack.c.bf16 %v6401, %v6400
      %v6431 = vpack.c.bf16 %v6403, %v6402
      %v6432 = vpack.c.bf16 %v6405, %v6404
      %v6433 = vpack.c.bf16 %v6407, %v6406
      %v6434 = vpack.c.bf16 %v6409, %v6408
      %v6435 = vpack.c.bf16 %v6411, %v6410
      %v6436 = vpack.c.bf16 %v6413, %v6412
      %v6437 = vpack.c.bf16 %v6415, %v6414
      %v6438 = vpack.c.bf16 %v6417, %v6416
      %v6439 = vpack.c.bf16 %v6419, %v6418
      %v6440 = vpack.c.bf16 %v6421, %v6420
      %v6441 = vpack.c.bf16 %v6423, %v6422
      %v6442 = vpack.c.bf16 %v6425, %v6424
      %v6443 = vpack.c.bf16 %v6427, %v6426
      %v6460 = vunpack.c.l.b16 %v6428
      %v6461 = vunpack.c.h.b16 %v6428
      %v6462 = vunpack.c.l.b16 %v6429
      %v6463 = vunpack.c.h.b16 %v6429
      %v6464 = vunpack.c.l.b16 %v6430
      %v6465 = vunpack.c.h.b16 %v6430
      %v6466 = vunpack.c.l.b16 %v6431
      %v6467 = vunpack.c.h.b16 %v6431
      %v6468 = vunpack.c.l.b16 %v6432
      %v6469 = vunpack.c.h.b16 %v6432
      %v6470 = vunpack.c.l.b16 %v6433
      %v6471 = vunpack.c.h.b16 %v6433
      %v6472 = vunpack.c.l.b16 %v6434
      %v6473 = vunpack.c.h.b16 %v6434
      %v6474 = vunpack.c.l.b16 %v6435
      %v6475 = vunpack.c.h.b16 %v6435
      %v6476 = vunpack.c.l.b16 %v6436
      %v6477 = vunpack.c.h.b16 %v6436
      %v6478 = vunpack.c.l.b16 %v6437
      %v6479 = vunpack.c.h.b16 %v6437
      %v6480 = vunpack.c.l.b16 %v6438
      %v6481 = vunpack.c.h.b16 %v6438
      %v6482 = vunpack.c.l.b16 %v6439
      %v6483 = vunpack.c.h.b16 %v6439
      %v6484 = vunpack.c.l.b16 %v6440
      %v6485 = vunpack.c.h.b16 %v6440
      %v6486 = vunpack.c.l.b16 %v6441
      %v6487 = vunpack.c.h.b16 %v6441
      %v6488 = vunpack.c.l.b16 %v6442
      %v6489 = vunpack.c.h.b16 %v6442
      %v6490 = vunpack.c.l.b16 %v6443
      %v6491 = vunpack.c.h.b16 %v6443
      %v6492 = vpack.c.b16 %v6460, %v6460
      %v6493 = vpack.c.b16 %v6461, %v6461
      %v6494 = vpack.c.b16 %v6462, %v6462
      %v6495 = vpack.c.b16 %v6463, %v6463
      %v6496 = vpack.c.b16 %v6464, %v6464
      %v6497 = vpack.c.b16 %v6465, %v6465
      %v6498 = vpack.c.b16 %v6466, %v6466
      %v6499 = vpack.c.b16 %v6467, %v6467
      %v6500 = vpack.c.b16 %v6468, %v6468
      %v6501 = vpack.c.b16 %v6469, %v6469
      %v6502 = vpack.c.b16 %v6470, %v6470
      %v6503 = vpack.c.b16 %v6471, %v6471
      %v6504 = vpack.c.b16 %v6472, %v6472
      %v6505 = vpack.c.b16 %v6473, %v6473
      %v6506 = vpack.c.b16 %v6474, %v6474
      %v6507 = vpack.c.b16 %v6475, %v6475
      %v6508 = vpack.c.b16 %v6476, %v6476
      %v6509 = vpack.c.b16 %v6477, %v6477
      %v6510 = vpack.c.b16 %v6478, %v6478
      %v6511 = vpack.c.b16 %v6479, %v6479
      %v6512 = vpack.c.b16 %v6480, %v6480
      %v6513 = vpack.c.b16 %v6481, %v6481
      %v6514 = vpack.c.b16 %v6482, %v6482
      %v6515 = vpack.c.b16 %v6483, %v6483
      %v6516 = vpack.c.b16 %v6484, %v6484
      %v6517 = vpack.c.b16 %v6485, %v6485
      %v6518 = vpack.c.b16 %v6486, %v6486
      %v6519 = vpack.c.b16 %v6487, %v6487
      %v6520 = vpack.c.b16 %v6488, %v6488
      %v6521 = vpack.c.b16 %v6489, %v6489
      %v6522 = vpack.c.b16 %v6490, %v6490
      %v6523 = vpack.c.b16 %v6491, %v6491
      %6556 = vst.msk [vmem:[%s440] sm:$0xf] %vm957, %v6492
      %6557 = vst.msk [vmem:[%s440 + $0x4] sm:$0xf] %vm957, %v6493
      %6558 = vst.msk [vmem:[%s440 + $0x8] sm:$0xf] %vm957, %v6494
      %6559 = vst.msk [vmem:[%s440 + $0xc] sm:$0xf] %vm957, %v6495
      %6560 = vst.msk [vmem:[%s440 + $0x10] sm:$0xf] %vm957, %v6496
      %6561 = vst.msk [vmem:[%s440 + $0x14] sm:$0xf] %vm957, %v6497
      %6562 = vst.msk [vmem:[%s440 + $0x18] sm:$0xf] %vm957, %v6498
      %6563 = vst.msk [vmem:[%s440 + $0x1c] sm:$0xf] %vm957, %v6499
      %6564 = vst.msk [vmem:[%s440 + $0x20] sm:$0xf] %vm957, %v6500
      %6565 = vst.msk [vmem:[%s440 + $0x24] sm:$0xf] %vm957, %v6501
      %6566 = vst.msk [vmem:[%s440 + $0x28] sm:$0xf] %vm957, %v6502
      %6567 = vst.msk [vmem:[%s440 + $0x2c] sm:$0xf] %vm957, %v6503
      %6568 = vst.msk [vmem:[%s440 + $0x30] sm:$0xf] %vm957, %v6504
      %6569 = vst.msk [vmem:[%s440 + $0x34] sm:$0xf] %vm957, %v6505
      %6570 = vst.msk [vmem:[%s440 + $0x38] sm:$0xf] %vm957, %v6506
      %6571 = vst.msk [vmem:[%s440 + $0x3c] sm:$0xf] %vm957, %v6507
      %6572 = vst.msk [vmem:[%s440 + $0x40] sm:$0xf] %vm957, %v6508
      %6573 = vst.msk [vmem:[%s440 + $0x44] sm:$0xf] %vm957, %v6509
      %6574 = vst.msk [vmem:[%s440 + $0x48] sm:$0xf] %vm957, %v6510
      %6575 = vst.msk [vmem:[%s440 + $0x4c] sm:$0xf] %vm957, %v6511
      %6576 = vst.msk [vmem:[%s440 + $0x50] sm:$0xf] %vm957, %v6512
      %6577 = vst.msk [vmem:[%s440 + $0x54] sm:$0xf] %vm957, %v6513
      %6578 = vst.msk [vmem:[%s440 + $0x58] sm:$0xf] %vm957, %v6514
      %6579 = vst.msk [vmem:[%s440 + $0x5c] sm:$0xf] %vm957, %v6515
      %6580 = vst.msk [vmem:[%s440 + $0x60] sm:$0xf] %vm957, %v6516
      %6581 = vst.msk [vmem:[%s440 + $0x64] sm:$0xf] %vm957, %v6517
      %6582 = vst.msk [vmem:[%s440 + $0x68] sm:$0xf] %vm957, %v6518
      %6583 = vst.msk [vmem:[%s440 + $0x6c] sm:$0xf] %vm957, %v6519
      %6584 = vst.msk [vmem:[%s440 + $0x70] sm:$0xf] %vm957, %v6520
      %6585 = vst.msk [vmem:[%s440 + $0x74] sm:$0xf] %vm957, %v6521
      %6586 = vst.msk [vmem:[%s440 + $0x78] sm:$0xf] %vm957, %v6522
      %6587 = vst.msk [vmem:[%s440 + $0x7c] sm:$0xf] %vm957, %v6523
      %v6620 = vcombine.high %v6396, %v6396
      %v6622 = vunpack.c.l.s4 1983009808
      %v6623 = vunpack.c.0.s8 %v6622
      %v6624 = vlaneseq
      %v6625 = vshrl.u32 %v6624, 7
      %v6626 = vsub.s32 %v6623, %v6625
      %v6627 = vrot.slane %v6396, %v6626
      %v6629 = vunpack.c.l.s4 1983009808
      %v6630 = vunpack.c.0.s8 %v6629
      %v6631 = vlaneseq
      %v6632 = vshrl.u32 %v6631, 7
      %v6633 = vsub.s32 %v6630, %v6632
      %v6634 = vrot.slane %v6620, %v6633
      %v6635 = vcombine.high %v6627, %v6627
      %v6636 = vcombine.high %v6634, %v6634
      %v6637 = vcombine.high %v6397, %v6397
      %v6639 = vunpack.c.l.s4 1983009808
      %v6640 = vunpack.c.0.s8 %v6639
      %v6641 = vlaneseq
      %v6642 = vshrl.u32 %v6641, 7
      %v6643 = vsub.s32 %v6640, %v6642
      %v6644 = vrot.slane %v6397, %v6643
      %v6646 = vunpack.c.l.s4 1983009808
      %v6647 = vunpack.c.0.s8 %v6646
      %v6648 = vlaneseq
      %v6649 = vshrl.u32 %v6648, 7
      %v6650 = vsub.s32 %v6647, %v6649
      %v6651 = vrot.slane %v6637, %v6650
      %v6652 = vcombine.high %v6644, %v6644
      %v6653 = vcombine.high %v6651, %v6651
      %v6654 = vcombine.high %v6398, %v6398
      %v6656 = vunpack.c.l.s4 1983009808
      %v6657 = vunpack.c.0.s8 %v6656
      %v6658 = vlaneseq
      %v6659 = vshrl.u32 %v6658, 7
      %v6660 = vsub.s32 %v6657, %v6659
      %v6661 = vrot.slane %v6398, %v6660
      %v6663 = vunpack.c.l.s4 1983009808
      %v6664 = vunpack.c.0.s8 %v6663
      %v6665 = vlaneseq
      %v6666 = vshrl.u32 %v6665, 7
      %v6667 = vsub.s32 %v6664, %v6666
      %v6668 = vrot.slane %v6654, %v6667
      %v6669 = vcombine.high %v6661, %v6661
      %v6670 = vcombine.high %v6668, %v6668
      %v6671 = vcombine.high %v6399, %v6399
      %v6673 = vunpack.c.l.s4 1983009808
      %v6674 = vunpack.c.0.s8 %v6673
      %v6675 = vlaneseq
      %v6676 = vshrl.u32 %v6675, 7
      %v6677 = vsub.s32 %v6674, %v6676
      %v6678 = vrot.slane %v6399, %v6677
      %v6680 = vunpack.c.l.s4 1983009808
      %v6681 = vunpack.c.0.s8 %v6680
      %v6682 = vlaneseq
      %v6683 = vshrl.u32 %v6682, 7
      %v6684 = vsub.s32 %v6681, %v6683
      %v6685 = vrot.slane %v6671, %v6684
      %v6686 = vcombine.high %v6678, %v6678
      %v6687 = vcombine.high %v6685, %v6685
      %v6688 = vcombine.high %v6400, %v6400
      %v6690 = vunpack.c.l.s4 1983009808
      %v6691 = vunpack.c.0.s8 %v6690
      %v6692 = vlaneseq
      %v6693 = vshrl.u32 %v6692, 7
      %v6694 = vsub.s32 %v6691, %v6693
      %v6695 = vrot.slane %v6400, %v6694
      %v6697 = vunpack.c.l.s4 1983009808
      %v6698 = vunpack.c.0.s8 %v6697
      %v6699 = vlaneseq
      %v6700 = vshrl.u32 %v6699, 7
      %v6701 = vsub.s32 %v6698, %v6700
      %v6702 = vrot.slane %v6688, %v6701
      %v6703 = vcombine.high %v6695, %v6695
      %v6704 = vcombine.high %v6702, %v6702
      %v6705 = vcombine.high %v6401, %v6401
      %v6707 = vunpack.c.l.s4 1983009808
      %v6708 = vunpack.c.0.s8 %v6707
      %v6709 = vlaneseq
      %v6710 = vshrl.u32 %v6709, 7
      %v6711 = vsub.s32 %v6708, %v6710
      %v6712 = vrot.slane %v6401, %v6711
      %v6714 = vunpack.c.l.s4 1983009808
      %v6715 = vunpack.c.0.s8 %v6714
      %v6716 = vlaneseq
      %v6717 = vshrl.u32 %v6716, 7
      %v6718 = vsub.s32 %v6715, %v6717
      %v6719 = vrot.slane %v6705, %v6718
      %v6720 = vcombine.high %v6712, %v6712
      %v6721 = vcombine.high %v6719, %v6719
      %v6722 = vcombine.high %v6402, %v6402
      %v6724 = vunpack.c.l.s4 1983009808
      %v6725 = vunpack.c.0.s8 %v6724
      %v6726 = vlaneseq
      %v6727 = vshrl.u32 %v6726, 7
      %v6728 = vsub.s32 %v6725, %v6727
      %v6729 = vrot.slane %v6402, %v6728
      %v6731 = vunpack.c.l.s4 1983009808
      %v6732 = vunpack.c.0.s8 %v6731
      %v6733 = vlaneseq
      %v6734 = vshrl.u32 %v6733, 7
      %v6735 = vsub.s32 %v6732, %v6734
      %v6736 = vrot.slane %v6722, %v6735
      %v6737 = vcombine.high %v6729, %v6729
      %v6738 = vcombine.high %v6736, %v6736
      %v6739 = vcombine.high %v6403, %v6403
      %v6741 = vunpack.c.l.s4 1983009808
      %v6742 = vunpack.c.0.s8 %v6741
      %v6743 = vlaneseq
      %v6744 = vshrl.u32 %v6743, 7
      %v6745 = vsub.s32 %v6742, %v6744
      %v6746 = vrot.slane %v6403, %v6745
      %v6748 = vunpack.c.l.s4 1983009808
      %v6749 = vunpack.c.0.s8 %v6748
      %v6750 = vlaneseq
      %v6751 = vshrl.u32 %v6750, 7
      %v6752 = vsub.s32 %v6749, %v6751
      %v6753 = vrot.slane %v6739, %v6752
      %v6754 = vcombine.high %v6746, %v6746
      %v6755 = vcombine.high %v6753, %v6753
      %v6756 = vcombine.high %v6404, %v6404
      %v6758 = vunpack.c.l.s4 1983009808
      %v6759 = vunpack.c.0.s8 %v6758
      %v6760 = vlaneseq
      %v6761 = vshrl.u32 %v6760, 7
      %v6762 = vsub.s32 %v6759, %v6761
      %v6763 = vrot.slane %v6404, %v6762
      %v6765 = vunpack.c.l.s4 1983009808
      %v6766 = vunpack.c.0.s8 %v6765
      %v6767 = vlaneseq
      %v6768 = vshrl.u32 %v6767, 7
      %v6769 = vsub.s32 %v6766, %v6768
      %v6770 = vrot.slane %v6756, %v6769
      %v6771 = vcombine.high %v6763, %v6763
      %v6772 = vcombine.high %v6770, %v6770
      %v6773 = vcombine.high %v6405, %v6405
      %v6775 = vunpack.c.l.s4 1983009808
      %v6776 = vunpack.c.0.s8 %v6775
      %v6777 = vlaneseq
      %v6778 = vshrl.u32 %v6777, 7
      %v6779 = vsub.s32 %v6776, %v6778
      %v6780 = vrot.slane %v6405, %v6779
      %v6782 = vunpack.c.l.s4 1983009808
      %v6783 = vunpack.c.0.s8 %v6782
      %v6784 = vlaneseq
      %v6785 = vshrl.u32 %v6784, 7
      %v6786 = vsub.s32 %v6783, %v6785
      %v6787 = vrot.slane %v6773, %v6786
      %v6788 = vcombine.high %v6780, %v6780
      %v6789 = vcombine.high %v6787, %v6787
      %v6790 = vcombine.high %v6406, %v6406
      %v6792 = vunpack.c.l.s4 1983009808
      %v6793 = vunpack.c.0.s8 %v6792
      %v6794 = vlaneseq
      %v6795 = vshrl.u32 %v6794, 7
      %v6796 = vsub.s32 %v6793, %v6795
      %v6797 = vrot.slane %v6406, %v6796
      %v6799 = vunpack.c.l.s4 1983009808
      %v6800 = vunpack.c.0.s8 %v6799
      %v6801 = vlaneseq
      %v6802 = vshrl.u32 %v6801, 7
      %v6803 = vsub.s32 %v6800, %v6802
      %v6804 = vrot.slane %v6790, %v6803
      %v6805 = vcombine.high %v6797, %v6797
      %v6806 = vcombine.high %v6804, %v6804
      %v6807 = vcombine.high %v6407, %v6407
      %v6809 = vunpack.c.l.s4 1983009808
      %v6810 = vunpack.c.0.s8 %v6809
      %v6811 = vlaneseq
      %v6812 = vshrl.u32 %v6811, 7
      %v6813 = vsub.s32 %v6810, %v6812
      %v6814 = vrot.slane %v6407, %v6813
      %v6816 = vunpack.c.l.s4 1983009808
      %v6817 = vunpack.c.0.s8 %v6816
      %v6818 = vlaneseq
      %v6819 = vshrl.u32 %v6818, 7
      %v6820 = vsub.s32 %v6817, %v6819
      %v6821 = vrot.slane %v6807, %v6820
      %v6822 = vcombine.high %v6814, %v6814
      %v6823 = vcombine.high %v6821, %v6821
      %v6824 = vcombine.high %v6408, %v6408
      %v6826 = vunpack.c.l.s4 1983009808
      %v6827 = vunpack.c.0.s8 %v6826
      %v6828 = vlaneseq
      %v6829 = vshrl.u32 %v6828, 7
      %v6830 = vsub.s32 %v6827, %v6829
      %v6831 = vrot.slane %v6408, %v6830
      %v6833 = vunpack.c.l.s4 1983009808
      %v6834 = vunpack.c.0.s8 %v6833
      %v6835 = vlaneseq
      %v6836 = vshrl.u32 %v6835, 7
      %v6837 = vsub.s32 %v6834, %v6836
      %v6838 = vrot.slane %v6824, %v6837
      %v6839 = vcombine.high %v6831, %v6831
      %v6840 = vcombine.high %v6838, %v6838
      %v6841 = vcombine.high %v6409, %v6409
      %v6843 = vunpack.c.l.s4 1983009808
      %v6844 = vunpack.c.0.s8 %v6843
      %v6845 = vlaneseq
      %v6846 = vshrl.u32 %v6845, 7
      %v6847 = vsub.s32 %v6844, %v6846
      %v6848 = vrot.slane %v6409, %v6847
      %v6850 = vunpack.c.l.s4 1983009808
      %v6851 = vunpack.c.0.s8 %v6850
      %v6852 = vlaneseq
      %v6853 = vshrl.u32 %v6852, 7
      %v6854 = vsub.s32 %v6851, %v6853
      %v6855 = vrot.slane %v6841, %v6854
      %v6856 = vcombine.high %v6848, %v6848
      %v6857 = vcombine.high %v6855, %v6855
      %v6858 = vcombine.high %v6410, %v6410
      %v6860 = vunpack.c.l.s4 1983009808
      %v6861 = vunpack.c.0.s8 %v6860
      %v6862 = vlaneseq
      %v6863 = vshrl.u32 %v6862, 7
      %v6864 = vsub.s32 %v6861, %v6863
      %v6865 = vrot.slane %v6410, %v6864
      %v6867 = vunpack.c.l.s4 1983009808
      %v6868 = vunpack.c.0.s8 %v6867
      %v6869 = vlaneseq
      %v6870 = vshrl.u32 %v6869, 7
      %v6871 = vsub.s32 %v6868, %v6870
      %v6872 = vrot.slane %v6858, %v6871
      %v6873 = vcombine.high %v6865, %v6865
      %v6874 = vcombine.high %v6872, %v6872
      %v6875 = vcombine.high %v6411, %v6411
      %v6877 = vunpack.c.l.s4 1983009808
      %v6878 = vunpack.c.0.s8 %v6877
      %v6879 = vlaneseq
      %v6880 = vshrl.u32 %v6879, 7
      %v6881 = vsub.s32 %v6878, %v6880
      %v6882 = vrot.slane %v6411, %v6881
      %v6884 = vunpack.c.l.s4 1983009808
      %v6885 = vunpack.c.0.s8 %v6884
      %v6886 = vlaneseq
      %v6887 = vshrl.u32 %v6886, 7
      %v6888 = vsub.s32 %v6885, %v6887
      %v6889 = vrot.slane %v6875, %v6888
      %v6890 = vcombine.high %v6882, %v6882
      %v6891 = vcombine.high %v6889, %v6889
      %v6892 = vcombine.high %v6412, %v6412
      %v6894 = vunpack.c.l.s4 1983009808
      %v6895 = vunpack.c.0.s8 %v6894
      %v6896 = vlaneseq
      %v6897 = vshrl.u32 %v6896, 7
      %v6898 = vsub.s32 %v6895, %v6897
      %v6899 = vrot.slane %v6412, %v6898
      %v6901 = vunpack.c.l.s4 1983009808
      %v6902 = vunpack.c.0.s8 %v6901
      %v6903 = vlaneseq
      %v6904 = vshrl.u32 %v6903, 7
      %v6905 = vsub.s32 %v6902, %v6904
      %v6906 = vrot.slane %v6892, %v6905
      %v6907 = vcombine.high %v6899, %v6899
      %v6908 = vcombine.high %v6906, %v6906
      %v6909 = vcombine.high %v6413, %v6413
      %v6911 = vunpack.c.l.s4 1983009808
      %v6912 = vunpack.c.0.s8 %v6911
      %v6913 = vlaneseq
      %v6914 = vshrl.u32 %v6913, 7
      %v6915 = vsub.s32 %v6912, %v6914
      %v6916 = vrot.slane %v6413, %v6915
      %v6918 = vunpack.c.l.s4 1983009808
      %v6919 = vunpack.c.0.s8 %v6918
      %v6920 = vlaneseq
      %v6921 = vshrl.u32 %v6920, 7
      %v6922 = vsub.s32 %v6919, %v6921
      %v6923 = vrot.slane %v6909, %v6922
      %v6924 = vcombine.high %v6916, %v6916
      %v6925 = vcombine.high %v6923, %v6923
      %v6926 = vcombine.high %v6414, %v6414
      %v6928 = vunpack.c.l.s4 1983009808
      %v6929 = vunpack.c.0.s8 %v6928
      %v6930 = vlaneseq
      %v6931 = vshrl.u32 %v6930, 7
      %v6932 = vsub.s32 %v6929, %v6931
      %v6933 = vrot.slane %v6414, %v6932
      %v6935 = vunpack.c.l.s4 1983009808
      %v6936 = vunpack.c.0.s8 %v6935
      %v6937 = vlaneseq
      %v6938 = vshrl.u32 %v6937, 7
      %v6939 = vsub.s32 %v6936, %v6938
      %v6940 = vrot.slane %v6926, %v6939
      %v6941 = vcombine.high %v6933, %v6933
      %v6942 = vcombine.high %v6940, %v6940
      %v6943 = vcombine.high %v6415, %v6415
      %v6945 = vunpack.c.l.s4 1983009808
      %v6946 = vunpack.c.0.s8 %v6945
      %v6947 = vlaneseq
      %v6948 = vshrl.u32 %v6947, 7
      %v6949 = vsub.s32 %v6946, %v6948
      %v6950 = vrot.slane %v6415, %v6949
      %v6952 = vunpack.c.l.s4 1983009808
      %v6953 = vunpack.c.0.s8 %v6952
      %v6954 = vlaneseq
      %v6955 = vshrl.u32 %v6954, 7
      %v6956 = vsub.s32 %v6953, %v6955
      %v6957 = vrot.slane %v6943, %v6956
      %v6958 = vcombine.high %v6950, %v6950
      %v6959 = vcombine.high %v6957, %v6957
      %v6960 = vcombine.high %v6416, %v6416
      %v6962 = vunpack.c.l.s4 1983009808
      %v6963 = vunpack.c.0.s8 %v6962
      %v6964 = vlaneseq
      %v6965 = vshrl.u32 %v6964, 7
      %v6966 = vsub.s32 %v6963, %v6965
      %v6967 = vrot.slane %v6416, %v6966
      %v6969 = vunpack.c.l.s4 1983009808
      %v6970 = vunpack.c.0.s8 %v6969
      %v6971 = vlaneseq
      %v6972 = vshrl.u32 %v6971, 7
      %v6973 = vsub.s32 %v6970, %v6972
      %v6974 = vrot.slane %v6960, %v6973
      %v6975 = vcombine.high %v6967, %v6967
      %v6976 = vcombine.high %v6974, %v6974
      %v6977 = vcombine.high %v6417, %v6417
      %v6979 = vunpack.c.l.s4 1983009808
      %v6980 = vunpack.c.0.s8 %v6979
      %v6981 = vlaneseq
      %v6982 = vshrl.u32 %v6981, 7
      %v6983 = vsub.s32 %v6980, %v6982
      %v6984 = vrot.slane %v6417, %v6983
      %v6986 = vunpack.c.l.s4 1983009808
      %v6987 = vunpack.c.0.s8 %v6986
      %v6988 = vlaneseq
      %v6989 = vshrl.u32 %v6988, 7
      %v6990 = vsub.s32 %v6987, %v6989
      %v6991 = vrot.slane %v6977, %v6990
      %v6992 = vcombine.high %v6984, %v6984
      %v6993 = vcombine.high %v6991, %v6991
      %v6994 = vcombine.high %v6418, %v6418
      %v6996 = vunpack.c.l.s4 1983009808
      %v6997 = vunpack.c.0.s8 %v6996
      %v6998 = vlaneseq
      %v6999 = vshrl.u32 %v6998, 7
      %v7000 = vsub.s32 %v6997, %v6999
      %v7001 = vrot.slane %v6418, %v7000
      %v7003 = vunpack.c.l.s4 1983009808
      %v7004 = vunpack.c.0.s8 %v7003
      %v7005 = vlaneseq
      %v7006 = vshrl.u32 %v7005, 7
      %v7007 = vsub.s32 %v7004, %v7006
      %v7008 = vrot.slane %v6994, %v7007
      %v7009 = vcombine.high %v7001, %v7001
      %v7010 = vcombine.high %v7008, %v7008
      %v7011 = vcombine.high %v6419, %v6419
      %v7013 = vunpack.c.l.s4 1983009808
      %v7014 = vunpack.c.0.s8 %v7013
      %v7015 = vlaneseq
      %v7016 = vshrl.u32 %v7015, 7
      %v7017 = vsub.s32 %v7014, %v7016
      %v7018 = vrot.slane %v6419, %v7017
      %v7020 = vunpack.c.l.s4 1983009808
      %v7021 = vunpack.c.0.s8 %v7020
      %v7022 = vlaneseq
      %v7023 = vshrl.u32 %v7022, 7
      %v7024 = vsub.s32 %v7021, %v7023
      %v7025 = vrot.slane %v7011, %v7024
      %v7026 = vcombine.high %v7018, %v7018
      %v7027 = vcombine.high %v7025, %v7025
      %v7028 = vcombine.high %v6420, %v6420
      %v7030 = vunpack.c.l.s4 1983009808
      %v7031 = vunpack.c.0.s8 %v7030
      %v7032 = vlaneseq
      %v7033 = vshrl.u32 %v7032, 7
      %v7034 = vsub.s32 %v7031, %v7033
      %v7035 = vrot.slane %v6420, %v7034
      %v7037 = vunpack.c.l.s4 1983009808
      %v7038 = vunpack.c.0.s8 %v7037
      %v7039 = vlaneseq
      %v7040 = vshrl.u32 %v7039, 7
      %v7041 = vsub.s32 %v7038, %v7040
      %v7042 = vrot.slane %v7028, %v7041
      %v7043 = vcombine.high %v7035, %v7035
      %v7044 = vcombine.high %v7042, %v7042
      %v7045 = vcombine.high %v6421, %v6421
      %v7047 = vunpack.c.l.s4 1983009808
      %v7048 = vunpack.c.0.s8 %v7047
      %v7049 = vlaneseq
      %v7050 = vshrl.u32 %v7049, 7
      %v7051 = vsub.s32 %v7048, %v7050
      %v7052 = vrot.slane %v6421, %v7051
      %v7054 = vunpack.c.l.s4 1983009808
      %v7055 = vunpack.c.0.s8 %v7054
      %v7056 = vlaneseq
      %v7057 = vshrl.u32 %v7056, 7
      %v7058 = vsub.s32 %v7055, %v7057
      %v7059 = vrot.slane %v7045, %v7058
      %v7060 = vcombine.high %v7052, %v7052
      %v7061 = vcombine.high %v7059, %v7059
      %v7062 = vcombine.high %v6422, %v6422
      %v7064 = vunpack.c.l.s4 1983009808
      %v7065 = vunpack.c.0.s8 %v7064
      %v7066 = vlaneseq
      %v7067 = vshrl.u32 %v7066, 7
      %v7068 = vsub.s32 %v7065, %v7067
      %v7069 = vrot.slane %v6422, %v7068
      %v7071 = vunpack.c.l.s4 1983009808
      %v7072 = vunpack.c.0.s8 %v7071
      %v7073 = vlaneseq
      %v7074 = vshrl.u32 %v7073, 7
      %v7075 = vsub.s32 %v7072, %v7074
      %v7076 = vrot.slane %v7062, %v7075
      %v7077 = vcombine.high %v7069, %v7069
      %v7078 = vcombine.high %v7076, %v7076
      %v7079 = vcombine.high %v6423, %v6423
      %v7081 = vunpack.c.l.s4 1983009808
      %v7082 = vunpack.c.0.s8 %v7081
      %v7083 = vlaneseq
      %v7084 = vshrl.u32 %v7083, 7
      %v7085 = vsub.s32 %v7082, %v7084
      %v7086 = vrot.slane %v6423, %v7085
      %v7088 = vunpack.c.l.s4 1983009808
      %v7089 = vunpack.c.0.s8 %v7088
      %v7090 = vlaneseq
      %v7091 = vshrl.u32 %v7090, 7
      %v7092 = vsub.s32 %v7089, %v7091
      %v7093 = vrot.slane %v7079, %v7092
      %v7094 = vcombine.high %v7086, %v7086
      %v7095 = vcombine.high %v7093, %v7093
      %v7096 = vcombine.high %v6424, %v6424
      %v7098 = vunpack.c.l.s4 1983009808
      %v7099 = vunpack.c.0.s8 %v7098
      %v7100 = vlaneseq
      %v7101 = vshrl.u32 %v7100, 7
      %v7102 = vsub.s32 %v7099, %v7101
      %v7103 = vrot.slane %v6424, %v7102
      %v7105 = vunpack.c.l.s4 1983009808
      %v7106 = vunpack.c.0.s8 %v7105
      %v7107 = vlaneseq
      %v7108 = vshrl.u32 %v7107, 7
      %v7109 = vsub.s32 %v7106, %v7108
      %v7110 = vrot.slane %v7096, %v7109
      %v7111 = vcombine.high %v7103, %v7103
      %v7112 = vcombine.high %v7110, %v7110
      %v7113 = vcombine.high %v6425, %v6425
      %v7115 = vunpack.c.l.s4 1983009808
      %v7116 = vunpack.c.0.s8 %v7115
      %v7117 = vlaneseq
      %v7118 = vshrl.u32 %v7117, 7
      %v7119 = vsub.s32 %v7116, %v7118
      %v7120 = vrot.slane %v6425, %v7119
      %v7122 = vunpack.c.l.s4 1983009808
      %v7123 = vunpack.c.0.s8 %v7122
      %v7124 = vlaneseq
      %v7125 = vshrl.u32 %v7124, 7
      %v7126 = vsub.s32 %v7123, %v7125
      %v7127 = vrot.slane %v7113, %v7126
      %v7128 = vcombine.high %v7120, %v7120
      %v7129 = vcombine.high %v7127, %v7127
      %v7130 = vcombine.high %v6426, %v6426
      %v7132 = vunpack.c.l.s4 1983009808
      %v7133 = vunpack.c.0.s8 %v7132
      %v7134 = vlaneseq
      %v7135 = vshrl.u32 %v7134, 7
      %v7136 = vsub.s32 %v7133, %v7135
      %v7137 = vrot.slane %v6426, %v7136
      %v7139 = vunpack.c.l.s4 1983009808
      %v7140 = vunpack.c.0.s8 %v7139
      %v7141 = vlaneseq
      %v7142 = vshrl.u32 %v7141, 7
      %v7143 = vsub.s32 %v7140, %v7142
      %v7144 = vrot.slane %v7130, %v7143
      %v7145 = vcombine.high %v7137, %v7137
      %v7146 = vcombine.high %v7144, %v7144
      %v7147 = vcombine.high %v6427, %v6427
      %v7149 = vunpack.c.l.s4 1983009808
      %v7150 = vunpack.c.0.s8 %v7149
      %v7151 = vlaneseq
      %v7152 = vshrl.u32 %v7151, 7
      %v7153 = vsub.s32 %v7150, %v7152
      %v7154 = vrot.slane %v6427, %v7153
      %v7156 = vunpack.c.l.s4 1983009808
      %v7157 = vunpack.c.0.s8 %v7156
      %v7158 = vlaneseq
      %v7159 = vshrl.u32 %v7158, 7
      %v7160 = vsub.s32 %v7157, %v7159
      %v7161 = vrot.slane %v7147, %v7160
      %v7162 = vcombine.high %v7154, %v7154
      %v7163 = vcombine.high %v7161, %v7161
      %vm7292 = vcmask 517120
      %v7293 = vsel %vm7292, %v6627, -inf
      %v7294 = vrot.slane %v7293, 4
      %v7295 = vmax.f32 %v7293, %v7294
      %v7296 = vrot.slane %v7295, 2
      %v7297 = vmax.f32 %v7295, %v7296
      %v7298 = vrot.slane %v7297, 1
      %v7299 = vmax.f32 %v7297, %v7298
      %v7300 = vsel %vm7292, %v6635, -inf
      %v7301 = vrot.slane %v7300, 4
      %v7302 = vmax.f32 %v7300, %v7301
      %v7303 = vrot.slane %v7302, 2
      %v7304 = vmax.f32 %v7302, %v7303
      %v7305 = vrot.slane %v7304, 1
      %v7306 = vmax.f32 %v7304, %v7305
      %v7307 = vsel %vm7292, %v6634, -inf
      %v7308 = vrot.slane %v7307, 4
      %v7309 = vmax.f32 %v7307, %v7308
      %v7310 = vrot.slane %v7309, 2
      %v7311 = vmax.f32 %v7309, %v7310
      %v7312 = vrot.slane %v7311, 1
      %v7313 = vmax.f32 %v7311, %v7312
      %v7314 = vsel %vm7292, %v6636, -inf
      %v7315 = vrot.slane %v7314, 4
      %v7316 = vmax.f32 %v7314, %v7315
      %v7317 = vrot.slane %v7316, 2
      %v7318 = vmax.f32 %v7316, %v7317
      %v7319 = vrot.slane %v7318, 1
      %v7320 = vmax.f32 %v7318, %v7319
      %v7321 = vsel %vm7292, %v6644, -inf
      %v7322 = vrot.slane %v7321, 4
      %v7323 = vmax.f32 %v7321, %v7322
      %v7324 = vrot.slane %v7323, 2
      %v7325 = vmax.f32 %v7323, %v7324
      %v7326 = vrot.slane %v7325, 1
      %v7327 = vmax.f32 %v7325, %v7326
      %v7328 = vsel %vm7292, %v6652, -inf
      %v7329 = vrot.slane %v7328, 4
      %v7330 = vmax.f32 %v7328, %v7329
      %v7331 = vrot.slane %v7330, 2
      %v7332 = vmax.f32 %v7330, %v7331
      %v7333 = vrot.slane %v7332, 1
      %v7334 = vmax.f32 %v7332, %v7333
      %v7335 = vsel %vm7292, %v6651, -inf
      %v7336 = vrot.slane %v7335, 4
      %v7337 = vmax.f32 %v7335, %v7336
      %v7338 = vrot.slane %v7337, 2
      %v7339 = vmax.f32 %v7337, %v7338
      %v7340 = vrot.slane %v7339, 1
      %v7341 = vmax.f32 %v7339, %v7340
      %v7342 = vsel %vm7292, %v6653, -inf
      %v7343 = vrot.slane %v7342, 4
      %v7344 = vmax.f32 %v7342, %v7343
      %v7345 = vrot.slane %v7344, 2
      %v7346 = vmax.f32 %v7344, %v7345
      %v7347 = vrot.slane %v7346, 1
      %v7348 = vmax.f32 %v7346, %v7347
      %v7349 = vsel %vm7292, %v6661, -inf
      %v7350 = vrot.slane %v7349, 4
      %v7351 = vmax.f32 %v7349, %v7350
      %v7352 = vrot.slane %v7351, 2
      %v7353 = vmax.f32 %v7351, %v7352
      %v7354 = vrot.slane %v7353, 1
      %v7355 = vmax.f32 %v7353, %v7354
      %v7356 = vsel %vm7292, %v6669, -inf
      %v7357 = vrot.slane %v7356, 4
      %v7358 = vmax.f32 %v7356, %v7357
      %v7359 = vrot.slane %v7358, 2
      %v7360 = vmax.f32 %v7358, %v7359
      %v7361 = vrot.slane %v7360, 1
      %v7362 = vmax.f32 %v7360, %v7361
      %v7363 = vsel %vm7292, %v6668, -inf
      %v7364 = vrot.slane %v7363, 4
      %v7365 = vmax.f32 %v7363, %v7364
      %v7366 = vrot.slane %v7365, 2
      %v7367 = vmax.f32 %v7365, %v7366
      %v7368 = vrot.slane %v7367, 1
      %v7369 = vmax.f32 %v7367, %v7368
      %v7370 = vsel %vm7292, %v6670, -inf
      %v7371 = vrot.slane %v7370, 4
      %v7372 = vmax.f32 %v7370, %v7371
      %v7373 = vrot.slane %v7372, 2
      %v7374 = vmax.f32 %v7372, %v7373
      %v7375 = vrot.slane %v7374, 1
      %v7376 = vmax.f32 %v7374, %v7375
      %v7377 = vsel %vm7292, %v6678, -inf
      %v7378 = vrot.slane %v7377, 4
      %v7379 = vmax.f32 %v7377, %v7378
      %v7380 = vrot.slane %v7379, 2
      %v7381 = vmax.f32 %v7379, %v7380
      %v7382 = vrot.slane %v7381, 1
      %v7383 = vmax.f32 %v7381, %v7382
      %v7384 = vsel %vm7292, %v6686, -inf
      %v7385 = vrot.slane %v7384, 4
      %v7386 = vmax.f32 %v7384, %v7385
      %v7387 = vrot.slane %v7386, 2
      %v7388 = vmax.f32 %v7386, %v7387
      %v7389 = vrot.slane %v7388, 1
      %v7390 = vmax.f32 %v7388, %v7389
      %v7391 = vsel %vm7292, %v6685, -inf
      %v7392 = vrot.slane %v7391, 4
      %v7393 = vmax.f32 %v7391, %v7392
      %v7394 = vrot.slane %v7393, 2
      %v7395 = vmax.f32 %v7393, %v7394
      %v7396 = vrot.slane %v7395, 1
      %v7397 = vmax.f32 %v7395, %v7396
      %v7398 = vsel %vm7292, %v6687, -inf
      %v7399 = vrot.slane %v7398, 4
      %v7400 = vmax.f32 %v7398, %v7399
      %v7401 = vrot.slane %v7400, 2
      %v7402 = vmax.f32 %v7400, %v7401
      %v7403 = vrot.slane %v7402, 1
      %v7404 = vmax.f32 %v7402, %v7403
      %v7405 = vsel %vm7292, %v6695, -inf
      %v7406 = vrot.slane %v7405, 4
      %v7407 = vmax.f32 %v7405, %v7406
      %v7408 = vrot.slane %v7407, 2
      %v7409 = vmax.f32 %v7407, %v7408
      %v7410 = vrot.slane %v7409, 1
      %v7411 = vmax.f32 %v7409, %v7410
      %v7412 = vsel %vm7292, %v6703, -inf
      %v7413 = vrot.slane %v7412, 4
      %v7414 = vmax.f32 %v7412, %v7413
      %v7415 = vrot.slane %v7414, 2
      %v7416 = vmax.f32 %v7414, %v7415
      %v7417 = vrot.slane %v7416, 1
      %v7418 = vmax.f32 %v7416, %v7417
      %v7419 = vsel %vm7292, %v6702, -inf
      %v7420 = vrot.slane %v7419, 4
      %v7421 = vmax.f32 %v7419, %v7420
      %v7422 = vrot.slane %v7421, 2
      %v7423 = vmax.f32 %v7421, %v7422
      %v7424 = vrot.slane %v7423, 1
      %v7425 = vmax.f32 %v7423, %v7424
      %v7426 = vsel %vm7292, %v6704, -inf
      %v7427 = vrot.slane %v7426, 4
      %v7428 = vmax.f32 %v7426, %v7427
      %v7429 = vrot.slane %v7428, 2
      %v7430 = vmax.f32 %v7428, %v7429
      %v7431 = vrot.slane %v7430, 1
      %v7432 = vmax.f32 %v7430, %v7431
      %v7433 = vsel %vm7292, %v6712, -inf
      %v7434 = vrot.slane %v7433, 4
      %v7435 = vmax.f32 %v7433, %v7434
      %v7436 = vrot.slane %v7435, 2
      %v7437 = vmax.f32 %v7435, %v7436
      %v7438 = vrot.slane %v7437, 1
      %v7439 = vmax.f32 %v7437, %v7438
      %v7440 = vsel %vm7292, %v6720, -inf
      %v7441 = vrot.slane %v7440, 4
      %v7442 = vmax.f32 %v7440, %v7441
      %v7443 = vrot.slane %v7442, 2
      %v7444 = vmax.f32 %v7442, %v7443
      %v7445 = vrot.slane %v7444, 1
      %v7446 = vmax.f32 %v7444, %v7445
      %v7447 = vsel %vm7292, %v6719, -inf
      %v7448 = vrot.slane %v7447, 4
      %v7449 = vmax.f32 %v7447, %v7448
      %v7450 = vrot.slane %v7449, 2
      %v7451 = vmax.f32 %v7449, %v7450
      %v7452 = vrot.slane %v7451, 1
      %v7453 = vmax.f32 %v7451, %v7452
      %v7454 = vsel %vm7292, %v6721, -inf
      %v7455 = vrot.slane %v7454, 4
      %v7456 = vmax.f32 %v7454, %v7455
      %v7457 = vrot.slane %v7456, 2
      %v7458 = vmax.f32 %v7456, %v7457
      %v7459 = vrot.slane %v7458, 1
      %v7460 = vmax.f32 %v7458, %v7459
      %v7461 = vsel %vm7292, %v6729, -inf
      %v7462 = vrot.slane %v7461, 4
      %v7463 = vmax.f32 %v7461, %v7462
      %v7464 = vrot.slane %v7463, 2
      %v7465 = vmax.f32 %v7463, %v7464
      %v7466 = vrot.slane %v7465, 1
      %v7467 = vmax.f32 %v7465, %v7466
      %v7468 = vsel %vm7292, %v6737, -inf
      %v7469 = vrot.slane %v7468, 4
      %v7470 = vmax.f32 %v7468, %v7469
      %v7471 = vrot.slane %v7470, 2
      %v7472 = vmax.f32 %v7470, %v7471
      %v7473 = vrot.slane %v7472, 1
      %v7474 = vmax.f32 %v7472, %v7473
      %v7475 = vsel %vm7292, %v6736, -inf
      %v7476 = vrot.slane %v7475, 4
      %v7477 = vmax.f32 %v7475, %v7476
      %v7478 = vrot.slane %v7477, 2
      %v7479 = vmax.f32 %v7477, %v7478
      %v7480 = vrot.slane %v7479, 1
      %v7481 = vmax.f32 %v7479, %v7480
      %v7482 = vsel %vm7292, %v6738, -inf
      %v7483 = vrot.slane %v7482, 4
      %v7484 = vmax.f32 %v7482, %v7483
      %v7485 = vrot.slane %v7484, 2
      %v7486 = vmax.f32 %v7484, %v7485
      %v7487 = vrot.slane %v7486, 1
      %v7488 = vmax.f32 %v7486, %v7487
      %v7489 = vsel %vm7292, %v6746, -inf
      %v7490 = vrot.slane %v7489, 4
      %v7491 = vmax.f32 %v7489, %v7490
      %v7492 = vrot.slane %v7491, 2
      %v7493 = vmax.f32 %v7491, %v7492
      %v7494 = vrot.slane %v7493, 1
      %v7495 = vmax.f32 %v7493, %v7494
      %v7496 = vsel %vm7292, %v6754, -inf
      %v7497 = vrot.slane %v7496, 4
      %v7498 = vmax.f32 %v7496, %v7497
      %v7499 = vrot.slane %v7498, 2
      %v7500 = vmax.f32 %v7498, %v7499
      %v7501 = vrot.slane %v7500, 1
      %v7502 = vmax.f32 %v7500, %v7501
      %v7503 = vsel %vm7292, %v6753, -inf
      %v7504 = vrot.slane %v7503, 4
      %v7505 = vmax.f32 %v7503, %v7504
      %v7506 = vrot.slane %v7505, 2
      %v7507 = vmax.f32 %v7505, %v7506
      %v7508 = vrot.slane %v7507, 1
      %v7509 = vmax.f32 %v7507, %v7508
      %v7510 = vsel %vm7292, %v6755, -inf
      %v7511 = vrot.slane %v7510, 4
      %v7512 = vmax.f32 %v7510, %v7511
      %v7513 = vrot.slane %v7512, 2
      %v7514 = vmax.f32 %v7512, %v7513
      %v7515 = vrot.slane %v7514, 1
      %v7516 = vmax.f32 %v7514, %v7515
      %v7517 = vsel %vm7292, %v6763, -inf
      %v7518 = vrot.slane %v7517, 4
      %v7519 = vmax.f32 %v7517, %v7518
      %v7520 = vrot.slane %v7519, 2
      %v7521 = vmax.f32 %v7519, %v7520
      %v7522 = vrot.slane %v7521, 1
      %v7523 = vmax.f32 %v7521, %v7522
      %v7524 = vsel %vm7292, %v6771, -inf
      %v7525 = vrot.slane %v7524, 4
      %v7526 = vmax.f32 %v7524, %v7525
      %v7527 = vrot.slane %v7526, 2
      %v7528 = vmax.f32 %v7526, %v7527
      %v7529 = vrot.slane %v7528, 1
      %v7530 = vmax.f32 %v7528, %v7529
      %v7531 = vsel %vm7292, %v6770, -inf
      %v7532 = vrot.slane %v7531, 4
      %v7533 = vmax.f32 %v7531, %v7532
      %v7534 = vrot.slane %v7533, 2
      %v7535 = vmax.f32 %v7533, %v7534
      %v7536 = vrot.slane %v7535, 1
      %v7537 = vmax.f32 %v7535, %v7536
      %v7538 = vsel %vm7292, %v6772, -inf
      %v7539 = vrot.slane %v7538, 4
      %v7540 = vmax.f32 %v7538, %v7539
      %v7541 = vrot.slane %v7540, 2
      %v7542 = vmax.f32 %v7540, %v7541
      %v7543 = vrot.slane %v7542, 1
      %v7544 = vmax.f32 %v7542, %v7543
      %v7545 = vsel %vm7292, %v6780, -inf
      %v7546 = vrot.slane %v7545, 4
      %v7547 = vmax.f32 %v7545, %v7546
      %v7548 = vrot.slane %v7547, 2
      %v7549 = vmax.f32 %v7547, %v7548
      %v7550 = vrot.slane %v7549, 1
      %v7551 = vmax.f32 %v7549, %v7550
      %v7552 = vsel %vm7292, %v6788, -inf
      %v7553 = vrot.slane %v7552, 4
      %v7554 = vmax.f32 %v7552, %v7553
      %v7555 = vrot.slane %v7554, 2
      %v7556 = vmax.f32 %v7554, %v7555
      %v7557 = vrot.slane %v7556, 1
      %v7558 = vmax.f32 %v7556, %v7557
      %v7559 = vsel %vm7292, %v6787, -inf
      %v7560 = vrot.slane %v7559, 4
      %v7561 = vmax.f32 %v7559, %v7560
      %v7562 = vrot.slane %v7561, 2
      %v7563 = vmax.f32 %v7561, %v7562
      %v7564 = vrot.slane %v7563, 1
      %v7565 = vmax.f32 %v7563, %v7564
      %v7566 = vsel %vm7292, %v6789, -inf
      %v7567 = vrot.slane %v7566, 4
      %v7568 = vmax.f32 %v7566, %v7567
      %v7569 = vrot.slane %v7568, 2
      %v7570 = vmax.f32 %v7568, %v7569
      %v7571 = vrot.slane %v7570, 1
      %v7572 = vmax.f32 %v7570, %v7571
      %v7573 = vsel %vm7292, %v6797, -inf
      %v7574 = vrot.slane %v7573, 4
      %v7575 = vmax.f32 %v7573, %v7574
      %v7576 = vrot.slane %v7575, 2
      %v7577 = vmax.f32 %v7575, %v7576
      %v7578 = vrot.slane %v7577, 1
      %v7579 = vmax.f32 %v7577, %v7578
      %v7580 = vsel %vm7292, %v6805, -inf
      %v7581 = vrot.slane %v7580, 4
      %v7582 = vmax.f32 %v7580, %v7581
      %v7583 = vrot.slane %v7582, 2
      %v7584 = vmax.f32 %v7582, %v7583
      %v7585 = vrot.slane %v7584, 1
      %v7586 = vmax.f32 %v7584, %v7585
      %v7587 = vsel %vm7292, %v6804, -inf
      %v7588 = vrot.slane %v7587, 4
      %v7589 = vmax.f32 %v7587, %v7588
      %v7590 = vrot.slane %v7589, 2
      %v7591 = vmax.f32 %v7589, %v7590
      %v7592 = vrot.slane %v7591, 1
      %v7593 = vmax.f32 %v7591, %v7592
      %v7594 = vsel %vm7292, %v6806, -inf
      %v7595 = vrot.slane %v7594, 4
      %v7596 = vmax.f32 %v7594, %v7595
      %v7597 = vrot.slane %v7596, 2
      %v7598 = vmax.f32 %v7596, %v7597
      %v7599 = vrot.slane %v7598, 1
      %v7600 = vmax.f32 %v7598, %v7599
      %v7601 = vsel %vm7292, %v6814, -inf
      %v7602 = vrot.slane %v7601, 4
      %v7603 = vmax.f32 %v7601, %v7602
      %v7604 = vrot.slane %v7603, 2
      %v7605 = vmax.f32 %v7603, %v7604
      %v7606 = vrot.slane %v7605, 1
      %v7607 = vmax.f32 %v7605, %v7606
      %v7608 = vsel %vm7292, %v6822, -inf
      %v7609 = vrot.slane %v7608, 4
      %v7610 = vmax.f32 %v7608, %v7609
      %v7611 = vrot.slane %v7610, 2
      %v7612 = vmax.f32 %v7610, %v7611
      %v7613 = vrot.slane %v7612, 1
      %v7614 = vmax.f32 %v7612, %v7613
      %v7615 = vsel %vm7292, %v6821, -inf
      %v7616 = vrot.slane %v7615, 4
      %v7617 = vmax.f32 %v7615, %v7616
      %v7618 = vrot.slane %v7617, 2
      %v7619 = vmax.f32 %v7617, %v7618
      %v7620 = vrot.slane %v7619, 1
      %v7621 = vmax.f32 %v7619, %v7620
      %v7622 = vsel %vm7292, %v6823, -inf
      %v7623 = vrot.slane %v7622, 4
      %v7624 = vmax.f32 %v7622, %v7623
      %v7625 = vrot.slane %v7624, 2
      %v7626 = vmax.f32 %v7624, %v7625
      %v7627 = vrot.slane %v7626, 1
      %v7628 = vmax.f32 %v7626, %v7627
      %v7629 = vsel %vm7292, %v6831, -inf
      %v7630 = vrot.slane %v7629, 4
      %v7631 = vmax.f32 %v7629, %v7630
      %v7632 = vrot.slane %v7631, 2
      %v7633 = vmax.f32 %v7631, %v7632
      %v7634 = vrot.slane %v7633, 1
      %v7635 = vmax.f32 %v7633, %v7634
      %v7636 = vsel %vm7292, %v6839, -inf
      %v7637 = vrot.slane %v7636, 4
      %v7638 = vmax.f32 %v7636, %v7637
      %v7639 = vrot.slane %v7638, 2
      %v7640 = vmax.f32 %v7638, %v7639
      %v7641 = vrot.slane %v7640, 1
      %v7642 = vmax.f32 %v7640, %v7641
      %v7643 = vsel %vm7292, %v6838, -inf
      %v7644 = vrot.slane %v7643, 4
      %v7645 = vmax.f32 %v7643, %v7644
      %v7646 = vrot.slane %v7645, 2
      %v7647 = vmax.f32 %v7645, %v7646
      %v7648 = vrot.slane %v7647, 1
      %v7649 = vmax.f32 %v7647, %v7648
      %v7650 = vsel %vm7292, %v6840, -inf
      %v7651 = vrot.slane %v7650, 4
      %v7652 = vmax.f32 %v7650, %v7651
      %v7653 = vrot.slane %v7652, 2
      %v7654 = vmax.f32 %v7652, %v7653
      %v7655 = vrot.slane %v7654, 1
      %v7656 = vmax.f32 %v7654, %v7655
      %v7657 = vsel %vm7292, %v6848, -inf
      %v7658 = vrot.slane %v7657, 4
      %v7659 = vmax.f32 %v7657, %v7658
      %v7660 = vrot.slane %v7659, 2
      %v7661 = vmax.f32 %v7659, %v7660
      %v7662 = vrot.slane %v7661, 1
      %v7663 = vmax.f32 %v7661, %v7662
      %v7664 = vsel %vm7292, %v6856, -inf
      %v7665 = vrot.slane %v7664, 4
      %v7666 = vmax.f32 %v7664, %v7665
      %v7667 = vrot.slane %v7666, 2
      %v7668 = vmax.f32 %v7666, %v7667
      %v7669 = vrot.slane %v7668, 1
      %v7670 = vmax.f32 %v7668, %v7669
      %v7671 = vsel %vm7292, %v6855, -inf
      %v7672 = vrot.slane %v7671, 4
      %v7673 = vmax.f32 %v7671, %v7672
      %v7674 = vrot.slane %v7673, 2
      %v7675 = vmax.f32 %v7673, %v7674
      %v7676 = vrot.slane %v7675, 1
      %v7677 = vmax.f32 %v7675, %v7676
      %v7678 = vsel %vm7292, %v6857, -inf
      %v7679 = vrot.slane %v7678, 4
      %v7680 = vmax.f32 %v7678, %v7679
      %v7681 = vrot.slane %v7680, 2
      %v7682 = vmax.f32 %v7680, %v7681
      %v7683 = vrot.slane %v7682, 1
      %v7684 = vmax.f32 %v7682, %v7683
      %v7685 = vsel %vm7292, %v6865, -inf
      %v7686 = vrot.slane %v7685, 4
      %v7687 = vmax.f32 %v7685, %v7686
      %v7688 = vrot.slane %v7687, 2
      %v7689 = vmax.f32 %v7687, %v7688
      %v7690 = vrot.slane %v7689, 1
      %v7691 = vmax.f32 %v7689, %v7690
      %v7692 = vsel %vm7292, %v6873, -inf
      %v7693 = vrot.slane %v7692, 4
      %v7694 = vmax.f32 %v7692, %v7693
      %v7695 = vrot.slane %v7694, 2
      %v7696 = vmax.f32 %v7694, %v7695
      %v7697 = vrot.slane %v7696, 1
      %v7698 = vmax.f32 %v7696, %v7697
      %v7699 = vsel %vm7292, %v6872, -inf
      %v7700 = vrot.slane %v7699, 4
      %v7701 = vmax.f32 %v7699, %v7700
      %v7702 = vrot.slane %v7701, 2
      %v7703 = vmax.f32 %v7701, %v7702
      %v7704 = vrot.slane %v7703, 1
      %v7705 = vmax.f32 %v7703, %v7704
      %v7706 = vsel %vm7292, %v6874, -inf
      %v7707 = vrot.slane %v7706, 4
      %v7708 = vmax.f32 %v7706, %v7707
      %v7709 = vrot.slane %v7708, 2
      %v7710 = vmax.f32 %v7708, %v7709
      %v7711 = vrot.slane %v7710, 1
      %v7712 = vmax.f32 %v7710, %v7711
      %v7713 = vsel %vm7292, %v6882, -inf
      %v7714 = vrot.slane %v7713, 4
      %v7715 = vmax.f32 %v7713, %v7714
      %v7716 = vrot.slane %v7715, 2
      %v7717 = vmax.f32 %v7715, %v7716
      %v7718 = vrot.slane %v7717, 1
      %v7719 = vmax.f32 %v7717, %v7718
      %v7720 = vsel %vm7292, %v6890, -inf
      %v7721 = vrot.slane %v7720, 4
      %v7722 = vmax.f32 %v7720, %v7721
      %v7723 = vrot.slane %v7722, 2
      %v7724 = vmax.f32 %v7722, %v7723
      %v7725 = vrot.slane %v7724, 1
      %v7726 = vmax.f32 %v7724, %v7725
      %v7727 = vsel %vm7292, %v6889, -inf
      %v7728 = vrot.slane %v7727, 4
      %v7729 = vmax.f32 %v7727, %v7728
      %v7730 = vrot.slane %v7729, 2
      %v7731 = vmax.f32 %v7729, %v7730
      %v7732 = vrot.slane %v7731, 1
      %v7733 = vmax.f32 %v7731, %v7732
      %v7734 = vsel %vm7292, %v6891, -inf
      %v7735 = vrot.slane %v7734, 4
      %v7736 = vmax.f32 %v7734, %v7735
      %v7737 = vrot.slane %v7736, 2
      %v7738 = vmax.f32 %v7736, %v7737
      %v7739 = vrot.slane %v7738, 1
      %v7740 = vmax.f32 %v7738, %v7739
      %v7741 = vsel %vm7292, %v6899, -inf
      %v7742 = vrot.slane %v7741, 4
      %v7743 = vmax.f32 %v7741, %v7742
      %v7744 = vrot.slane %v7743, 2
      %v7745 = vmax.f32 %v7743, %v7744
      %v7746 = vrot.slane %v7745, 1
      %v7747 = vmax.f32 %v7745, %v7746
      %v7748 = vsel %vm7292, %v6907, -inf
      %v7749 = vrot.slane %v7748, 4
      %v7750 = vmax.f32 %v7748, %v7749
      %v7751 = vrot.slane %v7750, 2
      %v7752 = vmax.f32 %v7750, %v7751
      %v7753 = vrot.slane %v7752, 1
      %v7754 = vmax.f32 %v7752, %v7753
      %v7755 = vsel %vm7292, %v6906, -inf
      %v7756 = vrot.slane %v7755, 4
      %v7757 = vmax.f32 %v7755, %v7756
      %v7758 = vrot.slane %v7757, 2
      %v7759 = vmax.f32 %v7757, %v7758
      %v7760 = vrot.slane %v7759, 1
      %v7761 = vmax.f32 %v7759, %v7760
      %v7762 = vsel %vm7292, %v6908, -inf
      %v7763 = vrot.slane %v7762, 4
      %v7764 = vmax.f32 %v7762, %v7763
      %v7765 = vrot.slane %v7764, 2
      %v7766 = vmax.f32 %v7764, %v7765
      %v7767 = vrot.slane %v7766, 1
      %v7768 = vmax.f32 %v7766, %v7767
      %v7769 = vsel %vm7292, %v6916, -inf
      %v7770 = vrot.slane %v7769, 4
      %v7771 = vmax.f32 %v7769, %v7770
      %v7772 = vrot.slane %v7771, 2
      %v7773 = vmax.f32 %v7771, %v7772
      %v7774 = vrot.slane %v7773, 1
      %v7775 = vmax.f32 %v7773, %v7774
      %v7776 = vsel %vm7292, %v6924, -inf
      %v7777 = vrot.slane %v7776, 4
      %v7778 = vmax.f32 %v7776, %v7777
      %v7779 = vrot.slane %v7778, 2
      %v7780 = vmax.f32 %v7778, %v7779
      %v7781 = vrot.slane %v7780, 1
      %v7782 = vmax.f32 %v7780, %v7781
      %v7783 = vsel %vm7292, %v6923, -inf
      %v7784 = vrot.slane %v7783, 4
      %v7785 = vmax.f32 %v7783, %v7784
      %v7786 = vrot.slane %v7785, 2
      %v7787 = vmax.f32 %v7785, %v7786
      %v7788 = vrot.slane %v7787, 1
      %v7789 = vmax.f32 %v7787, %v7788
      %v7790 = vsel %vm7292, %v6925, -inf
      %v7791 = vrot.slane %v7790, 4
      %v7792 = vmax.f32 %v7790, %v7791
      %v7793 = vrot.slane %v7792, 2
      %v7794 = vmax.f32 %v7792, %v7793
      %v7795 = vrot.slane %v7794, 1
      %v7796 = vmax.f32 %v7794, %v7795
      %v7797 = vsel %vm7292, %v6933, -inf
      %v7798 = vrot.slane %v7797, 4
      %v7799 = vmax.f32 %v7797, %v7798
      %v7800 = vrot.slane %v7799, 2
      %v7801 = vmax.f32 %v7799, %v7800
      %v7802 = vrot.slane %v7801, 1
      %v7803 = vmax.f32 %v7801, %v7802
      %v7804 = vsel %vm7292, %v6941, -inf
      %v7805 = vrot.slane %v7804, 4
      %v7806 = vmax.f32 %v7804, %v7805
      %v7807 = vrot.slane %v7806, 2
      %v7808 = vmax.f32 %v7806, %v7807
      %v7809 = vrot.slane %v7808, 1
      %v7810 = vmax.f32 %v7808, %v7809
      %v7811 = vsel %vm7292, %v6940, -inf
      %v7812 = vrot.slane %v7811, 4
      %v7813 = vmax.f32 %v7811, %v7812
      %v7814 = vrot.slane %v7813, 2
      %v7815 = vmax.f32 %v7813, %v7814
      %v7816 = vrot.slane %v7815, 1
      %v7817 = vmax.f32 %v7815, %v7816
      %v7818 = vsel %vm7292, %v6942, -inf
      %v7819 = vrot.slane %v7818, 4
      %v7820 = vmax.f32 %v7818, %v7819
      %v7821 = vrot.slane %v7820, 2
      %v7822 = vmax.f32 %v7820, %v7821
      %v7823 = vrot.slane %v7822, 1
      %v7824 = vmax.f32 %v7822, %v7823
      %v7825 = vsel %vm7292, %v6950, -inf
      %v7826 = vrot.slane %v7825, 4
      %v7827 = vmax.f32 %v7825, %v7826
      %v7828 = vrot.slane %v7827, 2
      %v7829 = vmax.f32 %v7827, %v7828
      %v7830 = vrot.slane %v7829, 1
      %v7831 = vmax.f32 %v7829, %v7830
      %v7832 = vsel %vm7292, %v6958, -inf
      %v7833 = vrot.slane %v7832, 4
      %v7834 = vmax.f32 %v7832, %v7833
      %v7835 = vrot.slane %v7834, 2
      %v7836 = vmax.f32 %v7834, %v7835
      %v7837 = vrot.slane %v7836, 1
      %v7838 = vmax.f32 %v7836, %v7837
      %v7839 = vsel %vm7292, %v6957, -inf
      %v7840 = vrot.slane %v7839, 4
      %v7841 = vmax.f32 %v7839, %v7840
      %v7842 = vrot.slane %v7841, 2
      %v7843 = vmax.f32 %v7841, %v7842
      %v7844 = vrot.slane %v7843, 1
      %v7845 = vmax.f32 %v7843, %v7844
      %v7846 = vsel %vm7292, %v6959, -inf
      %v7847 = vrot.slane %v7846, 4
      %v7848 = vmax.f32 %v7846, %v7847
      %v7849 = vrot.slane %v7848, 2
      %v7850 = vmax.f32 %v7848, %v7849
      %v7851 = vrot.slane %v7850, 1
      %v7852 = vmax.f32 %v7850, %v7851
      %v7853 = vsel %vm7292, %v6967, -inf
      %v7854 = vrot.slane %v7853, 4
      %v7855 = vmax.f32 %v7853, %v7854
      %v7856 = vrot.slane %v7855, 2
      %v7857 = vmax.f32 %v7855, %v7856
      %v7858 = vrot.slane %v7857, 1
      %v7859 = vmax.f32 %v7857, %v7858
      %v7860 = vsel %vm7292, %v6975, -inf
      %v7861 = vrot.slane %v7860, 4
      %v7862 = vmax.f32 %v7860, %v7861
      %v7863 = vrot.slane %v7862, 2
      %v7864 = vmax.f32 %v7862, %v7863
      %v7865 = vrot.slane %v7864, 1
      %v7866 = vmax.f32 %v7864, %v7865
      %v7867 = vsel %vm7292, %v6974, -inf
      %v7868 = vrot.slane %v7867, 4
      %v7869 = vmax.f32 %v7867, %v7868
      %v7870 = vrot.slane %v7869, 2
      %v7871 = vmax.f32 %v7869, %v7870
      %v7872 = vrot.slane %v7871, 1
      %v7873 = vmax.f32 %v7871, %v7872
      %v7874 = vsel %vm7292, %v6976, -inf
      %v7875 = vrot.slane %v7874, 4
      %v7876 = vmax.f32 %v7874, %v7875
      %v7877 = vrot.slane %v7876, 2
      %v7878 = vmax.f32 %v7876, %v7877
      %v7879 = vrot.slane %v7878, 1
      %v7880 = vmax.f32 %v7878, %v7879
      %v7881 = vsel %vm7292, %v6984, -inf
      %v7882 = vrot.slane %v7881, 4
      %v7883 = vmax.f32 %v7881, %v7882
      %v7884 = vrot.slane %v7883, 2
      %v7885 = vmax.f32 %v7883, %v7884
      %v7886 = vrot.slane %v7885, 1
      %v7887 = vmax.f32 %v7885, %v7886
      %v7888 = vsel %vm7292, %v6992, -inf
      %v7889 = vrot.slane %v7888, 4
      %v7890 = vmax.f32 %v7888, %v7889
      %v7891 = vrot.slane %v7890, 2
      %v7892 = vmax.f32 %v7890, %v7891
      %v7893 = vrot.slane %v7892, 1
      %v7894 = vmax.f32 %v7892, %v7893
      %v7895 = vsel %vm7292, %v6991, -inf
      %v7896 = vrot.slane %v7895, 4
      %v7897 = vmax.f32 %v7895, %v7896
      %v7898 = vrot.slane %v7897, 2
      %v7899 = vmax.f32 %v7897, %v7898
      %v7900 = vrot.slane %v7899, 1
      %v7901 = vmax.f32 %v7899, %v7900
      %v7902 = vsel %vm7292, %v6993, -inf
      %v7903 = vrot.slane %v7902, 4
      %v7904 = vmax.f32 %v7902, %v7903
      %v7905 = vrot.slane %v7904, 2
      %v7906 = vmax.f32 %v7904, %v7905
      %v7907 = vrot.slane %v7906, 1
      %v7908 = vmax.f32 %v7906, %v7907
      %v7909 = vsel %vm7292, %v7001, -inf
      %v7910 = vrot.slane %v7909, 4
      %v7911 = vmax.f32 %v7909, %v7910
      %v7912 = vrot.slane %v7911, 2
      %v7913 = vmax.f32 %v7911, %v7912
      %v7914 = vrot.slane %v7913, 1
      %v7915 = vmax.f32 %v7913, %v7914
      %v7916 = vsel %vm7292, %v7009, -inf
      %v7917 = vrot.slane %v7916, 4
      %v7918 = vmax.f32 %v7916, %v7917
      %v7919 = vrot.slane %v7918, 2
      %v7920 = vmax.f32 %v7918, %v7919
      %v7921 = vrot.slane %v7920, 1
      %v7922 = vmax.f32 %v7920, %v7921
      %v7923 = vsel %vm7292, %v7008, -inf
      %v7924 = vrot.slane %v7923, 4
      %v7925 = vmax.f32 %v7923, %v7924
      %v7926 = vrot.slane %v7925, 2
      %v7927 = vmax.f32 %v7925, %v7926
      %v7928 = vrot.slane %v7927, 1
      %v7929 = vmax.f32 %v7927, %v7928
      %v7930 = vsel %vm7292, %v7010, -inf
      %v7931 = vrot.slane %v7930, 4
      %v7932 = vmax.f32 %v7930, %v7931
      %v7933 = vrot.slane %v7932, 2
      %v7934 = vmax.f32 %v7932, %v7933
      %v7935 = vrot.slane %v7934, 1
      %v7936 = vmax.f32 %v7934, %v7935
      %v7937 = vsel %vm7292, %v7018, -inf
      %v7938 = vrot.slane %v7937, 4
      %v7939 = vmax.f32 %v7937, %v7938
      %v7940 = vrot.slane %v7939, 2
      %v7941 = vmax.f32 %v7939, %v7940
      %v7942 = vrot.slane %v7941, 1
      %v7943 = vmax.f32 %v7941, %v7942
      %v7944 = vsel %vm7292, %v7026, -inf
      %v7945 = vrot.slane %v7944, 4
      %v7946 = vmax.f32 %v7944, %v7945
      %v7947 = vrot.slane %v7946, 2
      %v7948 = vmax.f32 %v7946, %v7947
      %v7949 = vrot.slane %v7948, 1
      %v7950 = vmax.f32 %v7948, %v7949
      %v7951 = vsel %vm7292, %v7025, -inf
      %v7952 = vrot.slane %v7951, 4
      %v7953 = vmax.f32 %v7951, %v7952
      %v7954 = vrot.slane %v7953, 2
      %v7955 = vmax.f32 %v7953, %v7954
      %v7956 = vrot.slane %v7955, 1
      %v7957 = vmax.f32 %v7955, %v7956
      %v7958 = vsel %vm7292, %v7027, -inf
      %v7959 = vrot.slane %v7958, 4
      %v7960 = vmax.f32 %v7958, %v7959
      %v7961 = vrot.slane %v7960, 2
      %v7962 = vmax.f32 %v7960, %v7961
      %v7963 = vrot.slane %v7962, 1
      %v7964 = vmax.f32 %v7962, %v7963
      %v7965 = vsel %vm7292, %v7035, -inf
      %v7966 = vrot.slane %v7965, 4
      %v7967 = vmax.f32 %v7965, %v7966
      %v7968 = vrot.slane %v7967, 2
      %v7969 = vmax.f32 %v7967, %v7968
      %v7970 = vrot.slane %v7969, 1
      %v7971 = vmax.f32 %v7969, %v7970
      %v7972 = vsel %vm7292, %v7043, -inf
      %v7973 = vrot.slane %v7972, 4
      %v7974 = vmax.f32 %v7972, %v7973
      %v7975 = vrot.slane %v7974, 2
      %v7976 = vmax.f32 %v7974, %v7975
      %v7977 = vrot.slane %v7976, 1
      %v7978 = vmax.f32 %v7976, %v7977
      %v7979 = vsel %vm7292, %v7042, -inf
      %v7980 = vrot.slane %v7979, 4
      %v7981 = vmax.f32 %v7979, %v7980
      %v7982 = vrot.slane %v7981, 2
      %v7983 = vmax.f32 %v7981, %v7982
      %v7984 = vrot.slane %v7983, 1
      %v7985 = vmax.f32 %v7983, %v7984
      %v7986 = vsel %vm7292, %v7044, -inf
      %v7987 = vrot.slane %v7986, 4
      %v7988 = vmax.f32 %v7986, %v7987
      %v7989 = vrot.slane %v7988, 2
      %v7990 = vmax.f32 %v7988, %v7989
      %v7991 = vrot.slane %v7990, 1
      %v7992 = vmax.f32 %v7990, %v7991
      %v7993 = vsel %vm7292, %v7052, -inf
      %v7994 = vrot.slane %v7993, 4
      %v7995 = vmax.f32 %v7993, %v7994
      %v7996 = vrot.slane %v7995, 2
      %v7997 = vmax.f32 %v7995, %v7996
      %v7998 = vrot.slane %v7997, 1
      %v7999 = vmax.f32 %v7997, %v7998
      %v8000 = vsel %vm7292, %v7060, -inf
      %v8001 = vrot.slane %v8000, 4
      %v8002 = vmax.f32 %v8000, %v8001
      %v8003 = vrot.slane %v8002, 2
      %v8004 = vmax.f32 %v8002, %v8003
      %v8005 = vrot.slane %v8004, 1
      %v8006 = vmax.f32 %v8004, %v8005
      %v8007 = vsel %vm7292, %v7059, -inf
      %v8008 = vrot.slane %v8007, 4
      %v8009 = vmax.f32 %v8007, %v8008
      %v8010 = vrot.slane %v8009, 2
      %v8011 = vmax.f32 %v8009, %v8010
      %v8012 = vrot.slane %v8011, 1
      %v8013 = vmax.f32 %v8011, %v8012
      %v8014 = vsel %vm7292, %v7061, -inf
      %v8015 = vrot.slane %v8014, 4
      %v8016 = vmax.f32 %v8014, %v8015
      %v8017 = vrot.slane %v8016, 2
      %v8018 = vmax.f32 %v8016, %v8017
      %v8019 = vrot.slane %v8018, 1
      %v8020 = vmax.f32 %v8018, %v8019
      %v8021 = vsel %vm7292, %v7069, -inf
      %v8022 = vrot.slane %v8021, 4
      %v8023 = vmax.f32 %v8021, %v8022
      %v8024 = vrot.slane %v8023, 2
      %v8025 = vmax.f32 %v8023, %v8024
      %v8026 = vrot.slane %v8025, 1
      %v8027 = vmax.f32 %v8025, %v8026
      %v8028 = vsel %vm7292, %v7077, -inf
      %v8029 = vrot.slane %v8028, 4
      %v8030 = vmax.f32 %v8028, %v8029
      %v8031 = vrot.slane %v8030, 2
      %v8032 = vmax.f32 %v8030, %v8031
      %v8033 = vrot.slane %v8032, 1
      %v8034 = vmax.f32 %v8032, %v8033
      %v8035 = vsel %vm7292, %v7076, -inf
      %v8036 = vrot.slane %v8035, 4
      %v8037 = vmax.f32 %v8035, %v8036
      %v8038 = vrot.slane %v8037, 2
      %v8039 = vmax.f32 %v8037, %v8038
      %v8040 = vrot.slane %v8039, 1
      %v8041 = vmax.f32 %v8039, %v8040
      %v8042 = vsel %vm7292, %v7078, -inf
      %v8043 = vrot.slane %v8042, 4
      %v8044 = vmax.f32 %v8042, %v8043
      %v8045 = vrot.slane %v8044, 2
      %v8046 = vmax.f32 %v8044, %v8045
      %v8047 = vrot.slane %v8046, 1
      %v8048 = vmax.f32 %v8046, %v8047
      %v8049 = vsel %vm7292, %v7086, -inf
      %v8050 = vrot.slane %v8049, 4
      %v8051 = vmax.f32 %v8049, %v8050
      %v8052 = vrot.slane %v8051, 2
      %v8053 = vmax.f32 %v8051, %v8052
      %v8054 = vrot.slane %v8053, 1
      %v8055 = vmax.f32 %v8053, %v8054
      %v8056 = vsel %vm7292, %v7094, -inf
      %v8057 = vrot.slane %v8056, 4
      %v8058 = vmax.f32 %v8056, %v8057
      %v8059 = vrot.slane %v8058, 2
      %v8060 = vmax.f32 %v8058, %v8059
      %v8061 = vrot.slane %v8060, 1
      %v8062 = vmax.f32 %v8060, %v8061
      %v8063 = vsel %vm7292, %v7093, -inf
      %v8064 = vrot.slane %v8063, 4
      %v8065 = vmax.f32 %v8063, %v8064
      %v8066 = vrot.slane %v8065, 2
      %v8067 = vmax.f32 %v8065, %v8066
      %v8068 = vrot.slane %v8067, 1
      %v8069 = vmax.f32 %v8067, %v8068
      %v8070 = vsel %vm7292, %v7095, -inf
      %v8071 = vrot.slane %v8070, 4
      %v8072 = vmax.f32 %v8070, %v8071
      %v8073 = vrot.slane %v8072, 2
      %v8074 = vmax.f32 %v8072, %v8073
      %v8075 = vrot.slane %v8074, 1
      %v8076 = vmax.f32 %v8074, %v8075
      %v8077 = vsel %vm7292, %v7103, -inf
      %v8078 = vrot.slane %v8077, 4
      %v8079 = vmax.f32 %v8077, %v8078
      %v8080 = vrot.slane %v8079, 2
      %v8081 = vmax.f32 %v8079, %v8080
      %v8082 = vrot.slane %v8081, 1
      %v8083 = vmax.f32 %v8081, %v8082
      %v8084 = vsel %vm7292, %v7111, -inf
      %v8085 = vrot.slane %v8084, 4
      %v8086 = vmax.f32 %v8084, %v8085
      %v8087 = vrot.slane %v8086, 2
      %v8088 = vmax.f32 %v8086, %v8087
      %v8089 = vrot.slane %v8088, 1
      %v8090 = vmax.f32 %v8088, %v8089
      %v8091 = vsel %vm7292, %v7110, -inf
      %v8092 = vrot.slane %v8091, 4
      %v8093 = vmax.f32 %v8091, %v8092
      %v8094 = vrot.slane %v8093, 2
      %v8095 = vmax.f32 %v8093, %v8094
      %v8096 = vrot.slane %v8095, 1
      %v8097 = vmax.f32 %v8095, %v8096
      %v8098 = vsel %vm7292, %v7112, -inf
      %v8099 = vrot.slane %v8098, 4
      %v8100 = vmax.f32 %v8098, %v8099
      %v8101 = vrot.slane %v8100, 2
      %v8102 = vmax.f32 %v8100, %v8101
      %v8103 = vrot.slane %v8102, 1
      %v8104 = vmax.f32 %v8102, %v8103
      %v8105 = vsel %vm7292, %v7120, -inf
      %v8106 = vrot.slane %v8105, 4
      %v8107 = vmax.f32 %v8105, %v8106
      %v8108 = vrot.slane %v8107, 2
      %v8109 = vmax.f32 %v8107, %v8108
      %v8110 = vrot.slane %v8109, 1
      %v8111 = vmax.f32 %v8109, %v8110
      %v8112 = vsel %vm7292, %v7128, -inf
      %v8113 = vrot.slane %v8112, 4
      %v8114 = vmax.f32 %v8112, %v8113
      %v8115 = vrot.slane %v8114, 2
      %v8116 = vmax.f32 %v8114, %v8115
      %v8117 = vrot.slane %v8116, 1
      %v8118 = vmax.f32 %v8116, %v8117
      %v8119 = vsel %vm7292, %v7127, -inf
      %v8120 = vrot.slane %v8119, 4
      %v8121 = vmax.f32 %v8119, %v8120
      %v8122 = vrot.slane %v8121, 2
      %v8123 = vmax.f32 %v8121, %v8122
      %v8124 = vrot.slane %v8123, 1
      %v8125 = vmax.f32 %v8123, %v8124
      %v8126 = vsel %vm7292, %v7129, -inf
      %v8127 = vrot.slane %v8126, 4
      %v8128 = vmax.f32 %v8126, %v8127
      %v8129 = vrot.slane %v8128, 2
      %v8130 = vmax.f32 %v8128, %v8129
      %v8131 = vrot.slane %v8130, 1
      %v8132 = vmax.f32 %v8130, %v8131
      %v8133 = vsel %vm7292, %v7137, -inf
      %v8134 = vrot.slane %v8133, 4
      %v8135 = vmax.f32 %v8133, %v8134
      %v8136 = vrot.slane %v8135, 2
      %v8137 = vmax.f32 %v8135, %v8136
      %v8138 = vrot.slane %v8137, 1
      %v8139 = vmax.f32 %v8137, %v8138
      %v8140 = vsel %vm7292, %v7145, -inf
      %v8141 = vrot.slane %v8140, 4
      %v8142 = vmax.f32 %v8140, %v8141
      %v8143 = vrot.slane %v8142, 2
      %v8144 = vmax.f32 %v8142, %v8143
      %v8145 = vrot.slane %v8144, 1
      %v8146 = vmax.f32 %v8144, %v8145
      %v8147 = vsel %vm7292, %v7144, -inf
      %v8148 = vrot.slane %v8147, 4
      %v8149 = vmax.f32 %v8147, %v8148
      %v8150 = vrot.slane %v8149, 2
      %v8151 = vmax.f32 %v8149, %v8150
      %v8152 = vrot.slane %v8151, 1
      %v8153 = vmax.f32 %v8151, %v8152
      %v8154 = vsel %vm7292, %v7146, -inf
      %v8155 = vrot.slane %v8154, 4
      %v8156 = vmax.f32 %v8154, %v8155
      %v8157 = vrot.slane %v8156, 2
      %v8158 = vmax.f32 %v8156, %v8157
      %v8159 = vrot.slane %v8158, 1
      %v8160 = vmax.f32 %v8158, %v8159
      %v8161 = vsel %vm7292, %v7154, -inf
      %v8162 = vrot.slane %v8161, 4
      %v8163 = vmax.f32 %v8161, %v8162
      %v8164 = vrot.slane %v8163, 2
      %v8165 = vmax.f32 %v8163, %v8164
      %v8166 = vrot.slane %v8165, 1
      %v8167 = vmax.f32 %v8165, %v8166
      %v8168 = vsel %vm7292, %v7162, -inf
      %v8169 = vrot.slane %v8168, 4
      %v8170 = vmax.f32 %v8168, %v8169
      %v8171 = vrot.slane %v8170, 2
      %v8172 = vmax.f32 %v8170, %v8171
      %v8173 = vrot.slane %v8172, 1
      %v8174 = vmax.f32 %v8172, %v8173
      %v8175 = vsel %vm7292, %v7161, -inf
      %v8176 = vrot.slane %v8175, 4
      %v8177 = vmax.f32 %v8175, %v8176
      %v8178 = vrot.slane %v8177, 2
      %v8179 = vmax.f32 %v8177, %v8178
      %v8180 = vrot.slane %v8179, 1
      %v8181 = vmax.f32 %v8179, %v8180
      %v8182 = vsel %vm7292, %v7163, -inf
      %v8183 = vrot.slane %v8182, 4
      %v8184 = vmax.f32 %v8182, %v8183
      %v8185 = vrot.slane %v8184, 2
      %v8186 = vmax.f32 %v8184, %v8185
      %v8187 = vrot.slane %v8186, 1
      %v8188 = vmax.f32 %v8186, %v8187
      %v8189 = vsel %vm2072, %v7299, -inf
      %v8190 = vsel %vm2072, %v7355, -inf
      %v8191 = vmax.f32 %v8189, %v8190
      %v8192 = vsel %vm2072, %v7306, -inf
      %v8193 = vsel %vm2072, %v7362, -inf
      %v8194 = vmax.f32 %v8192, %v8193
      %v8195 = vsel %vm2072, %v7313, -inf
      %v8196 = vsel %vm2072, %v7369, -inf
      %v8197 = vmax.f32 %v8195, %v8196
      %v8198 = vsel %vm2072, %v7320, -inf
      %v8199 = vsel %vm2072, %v7376, -inf
      %v8200 = vmax.f32 %v8198, %v8199
      %v8201 = vsel %vm2072, %v7327, -inf
      %v8202 = vsel %vm2072, %v7383, -inf
      %v8203 = vmax.f32 %v8201, %v8202
      %v8204 = vsel %vm2072, %v7334, -inf
      %v8205 = vsel %vm2072, %v7390, -inf
      %v8206 = vmax.f32 %v8204, %v8205
      %v8207 = vsel %vm2072, %v7341, -inf
      %v8208 = vsel %vm2072, %v7397, -inf
      %v8209 = vmax.f32 %v8207, %v8208
      %v8210 = vsel %vm2072, %v7348, -inf
      %v8211 = vsel %vm2072, %v7404, -inf
      %v8212 = vmax.f32 %v8210, %v8211
      %v8213 = vsel %vm2072, %v7411, -inf
      %v8214 = vsel %vm2072, %v7467, -inf
      %v8215 = vmax.f32 %v8213, %v8214
      %v8216 = vsel %vm2072, %v7418, -inf
      %v8217 = vsel %vm2072, %v7474, -inf
      %v8218 = vmax.f32 %v8216, %v8217
      %v8219 = vsel %vm2072, %v7425, -inf
      %v8220 = vsel %vm2072, %v7481, -inf
      %v8221 = vmax.f32 %v8219, %v8220
      %v8222 = vsel %vm2072, %v7432, -inf
      %v8223 = vsel %vm2072, %v7488, -inf
      %v8224 = vmax.f32 %v8222, %v8223
      %v8225 = vsel %vm2072, %v7439, -inf
      %v8226 = vsel %vm2072, %v7495, -inf
      %v8227 = vmax.f32 %v8225, %v8226
      %v8228 = vsel %vm2072, %v7446, -inf
      %v8229 = vsel %vm2072, %v7502, -inf
      %v8230 = vmax.f32 %v8228, %v8229
      %v8231 = vsel %vm2072, %v7453, -inf
      %v8232 = vsel %vm2072, %v7509, -inf
      %v8233 = vmax.f32 %v8231, %v8232
      %v8234 = vsel %vm2072, %v7460, -inf
      %v8235 = vsel %vm2072, %v7516, -inf
      %v8236 = vmax.f32 %v8234, %v8235
      %v8237 = vsel %vm2072, %v7523, -inf
      %v8238 = vsel %vm2072, %v7579, -inf
      %v8239 = vmax.f32 %v8237, %v8238
      %v8240 = vsel %vm2072, %v7530, -inf
      %v8241 = vsel %vm2072, %v7586, -inf
      %v8242 = vmax.f32 %v8240, %v8241
      %v8243 = vsel %vm2072, %v7537, -inf
      %v8244 = vsel %vm2072, %v7593, -inf
      %v8245 = vmax.f32 %v8243, %v8244
      %v8246 = vsel %vm2072, %v7544, -inf
      %v8247 = vsel %vm2072, %v7600, -inf
      %v8248 = vmax.f32 %v8246, %v8247
      %v8249 = vsel %vm2072, %v7551, -inf
      %v8250 = vsel %vm2072, %v7607, -inf
      %v8251 = vmax.f32 %v8249, %v8250
      %v8252 = vsel %vm2072, %v7558, -inf
      %v8253 = vsel %vm2072, %v7614, -inf
      %v8254 = vmax.f32 %v8252, %v8253
      %v8255 = vsel %vm2072, %v7565, -inf
      %v8256 = vsel %vm2072, %v7621, -inf
      %v8257 = vmax.f32 %v8255, %v8256
      %v8258 = vsel %vm2072, %v7572, -inf
      %v8259 = vsel %vm2072, %v7628, -inf
      %v8260 = vmax.f32 %v8258, %v8259
      %v8261 = vsel %vm2072, %v7635, -inf
      %v8262 = vsel %vm2072, %v7691, -inf
      %v8263 = vmax.f32 %v8261, %v8262
      %v8264 = vsel %vm2072, %v7642, -inf
      %v8265 = vsel %vm2072, %v7698, -inf
      %v8266 = vmax.f32 %v8264, %v8265
      %v8267 = vsel %vm2072, %v7649, -inf
      %v8268 = vsel %vm2072, %v7705, -inf
      %v8269 = vmax.f32 %v8267, %v8268
      %v8270 = vsel %vm2072, %v7656, -inf
      %v8271 = vsel %vm2072, %v7712, -inf
      %v8272 = vmax.f32 %v8270, %v8271
      %v8273 = vsel %vm2072, %v7663, -inf
      %v8274 = vsel %vm2072, %v7719, -inf
      %v8275 = vmax.f32 %v8273, %v8274
      %v8276 = vsel %vm2072, %v7670, -inf
      %v8277 = vsel %vm2072, %v7726, -inf
      %v8278 = vmax.f32 %v8276, %v8277
      %v8279 = vsel %vm2072, %v7677, -inf
      %v8280 = vsel %vm2072, %v7733, -inf
      %v8281 = vmax.f32 %v8279, %v8280
      %v8282 = vsel %vm2072, %v7684, -inf
      %v8283 = vsel %vm2072, %v7740, -inf
      %v8284 = vmax.f32 %v8282, %v8283
      %v8285 = vsel %vm2072, %v7747, -inf
      %v8286 = vsel %vm2072, %v7803, -inf
      %v8287 = vmax.f32 %v8285, %v8286
      %v8288 = vsel %vm2072, %v7754, -inf
      %v8289 = vsel %vm2072, %v7810, -inf
      %v8290 = vmax.f32 %v8288, %v8289
      %v8291 = vsel %vm2072, %v7761, -inf
      %v8292 = vsel %vm2072, %v7817, -inf
      %v8293 = vmax.f32 %v8291, %v8292
      %v8294 = vsel %vm2072, %v7768, -inf
      %v8295 = vsel %vm2072, %v7824, -inf
      %v8296 = vmax.f32 %v8294, %v8295
      %v8297 = vsel %vm2072, %v7775, -inf
      %v8298 = vsel %vm2072, %v7831, -inf
      %v8299 = vmax.f32 %v8297, %v8298
      %v8300 = vsel %vm2072, %v7782, -inf
      %v8301 = vsel %vm2072, %v7838, -inf
      %v8302 = vmax.f32 %v8300, %v8301
      %v8303 = vsel %vm2072, %v7789, -inf
      %v8304 = vsel %vm2072, %v7845, -inf
      %v8305 = vmax.f32 %v8303, %v8304
      %v8306 = vsel %vm2072, %v7796, -inf
      %v8307 = vsel %vm2072, %v7852, -inf
      %v8308 = vmax.f32 %v8306, %v8307
      %v8309 = vsel %vm2072, %v7859, -inf
      %v8310 = vsel %vm2072, %v7915, -inf
      %v8311 = vmax.f32 %v8309, %v8310
      %v8312 = vsel %vm2072, %v7866, -inf
      %v8313 = vsel %vm2072, %v7922, -inf
      %v8314 = vmax.f32 %v8312, %v8313
      %v8315 = vsel %vm2072, %v7873, -inf
      %v8316 = vsel %vm2072, %v7929, -inf
      %v8317 = vmax.f32 %v8315, %v8316
      %v8318 = vsel %vm2072, %v7880, -inf
      %v8319 = vsel %vm2072, %v7936, -inf
      %v8320 = vmax.f32 %v8318, %v8319
      %v8321 = vsel %vm2072, %v7887, -inf
      %v8322 = vsel %vm2072, %v7943, -inf
      %v8323 = vmax.f32 %v8321, %v8322
      %v8324 = vsel %vm2072, %v7894, -inf
      %v8325 = vsel %vm2072, %v7950, -inf
      %v8326 = vmax.f32 %v8324, %v8325
      %v8327 = vsel %vm2072, %v7901, -inf
      %v8328 = vsel %vm2072, %v7957, -inf
      %v8329 = vmax.f32 %v8327, %v8328
      %v8330 = vsel %vm2072, %v7908, -inf
      %v8331 = vsel %vm2072, %v7964, -inf
      %v8332 = vmax.f32 %v8330, %v8331
      %v8333 = vsel %vm2072, %v7971, -inf
      %v8334 = vsel %vm2072, %v8027, -inf
      %v8335 = vmax.f32 %v8333, %v8334
      %v8336 = vsel %vm2072, %v7978, -inf
      %v8337 = vsel %vm2072, %v8034, -inf
      %v8338 = vmax.f32 %v8336, %v8337
      %v8339 = vsel %vm2072, %v7985, -inf
      %v8340 = vsel %vm2072, %v8041, -inf
      %v8341 = vmax.f32 %v8339, %v8340
      %v8342 = vsel %vm2072, %v7992, -inf
      %v8343 = vsel %vm2072, %v8048, -inf
      %v8344 = vmax.f32 %v8342, %v8343
      %v8345 = vsel %vm2072, %v7999, -inf
      %v8346 = vsel %vm2072, %v8055, -inf
      %v8347 = vmax.f32 %v8345, %v8346
      %v8348 = vsel %vm2072, %v8006, -inf
      %v8349 = vsel %vm2072, %v8062, -inf
      %v8350 = vmax.f32 %v8348, %v8349
      %v8351 = vsel %vm2072, %v8013, -inf
      %v8352 = vsel %vm2072, %v8069, -inf
      %v8353 = vmax.f32 %v8351, %v8352
      %v8354 = vsel %vm2072, %v8020, -inf
      %v8355 = vsel %vm2072, %v8076, -inf
      %v8356 = vmax.f32 %v8354, %v8355
      %v8357 = vsel %vm2072, %v8083, -inf
      %v8358 = vsel %vm2072, %v8139, -inf
      %v8359 = vmax.f32 %v8357, %v8358
      %v8360 = vsel %vm2072, %v8090, -inf
      %v8361 = vsel %vm2072, %v8146, -inf
      %v8362 = vmax.f32 %v8360, %v8361
      %v8363 = vsel %vm2072, %v8097, -inf
      %v8364 = vsel %vm2072, %v8153, -inf
      %v8365 = vmax.f32 %v8363, %v8364
      %v8366 = vsel %vm2072, %v8104, -inf
      %v8367 = vsel %vm2072, %v8160, -inf
      %v8368 = vmax.f32 %v8366, %v8367
      %v8369 = vsel %vm2072, %v8111, -inf
      %v8370 = vsel %vm2072, %v8167, -inf
      %v8371 = vmax.f32 %v8369, %v8370
      %v8372 = vsel %vm2072, %v8118, -inf
      %v8373 = vsel %vm2072, %v8174, -inf
      %v8374 = vmax.f32 %v8372, %v8373
      %v8375 = vsel %vm2072, %v8125, -inf
      %v8376 = vsel %vm2072, %v8181, -inf
      %v8377 = vmax.f32 %v8375, %v8376
      %v8378 = vsel %vm2072, %v8132, -inf
      %v8379 = vsel %vm2072, %v8188, -inf
      %v8380 = vmax.f32 %v8378, %v8379
      %v8381 = vpack.c.bf16 %v8191, %v8191
      %v8382 = vpack.c.bf16 %v8194, %v8194
      %v8383 = vpack.c.bf16 %v8197, %v8197
      %v8384 = vpack.c.bf16 %v8200, %v8200
      %v8385 = vpack.c.bf16 %v8203, %v8203
      %v8386 = vpack.c.bf16 %v8206, %v8206
      %v8387 = vpack.c.bf16 %v8209, %v8209
      %v8388 = vpack.c.bf16 %v8212, %v8212
      %v8389 = vpack.c.bf16 %v8215, %v8215
      %v8390 = vpack.c.bf16 %v8218, %v8218
      %v8391 = vpack.c.bf16 %v8221, %v8221
      %v8392 = vpack.c.bf16 %v8224, %v8224
      %v8393 = vpack.c.bf16 %v8227, %v8227
      %v8394 = vpack.c.bf16 %v8230, %v8230
      %v8395 = vpack.c.bf16 %v8233, %v8233
      %v8396 = vpack.c.bf16 %v8236, %v8236
      %v8397 = vpack.c.bf16 %v8239, %v8239
      %v8398 = vpack.c.bf16 %v8242, %v8242
      %v8399 = vpack.c.bf16 %v8245, %v8245
      %v8400 = vpack.c.bf16 %v8248, %v8248
      %v8401 = vpack.c.bf16 %v8251, %v8251
      %v8402 = vpack.c.bf16 %v8254, %v8254
      %v8403 = vpack.c.bf16 %v8257, %v8257
      %v8404 = vpack.c.bf16 %v8260, %v8260
      %v8405 = vpack.c.bf16 %v8263, %v8263
      %v8406 = vpack.c.bf16 %v8266, %v8266
      %v8407 = vpack.c.bf16 %v8269, %v8269
      %v8408 = vpack.c.bf16 %v8272, %v8272
      %v8409 = vpack.c.bf16 %v8275, %v8275
      %v8410 = vpack.c.bf16 %v8278, %v8278
      %v8411 = vpack.c.bf16 %v8281, %v8281
      %v8412 = vpack.c.bf16 %v8284, %v8284
      %v8413 = vpack.c.bf16 %v8287, %v8287
      %v8414 = vpack.c.bf16 %v8290, %v8290
      %v8415 = vpack.c.bf16 %v8293, %v8293
      %v8416 = vpack.c.bf16 %v8296, %v8296
      %v8417 = vpack.c.bf16 %v8299, %v8299
      %v8418 = vpack.c.bf16 %v8302, %v8302
      %v8419 = vpack.c.bf16 %v8305, %v8305
      %v8420 = vpack.c.bf16 %v8308, %v8308
      %v8421 = vpack.c.bf16 %v8311, %v8311
      %v8422 = vpack.c.bf16 %v8314, %v8314
      %v8423 = vpack.c.bf16 %v8317, %v8317
      %v8424 = vpack.c.bf16 %v8320, %v8320
      %v8425 = vpack.c.bf16 %v8323, %v8323
      %v8426 = vpack.c.bf16 %v8326, %v8326
      %v8427 = vpack.c.bf16 %v8329, %v8329
      %v8428 = vpack.c.bf16 %v8332, %v8332
      %v8429 = vpack.c.bf16 %v8335, %v8335
      %v8430 = vpack.c.bf16 %v8338, %v8338
      %v8431 = vpack.c.bf16 %v8341, %v8341
      %v8432 = vpack.c.bf16 %v8344, %v8344
      %v8433 = vpack.c.bf16 %v8347, %v8347
      %v8434 = vpack.c.bf16 %v8350, %v8350
      %v8435 = vpack.c.bf16 %v8353, %v8353
      %v8436 = vpack.c.bf16 %v8356, %v8356
      %v8437 = vpack.c.bf16 %v8359, %v8359
      %v8438 = vpack.c.bf16 %v8362, %v8362
      %v8439 = vpack.c.bf16 %v8365, %v8365
      %v8440 = vpack.c.bf16 %v8368, %v8368
      %v8441 = vpack.c.bf16 %v8371, %v8371
      %v8442 = vpack.c.bf16 %v8374, %v8374
      %v8443 = vpack.c.bf16 %v8377, %v8377
      %v8444 = vpack.c.bf16 %v8380, %v8380
      %8445 = vst.msk [vmem:[#allocation3] sm:$0xf] %vm957, 0
      %8446 = vst.msk [vmem:[#allocation3 + $0x4] sm:$0x1] %vm992, 0
      %s8447 = scalar_lea.vmem [#allocation3], 72
      %8448 = vst.msk [vmem:[%s8447] sm:$0xf] %vm957, 0
      %8449 = vst.msk [vmem:[%s8447 + $0x4] sm:$0x1] %vm992, 0
      %v8450 = vld [vmem:[#allocation3] sm:$0x1]
      %v8451 = vsel %vm1000, 0, %v8450
      %8452 = vst [vmem:[#allocation3] sm:$0x1] %v8451
      %v8453 = vld [vmem:[#allocation3 + $0x8] sm:$0x1]
      %v8454 = vsel %vm1000, 0, %v8453
      %8455 = vst [vmem:[#allocation3 + $0x8] sm:$0x1] %v8454
      %v8456 = vld [vmem:[#allocation3 + $0x10] sm:$0x1]
      %v8457 = vsel %vm1000, 0, %v8456
      %8458 = vst [vmem:[#allocation3 + $0x10] sm:$0x1] %v8457
      %v8459 = vld [vmem:[#allocation3 + $0x18] sm:$0x1]
      %v8460 = vsel %vm1000, 0, %v8459
      %8461 = vst [vmem:[#allocation3 + $0x18] sm:$0x1] %v8460
      %v8462 = vld [vmem:[#allocation3 + $0x20] sm:$0x1]
      %v8463 = vsel %vm1000, 0, %v8462
      %8464 = vst [vmem:[#allocation3 + $0x20] sm:$0x1] %v8463
      %v8465 = vld [vmem:[#allocation3 + $0x28] sm:$0x1]
      %v8466 = vsel %vm1000, 0, %v8465
      %8467 = vst [vmem:[#allocation3 + $0x28] sm:$0x1] %v8466
      %v8468 = vld [vmem:[#allocation3 + $0x30] sm:$0x1]
      %v8469 = vsel %vm1000, 0, %v8468
      %8470 = vst [vmem:[#allocation3 + $0x30] sm:$0x1] %v8469
      %v8471 = vld [vmem:[#allocation3 + $0x38] sm:$0x1]
      %v8472 = vsel %vm1000, 0, %v8471
      %8473 = vst [vmem:[#allocation3 + $0x38] sm:$0x1] %v8472
      %v8474 = vld [vmem:[#allocation3 + $0x40] sm:$0x1]
      %v8475 = vsel %vm1000, 0, %v8474
      %8476 = vst [vmem:[#allocation3 + $0x40] sm:$0x1] %v8475
      %v8477 = vld [vmem:[#allocation3 + $0x48] sm:$0x1]
      %v8478 = vsel %vm1000, 0, %v8477
      %8479 = vst [vmem:[#allocation3 + $0x48] sm:$0x1] %v8478
      %v8480 = vld [vmem:[#allocation3 + $0x4] sm:$0x1]
      %v8481 = vsel %vm1056, 0, %v8480
      %8482 = vst [vmem:[#allocation3 + $0x4] sm:$0x1] %v8481
      %v8483 = vld [vmem:[#allocation3 + $0xc] sm:$0x1]
      %v8484 = vsel %vm1056, 0, %v8483
      %8485 = vst [vmem:[#allocation3 + $0xc] sm:$0x1] %v8484
      %v8486 = vld [vmem:[#allocation3 + $0x14] sm:$0x1]
      %v8487 = vsel %vm1056, 0, %v8486
      %8488 = vst [vmem:[#allocation3 + $0x14] sm:$0x1] %v8487
      %v8489 = vld [vmem:[#allocation3 + $0x1c] sm:$0x1]
      %v8490 = vsel %vm1056, 0, %v8489
      %8491 = vst [vmem:[#allocation3 + $0x1c] sm:$0x1] %v8490
      %v8492 = vld [vmem:[#allocation3 + $0x24] sm:$0x1]
      %v8493 = vsel %vm1056, 0, %v8492
      %8494 = vst [vmem:[#allocation3 + $0x24] sm:$0x1] %v8493
      %v8495 = vld [vmem:[#allocation3 + $0x2c] sm:$0x1]
      %v8496 = vsel %vm1056, 0, %v8495
      %8497 = vst [vmem:[#allocation3 + $0x2c] sm:$0x1] %v8496
      %v8498 = vld [vmem:[#allocation3 + $0x34] sm:$0x1]
      %v8499 = vsel %vm1056, 0, %v8498
      %8500 = vst [vmem:[#allocation3 + $0x34] sm:$0x1] %v8499
      %v8501 = vld [vmem:[#allocation3 + $0x3c] sm:$0x1]
      %v8502 = vsel %vm1056, 0, %v8501
      %8503 = vst [vmem:[#allocation3 + $0x3c] sm:$0x1] %v8502
      %v8504 = vld [vmem:[#allocation3 + $0x44] sm:$0x1]
      %v8505 = vsel %vm1056, 0, %v8504
      %8506 = vst [vmem:[#allocation3 + $0x44] sm:$0x1] %v8505
      %v8507 = vld [vmem:[#allocation3 + $0x4c] sm:$0x1]
      %v8508 = vsel %vm1056, 0, %v8507
      %8509 = vst [vmem:[#allocation3 + $0x4c] sm:$0x1] %v8508
      %v8574 = vunpack.c.l.b16 %v8381
      %v8575 = vunpack.c.l.b16 %v8382
      %v8576 = vunpack.c.l.b16 %v8383
      %v8577 = vunpack.c.l.b16 %v8384
      %v8578 = vunpack.c.l.b16 %v8385
      %v8579 = vunpack.c.l.b16 %v8386
      %v8580 = vunpack.c.l.b16 %v8387
      %v8581 = vunpack.c.l.b16 %v8388
      %v8582 = vunpack.c.l.b16 %v8389
      %v8583 = vunpack.c.l.b16 %v8390
      %v8584 = vunpack.c.l.b16 %v8391
      %v8585 = vunpack.c.l.b16 %v8392
      %v8586 = vunpack.c.l.b16 %v8393
      %v8587 = vunpack.c.l.b16 %v8394
      %v8588 = vunpack.c.l.b16 %v8395
      %v8589 = vunpack.c.l.b16 %v8396
      %v8590 = vunpack.c.l.b16 %v8397
      %v8591 = vunpack.c.l.b16 %v8398
      %v8592 = vunpack.c.l.b16 %v8399
      %v8593 = vunpack.c.l.b16 %v8400
      %v8594 = vunpack.c.l.b16 %v8401
      %v8595 = vunpack.c.l.b16 %v8402
      %v8596 = vunpack.c.l.b16 %v8403
      %v8597 = vunpack.c.l.b16 %v8404
      %v8598 = vunpack.c.l.b16 %v8405
      %v8599 = vunpack.c.l.b16 %v8406
      %v8600 = vunpack.c.l.b16 %v8407
      %v8601 = vunpack.c.l.b16 %v8408
      %v8602 = vunpack.c.l.b16 %v8409
      %v8603 = vunpack.c.l.b16 %v8410
      %v8604 = vunpack.c.l.b16 %v8411
      %v8605 = vunpack.c.l.b16 %v8412
      %v8606 = vunpack.c.l.b16 %v8413
      %v8607 = vunpack.c.l.b16 %v8414
      %v8608 = vunpack.c.l.b16 %v8415
      %v8609 = vunpack.c.l.b16 %v8416
      %v8610 = vunpack.c.l.b16 %v8417
      %v8611 = vunpack.c.l.b16 %v8418
      %v8612 = vunpack.c.l.b16 %v8419
      %v8613 = vunpack.c.l.b16 %v8420
      %v8614 = vunpack.c.l.b16 %v8421
      %v8615 = vunpack.c.l.b16 %v8422
      %v8616 = vunpack.c.l.b16 %v8423
      %v8617 = vunpack.c.l.b16 %v8424
      %v8618 = vunpack.c.l.b16 %v8425
      %v8619 = vunpack.c.l.b16 %v8426
      %v8620 = vunpack.c.l.b16 %v8427
      %v8621 = vunpack.c.l.b16 %v8428
      %v8622 = vunpack.c.l.b16 %v8429
      %v8623 = vunpack.c.l.b16 %v8430
      %v8624 = vunpack.c.l.b16 %v8431
      %v8625 = vunpack.c.l.b16 %v8432
      %v8626 = vunpack.c.l.b16 %v8433
      %v8627 = vunpack.c.l.b16 %v8434
      %v8628 = vunpack.c.l.b16 %v8435
      %v8629 = vunpack.c.l.b16 %v8436
      %v8630 = vunpack.c.l.b16 %v8437
      %v8631 = vunpack.c.l.b16 %v8438
      %v8632 = vunpack.c.l.b16 %v8439
      %v8633 = vunpack.c.l.b16 %v8440
      %v8634 = vunpack.c.l.b16 %v8441
      %v8635 = vunpack.c.l.b16 %v8442
      %v8636 = vunpack.c.l.b16 %v8443
      %v8637 = vunpack.c.l.b16 %v8444
      %v8638 = vpack.c.b16 %v8574, %v8574
      %v8639 = vpack.c.b16 %v8575, %v8575
      %v8640 = vpack.c.b16 %v8576, %v8576
      %v8641 = vpack.c.b16 %v8577, %v8577
      %v8642 = vpack.c.b16 %v8578, %v8578
      %v8643 = vpack.c.b16 %v8579, %v8579
      %v8644 = vpack.c.b16 %v8580, %v8580
      %v8645 = vpack.c.b16 %v8581, %v8581
      %v8646 = vpack.c.b16 %v8582, %v8582
      %v8647 = vpack.c.b16 %v8583, %v8583
      %v8648 = vpack.c.b16 %v8584, %v8584
      %v8649 = vpack.c.b16 %v8585, %v8585
      %v8650 = vpack.c.b16 %v8586, %v8586
      %v8651 = vpack.c.b16 %v8587, %v8587
      %v8652 = vpack.c.b16 %v8588, %v8588
      %v8653 = vpack.c.b16 %v8589, %v8589
      %v8654 = vpack.c.b16 %v8590, %v8590
      %v8655 = vpack.c.b16 %v8591, %v8591
      %v8656 = vpack.c.b16 %v8592, %v8592
      %v8657 = vpack.c.b16 %v8593, %v8593
      %v8658 = vpack.c.b16 %v8594, %v8594
      %v8659 = vpack.c.b16 %v8595, %v8595
      %v8660 = vpack.c.b16 %v8596, %v8596
      %v8661 = vpack.c.b16 %v8597, %v8597
      %v8662 = vpack.c.b16 %v8598, %v8598
      %v8663 = vpack.c.b16 %v8599, %v8599
      %v8664 = vpack.c.b16 %v8600, %v8600
      %v8665 = vpack.c.b16 %v8601, %v8601
      %v8666 = vpack.c.b16 %v8602, %v8602
      %v8667 = vpack.c.b16 %v8603, %v8603
      %v8668 = vpack.c.b16 %v8604, %v8604
      %v8669 = vpack.c.b16 %v8605, %v8605
      %v8670 = vpack.c.b16 %v8606, %v8606
      %v8671 = vpack.c.b16 %v8607, %v8607
      %v8672 = vpack.c.b16 %v8608, %v8608
      %v8673 = vpack.c.b16 %v8609, %v8609
      %v8674 = vpack.c.b16 %v8610, %v8610
      %v8675 = vpack.c.b16 %v8611, %v8611
      %v8676 = vpack.c.b16 %v8612, %v8612
      %v8677 = vpack.c.b16 %v8613, %v8613
      %v8678 = vpack.c.b16 %v8614, %v8614
      %v8679 = vpack.c.b16 %v8615, %v8615
      %v8680 = vpack.c.b16 %v8616, %v8616
      %v8681 = vpack.c.b16 %v8617, %v8617
      %v8682 = vpack.c.b16 %v8618, %v8618
      %v8683 = vpack.c.b16 %v8619, %v8619
      %v8684 = vpack.c.b16 %v8620, %v8620
      %v8685 = vpack.c.b16 %v8621, %v8621
      %v8686 = vpack.c.b16 %v8622, %v8622
      %v8687 = vpack.c.b16 %v8623, %v8623
      %v8688 = vpack.c.b16 %v8624, %v8624
      %v8689 = vpack.c.b16 %v8625, %v8625
      %v8690 = vpack.c.b16 %v8626, %v8626
      %v8691 = vpack.c.b16 %v8627, %v8627
      %v8692 = vpack.c.b16 %v8628, %v8628
      %v8693 = vpack.c.b16 %v8629, %v8629
      %v8694 = vpack.c.b16 %v8630, %v8630
      %v8695 = vpack.c.b16 %v8631, %v8631
      %v8696 = vpack.c.b16 %v8632, %v8632
      %v8697 = vpack.c.b16 %v8633, %v8633
      %v8698 = vpack.c.b16 %v8634, %v8634
      %v8699 = vpack.c.b16 %v8635, %v8635
      %v8700 = vpack.c.b16 %v8636, %v8636
      %v8701 = vpack.c.b16 %v8637, %v8637
      %v8702 = vunpack.c.l.b16 %v8638
      %v8703 = vunpack.c.l.b16 %v8639
      %v8704 = vunpack.c.l.b16 %v8640
      %v8705 = vunpack.c.l.b16 %v8641
      %v8706 = vunpack.c.l.b16 %v8642
      %v8707 = vunpack.c.l.b16 %v8643
      %v8708 = vunpack.c.l.b16 %v8644
      %v8709 = vunpack.c.l.b16 %v8645
      %v8710 = vunpack.c.l.b16 %v8646
      %v8711 = vunpack.c.l.b16 %v8647
      %v8712 = vunpack.c.l.b16 %v8648
      %v8713 = vunpack.c.l.b16 %v8649
      %v8714 = vunpack.c.l.b16 %v8650
      %v8715 = vunpack.c.l.b16 %v8651
      %v8716 = vunpack.c.l.b16 %v8652
      %v8717 = vunpack.c.l.b16 %v8653
      %v8718 = vunpack.c.l.b16 %v8654
      %v8719 = vunpack.c.l.b16 %v8655
      %v8720 = vunpack.c.l.b16 %v8656
      %v8721 = vunpack.c.l.b16 %v8657
      %v8722 = vunpack.c.l.b16 %v8658
      %v8723 = vunpack.c.l.b16 %v8659
      %v8724 = vunpack.c.l.b16 %v8660
      %v8725 = vunpack.c.l.b16 %v8661
      %v8726 = vunpack.c.l.b16 %v8662
      %v8727 = vunpack.c.l.b16 %v8663
      %v8728 = vunpack.c.l.b16 %v8664
      %v8729 = vunpack.c.l.b16 %v8665
      %v8730 = vunpack.c.l.b16 %v8666
      %v8731 = vunpack.c.l.b16 %v8667
      %v8732 = vunpack.c.l.b16 %v8668
      %v8733 = vunpack.c.l.b16 %v8669
      %v8734 = vunpack.c.l.b16 %v8670
      %v8735 = vunpack.c.l.b16 %v8671
      %v8736 = vunpack.c.l.b16 %v8672
      %v8737 = vunpack.c.l.b16 %v8673
      %v8738 = vunpack.c.l.b16 %v8674
      %v8739 = vunpack.c.l.b16 %v8675
      %v8740 = vunpack.c.l.b16 %v8676
      %v8741 = vunpack.c.l.b16 %v8677
      %v8742 = vunpack.c.l.b16 %v8678
      %v8743 = vunpack.c.l.b16 %v8679
      %v8744 = vunpack.c.l.b16 %v8680
      %v8745 = vunpack.c.l.b16 %v8681
      %v8746 = vunpack.c.l.b16 %v8682
      %v8747 = vunpack.c.l.b16 %v8683
      %v8748 = vunpack.c.l.b16 %v8684
      %v8749 = vunpack.c.l.b16 %v8685
      %v8750 = vunpack.c.l.b16 %v8686
      %v8751 = vunpack.c.l.b16 %v8687
      %v8752 = vunpack.c.l.b16 %v8688
      %v8753 = vunpack.c.l.b16 %v8689
      %v8754 = vunpack.c.l.b16 %v8690
      %v8755 = vunpack.c.l.b16 %v8691
      %v8756 = vunpack.c.l.b16 %v8692
      %v8757 = vunpack.c.l.b16 %v8693
      %v8758 = vunpack.c.l.b16 %v8694
      %v8759 = vunpack.c.l.b16 %v8695
      %v8760 = vunpack.c.l.b16 %v8696
      %v8761 = vunpack.c.l.b16 %v8697
      %v8762 = vunpack.c.l.b16 %v8698
      %v8763 = vunpack.c.l.b16 %v8699
      %v8764 = vunpack.c.l.b16 %v8700
      %v8765 = vunpack.c.l.b16 %v8701
      %vm8766 = vcmask 1042434
      %v8767 = vsel %vm8766, %v8703, %v8702
      %vm8768 = vcmask 1043459
      %v8769 = vsel %vm8768, %v8704, %v8767
      %vm8770 = vcmask 1044484
      %v8771 = vsel %vm8770, %v8705, %v8769
      %vm8772 = vcmask 1045509
      %v8773 = vsel %vm8772, %v8706, %v8771
      %vm8774 = vcmask 1046534
      %v8775 = vsel %vm8774, %v8707, %v8773
      %vm8776 = vcmask 1047559
      %v8777 = vsel %vm8776, %v8708, %v8775
      %v8778 = vsel %vm8766, %v8711, %v8710
      %v8779 = vsel %vm8768, %v8712, %v8778
      %v8780 = vsel %vm8770, %v8713, %v8779
      %v8781 = vsel %vm8772, %v8714, %v8780
      %v8782 = vsel %vm8774, %v8715, %v8781
      %v8783 = vsel %vm8776, %v8716, %v8782
      %v8784 = vsel %vm8766, %v8719, %v8718
      %v8785 = vsel %vm8768, %v8720, %v8784
      %v8786 = vsel %vm8770, %v8721, %v8785
      %v8787 = vsel %vm8772, %v8722, %v8786
      %v8788 = vsel %vm8774, %v8723, %v8787
      %v8789 = vsel %vm8776, %v8724, %v8788
      %v8790 = vsel %vm8766, %v8727, %v8726
      %v8791 = vsel %vm8768, %v8728, %v8790
      %v8792 = vsel %vm8770, %v8729, %v8791
      %v8793 = vsel %vm8772, %v8730, %v8792
      %v8794 = vsel %vm8774, %v8731, %v8793
      %v8795 = vsel %vm8776, %v8732, %v8794
      %v8796 = vsel %vm8766, %v8735, %v8734
      %v8797 = vsel %vm8768, %v8736, %v8796
      %v8798 = vsel %vm8770, %v8737, %v8797
      %v8799 = vsel %vm8772, %v8738, %v8798
      %v8800 = vsel %vm8774, %v8739, %v8799
      %v8801 = vsel %vm8776, %v8740, %v8800
      %v8802 = vsel %vm8766, %v8743, %v8742
      %v8803 = vsel %vm8768, %v8744, %v8802
      %v8804 = vsel %vm8770, %v8745, %v8803
      %v8805 = vsel %vm8772, %v8746, %v8804
      %v8806 = vsel %vm8774, %v8747, %v8805
      %v8807 = vsel %vm8776, %v8748, %v8806
      %v8808 = vsel %vm8766, %v8751, %v8750
      %v8809 = vsel %vm8768, %v8752, %v8808
      %v8810 = vsel %vm8770, %v8753, %v8809
      %v8811 = vsel %vm8772, %v8754, %v8810
      %v8812 = vsel %vm8774, %v8755, %v8811
      %v8813 = vsel %vm8776, %v8756, %v8812
      %v8814 = vsel %vm8766, %v8759, %v8758
      %v8815 = vsel %vm8768, %v8760, %v8814
      %v8816 = vsel %vm8770, %v8761, %v8815
      %v8817 = vsel %vm8772, %v8762, %v8816
      %v8818 = vsel %vm8774, %v8763, %v8817
      %v8819 = vsel %vm8776, %v8764, %v8818
      %v8820 = vpack.c.b16 %v8777, %v8777
      %v8821 = vpack.c.b16 %v8709, %v8709
      %v8822 = vpack.c.b16 %v8783, %v8783
      %v8823 = vpack.c.b16 %v8717, %v8717
      %v8824 = vpack.c.b16 %v8789, %v8789
      %v8825 = vpack.c.b16 %v8725, %v8725
      %v8826 = vpack.c.b16 %v8795, %v8795
      %v8827 = vpack.c.b16 %v8733, %v8733
      %v8828 = vpack.c.b16 %v8801, %v8801
      %v8829 = vpack.c.b16 %v8741, %v8741
      %v8830 = vpack.c.b16 %v8807, %v8807
      %v8831 = vpack.c.b16 %v8749, %v8749
      %v8832 = vpack.c.b16 %v8813, %v8813
      %v8833 = vpack.c.b16 %v8757, %v8757
      %v8834 = vpack.c.b16 %v8819, %v8819
      %v8835 = vpack.c.b16 %v8765, %v8765
      %s8852 = scalar_lea.vmem [#allocation3], 8
      %v8853 = vld [vmem:[%s8852] sm:$0xf]
      %v8854 = vsel %vm1435, %v8820, %v8853
      %8855 = vst [vmem:[%s8852] sm:$0xf] %v8854
      %v8856 = vld [vmem:[%s8852 + $0x4] sm:$0x1]
      %v8857 = vsel %vm1000, %v8821, %v8856
      %8858 = vst [vmem:[%s8852 + $0x4] sm:$0x1] %v8857
      %v8859 = vld [vmem:[%s8852 + $0x8] sm:$0xf]
      %v8860 = vsel %vm1435, %v8822, %v8859
      %8861 = vst [vmem:[%s8852 + $0x8] sm:$0xf] %v8860
      %v8862 = vld [vmem:[%s8852 + $0xc] sm:$0x1]
      %v8863 = vsel %vm1000, %v8823, %v8862
      %8864 = vst [vmem:[%s8852 + $0xc] sm:$0x1] %v8863
      %v8865 = vld [vmem:[%s8852 + $0x10] sm:$0xf]
      %v8866 = vsel %vm1435, %v8824, %v8865
      %8867 = vst [vmem:[%s8852 + $0x10] sm:$0xf] %v8866
      %v8868 = vld [vmem:[%s8852 + $0x14] sm:$0x1]
      %v8869 = vsel %vm1000, %v8825, %v8868
      %8870 = vst [vmem:[%s8852 + $0x14] sm:$0x1] %v8869
      %v8871 = vld [vmem:[%s8852 + $0x18] sm:$0xf]
      %v8872 = vsel %vm1435, %v8826, %v8871
      %8873 = vst [vmem:[%s8852 + $0x18] sm:$0xf] %v8872
      %v8874 = vld [vmem:[%s8852 + $0x1c] sm:$0x1]
      %v8875 = vsel %vm1000, %v8827, %v8874
      %8876 = vst [vmem:[%s8852 + $0x1c] sm:$0x1] %v8875
      %v8877 = vld [vmem:[%s8852 + $0x20] sm:$0xf]
      %v8878 = vsel %vm1435, %v8828, %v8877
      %8879 = vst [vmem:[%s8852 + $0x20] sm:$0xf] %v8878
      %v8880 = vld [vmem:[%s8852 + $0x24] sm:$0x1]
      %v8881 = vsel %vm1000, %v8829, %v8880
      %8882 = vst [vmem:[%s8852 + $0x24] sm:$0x1] %v8881
      %v8883 = vld [vmem:[%s8852 + $0x28] sm:$0xf]
      %v8884 = vsel %vm1435, %v8830, %v8883
      %8885 = vst [vmem:[%s8852 + $0x28] sm:$0xf] %v8884
      %v8886 = vld [vmem:[%s8852 + $0x2c] sm:$0x1]
      %v8887 = vsel %vm1000, %v8831, %v8886
      %8888 = vst [vmem:[%s8852 + $0x2c] sm:$0x1] %v8887
      %v8889 = vld [vmem:[%s8852 + $0x30] sm:$0xf]
      %v8890 = vsel %vm1435, %v8832, %v8889
      %8891 = vst [vmem:[%s8852 + $0x30] sm:$0xf] %v8890
      %v8892 = vld [vmem:[%s8852 + $0x34] sm:$0x1]
      %v8893 = vsel %vm1000, %v8833, %v8892
      %8894 = vst [vmem:[%s8852 + $0x34] sm:$0x1] %v8893
      %v8895 = vld [vmem:[%s8852 + $0x38] sm:$0xf]
      %v8896 = vsel %vm1435, %v8834, %v8895
      %8897 = vst [vmem:[%s8852 + $0x38] sm:$0xf] %v8896
      %v8898 = vld [vmem:[%s8852 + $0x3c] sm:$0x1]
      %v8899 = vsel %vm1000, %v8835, %v8898
      %8900 = vst [vmem:[%s8852 + $0x3c] sm:$0x1] %v8899
      %v8901 = vld [vmem:[#allocation3] sm:$0xf]
      %v8902 = vld [vmem:[#allocation3 + $0x8] sm:$0xf]
      %v8903 = vld [vmem:[#allocation3 + $0x10] sm:$0xf]
      %v8904 = vld [vmem:[#allocation3 + $0x18] sm:$0xf]
      %v8905 = vld [vmem:[#allocation3 + $0x20] sm:$0xf]
      %v8906 = vld [vmem:[#allocation3 + $0x28] sm:$0xf]
      %v8907 = vld [vmem:[#allocation3 + $0x30] sm:$0xf]
      %v8908 = vld [vmem:[#allocation3 + $0x38] sm:$0xf]
      %v8909 = vld [vmem:[%s5] sm:$0xf]
      %v8910 = vld [vmem:[%s5 + $0x4] sm:$0xf]
      %v8911 = vld [vmem:[%s5 + $0x8] sm:$0xf]
      %v8912 = vld [vmem:[%s5 + $0xc] sm:$0xf]
      %v8913 = vld [vmem:[%s5 + $0x10] sm:$0xf]
      %v8914 = vld [vmem:[%s5 + $0x14] sm:$0xf]
      %v8915 = vld [vmem:[%s5 + $0x18] sm:$0xf]
      %v8916 = vld [vmem:[%s5 + $0x1c] sm:$0xf]
      %v8917 = vld [vmem:[#allocation3 + $0x4] sm:$0x1]
      %v8918 = vld [vmem:[#allocation3 + $0xc] sm:$0x1]
      %v8919 = vld [vmem:[#allocation3 + $0x14] sm:$0x1]
      %v8920 = vld [vmem:[#allocation3 + $0x1c] sm:$0x1]
      %v8921 = vld [vmem:[#allocation3 + $0x24] sm:$0x1]
      %v8922 = vld [vmem:[#allocation3 + $0x2c] sm:$0x1]
      %v8923 = vld [vmem:[#allocation3 + $0x34] sm:$0x1]
      %v8924 = vld [vmem:[#allocation3 + $0x3c] sm:$0x1]
      %v8926 = vshrl.u32 %v8901, 16
      %v8928 = vrot.slane %v8926, 4
      %v8929 = vshll.u32 %v8901, 16
      %v8931 = vrot.slane %v8929, 5
      %v8932 = vor.u32 %v8928, %v8931
      %v8933 = vrot.slane %v8932, 4
      %v8935 = vshll.u32 %v8917, 16
      %v8937 = vrot.slane %v8935, 5
      %v8938 = vsel %vm1606, %v8933, %v8937
      %v8940 = vshrl.u32 %v8902, 16
      %v8942 = vrot.slane %v8940, 4
      %v8943 = vshll.u32 %v8902, 16
      %v8945 = vrot.slane %v8943, 5
      %v8946 = vor.u32 %v8942, %v8945
      %v8947 = vrot.slane %v8946, 4
      %v8949 = vshll.u32 %v8918, 16
      %v8951 = vrot.slane %v8949, 5
      %v8952 = vsel %vm1606, %v8947, %v8951
      %v8954 = vshrl.u32 %v8903, 16
      %v8956 = vrot.slane %v8954, 4
      %v8957 = vshll.u32 %v8903, 16
      %v8959 = vrot.slane %v8957, 5
      %v8960 = vor.u32 %v8956, %v8959
      %v8961 = vrot.slane %v8960, 4
      %v8963 = vshll.u32 %v8919, 16
      %v8965 = vrot.slane %v8963, 5
      %v8966 = vsel %vm1606, %v8961, %v8965
      %v8968 = vshrl.u32 %v8904, 16
      %v8970 = vrot.slane %v8968, 4
      %v8971 = vshll.u32 %v8904, 16
      %v8973 = vrot.slane %v8971, 5
      %v8974 = vor.u32 %v8970, %v8973
      %v8975 = vrot.slane %v8974, 4
      %v8977 = vshll.u32 %v8920, 16
      %v8979 = vrot.slane %v8977, 5
      %v8980 = vsel %vm1606, %v8975, %v8979
      %v8982 = vshrl.u32 %v8905, 16
      %v8984 = vrot.slane %v8982, 4
      %v8985 = vshll.u32 %v8905, 16
      %v8987 = vrot.slane %v8985, 5
      %v8988 = vor.u32 %v8984, %v8987
      %v8989 = vrot.slane %v8988, 4
      %v8991 = vshll.u32 %v8921, 16
      %v8993 = vrot.slane %v8991, 5
      %v8994 = vsel %vm1606, %v8989, %v8993
      %v8996 = vshrl.u32 %v8906, 16
      %v8998 = vrot.slane %v8996, 4
      %v8999 = vshll.u32 %v8906, 16
      %v9001 = vrot.slane %v8999, 5
      %v9002 = vor.u32 %v8998, %v9001
      %v9003 = vrot.slane %v9002, 4
      %v9005 = vshll.u32 %v8922, 16
      %v9007 = vrot.slane %v9005, 5
      %v9008 = vsel %vm1606, %v9003, %v9007
      %v9010 = vshrl.u32 %v8907, 16
      %v9012 = vrot.slane %v9010, 4
      %v9013 = vshll.u32 %v8907, 16
      %v9015 = vrot.slane %v9013, 5
      %v9016 = vor.u32 %v9012, %v9015
      %v9017 = vrot.slane %v9016, 4
      %v9019 = vshll.u32 %v8923, 16
      %v9021 = vrot.slane %v9019, 5
      %v9022 = vsel %vm1606, %v9017, %v9021
      %v9024 = vshrl.u32 %v8908, 16
      %v9026 = vrot.slane %v9024, 4
      %v9027 = vshll.u32 %v8908, 16
      %v9029 = vrot.slane %v9027, 5
      %v9030 = vor.u32 %v9026, %v9029
      %v9031 = vrot.slane %v9030, 4
      %v9033 = vshll.u32 %v8924, 16
      %v9035 = vrot.slane %v9033, 5
      %v9036 = vsel %vm1606, %v9031, %v9035
      %s9037 = scalar_lea.vmem %s5, 32
      %v9038 = vld [vmem:[%s9037] sm:$0xf]
      %v9039 = vld [vmem:[%s9037 + $0x4] sm:$0xf]
      %v9040 = vld [vmem:[%s9037 + $0x8] sm:$0xf]
      %v9041 = vld [vmem:[%s9037 + $0xc] sm:$0xf]
      %v9042 = vld [vmem:[%s9037 + $0x10] sm:$0xf]
      %v9043 = vld [vmem:[%s9037 + $0x14] sm:$0xf]
      %v9044 = vld [vmem:[%s9037 + $0x18] sm:$0xf]
      %v9045 = vld [vmem:[%s9037 + $0x1c] sm:$0xf]
      %v9046 = vunpack.c.l.b16 %v8938
      %v9047 = vunpack.c.l.b16 %v8952
      %v9048 = vunpack.c.l.b16 %v8966
      %v9049 = vunpack.c.l.b16 %v8980
      %v9050 = vunpack.c.l.b16 %v8994
      %v9051 = vunpack.c.l.b16 %v9008
      %v9052 = vunpack.c.l.b16 %v9022
      %v9053 = vunpack.c.l.b16 %v9036
      %v9054 = vpack.c.b16 %v9047, %v9046
      %v9055 = vpack.c.b16 %v9049, %v9048
      %v9056 = vpack.c.b16 %v9051, %v9050
      %v9057 = vpack.c.b16 %v9053, %v9052
      %v9066 = vunpack.c.l.b16 %v9038
      %v9067 = vunpack.c.l.b16 %v9039
      %v9068 = vunpack.c.l.b16 %v9040
      %v9069 = vunpack.c.l.b16 %v9041
      %v9070 = vunpack.c.l.b16 %v9042
      %v9071 = vunpack.c.l.b16 %v9043
      %v9072 = vunpack.c.l.b16 %v9044
      %v9073 = vunpack.c.l.b16 %v9045
      %v9074 = vpack.c.b16 %v9067, %v9066
      %v9075 = vpack.c.b16 %v9069, %v9068
      %v9076 = vpack.c.b16 %v9071, %v9070
      %v9077 = vpack.c.b16 %v9073, %v9072
      %v9083 = vsel %vm2072, %v9054, 0
      %v9086 = vsel %vm2072, %v9055, 0
      %v9089 = vsel %vm2072, %v9056, 0
      %v9092 = vsel %vm2072, %v9057, 0
      %9094 = vmatprep.subr.bf16.mxu0 0
      %9095 = vmatpush1.bf16.msra.mxu0 %v9074
      %9096 = vmatprep.subr.bf16.mxu0 0
      %9097 = vmatpush1.bf16.msra.mxu0 %v9075
      %9098 = vmatprep.subr.bf16.mxu0 0
      %9099 = vmatpush1.bf16.msra.mxu0 %v9076
      %9100 = vmatprep.subr.bf16.mxu0 0
      %9101 = vmatpush1.bf16.msra.mxu0 %v9077
      %9102 = vmatprep.subr.bf16.mxu0 0
      %9103 = vmatpush1.bf16.msra.mxu0 0
      %9104 = vmatprep.subr.bf16.mxu0 0
      %9105 = vmatpush1.bf16.msra.mxu0 0
      %9106 = vmatprep.subr.bf16.mxu0 0
      %9107 = vmatpush1.bf16.msra.mxu0 0
      %9108 = vmatprep.subr.bf16.mxu0 0
      %9109 = vmatpush1.bf16.msra.mxu0 0
      %9110 = vmatprep.subr.bf16.mxu0 0
      %9111 = vmatpush1.bf16.msra.mxu0 0
      %9112 = vmatprep.subr.bf16.mxu0 0
      %9113 = vmatpush1.bf16.msra.mxu0 0
      %9114 = vmatprep.subr.bf16.mxu0 0
      %9115 = vmatpush1.bf16.msra.mxu0 0
      %9116 = vmatprep.subr.bf16.mxu0 0
      %9117 = vmatpush1.bf16.msra.mxu0 0
      %9118 = vmatprep.subr.bf16.mxu0 0
      %9119 = vmatpush1.bf16.msra.mxu0 0
      %9120 = vmatprep.subr.bf16.mxu0 0
      %9121 = vmatpush1.bf16.msra.mxu0 0
      %9122 = vmatprep.subr.bf16.mxu0 0
      %9123 = vmatpush1.bf16.msra.mxu0 0
      %9124 = vmatprep.subr.bf16.mxu0 0
      %9125 = vmatpush1.bf16.msra.mxu0 0
      %9126 = vmatprep.mubr.bf16.mxu0 0
      %9127 = vmatmul.mubr.bf16.gmra.mrb[0].mxu0 %v9083
      %v9128 = vpop.f32.mrb[0].mxu0
      %v9129 = vadd.f32 0.0, %v9128
      %v9130 = vpop.f32.mrb[0].mxu0
      %v9131 = vpop.f32.mrb[0].mxu0
      %v9132 = vadd.f32 0.0, %v9131
      %v9133 = vpop.f32.mrb[0].mxu0
      %9134 = vmatprep.mubr.bf16.mxu0 0
      %9135 = vmatmul.mubr.bf16.gmra.mrb[0].mxu0 %v9086
      %v9136 = vpop.f32.mrb[0].mxu0
      %v9137 = vadd.f32 0.0, %v9136
      %v9138 = vpop.f32.mrb[0].mxu0
      %v9139 = vpop.f32.mrb[0].mxu0
      %v9140 = vadd.f32 0.0, %v9139
      %v9141 = vpop.f32.mrb[0].mxu0
      %9142 = vmatprep.mubr.bf16.mxu0 0
      %9143 = vmatmul.mubr.bf16.gmra.mrb[0].mxu0 %v9089
      %v9144 = vpop.f32.mrb[0].mxu0
      %v9145 = vadd.f32 0.0, %v9144
      %v9146 = vpop.f32.mrb[0].mxu0
      %v9147 = vpop.f32.mrb[0].mxu0
      %v9148 = vadd.f32 0.0, %v9147
      %v9149 = vpop.f32.mrb[0].mxu0
      %9150 = vmatprep.mubr.bf16.mxu0 0
      %9151 = vmatmul.mubr.bf16.gmra.mrb[0].mxu0 %v9092
      %v9152 = vpop.f32.mrb[0].mxu0
      %v9153 = vadd.f32 0.0, %v9152
      %v9154 = vpop.f32.mrb[0].mxu0
      %v9155 = vpop.f32.mrb[0].mxu0
      %v9156 = vadd.f32 0.0, %v9155
      %v9157 = vpop.f32.mrb[0].mxu0
      %9158 = vdwg.mxu0
      %v9167 = vunpack.c.l.b16 %v8901
      %v9168 = vunpack.c.l.b16 %v8902
      %v9169 = vunpack.c.l.b16 %v8903
      %v9170 = vunpack.c.l.b16 %v8904
      %v9171 = vunpack.c.l.b16 %v8905
      %v9172 = vunpack.c.l.b16 %v8906
      %v9173 = vunpack.c.l.b16 %v8907
      %v9174 = vunpack.c.l.b16 %v8908
      %v9175 = vpack.c.b16 %v9168, %v9167
      %v9176 = vpack.c.b16 %v9170, %v9169
      %v9177 = vpack.c.b16 %v9172, %v9171
      %v9178 = vpack.c.b16 %v9174, %v9173
      %v9187 = vunpack.c.l.b16 %v8909
      %v9188 = vunpack.c.l.b16 %v8910
      %v9189 = vunpack.c.l.b16 %v8911
      %v9190 = vunpack.c.l.b16 %v8912
      %v9191 = vunpack.c.l.b16 %v8913
      %v9192 = vunpack.c.l.b16 %v8914
      %v9193 = vunpack.c.l.b16 %v8915
      %v9194 = vunpack.c.l.b16 %v8916
      %v9195 = vpack.c.b16 %v9188, %v9187
      %v9196 = vpack.c.b16 %v9190, %v9189
      %v9197 = vpack.c.b16 %v9192, %v9191
      %v9198 = vpack.c.b16 %v9194, %v9193
      %v9204 = vsel %vm2072, %v9175, 0
      %v9207 = vsel %vm2072, %v9176, 0
      %v9210 = vsel %vm2072, %v9177, 0
      %v9213 = vsel %vm2072, %v9178, 0
      %9215 = vmatprep.subr.bf16.mxu0 0
      %9216 = vmatpush1.bf16.msra.mxu0 %v9195
      %9217 = vmatprep.subr.bf16.mxu0 0
      %9218 = vmatpush1.bf16.msra.mxu0 %v9196
      %9219 = vmatprep.subr.bf16.mxu0 0
      %9220 = vmatpush1.bf16.msra.mxu0 %v9197
      %9221 = vmatprep.subr.bf16.mxu0 0
      %9222 = vmatpush1.bf16.msra.mxu0 %v9198
      %9223 = vmatprep.subr.bf16.mxu0 0
      %9224 = vmatpush1.bf16.msra.mxu0 0
      %9225 = vmatprep.subr.bf16.mxu0 0
      %9226 = vmatpush1.bf16.msra.mxu0 0
      %9227 = vmatprep.subr.bf16.mxu0 0
      %9228 = vmatpush1.bf16.msra.mxu0 0
      %9229 = vmatprep.subr.bf16.mxu0 0
      %9230 = vmatpush1.bf16.msra.mxu0 0
      %9231 = vmatprep.subr.bf16.mxu0 0
      %9232 = vmatpush1.bf16.msra.mxu0 0
      %9233 = vmatprep.subr.bf16.mxu0 0
      %9234 = vmatpush1.bf16.msra.mxu0 0
      %9235 = vmatprep.subr.bf16.mxu0 0
      %9236 = vmatpush1.bf16.msra.mxu0 0
      %9237 = vmatprep.subr.bf16.mxu0 0
      %9238 = vmatpush1.bf16.msra.mxu0 0
      %9239 = vmatprep.subr.bf16.mxu0 0
      %9240 = vmatpush1.bf16.msra.mxu0 0
      %9241 = vmatprep.subr.bf16.mxu0 0
      %9242 = vmatpush1.bf16.msra.mxu0 0
      %9243 = vmatprep.subr.bf16.mxu0 0
      %9244 = vmatpush1.bf16.msra.mxu0 0
      %9245 = vmatprep.subr.bf16.mxu0 0
      %9246 = vmatpush1.bf16.msra.mxu0 0
      %9247 = vmatprep.mubr.bf16.mxu0 0
      %9248 = vmatmul.mubr.bf16.gmra.mrb[0].mxu0 %v9204
      %v9249 = vpop.f32.mrb[0].mxu0
      %v9250 = vadd.f32 %v9129, %v9249
      %v9251 = vpop.f32.mrb[0].mxu0
      %v9252 = vpop.f32.mrb[0].mxu0
      %v9253 = vadd.f32 %v9132, %v9252
      %v9254 = vpop.f32.mrb[0].mxu0
      %9255 = vmatprep.mubr.bf16.mxu0 0
      %9256 = vmatmul.mubr.bf16.gmra.mrb[0].mxu0 %v9207
      %v9257 = vpop.f32.mrb[0].mxu0
      %v9258 = vadd.f32 %v9137, %v9257
      %v9259 = vpop.f32.mrb[0].mxu0
      %v9260 = vpop.f32.mrb[0].mxu0
      %v9261 = vadd.f32 %v9140, %v9260
      %v9262 = vpop.f32.mrb[0].mxu0
      %9263 = vmatprep.mubr.bf16.mxu0 0
      %9264 = vmatmul.mubr.bf16.gmra.mrb[0].mxu0 %v9210
      %v9265 = vpop.f32.mrb[0].mxu0
      %v9266 = vadd.f32 %v9145, %v9265
      %v9267 = vpop.f32.mrb[0].mxu0
      %v9268 = vpop.f32.mrb[0].mxu0
      %v9269 = vadd.f32 %v9148, %v9268
      %v9270 = vpop.f32.mrb[0].mxu0
      %9271 = vmatprep.mubr.bf16.mxu0 0
      %9272 = vmatmul.mubr.bf16.gmra.mrb[0].mxu0 %v9213
      %v9273 = vpop.f32.mrb[0].mxu0
      %v9274 = vadd.f32 %v9153, %v9273
      %v9275 = vpop.f32.mrb[0].mxu0
      %v9276 = vpop.f32.mrb[0].mxu0
      %v9277 = vadd.f32 %v9156, %v9276
      %v9278 = vpop.f32.mrb[0].mxu0
      %9279 = vdwg.mxu0
      %v9280 = vld [vmem:[#allocation3] sm:$0xe]
      %v9281 = vld [vmem:[#allocation3 + $0x8] sm:$0xe]
      %v9282 = vld [vmem:[#allocation3 + $0x10] sm:$0xe]
      %v9283 = vld [vmem:[#allocation3 + $0x18] sm:$0xe]
      %v9284 = vld [vmem:[#allocation3 + $0x20] sm:$0xe]
      %v9285 = vld [vmem:[#allocation3 + $0x28] sm:$0xe]
      %v9286 = vld [vmem:[#allocation3 + $0x30] sm:$0xe]
      %v9287 = vld [vmem:[#allocation3 + $0x38] sm:$0xe]
      %v9304 = vrot.slane %v9280, 5
      %v9305 = vrot.slane %v9304, 4
      %v9306 = vrot.slane %v8917, 5
      %v9307 = vsel %vm2645, %v9305, %v9306
      %v9308 = vrot.slane %v9281, 5
      %v9309 = vrot.slane %v9308, 4
      %v9310 = vrot.slane %v8918, 5
      %v9311 = vsel %vm2645, %v9309, %v9310
      %v9312 = vrot.slane %v9282, 5
      %v9313 = vrot.slane %v9312, 4
      %v9314 = vrot.slane %v8919, 5
      %v9315 = vsel %vm2645, %v9313, %v9314
      %v9316 = vrot.slane %v9283, 5
      %v9317 = vrot.slane %v9316, 4
      %v9318 = vrot.slane %v8920, 5
      %v9319 = vsel %vm2645, %v9317, %v9318
      %v9320 = vrot.slane %v9284, 5
      %v9321 = vrot.slane %v9320, 4
      %v9322 = vrot.slane %v8921, 5
      %v9323 = vsel %vm2645, %v9321, %v9322
      %v9324 = vrot.slane %v9285, 5
      %v9325 = vrot.slane %v9324, 4
      %v9326 = vrot.slane %v8922, 5
      %v9327 = vsel %vm2645, %v9325, %v9326
      %v9328 = vrot.slane %v9286, 5
      %v9329 = vrot.slane %v9328, 4
      %v9330 = vrot.slane %v8923, 5
      %v9331 = vsel %vm2645, %v9329, %v9330
      %v9332 = vrot.slane %v9287, 5
      %v9333 = vrot.slane %v9332, 4
      %v9334 = vrot.slane %v8924, 5
      %v9335 = vsel %vm2645, %v9333, %v9334
      %s9336 = scalar_lea.vmem %s5, 64
      %v9337 = vld [vmem:[%s9336] sm:$0xf]
      %v9338 = vld [vmem:[%s9336 + $0x4] sm:$0xf]
      %v9339 = vld [vmem:[%s9336 + $0x8] sm:$0xf]
      %v9340 = vld [vmem:[%s9336 + $0xc] sm:$0xf]
      %v9341 = vld [vmem:[%s9336 + $0x10] sm:$0xf]
      %v9342 = vld [vmem:[%s9336 + $0x14] sm:$0xf]
      %v9343 = vld [vmem:[%s9336 + $0x18] sm:$0xf]
      %v9344 = vld [vmem:[%s9336 + $0x1c] sm:$0xf]
      %v9345 = vunpack.c.l.b16 %v9307
      %v9346 = vunpack.c.l.b16 %v9311
      %v9347 = vunpack.c.l.b16 %v9315
      %v9348 = vunpack.c.l.b16 %v9319
      %v9349 = vunpack.c.l.b16 %v9323
      %v9350 = vunpack.c.l.b16 %v9327
      %v9351 = vunpack.c.l.b16 %v9331
      %v9352 = vunpack.c.l.b16 %v9335
      %v9353 = vpack.c.b16 %v9346, %v9345
      %v9354 = vpack.c.b16 %v9348, %v9347
      %v9355 = vpack.c.b16 %v9350, %v9349
      %v9356 = vpack.c.b16 %v9352, %v9351
      %v9365 = vunpack.c.l.b16 %v9337
      %v9366 = vunpack.c.l.b16 %v9338
      %v9367 = vunpack.c.l.b16 %v9339
      %v9368 = vunpack.c.l.b16 %v9340
      %v9369 = vunpack.c.l.b16 %v9341
      %v9370 = vunpack.c.l.b16 %v9342
      %v9371 = vunpack.c.l.b16 %v9343
      %v9372 = vunpack.c.l.b16 %v9344
      %v9373 = vpack.c.b16 %v9366, %v9365
      %v9374 = vpack.c.b16 %v9368, %v9367
      %v9375 = vpack.c.b16 %v9370, %v9369
      %v9376 = vpack.c.b16 %v9372, %v9371
      %v9382 = vsel %vm2072, %v9353, 0
      %v9385 = vsel %vm2072, %v9354, 0
      %v9388 = vsel %vm2072, %v9355, 0
      %v9391 = vsel %vm2072, %v9356, 0
      %9393 = vmatprep.subr.bf16.mxu0 0
      %9394 = vmatpush1.bf16.msra.mxu0 %v9373
      %9395 = vmatprep.subr.bf16.mxu0 0
      %9396 = vmatpush1.bf16.msra.mxu0 %v9374
      %9397 = vmatprep.subr.bf16.mxu0 0
      %9398 = vmatpush1.bf16.msra.mxu0 %v9375
      %9399 = vmatprep.subr.bf16.mxu0 0
      %9400 = vmatpush1.bf16.msra.mxu0 %v9376
      %9401 = vmatprep.subr.bf16.mxu0 0
      %9402 = vmatpush1.bf16.msra.mxu0 0
      %9403 = vmatprep.subr.bf16.mxu0 0
      %9404 = vmatpush1.bf16.msra.mxu0 0
      %9405 = vmatprep.subr.bf16.mxu0 0
      %9406 = vmatpush1.bf16.msra.mxu0 0
      %9407 = vmatprep.subr.bf16.mxu0 0
      %9408 = vmatpush1.bf16.msra.mxu0 0
      %9409 = vmatprep.subr.bf16.mxu0 0
      %9410 = vmatpush1.bf16.msra.mxu0 0
      %9411 = vmatprep.subr.bf16.mxu0 0
      %9412 = vmatpush1.bf16.msra.mxu0 0
      %9413 = vmatprep.subr.bf16.mxu0 0
      %9414 = vmatpush1.bf16.msra.mxu0 0
      %9415 = vmatprep.subr.bf16.mxu0 0
      %9416 = vmatpush1.bf16.msra.mxu0 0
      %9417 = vmatprep.subr.bf16.mxu0 0
      %9418 = vmatpush1.bf16.msra.mxu0 0
      %9419 = vmatprep.subr.bf16.mxu0 0
      %9420 = vmatpush1.bf16.msra.mxu0 0
      %9421 = vmatprep.subr.bf16.mxu0 0
      %9422 = vmatpush1.bf16.msra.mxu0 0
      %9423 = vmatprep.subr.bf16.mxu0 0
      %9424 = vmatpush1.bf16.msra.mxu0 0
      %9425 = vmatprep.mubr.bf16.mxu0 0
      %9426 = vmatmul.mubr.bf16.gmra.mrb[0].mxu0 %v9382
      %v9427 = vpop.f32.mrb[0].mxu0
      %v9428 = vadd.f32 0.0, %v9427
      %v9429 = vpop.f32.mrb[0].mxu0
      %v9430 = vpop.f32.mrb[0].mxu0
      %v9431 = vadd.f32 0.0, %v9430
      %v9432 = vpop.f32.mrb[0].mxu0
      %9433 = vmatprep.mubr.bf16.mxu0 0
      %9434 = vmatmul.mubr.bf16.gmra.mrb[0].mxu0 %v9385
      %v9435 = vpop.f32.mrb[0].mxu0
      %v9436 = vadd.f32 0.0, %v9435
      %v9437 = vpop.f32.mrb[0].mxu0
      %v9438 = vpop.f32.mrb[0].mxu0
      %v9439 = vadd.f32 0.0, %v9438
      %v9440 = vpop.f32.mrb[0].mxu0
      %9441 = vmatprep.mubr.bf16.mxu0 0
      %9442 = vmatmul.mubr.bf16.gmra.mrb[0].mxu0 %v9388
      %v9443 = vpop.f32.mrb[0].mxu0
      %v9444 = vadd.f32 0.0, %v9443
      %v9445 = vpop.f32.mrb[0].mxu0
      %v9446 = vpop.f32.mrb[0].mxu0
      %v9447 = vadd.f32 0.0, %v9446
      %v9448 = vpop.f32.mrb[0].mxu0
      %9449 = vmatprep.mubr.bf16.mxu0 0
      %9450 = vmatmul.mubr.bf16.gmra.mrb[0].mxu0 %v9391
      %v9451 = vpop.f32.mrb[0].mxu0
      %v9452 = vadd.f32 0.0, %v9451
      %v9453 = vpop.f32.mrb[0].mxu0
      %v9454 = vpop.f32.mrb[0].mxu0
      %v9455 = vadd.f32 0.0, %v9454
      %v9456 = vpop.f32.mrb[0].mxu0
      %9457 = vdwg.mxu0
      %v9458 = vadd.f32 %v9250, %v9428
      %v9459 = vadd.f32 %v9253, %v9431
      %v9460 = vadd.f32 %v9258, %v9436
      %v9461 = vadd.f32 %v9261, %v9439
      %v9462 = vadd.f32 %v9266, %v9444
      %v9463 = vadd.f32 %v9269, %v9447
      %v9464 = vadd.f32 %v9274, %v9452
      %v9465 = vadd.f32 %v9277, %v9455
      %v9466 = vld [vmem:[%s8852] sm:$0xf]
      %v9467 = vld [vmem:[%s8852 + $0x8] sm:$0xf]
      %v9468 = vld [vmem:[%s8852 + $0x10] sm:$0xf]
      %v9469 = vld [vmem:[%s8852 + $0x18] sm:$0xf]
      %v9470 = vld [vmem:[%s8852 + $0x20] sm:$0xf]
      %v9471 = vld [vmem:[%s8852 + $0x28] sm:$0xf]
      %v9472 = vld [vmem:[%s8852 + $0x30] sm:$0xf]
      %v9473 = vld [vmem:[%s8852 + $0x38] sm:$0xf]
      %s9474 = scalar_lea.vmem %s5, 96
      %v9475 = vld [vmem:[%s9474] sm:$0xf]
      %v9476 = vld [vmem:[%s9474 + $0x4] sm:$0xf]
      %v9477 = vld [vmem:[%s9474 + $0x8] sm:$0xf]
      %v9478 = vld [vmem:[%s9474 + $0xc] sm:$0xf]
      %v9479 = vld [vmem:[%s9474 + $0x10] sm:$0xf]
      %v9480 = vld [vmem:[%s9474 + $0x14] sm:$0xf]
      %v9481 = vld [vmem:[%s9474 + $0x18] sm:$0xf]
      %v9482 = vld [vmem:[%s9474 + $0x1c] sm:$0xf]
      %v9491 = vunpack.c.l.b16 %v9466
      %v9492 = vunpack.c.l.b16 %v9467
      %v9493 = vunpack.c.l.b16 %v9468
      %v9494 = vunpack.c.l.b16 %v9469
      %v9495 = vunpack.c.l.b16 %v9470
      %v9496 = vunpack.c.l.b16 %v9471
      %v9497 = vunpack.c.l.b16 %v9472
      %v9498 = vunpack.c.l.b16 %v9473
      %v9499 = vpack.c.b16 %v9492, %v9491
      %v9500 = vpack.c.b16 %v9494, %v9493
      %v9501 = vpack.c.b16 %v9496, %v9495
      %v9502 = vpack.c.b16 %v9498, %v9497
      %v9511 = vunpack.c.l.b16 %v9475
      %v9512 = vunpack.c.l.b16 %v9476
      %v9513 = vunpack.c.l.b16 %v9477
      %v9514 = vunpack.c.l.b16 %v9478
      %v9515 = vunpack.c.l.b16 %v9479
      %v9516 = vunpack.c.l.b16 %v9480
      %v9517 = vunpack.c.l.b16 %v9481
      %v9518 = vunpack.c.l.b16 %v9482
      %v9519 = vpack.c.b16 %v9512, %v9511
      %v9520 = vpack.c.b16 %v9514, %v9513
      %v9521 = vpack.c.b16 %v9516, %v9515
      %v9522 = vpack.c.b16 %v9518, %v9517
      %v9528 = vsel %vm2072, %v9499, 0
      %v9531 = vsel %vm2072, %v9500, 0
      %v9534 = vsel %vm2072, %v9501, 0
      %v9537 = vsel %vm2072, %v9502, 0
      %9539 = vmatprep.subr.bf16.mxu0 0
      %9540 = vmatpush1.bf16.msra.mxu0 %v9519
      %9541 = vmatprep.subr.bf16.mxu0 0
      %9542 = vmatpush1.bf16.msra.mxu0 %v9520
      %9543 = vmatprep.subr.bf16.mxu0 0
      %9544 = vmatpush1.bf16.msra.mxu0 %v9521
      %9545 = vmatprep.subr.bf16.mxu0 0
      %9546 = vmatpush1.bf16.msra.mxu0 %v9522
      %9547 = vmatprep.subr.bf16.mxu0 0
      %9548 = vmatpush1.bf16.msra.mxu0 0
      %9549 = vmatprep.subr.bf16.mxu0 0
      %9550 = vmatpush1.bf16.msra.mxu0 0
      %9551 = vmatprep.subr.bf16.mxu0 0
      %9552 = vmatpush1.bf16.msra.mxu0 0
      %9553 = vmatprep.subr.bf16.mxu0 0
      %9554 = vmatpush1.bf16.msra.mxu0 0
      %9555 = vmatprep.subr.bf16.mxu0 0
      %9556 = vmatpush1.bf16.msra.mxu0 0
      %9557 = vmatprep.subr.bf16.mxu0 0
      %9558 = vmatpush1.bf16.msra.mxu0 0
      %9559 = vmatprep.subr.bf16.mxu0 0
      %9560 = vmatpush1.bf16.msra.mxu0 0
      %9561 = vmatprep.subr.bf16.mxu0 0
      %9562 = vmatpush1.bf16.msra.mxu0 0
      %9563 = vmatprep.subr.bf16.mxu0 0
      %9564 = vmatpush1.bf16.msra.mxu0 0
      %9565 = vmatprep.subr.bf16.mxu0 0
      %9566 = vmatpush1.bf16.msra.mxu0 0
      %9567 = vmatprep.subr.bf16.mxu0 0
      %9568 = vmatpush1.bf16.msra.mxu0 0
      %9569 = vmatprep.subr.bf16.mxu0 0
      %9570 = vmatpush1.bf16.msra.mxu0 0
      %9571 = vmatprep.mubr.bf16.mxu0 0
      %9572 = vmatmul.mubr.bf16.gmra.mrb[0].mxu0 %v9528
      %v9573 = vpop.f32.mrb[0].mxu0
      %v9574 = vadd.f32 0.0, %v9573
      %v9575 = vpop.f32.mrb[0].mxu0
      %v9576 = vpop.f32.mrb[0].mxu0
      %v9577 = vadd.f32 0.0, %v9576
      %v9578 = vpop.f32.mrb[0].mxu0
      %9579 = vmatprep.mubr.bf16.mxu0 0
      %9580 = vmatmul.mubr.bf16.gmra.mrb[0].mxu0 %v9531
      %v9581 = vpop.f32.mrb[0].mxu0
      %v9582 = vadd.f32 0.0, %v9581
      %v9583 = vpop.f32.mrb[0].mxu0
      %v9584 = vpop.f32.mrb[0].mxu0
      %v9585 = vadd.f32 0.0, %v9584
      %v9586 = vpop.f32.mrb[0].mxu0
      %9587 = vmatprep.mubr.bf16.mxu0 0
      %9588 = vmatmul.mubr.bf16.gmra.mrb[0].mxu0 %v9534
      %v9589 = vpop.f32.mrb[0].mxu0
      %v9590 = vadd.f32 0.0, %v9589
      %v9591 = vpop.f32.mrb[0].mxu0
      %v9592 = vpop.f32.mrb[0].mxu0
      %v9593 = vadd.f32 0.0, %v9592
      %v9594 = vpop.f32.mrb[0].mxu0
      %9595 = vmatprep.mubr.bf16.mxu0 0
      %9596 = vmatmul.mubr.bf16.gmra.mrb[0].mxu0 %v9537
      %v9597 = vpop.f32.mrb[0].mxu0
      %v9598 = vadd.f32 0.0, %v9597
      %v9599 = vpop.f32.mrb[0].mxu0
      %v9600 = vpop.f32.mrb[0].mxu0
      %v9601 = vadd.f32 0.0, %v9600
      %v9602 = vpop.f32.mrb[0].mxu0
      %9603 = vdwg.mxu0
      %v9604 = vadd.f32 %v9458, %v9574
      %v9605 = vadd.f32 %v9459, %v9577
      %v9606 = vadd.f32 %v9460, %v9582
      %v9607 = vadd.f32 %v9461, %v9585
      %v9608 = vadd.f32 %v9462, %v9590
      %v9609 = vadd.f32 %v9463, %v9593
      %v9610 = vadd.f32 %v9464, %v9598
      %v9611 = vadd.f32 %v9465, %v9601
      %v9612 = vld [vmem:[%s8852] sm:$0xf]
      %v9613 = vld [vmem:[%s8852 + $0x4] sm:$0x1]
      %v9614 = vld [vmem:[%s8852 + $0x8] sm:$0xf]
      %v9615 = vld [vmem:[%s8852 + $0xc] sm:$0x1]
      %v9616 = vld [vmem:[%s8852 + $0x10] sm:$0xf]
      %v9617 = vld [vmem:[%s8852 + $0x14] sm:$0x1]
      %v9618 = vld [vmem:[%s8852 + $0x18] sm:$0xf]
      %v9619 = vld [vmem:[%s8852 + $0x1c] sm:$0x1]
      %v9620 = vld [vmem:[%s8852 + $0x20] sm:$0xf]
      %v9621 = vld [vmem:[%s8852 + $0x24] sm:$0x1]
      %v9622 = vld [vmem:[%s8852 + $0x28] sm:$0xf]
      %v9623 = vld [vmem:[%s8852 + $0x2c] sm:$0x1]
      %v9624 = vld [vmem:[%s8852 + $0x30] sm:$0xf]
      %v9625 = vld [vmem:[%s8852 + $0x34] sm:$0x1]
      %v9626 = vld [vmem:[%s8852 + $0x38] sm:$0xf]
      %v9627 = vld [vmem:[%s8852 + $0x3c] sm:$0x1]
      %v9629 = vshrl.u32 %v9612, 16
      %v9631 = vrot.slane %v9629, 4
      %v9632 = vshll.u32 %v9612, 16
      %v9634 = vrot.slane %v9632, 5
      %v9635 = vor.u32 %v9631, %v9634
      %v9636 = vrot.slane %v9635, 4
      %v9638 = vshll.u32 %v9613, 16
      %v9640 = vrot.slane %v9638, 5
      %v9641 = vsel %vm1606, %v9636, %v9640
      %v9643 = vshrl.u32 %v9614, 16
      %v9645 = vrot.slane %v9643, 4
      %v9646 = vshll.u32 %v9614, 16
      %v9648 = vrot.slane %v9646, 5
      %v9649 = vor.u32 %v9645, %v9648
      %v9650 = vrot.slane %v9649, 4
      %v9652 = vshll.u32 %v9615, 16
      %v9654 = vrot.slane %v9652, 5
      %v9655 = vsel %vm1606, %v9650, %v9654
      %v9657 = vshrl.u32 %v9616, 16
      %v9659 = vrot.slane %v9657, 4
      %v9660 = vshll.u32 %v9616, 16
      %v9662 = vrot.slane %v9660, 5
      %v9663 = vor.u32 %v9659, %v9662
      %v9664 = vrot.slane %v9663, 4
      %v9666 = vshll.u32 %v9617, 16
      %v9668 = vrot.slane %v9666, 5
      %v9669 = vsel %vm1606, %v9664, %v9668
      %v9671 = vshrl.u32 %v9618, 16
      %v9673 = vrot.slane %v9671, 4
      %v9674 = vshll.u32 %v9618, 16
      %v9676 = vrot.slane %v9674, 5
      %v9677 = vor.u32 %v9673, %v9676
      %v9678 = vrot.slane %v9677, 4
      %v9680 = vshll.u32 %v9619, 16
      %v9682 = vrot.slane %v9680, 5
      %v9683 = vsel %vm1606, %v9678, %v9682
      %v9685 = vshrl.u32 %v9620, 16
      %v9687 = vrot.slane %v9685, 4
      %v9688 = vshll.u32 %v9620, 16
      %v9690 = vrot.slane %v9688, 5
      %v9691 = vor.u32 %v9687, %v9690
      %v9692 = vrot.slane %v9691, 4
      %v9694 = vshll.u32 %v9621, 16
      %v9696 = vrot.slane %v9694, 5
      %v9697 = vsel %vm1606, %v9692, %v9696
      %v9699 = vshrl.u32 %v9622, 16
      %v9701 = vrot.slane %v9699, 4
      %v9702 = vshll.u32 %v9622, 16
      %v9704 = vrot.slane %v9702, 5
      %v9705 = vor.u32 %v9701, %v9704
      %v9706 = vrot.slane %v9705, 4
      %v9708 = vshll.u32 %v9623, 16
      %v9710 = vrot.slane %v9708, 5
      %v9711 = vsel %vm1606, %v9706, %v9710
      %v9713 = vshrl.u32 %v9624, 16
      %v9715 = vrot.slane %v9713, 4
      %v9716 = vshll.u32 %v9624, 16
      %v9718 = vrot.slane %v9716, 5
      %v9719 = vor.u32 %v9715, %v9718
      %v9720 = vrot.slane %v9719, 4
      %v9722 = vshll.u32 %v9625, 16
      %v9724 = vrot.slane %v9722, 5
      %v9725 = vsel %vm1606, %v9720, %v9724
      %v9727 = vshrl.u32 %v9626, 16
      %v9729 = vrot.slane %v9727, 4
      %v9730 = vshll.u32 %v9626, 16
      %v9732 = vrot.slane %v9730, 5
      %v9733 = vor.u32 %v9729, %v9732
      %v9734 = vrot.slane %v9733, 4
      %v9736 = vshll.u32 %v9627, 16
      %v9738 = vrot.slane %v9736, 5
      %v9739 = vsel %vm1606, %v9734, %v9738
      %s9740 = scalar_lea.vmem %s5, 128
      %v9741 = vld [vmem:[%s9740] sm:$0xf]
      %v9742 = vld [vmem:[%s9740 + $0x4] sm:$0xf]
      %v9743 = vld [vmem:[%s9740 + $0x8] sm:$0xf]
      %v9744 = vld [vmem:[%s9740 + $0xc] sm:$0xf]
      %v9745 = vld [vmem:[%s9740 + $0x10] sm:$0xf]
      %v9746 = vld [vmem:[%s9740 + $0x14] sm:$0xf]
      %v9747 = vld [vmem:[%s9740 + $0x18] sm:$0xf]
      %v9748 = vld [vmem:[%s9740 + $0x1c] sm:$0xf]
      %v9749 = vunpack.c.l.b16 %v9641
      %v9750 = vunpack.c.l.b16 %v9655
      %v9751 = vunpack.c.l.b16 %v9669
      %v9752 = vunpack.c.l.b16 %v9683
      %v9753 = vunpack.c.l.b16 %v9697
      %v9754 = vunpack.c.l.b16 %v9711
      %v9755 = vunpack.c.l.b16 %v9725
      %v9756 = vunpack.c.l.b16 %v9739
      %v9757 = vpack.c.b16 %v9750, %v9749
      %v9758 = vpack.c.b16 %v9752, %v9751
      %v9759 = vpack.c.b16 %v9754, %v9753
      %v9760 = vpack.c.b16 %v9756, %v9755
      %v9769 = vunpack.c.l.b16 %v9741
      %v9770 = vunpack.c.l.b16 %v9742
      %v9771 = vunpack.c.l.b16 %v9743
      %v9772 = vunpack.c.l.b16 %v9744
      %v9773 = vunpack.c.l.b16 %v9745
      %v9774 = vunpack.c.l.b16 %v9746
      %v9775 = vunpack.c.l.b16 %v9747
      %v9776 = vunpack.c.l.b16 %v9748
      %v9777 = vpack.c.b16 %v9770, %v9769
      %v9778 = vpack.c.b16 %v9772, %v9771
      %v9779 = vpack.c.b16 %v9774, %v9773
      %v9780 = vpack.c.b16 %v9776, %v9775
      %v9786 = vsel %vm2072, %v9757, 0
      %v9789 = vsel %vm2072, %v9758, 0
      %v9792 = vsel %vm2072, %v9759, 0
      %v9795 = vsel %vm2072, %v9760, 0
      %9797 = vmatprep.subr.bf16.mxu0 0
      %9798 = vmatpush1.bf16.msra.mxu0 %v9777
      %9799 = vmatprep.subr.bf16.mxu0 0
      %9800 = vmatpush1.bf16.msra.mxu0 %v9778
      %9801 = vmatprep.subr.bf16.mxu0 0
      %9802 = vmatpush1.bf16.msra.mxu0 %v9779
      %9803 = vmatprep.subr.bf16.mxu0 0
      %9804 = vmatpush1.bf16.msra.mxu0 %v9780
      %9805 = vmatprep.subr.bf16.mxu0 0
      %9806 = vmatpush1.bf16.msra.mxu0 0
      %9807 = vmatprep.subr.bf16.mxu0 0
      %9808 = vmatpush1.bf16.msra.mxu0 0
      %9809 = vmatprep.subr.bf16.mxu0 0
      %9810 = vmatpush1.bf16.msra.mxu0 0
      %9811 = vmatprep.subr.bf16.mxu0 0
      %9812 = vmatpush1.bf16.msra.mxu0 0
      %9813 = vmatprep.subr.bf16.mxu0 0
      %9814 = vmatpush1.bf16.msra.mxu0 0
      %9815 = vmatprep.subr.bf16.mxu0 0
      %9816 = vmatpush1.bf16.msra.mxu0 0
      %9817 = vmatprep.subr.bf16.mxu0 0
      %9818 = vmatpush1.bf16.msra.mxu0 0
      %9819 = vmatprep.subr.bf16.mxu0 0
      %9820 = vmatpush1.bf16.msra.mxu0 0
      %9821 = vmatprep.subr.bf16.mxu0 0
      %9822 = vmatpush1.bf16.msra.mxu0 0
      %9823 = vmatprep.subr.bf16.mxu0 0
      %9824 = vmatpush1.bf16.msra.mxu0 0
      %9825 = vmatprep.subr.bf16.mxu0 0
      %9826 = vmatpush1.bf16.msra.mxu0 0
      %9827 = vmatprep.subr.bf16.mxu0 0
      %9828 = vmatpush1.bf16.msra.mxu0 0
      %9829 = vmatprep.mubr.bf16.mxu0 0
      %9830 = vmatmul.mubr.bf16.gmra.mrb[0].mxu0 %v9786
      %v9831 = vpop.f32.mrb[0].mxu0
      %v9832 = vadd.f32 0.0, %v9831
      %v9833 = vpop.f32.mrb[0].mxu0
      %v9834 = vpop.f32.mrb[0].mxu0
      %v9835 = vadd.f32 0.0, %v9834
      %v9836 = vpop.f32.mrb[0].mxu0
      %9837 = vmatprep.mubr.bf16.mxu0 0
      %9838 = vmatmul.mubr.bf16.gmra.mrb[0].mxu0 %v9789
      %v9839 = vpop.f32.mrb[0].mxu0
      %v9840 = vadd.f32 0.0, %v9839
      %v9841 = vpop.f32.mrb[0].mxu0
      %v9842 = vpop.f32.mrb[0].mxu0
      %v9843 = vadd.f32 0.0, %v9842
      %v9844 = vpop.f32.mrb[0].mxu0
      %9845 = vmatprep.mubr.bf16.mxu0 0
      %9846 = vmatmul.mubr.bf16.gmra.mrb[0].mxu0 %v9792
      %v9847 = vpop.f32.mrb[0].mxu0
      %v9848 = vadd.f32 0.0, %v9847
      %v9849 = vpop.f32.mrb[0].mxu0
      %v9850 = vpop.f32.mrb[0].mxu0
      %v9851 = vadd.f32 0.0, %v9850
      %v9852 = vpop.f32.mrb[0].mxu0
      %9853 = vmatprep.mubr.bf16.mxu0 0
      %9854 = vmatmul.mubr.bf16.gmra.mrb[0].mxu0 %v9795
      %v9855 = vpop.f32.mrb[0].mxu0
      %v9856 = vadd.f32 0.0, %v9855
      %v9857 = vpop.f32.mrb[0].mxu0
      %v9858 = vpop.f32.mrb[0].mxu0
      %v9859 = vadd.f32 0.0, %v9858
      %v9860 = vpop.f32.mrb[0].mxu0
      %9861 = vdwg.mxu0
      %v9862 = vadd.f32 %v9604, %v9832
      %v9863 = vadd.f32 %v9605, %v9835
      %v9864 = vadd.f32 %v9606, %v9840
      %v9865 = vadd.f32 %v9607, %v9843
      %v9866 = vadd.f32 %v9608, %v9848
      %v9867 = vadd.f32 %v9609, %v9851
      %v9868 = vadd.f32 %v9610, %v9856
      %v9869 = vadd.f32 %v9611, %v9859
      %v9870 = vld [vmem:[%s8852] sm:$0xe]
      %v9871 = vld [vmem:[%s8852 + $0x8] sm:$0xe]
      %v9872 = vld [vmem:[%s8852 + $0x10] sm:$0xe]
      %v9873 = vld [vmem:[%s8852 + $0x18] sm:$0xe]
      %v9874 = vld [vmem:[%s8852 + $0x20] sm:$0xe]
      %v9875 = vld [vmem:[%s8852 + $0x28] sm:$0xe]
      %v9876 = vld [vmem:[%s8852 + $0x30] sm:$0xe]
      %v9877 = vld [vmem:[%s8852 + $0x38] sm:$0xe]
      %v9894 = vrot.slane %v9870, 5
      %v9895 = vrot.slane %v9894, 4
      %v9896 = vrot.slane %v9613, 5
      %v9897 = vsel %vm2645, %v9895, %v9896
      %v9898 = vrot.slane %v9871, 5
      %v9899 = vrot.slane %v9898, 4
      %v9900 = vrot.slane %v9615, 5
      %v9901 = vsel %vm2645, %v9899, %v9900
      %v9902 = vrot.slane %v9872, 5
      %v9903 = vrot.slane %v9902, 4
      %v9904 = vrot.slane %v9617, 5
      %v9905 = vsel %vm2645, %v9903, %v9904
      %v9906 = vrot.slane %v9873, 5
      %v9907 = vrot.slane %v9906, 4
      %v9908 = vrot.slane %v9619, 5
      %v9909 = vsel %vm2645, %v9907, %v9908
      %v9910 = vrot.slane %v9874, 5
      %v9911 = vrot.slane %v9910, 4
      %v9912 = vrot.slane %v9621, 5
      %v9913 = vsel %vm2645, %v9911, %v9912
      %v9914 = vrot.slane %v9875, 5
      %v9915 = vrot.slane %v9914, 4
      %v9916 = vrot.slane %v9623, 5
      %v9917 = vsel %vm2645, %v9915, %v9916
      %v9918 = vrot.slane %v9876, 5
      %v9919 = vrot.slane %v9918, 4
      %v9920 = vrot.slane %v9625, 5
      %v9921 = vsel %vm2645, %v9919, %v9920
      %v9922 = vrot.slane %v9877, 5
      %v9923 = vrot.slane %v9922, 4
      %v9924 = vrot.slane %v9627, 5
      %v9925 = vsel %vm2645, %v9923, %v9924
      %s9926 = scalar_lea.vmem %s5, 160
      %v9927 = vld [vmem:[%s9926] sm:$0xf]
      %v9928 = vld [vmem:[%s9926 + $0x4] sm:$0xf]
      %v9929 = vld [vmem:[%s9926 + $0x8] sm:$0xf]
      %v9930 = vld [vmem:[%s9926 + $0xc] sm:$0xf]
      %v9931 = vld [vmem:[%s9926 + $0x10] sm:$0xf]
      %v9932 = vld [vmem:[%s9926 + $0x14] sm:$0xf]
      %v9933 = vld [vmem:[%s9926 + $0x18] sm:$0xf]
      %v9934 = vld [vmem:[%s9926 + $0x1c] sm:$0xf]
      %v9935 = vunpack.c.l.b16 %v9897
      %v9936 = vunpack.c.l.b16 %v9901
      %v9937 = vunpack.c.l.b16 %v9905
      %v9938 = vunpack.c.l.b16 %v9909
      %v9939 = vunpack.c.l.b16 %v9913
      %v9940 = vunpack.c.l.b16 %v9917
      %v9941 = vunpack.c.l.b16 %v9921
      %v9942 = vunpack.c.l.b16 %v9925
      %v9943 = vpack.c.b16 %v9936, %v9935
      %v9944 = vpack.c.b16 %v9938, %v9937
      %v9945 = vpack.c.b16 %v9940, %v9939
      %v9946 = vpack.c.b16 %v9942, %v9941
      %v9955 = vunpack.c.l.b16 %v9927
      %v9956 = vunpack.c.l.b16 %v9928
      %v9957 = vunpack.c.l.b16 %v9929
      %v9958 = vunpack.c.l.b16 %v9930
      %v9959 = vunpack.c.l.b16 %v9931
      %v9960 = vunpack.c.l.b16 %v9932
      %v9961 = vunpack.c.l.b16 %v9933
      %v9962 = vunpack.c.l.b16 %v9934
      %v9963 = vpack.c.b16 %v9956, %v9955
      %v9964 = vpack.c.b16 %v9958, %v9957
      %v9965 = vpack.c.b16 %v9960, %v9959
      %v9966 = vpack.c.b16 %v9962, %v9961
      %v9972 = vsel %vm2072, %v9943, 0
      %v9975 = vsel %vm2072, %v9944, 0
      %v9978 = vsel %vm2072, %v9945, 0
      %v9981 = vsel %vm2072, %v9946, 0
      %9983 = vmatprep.subr.bf16.mxu0 0
      %9984 = vmatpush1.bf16.msra.mxu0 %v9963
      %9985 = vmatprep.subr.bf16.mxu0 0
      %9986 = vmatpush1.bf16.msra.mxu0 %v9964
      %9987 = vmatprep.subr.bf16.mxu0 0
      %9988 = vmatpush1.bf16.msra.mxu0 %v9965
      %9989 = vmatprep.subr.bf16.mxu0 0
      %9990 = vmatpush1.bf16.msra.mxu0 %v9966
      %9991 = vmatprep.subr.bf16.mxu0 0
      %9992 = vmatpush1.bf16.msra.mxu0 0
      %9993 = vmatprep.subr.bf16.mxu0 0
      %9994 = vmatpush1.bf16.msra.mxu0 0
      %9995 = vmatprep.subr.bf16.mxu0 0
      %9996 = vmatpush1.bf16.msra.mxu0 0
      %9997 = vmatprep.subr.bf16.mxu0 0
      %9998 = vmatpush1.bf16.msra.mxu0 0
      %9999 = vmatprep.subr.bf16.mxu0 0
      %10000 = vmatpush1.bf16.msra.mxu0 0
      %10001 = vmatprep.subr.bf16.mxu0 0
      %10002 = vmatpush1.bf16.msra.mxu0 0
      %10003 = vmatprep.subr.bf16.mxu0 0
      %10004 = vmatpush1.bf16.msra.mxu0 0
      %10005 = vmatprep.subr.bf16.mxu0 0
      %10006 = vmatpush1.bf16.msra.mxu0 0
      %10007 = vmatprep.subr.bf16.mxu0 0
      %10008 = vmatpush1.bf16.msra.mxu0 0
      %10009 = vmatprep.subr.bf16.mxu0 0
      %10010 = vmatpush1.bf16.msra.mxu0 0
      %10011 = vmatprep.subr.bf16.mxu0 0
      %10012 = vmatpush1.bf16.msra.mxu0 0
      %10013 = vmatprep.subr.bf16.mxu0 0
      %10014 = vmatpush1.bf16.msra.mxu0 0
      %10015 = vmatprep.mubr.bf16.mxu0 0
      %10016 = vmatmul.mubr.bf16.gmra.mrb[0].mxu0 %v9972
      %v10017 = vpop.f32.mrb[0].mxu0
      %v10018 = vadd.f32 0.0, %v10017
      %v10019 = vpop.f32.mrb[0].mxu0
      %v10020 = vpop.f32.mrb[0].mxu0
      %v10021 = vadd.f32 0.0, %v10020
      %v10022 = vpop.f32.mrb[0].mxu0
      %10023 = vmatprep.mubr.bf16.mxu0 0
      %10024 = vmatmul.mubr.bf16.gmra.mrb[0].mxu0 %v9975
      %v10025 = vpop.f32.mrb[0].mxu0
      %v10026 = vadd.f32 0.0, %v10025
      %v10027 = vpop.f32.mrb[0].mxu0
      %v10028 = vpop.f32.mrb[0].mxu0
      %v10029 = vadd.f32 0.0, %v10028
      %v10030 = vpop.f32.mrb[0].mxu0
      %10031 = vmatprep.mubr.bf16.mxu0 0
      %10032 = vmatmul.mubr.bf16.gmra.mrb[0].mxu0 %v9978
      %v10033 = vpop.f32.mrb[0].mxu0
      %v10034 = vadd.f32 0.0, %v10033
      %v10035 = vpop.f32.mrb[0].mxu0
      %v10036 = vpop.f32.mrb[0].mxu0
      %v10037 = vadd.f32 0.0, %v10036
      %v10038 = vpop.f32.mrb[0].mxu0
      %10039 = vmatprep.mubr.bf16.mxu0 0
      %10040 = vmatmul.mubr.bf16.gmra.mrb[0].mxu0 %v9981
      %v10041 = vpop.f32.mrb[0].mxu0
      %v10042 = vadd.f32 0.0, %v10041
      %v10043 = vpop.f32.mrb[0].mxu0
      %v10044 = vpop.f32.mrb[0].mxu0
      %v10045 = vadd.f32 0.0, %v10044
      %v10046 = vpop.f32.mrb[0].mxu0
      %10047 = vdwg.mxu0
      %v10048 = vadd.f32 %v9862, %v10018
      %v10049 = vadd.f32 %v9863, %v10021
      %v10050 = vadd.f32 %v9864, %v10026
      %v10051 = vadd.f32 %v9865, %v10029
      %v10052 = vadd.f32 %v9866, %v10034
      %v10053 = vadd.f32 %v9867, %v10037
      %v10054 = vadd.f32 %v9868, %v10042
      %v10055 = vadd.f32 %v9869, %v10045
      %s10056 = scalar_lea.vmem [#allocation3], 16
      %v10057 = vld [vmem:[%s10056] sm:$0xf]
      %v10058 = vld [vmem:[%s10056 + $0x8] sm:$0xf]
      %v10059 = vld [vmem:[%s10056 + $0x10] sm:$0xf]
      %v10060 = vld [vmem:[%s10056 + $0x18] sm:$0xf]
      %v10061 = vld [vmem:[%s10056 + $0x20] sm:$0xf]
      %v10062 = vld [vmem:[%s10056 + $0x28] sm:$0xf]
      %v10063 = vld [vmem:[%s10056 + $0x30] sm:$0xf]
      %v10064 = vld [vmem:[%s10056 + $0x38] sm:$0xf]
      %s10065 = scalar_lea.vmem %s5, 192
      %v10066 = vld [vmem:[%s10065] sm:$0xf]
      %v10067 = vld [vmem:[%s10065 + $0x4] sm:$0xf]
      %v10068 = vld [vmem:[%s10065 + $0x8] sm:$0xf]
      %v10069 = vld [vmem:[%s10065 + $0xc] sm:$0xf]
      %v10070 = vld [vmem:[%s10065 + $0x10] sm:$0xf]
      %v10071 = vld [vmem:[%s10065 + $0x14] sm:$0xf]
      %v10072 = vld [vmem:[%s10065 + $0x18] sm:$0xf]
      %v10073 = vld [vmem:[%s10065 + $0x1c] sm:$0xf]
      %v10082 = vunpack.c.l.b16 %v10057
      %v10083 = vunpack.c.l.b16 %v10058
      %v10084 = vunpack.c.l.b16 %v10059
      %v10085 = vunpack.c.l.b16 %v10060
      %v10086 = vunpack.c.l.b16 %v10061
      %v10087 = vunpack.c.l.b16 %v10062
      %v10088 = vunpack.c.l.b16 %v10063
      %v10089 = vunpack.c.l.b16 %v10064
      %v10090 = vpack.c.b16 %v10083, %v10082
      %v10091 = vpack.c.b16 %v10085, %v10084
      %v10092 = vpack.c.b16 %v10087, %v10086
      %v10093 = vpack.c.b16 %v10089, %v10088
      %v10102 = vunpack.c.l.b16 %v10066
      %v10103 = vunpack.c.l.b16 %v10067
      %v10104 = vunpack.c.l.b16 %v10068
      %v10105 = vunpack.c.l.b16 %v10069
      %v10106 = vunpack.c.l.b16 %v10070
      %v10107 = vunpack.c.l.b16 %v10071
      %v10108 = vunpack.c.l.b16 %v10072
      %v10109 = vunpack.c.l.b16 %v10073
      %v10110 = vpack.c.b16 %v10103, %v10102
      %v10111 = vpack.c.b16 %v10105, %v10104
      %v10112 = vpack.c.b16 %v10107, %v10106
      %v10113 = vpack.c.b16 %v10109, %v10108
      %v10119 = vsel %vm2072, %v10090, 0
      %v10122 = vsel %vm2072, %v10091, 0
      %v10125 = vsel %vm2072, %v10092, 0
      %v10128 = vsel %vm2072, %v10093, 0
      %10130 = vmatprep.subr.bf16.mxu0 0
      %10131 = vmatpush1.bf16.msra.mxu0 %v10110
      %10132 = vmatprep.subr.bf16.mxu0 0
      %10133 = vmatpush1.bf16.msra.mxu0 %v10111
      %10134 = vmatprep.subr.bf16.mxu0 0
      %10135 = vmatpush1.bf16.msra.mxu0 %v10112
      %10136 = vmatprep.subr.bf16.mxu0 0
      %10137 = vmatpush1.bf16.msra.mxu0 %v10113
      %10138 = vmatprep.subr.bf16.mxu0 0
      %10139 = vmatpush1.bf16.msra.mxu0 0
      %10140 = vmatprep.subr.bf16.mxu0 0
      %10141 = vmatpush1.bf16.msra.mxu0 0
      %10142 = vmatprep.subr.bf16.mxu0 0
      %10143 = vmatpush1.bf16.msra.mxu0 0
      %10144 = vmatprep.subr.bf16.mxu0 0
      %10145 = vmatpush1.bf16.msra.mxu0 0
      %10146 = vmatprep.subr.bf16.mxu0 0
      %10147 = vmatpush1.bf16.msra.mxu0 0
      %10148 = vmatprep.subr.bf16.mxu0 0
      %10149 = vmatpush1.bf16.msra.mxu0 0
      %10150 = vmatprep.subr.bf16.mxu0 0
      %10151 = vmatpush1.bf16.msra.mxu0 0
      %10152 = vmatprep.subr.bf16.mxu0 0
      %10153 = vmatpush1.bf16.msra.mxu0 0
      %10154 = vmatprep.subr.bf16.mxu0 0
      %10155 = vmatpush1.bf16.msra.mxu0 0
      %10156 = vmatprep.subr.bf16.mxu0 0
      %10157 = vmatpush1.bf16.msra.mxu0 0
      %10158 = vmatprep.subr.bf16.mxu0 0
      %10159 = vmatpush1.bf16.msra.mxu0 0
      %10160 = vmatprep.subr.bf16.mxu0 0
      %10161 = vmatpush1.bf16.msra.mxu0 0
      %10162 = vmatprep.mubr.bf16.mxu0 0
      %10163 = vmatmul.mubr.bf16.gmra.mrb[0].mxu0 %v10119
      %v10164 = vpop.f32.mrb[0].mxu0
      %v10165 = vadd.f32 0.0, %v10164
      %v10166 = vpop.f32.mrb[0].mxu0
      %v10167 = vpop.f32.mrb[0].mxu0
      %v10168 = vadd.f32 0.0, %v10167
      %v10169 = vpop.f32.mrb[0].mxu0
      %10170 = vmatprep.mubr.bf16.mxu0 0
      %10171 = vmatmul.mubr.bf16.gmra.mrb[0].mxu0 %v10122
      %v10172 = vpop.f32.mrb[0].mxu0
      %v10173 = vadd.f32 0.0, %v10172
      %v10174 = vpop.f32.mrb[0].mxu0
      %v10175 = vpop.f32.mrb[0].mxu0
      %v10176 = vadd.f32 0.0, %v10175
      %v10177 = vpop.f32.mrb[0].mxu0
      %10178 = vmatprep.mubr.bf16.mxu0 0
      %10179 = vmatmul.mubr.bf16.gmra.mrb[0].mxu0 %v10125
      %v10180 = vpop.f32.mrb[0].mxu0
      %v10181 = vadd.f32 0.0, %v10180
      %v10182 = vpop.f32.mrb[0].mxu0
      %v10183 = vpop.f32.mrb[0].mxu0
      %v10184 = vadd.f32 0.0, %v10183
      %v10185 = vpop.f32.mrb[0].mxu0
      %10186 = vmatprep.mubr.bf16.mxu0 0
      %10187 = vmatmul.mubr.bf16.gmra.mrb[0].mxu0 %v10128
      %v10188 = vpop.f32.mrb[0].mxu0
      %v10189 = vadd.f32 0.0, %v10188
      %v10190 = vpop.f32.mrb[0].mxu0
      %v10191 = vpop.f32.mrb[0].mxu0
      %v10192 = vadd.f32 0.0, %v10191
      %v10193 = vpop.f32.mrb[0].mxu0
      %10194 = vdwg.mxu0
      %v10195 = vadd.f32 %v10048, %v10165
      %v10196 = vadd.f32 %v10049, %v10168
      %v10197 = vadd.f32 %v10050, %v10173
      %v10198 = vadd.f32 %v10051, %v10176
      %v10199 = vadd.f32 %v10052, %v10181
      %v10200 = vadd.f32 %v10053, %v10184
      %v10201 = vadd.f32 %v10054, %v10189
      %v10202 = vadd.f32 %v10055, %v10192
      %v10203 = vld [vmem:[%s10056] sm:$0xf]
      %v10204 = vld [vmem:[%s10056 + $0x4] sm:$0x1]
      %v10205 = vld [vmem:[%s10056 + $0x8] sm:$0xf]
      %v10206 = vld [vmem:[%s10056 + $0xc] sm:$0x1]
      %v10207 = vld [vmem:[%s10056 + $0x10] sm:$0xf]
      %v10208 = vld [vmem:[%s10056 + $0x14] sm:$0x1]
      %v10209 = vld [vmem:[%s10056 + $0x18] sm:$0xf]
      %v10210 = vld [vmem:[%s10056 + $0x1c] sm:$0x1]
      %v10211 = vld [vmem:[%s10056 + $0x20] sm:$0xf]
      %v10212 = vld [vmem:[%s10056 + $0x24] sm:$0x1]
      %v10213 = vld [vmem:[%s10056 + $0x28] sm:$0xf]
      %v10214 = vld [vmem:[%s10056 + $0x2c] sm:$0x1]
      %v10215 = vld [vmem:[%s10056 + $0x30] sm:$0xf]
      %v10216 = vld [vmem:[%s10056 + $0x34] sm:$0x1]
      %v10217 = vld [vmem:[%s10056 + $0x38] sm:$0xf]
      %v10218 = vld [vmem:[%s10056 + $0x3c] sm:$0x1]
      %v10220 = vshrl.u32 %v10203, 16
      %v10222 = vrot.slane %v10220, 4
      %v10223 = vshll.u32 %v10203, 16
      %v10225 = vrot.slane %v10223, 5
      %v10226 = vor.u32 %v10222, %v10225
      %v10227 = vrot.slane %v10226, 4
      %v10229 = vshll.u32 %v10204, 16
      %v10231 = vrot.slane %v10229, 5
      %v10232 = vsel %vm1606, %v10227, %v10231
      %v10234 = vshrl.u32 %v10205, 16
      %v10236 = vrot.slane %v10234, 4
      %v10237 = vshll.u32 %v10205, 16
      %v10239 = vrot.slane %v10237, 5
      %v10240 = vor.u32 %v10236, %v10239
      %v10241 = vrot.slane %v10240, 4
      %v10243 = vshll.u32 %v10206, 16
      %v10245 = vrot.slane %v10243, 5
      %v10246 = vsel %vm1606, %v10241, %v10245
      %v10248 = vshrl.u32 %v10207, 16
      %v10250 = vrot.slane %v10248, 4
      %v10251 = vshll.u32 %v10207, 16
      %v10253 = vrot.slane %v10251, 5
      %v10254 = vor.u32 %v10250, %v10253
      %v10255 = vrot.slane %v10254, 4
      %v10257 = vshll.u32 %v10208, 16
      %v10259 = vrot.slane %v10257, 5
      %v10260 = vsel %vm1606, %v10255, %v10259
      %v10262 = vshrl.u32 %v10209, 16
      %v10264 = vrot.slane %v10262, 4
      %v10265 = vshll.u32 %v10209, 16
      %v10267 = vrot.slane %v10265, 5
      %v10268 = vor.u32 %v10264, %v10267
      %v10269 = vrot.slane %v10268, 4
      %v10271 = vshll.u32 %v10210, 16
      %v10273 = vrot.slane %v10271, 5
      %v10274 = vsel %vm1606, %v10269, %v10273
      %v10276 = vshrl.u32 %v10211, 16
      %v10278 = vrot.slane %v10276, 4
      %v10279 = vshll.u32 %v10211, 16
      %v10281 = vrot.slane %v10279, 5
      %v10282 = vor.u32 %v10278, %v10281
      %v10283 = vrot.slane %v10282, 4
      %v10285 = vshll.u32 %v10212, 16
      %v10287 = vrot.slane %v10285, 5
      %v10288 = vsel %vm1606, %v10283, %v10287
      %v10290 = vshrl.u32 %v10213, 16
      %v10292 = vrot.slane %v10290, 4
      %v10293 = vshll.u32 %v10213, 16
      %v10295 = vrot.slane %v10293, 5
      %v10296 = vor.u32 %v10292, %v10295
      %v10297 = vrot.slane %v10296, 4
      %v10299 = vshll.u32 %v10214, 16
      %v10301 = vrot.slane %v10299, 5
      %v10302 = vsel %vm1606, %v10297, %v10301
      %v10304 = vshrl.u32 %v10215, 16
      %v10306 = vrot.slane %v10304, 4
      %v10307 = vshll.u32 %v10215, 16
      %v10309 = vrot.slane %v10307, 5
      %v10310 = vor.u32 %v10306, %v10309
      %v10311 = vrot.slane %v10310, 4
      %v10313 = vshll.u32 %v10216, 16
      %v10315 = vrot.slane %v10313, 5
      %v10316 = vsel %vm1606, %v10311, %v10315
      %v10318 = vshrl.u32 %v10217, 16
      %v10320 = vrot.slane %v10318, 4
      %v10321 = vshll.u32 %v10217, 16
      %v10323 = vrot.slane %v10321, 5
      %v10324 = vor.u32 %v10320, %v10323
      %v10325 = vrot.slane %v10324, 4
      %v10327 = vshll.u32 %v10218, 16
      %v10329 = vrot.slane %v10327, 5
      %v10330 = vsel %vm1606, %v10325, %v10329
      %s10331 = scalar_lea.vmem %s5, 224
      %v10332 = vld [vmem:[%s10331] sm:$0xf]
      %v10333 = vld [vmem:[%s10331 + $0x4] sm:$0xf]
      %v10334 = vld [vmem:[%s10331 + $0x8] sm:$0xf]
      %v10335 = vld [vmem:[%s10331 + $0xc] sm:$0xf]
      %v10336 = vld [vmem:[%s10331 + $0x10] sm:$0xf]
      %v10337 = vld [vmem:[%s10331 + $0x14] sm:$0xf]
      %v10338 = vld [vmem:[%s10331 + $0x18] sm:$0xf]
      %v10339 = vld [vmem:[%s10331 + $0x1c] sm:$0xf]
      %v10340 = vunpack.c.l.b16 %v10232
      %v10341 = vunpack.c.l.b16 %v10246
      %v10342 = vunpack.c.l.b16 %v10260
      %v10343 = vunpack.c.l.b16 %v10274
      %v10344 = vunpack.c.l.b16 %v10288
      %v10345 = vunpack.c.l.b16 %v10302
      %v10346 = vunpack.c.l.b16 %v10316
      %v10347 = vunpack.c.l.b16 %v10330
      %v10348 = vpack.c.b16 %v10341, %v10340
      %v10349 = vpack.c.b16 %v10343, %v10342
      %v10350 = vpack.c.b16 %v10345, %v10344
      %v10351 = vpack.c.b16 %v10347, %v10346
      %v10360 = vunpack.c.l.b16 %v10332
      %v10361 = vunpack.c.l.b16 %v10333
      %v10362 = vunpack.c.l.b16 %v10334
      %v10363 = vunpack.c.l.b16 %v10335
      %v10364 = vunpack.c.l.b16 %v10336
      %v10365 = vunpack.c.l.b16 %v10337
      %v10366 = vunpack.c.l.b16 %v10338
      %v10367 = vunpack.c.l.b16 %v10339
      %v10368 = vpack.c.b16 %v10361, %v10360
      %v10369 = vpack.c.b16 %v10363, %v10362
      %v10370 = vpack.c.b16 %v10365, %v10364
      %v10371 = vpack.c.b16 %v10367, %v10366
      %v10377 = vsel %vm2072, %v10348, 0
      %v10380 = vsel %vm2072, %v10349, 0
      %v10383 = vsel %vm2072, %v10350, 0
      %v10386 = vsel %vm2072, %v10351, 0
      %10388 = vmatprep.subr.bf16.mxu0 0
      %10389 = vmatpush1.bf16.msra.mxu0 %v10368
      %10390 = vmatprep.subr.bf16.mxu0 0
      %10391 = vmatpush1.bf16.msra.mxu0 %v10369
      %10392 = vmatprep.subr.bf16.mxu0 0
      %10393 = vmatpush1.bf16.msra.mxu0 %v10370
      %10394 = vmatprep.subr.bf16.mxu0 0
      %10395 = vmatpush1.bf16.msra.mxu0 %v10371
      %10396 = vmatprep.subr.bf16.mxu0 0
      %10397 = vmatpush1.bf16.msra.mxu0 0
      %10398 = vmatprep.subr.bf16.mxu0 0
      %10399 = vmatpush1.bf16.msra.mxu0 0
      %10400 = vmatprep.subr.bf16.mxu0 0
      %10401 = vmatpush1.bf16.msra.mxu0 0
      %10402 = vmatprep.subr.bf16.mxu0 0
      %10403 = vmatpush1.bf16.msra.mxu0 0
      %10404 = vmatprep.subr.bf16.mxu0 0
      %10405 = vmatpush1.bf16.msra.mxu0 0
      %10406 = vmatprep.subr.bf16.mxu0 0
      %10407 = vmatpush1.bf16.msra.mxu0 0
      %10408 = vmatprep.subr.bf16.mxu0 0
      %10409 = vmatpush1.bf16.msra.mxu0 0
      %10410 = vmatprep.subr.bf16.mxu0 0
      %10411 = vmatpush1.bf16.msra.mxu0 0
      %10412 = vmatprep.subr.bf16.mxu0 0
      %10413 = vmatpush1.bf16.msra.mxu0 0
      %10414 = vmatprep.subr.bf16.mxu0 0
      %10415 = vmatpush1.bf16.msra.mxu0 0
      %10416 = vmatprep.subr.bf16.mxu0 0
      %10417 = vmatpush1.bf16.msra.mxu0 0
      %10418 = vmatprep.subr.bf16.mxu0 0
      %10419 = vmatpush1.bf16.msra.mxu0 0
      %10420 = vmatprep.mubr.bf16.mxu0 0
      %10421 = vmatmul.mubr.bf16.gmra.mrb[0].mxu0 %v10377
      %v10422 = vpop.f32.mrb[0].mxu0
      %v10423 = vadd.f32 0.0, %v10422
      %v10424 = vpop.f32.mrb[0].mxu0
      %v10425 = vpop.f32.mrb[0].mxu0
      %v10426 = vadd.f32 0.0, %v10425
      %v10427 = vpop.f32.mrb[0].mxu0
      %10428 = vmatprep.mubr.bf16.mxu0 0
      %10429 = vmatmul.mubr.bf16.gmra.mrb[0].mxu0 %v10380
      %v10430 = vpop.f32.mrb[0].mxu0
      %v10431 = vadd.f32 0.0, %v10430
      %v10432 = vpop.f32.mrb[0].mxu0
      %v10433 = vpop.f32.mrb[0].mxu0
      %v10434 = vadd.f32 0.0, %v10433
      %v10435 = vpop.f32.mrb[0].mxu0
      %10436 = vmatprep.mubr.bf16.mxu0 0
      %10437 = vmatmul.mubr.bf16.gmra.mrb[0].mxu0 %v10383
      %v10438 = vpop.f32.mrb[0].mxu0
      %v10439 = vadd.f32 0.0, %v10438
      %v10440 = vpop.f32.mrb[0].mxu0
      %v10441 = vpop.f32.mrb[0].mxu0
      %v10442 = vadd.f32 0.0, %v10441
      %v10443 = vpop.f32.mrb[0].mxu0
      %10444 = vmatprep.mubr.bf16.mxu0 0
      %10445 = vmatmul.mubr.bf16.gmra.mrb[0].mxu0 %v10386
      %v10446 = vpop.f32.mrb[0].mxu0
      %v10447 = vadd.f32 0.0, %v10446
      %v10448 = vpop.f32.mrb[0].mxu0
      %v10449 = vpop.f32.mrb[0].mxu0
      %v10450 = vadd.f32 0.0, %v10449
      %v10451 = vpop.f32.mrb[0].mxu0
      %10452 = vdwg.mxu0
      %v10453 = vadd.f32 %v10195, %v10423
      %v10454 = vadd.f32 %v10196, %v10426
      %v10455 = vadd.f32 %v10197, %v10431
      %v10456 = vadd.f32 %v10198, %v10434
      %v10457 = vadd.f32 %v10199, %v10439
      %v10458 = vadd.f32 %v10200, %v10442
      %v10459 = vadd.f32 %v10201, %v10447
      %v10460 = vadd.f32 %v10202, %v10450
      %v10461 = vld [vmem:[%s10056] sm:$0xe]
      %v10462 = vld [vmem:[%s10056 + $0x8] sm:$0xe]
      %v10463 = vld [vmem:[%s10056 + $0x10] sm:$0xe]
      %v10464 = vld [vmem:[%s10056 + $0x18] sm:$0xe]
      %v10465 = vld [vmem:[%s10056 + $0x20] sm:$0xe]
      %v10466 = vld [vmem:[%s10056 + $0x28] sm:$0xe]
      %v10467 = vld [vmem:[%s10056 + $0x30] sm:$0xe]
      %v10468 = vld [vmem:[%s10056 + $0x38] sm:$0xe]
      %v10485 = vrot.slane %v10461, 5
      %v10486 = vrot.slane %v10485, 4
      %v10487 = vrot.slane %v10204, 5
      %v10488 = vsel %vm2645, %v10486, %v10487
      %v10489 = vrot.slane %v10462, 5
      %v10490 = vrot.slane %v10489, 4
      %v10491 = vrot.slane %v10206, 5
      %v10492 = vsel %vm2645, %v10490, %v10491
      %v10493 = vrot.slane %v10463, 5
      %v10494 = vrot.slane %v10493, 4
      %v10495 = vrot.slane %v10208, 5
      %v10496 = vsel %vm2645, %v10494, %v10495
      %v10497 = vrot.slane %v10464, 5
      %v10498 = vrot.slane %v10497, 4
      %v10499 = vrot.slane %v10210, 5
      %v10500 = vsel %vm2645, %v10498, %v10499
      %v10501 = vrot.slane %v10465, 5
      %v10502 = vrot.slane %v10501, 4
      %v10503 = vrot.slane %v10212, 5
      %v10504 = vsel %vm2645, %v10502, %v10503
      %v10505 = vrot.slane %v10466, 5
      %v10506 = vrot.slane %v10505, 4
      %v10507 = vrot.slane %v10214, 5
      %v10508 = vsel %vm2645, %v10506, %v10507
      %v10509 = vrot.slane %v10467, 5
      %v10510 = vrot.slane %v10509, 4
      %v10511 = vrot.slane %v10216, 5
      %v10512 = vsel %vm2645, %v10510, %v10511
      %v10513 = vrot.slane %v10468, 5
      %v10514 = vrot.slane %v10513, 4
      %v10515 = vrot.slane %v10218, 5
      %v10516 = vsel %vm2645, %v10514, %v10515
      %s10517 = scalar_lea.vmem %s5, 256
      %v10518 = vld [vmem:[%s10517] sm:$0xf]
      %v10519 = vld [vmem:[%s10517 + $0x4] sm:$0xf]
      %v10520 = vld [vmem:[%s10517 + $0x8] sm:$0xf]
      %v10521 = vld [vmem:[%s10517 + $0xc] sm:$0xf]
      %v10522 = vld [vmem:[%s10517 + $0x10] sm:$0xf]
      %v10523 = vld [vmem:[%s10517 + $0x14] sm:$0xf]
      %v10524 = vld [vmem:[%s10517 + $0x18] sm:$0xf]
      %v10525 = vld [vmem:[%s10517 + $0x1c] sm:$0xf]
      %v10526 = vunpack.c.l.b16 %v10488
      %v10527 = vunpack.c.l.b16 %v10492
      %v10528 = vunpack.c.l.b16 %v10496
      %v10529 = vunpack.c.l.b16 %v10500
      %v10530 = vunpack.c.l.b16 %v10504
      %v10531 = vunpack.c.l.b16 %v10508
      %v10532 = vunpack.c.l.b16 %v10512
      %v10533 = vunpack.c.l.b16 %v10516
      %v10534 = vpack.c.b16 %v10527, %v10526
      %v10535 = vpack.c.b16 %v10529, %v10528
      %v10536 = vpack.c.b16 %v10531, %v10530
      %v10537 = vpack.c.b16 %v10533, %v10532
      %v10546 = vunpack.c.l.b16 %v10518
      %v10547 = vunpack.c.l.b16 %v10519
      %v10548 = vunpack.c.l.b16 %v10520
      %v10549 = vunpack.c.l.b16 %v10521
      %v10550 = vunpack.c.l.b16 %v10522
      %v10551 = vunpack.c.l.b16 %v10523
      %v10552 = vunpack.c.l.b16 %v10524
      %v10553 = vunpack.c.l.b16 %v10525
      %v10554 = vpack.c.b16 %v10547, %v10546
      %v10555 = vpack.c.b16 %v10549, %v10548
      %v10556 = vpack.c.b16 %v10551, %v10550
      %v10557 = vpack.c.b16 %v10553, %v10552
      %v10563 = vsel %vm2072, %v10534, 0
      %v10566 = vsel %vm2072, %v10535, 0
      %v10569 = vsel %vm2072, %v10536, 0
      %v10572 = vsel %vm2072, %v10537, 0
      %10574 = vmatprep.subr.bf16.mxu0 0
      %10575 = vmatpush1.bf16.msra.mxu0 %v10554
      %10576 = vmatprep.subr.bf16.mxu0 0
      %10577 = vmatpush1.bf16.msra.mxu0 %v10555
      %10578 = vmatprep.subr.bf16.mxu0 0
      %10579 = vmatpush1.bf16.msra.mxu0 %v10556
      %10580 = vmatprep.subr.bf16.mxu0 0
      %10581 = vmatpush1.bf16.msra.mxu0 %v10557
      %10582 = vmatprep.subr.bf16.mxu0 0
      %10583 = vmatpush1.bf16.msra.mxu0 0
      %10584 = vmatprep.subr.bf16.mxu0 0
      %10585 = vmatpush1.bf16.msra.mxu0 0
      %10586 = vmatprep.subr.bf16.mxu0 0
      %10587 = vmatpush1.bf16.msra.mxu0 0
      %10588 = vmatprep.subr.bf16.mxu0 0
      %10589 = vmatpush1.bf16.msra.mxu0 0
      %10590 = vmatprep.subr.bf16.mxu0 0
      %10591 = vmatpush1.bf16.msra.mxu0 0
      %10592 = vmatprep.subr.bf16.mxu0 0
      %10593 = vmatpush1.bf16.msra.mxu0 0
      %10594 = vmatprep.subr.bf16.mxu0 0
      %10595 = vmatpush1.bf16.msra.mxu0 0
      %10596 = vmatprep.subr.bf16.mxu0 0
      %10597 = vmatpush1.bf16.msra.mxu0 0
      %10598 = vmatprep.subr.bf16.mxu0 0
      %10599 = vmatpush1.bf16.msra.mxu0 0
      %10600 = vmatprep.subr.bf16.mxu0 0
      %10601 = vmatpush1.bf16.msra.mxu0 0
      %10602 = vmatprep.subr.bf16.mxu0 0
      %10603 = vmatpush1.bf16.msra.mxu0 0
      %10604 = vmatprep.subr.bf16.mxu0 0
      %10605 = vmatpush1.bf16.msra.mxu0 0
      %10606 = vmatprep.mubr.bf16.mxu0 0
      %10607 = vmatmul.mubr.bf16.gmra.mrb[0].mxu0 %v10563
      %v10608 = vpop.f32.mrb[0].mxu0
      %v10609 = vadd.f32 0.0, %v10608
      %v10610 = vpop.f32.mrb[0].mxu0
      %v10611 = vpop.f32.mrb[0].mxu0
      %v10612 = vadd.f32 0.0, %v10611
      %v10613 = vpop.f32.mrb[0].mxu0
      %10614 = vmatprep.mubr.bf16.mxu0 0
      %10615 = vmatmul.mubr.bf16.gmra.mrb[0].mxu0 %v10566
      %v10616 = vpop.f32.mrb[0].mxu0
      %v10617 = vadd.f32 0.0, %v10616
      %v10618 = vpop.f32.mrb[0].mxu0
      %v10619 = vpop.f32.mrb[0].mxu0
      %v10620 = vadd.f32 0.0, %v10619
      %v10621 = vpop.f32.mrb[0].mxu0
      %10622 = vmatprep.mubr.bf16.mxu0 0
      %10623 = vmatmul.mubr.bf16.gmra.mrb[0].mxu0 %v10569
      %v10624 = vpop.f32.mrb[0].mxu0
      %v10625 = vadd.f32 0.0, %v10624
      %v10626 = vpop.f32.mrb[0].mxu0
      %v10627 = vpop.f32.mrb[0].mxu0
      %v10628 = vadd.f32 0.0, %v10627
      %v10629 = vpop.f32.mrb[0].mxu0
      %10630 = vmatprep.mubr.bf16.mxu0 0
      %10631 = vmatmul.mubr.bf16.gmra.mrb[0].mxu0 %v10572
      %v10632 = vpop.f32.mrb[0].mxu0
      %v10633 = vadd.f32 0.0, %v10632
      %v10634 = vpop.f32.mrb[0].mxu0
      %v10635 = vpop.f32.mrb[0].mxu0
      %v10636 = vadd.f32 0.0, %v10635
      %v10637 = vpop.f32.mrb[0].mxu0
      %10638 = vdwg.mxu0
      %v10639 = vadd.f32 %v10453, %v10609
      %v10640 = vadd.f32 %v10454, %v10612
      %v10641 = vadd.f32 %v10455, %v10617
      %v10642 = vadd.f32 %v10456, %v10620
      %v10643 = vadd.f32 %v10457, %v10625
      %v10644 = vadd.f32 %v10458, %v10628
      %v10645 = vadd.f32 %v10459, %v10633
      %v10646 = vadd.f32 %v10460, %v10636
      %v10647 = vld [vmem:[%s6] sm:$0x1]
      %v10649 = vlaneseq
      %v10650 = vshrl.u32 %v10649, 7
      %v10651 = vsub.s32 0, %v10650
      %v10652 = vrot.slane %v10647, %v10651
      %v10654 = vadd.f32 %v10639, %v10652
      %v10655 = vadd.f32 %v10640, %v10652
      %v10656 = vadd.f32 %v10641, %v10652
      %v10657 = vadd.f32 %v10642, %v10652
      %v10658 = vadd.f32 %v10643, %v10652
      %v10659 = vadd.f32 %v10644, %v10652
      %v10660 = vadd.f32 %v10645, %v10652
      %v10661 = vadd.f32 %v10646, %v10652
      %v10662 = vmax.f32 %v10654, 0.0
      %v10663 = vmax.f32 %v10655, 0.0
      %v10664 = vmax.f32 %v10656, 0.0
      %v10665 = vmax.f32 %v10657, 0.0
      %v10666 = vmax.f32 %v10658, 0.0
      %v10667 = vmax.f32 %v10659, 0.0
      %v10668 = vmax.f32 %v10660, 0.0
      %v10669 = vmax.f32 %v10661, 0.0
      %v10670 = vpack.c.bf16 %v10662, %v10662
      %v10671 = vpack.c.bf16 %v10663, %v10663
      %v10672 = vpack.c.bf16 %v10664, %v10664
      %v10673 = vpack.c.bf16 %v10665, %v10665
      %v10674 = vpack.c.bf16 %v10666, %v10666
      %v10675 = vpack.c.bf16 %v10667, %v10667
      %v10676 = vpack.c.bf16 %v10668, %v10668
      %v10677 = vpack.c.bf16 %v10669, %v10669
      %10678 = vst [vmem:[%s445] sm:$0xf] %v10670
      %10679 = vst [vmem:[%s445 + $0x4] sm:$0xf] %v10671
      %10680 = vst [vmem:[%s445 + $0x8] sm:$0xf] %v10672
      %10681 = vst [vmem:[%s445 + $0xc] sm:$0xf] %v10673
      %10682 = vst [vmem:[%s445 + $0x10] sm:$0xf] %v10674
      %10683 = vst [vmem:[%s445 + $0x14] sm:$0xf] %v10675
      %10684 = vst [vmem:[%s445 + $0x18] sm:$0xf] %v10676
      %10685 = vst [vmem:[%s445 + $0x1c] sm:$0xf] %v10677
      %10686 = vst [vmem:[#allocation4] sm:$0xf] 0
      %10687 = vst [vmem:[#allocation4 + $0x4] sm:$0x1] 0
      %s10688 = scalar_lea.vmem [#allocation4], 72
      %10689 = vst [vmem:[%s10688] sm:$0xf] 0
      %10690 = vst [vmem:[%s10688 + $0x4] sm:$0x1] 0
      %vm10691 = vcmask 1040384
      %vm10692 = vmand %vm10691, %vm999
      %v10693 = vld [vmem:[#allocation4] sm:$0x1]
      %v10694 = vsel %vm10692, 0, %v10693
      %10695 = vst [vmem:[#allocation4] sm:$0x1] %v10694
      %v10696 = vld [vmem:[#allocation4 + $0x8] sm:$0x1]
      %v10697 = vsel %vm10692, 0, %v10696
      %10698 = vst [vmem:[#allocation4 + $0x8] sm:$0x1] %v10697
      %v10699 = vld [vmem:[#allocation4 + $0x10] sm:$0x1]
      %v10700 = vsel %vm10692, 0, %v10699
      %10701 = vst [vmem:[#allocation4 + $0x10] sm:$0x1] %v10700
      %v10702 = vld [vmem:[#allocation4 + $0x18] sm:$0x1]
      %v10703 = vsel %vm10692, 0, %v10702
      %10704 = vst [vmem:[#allocation4 + $0x18] sm:$0x1] %v10703
      %v10705 = vld [vmem:[#allocation4 + $0x20] sm:$0x1]
      %v10706 = vsel %vm10692, 0, %v10705
      %10707 = vst [vmem:[#allocation4 + $0x20] sm:$0x1] %v10706
      %v10708 = vld [vmem:[#allocation4 + $0x28] sm:$0x1]
      %v10709 = vsel %vm10692, 0, %v10708
      %10710 = vst [vmem:[#allocation4 + $0x28] sm:$0x1] %v10709
      %v10711 = vld [vmem:[#allocation4 + $0x30] sm:$0x1]
      %v10712 = vsel %vm10692, 0, %v10711
      %10713 = vst [vmem:[#allocation4 + $0x30] sm:$0x1] %v10712
      %v10714 = vld [vmem:[#allocation4 + $0x38] sm:$0x1]
      %v10715 = vsel %vm10692, 0, %v10714
      %10716 = vst [vmem:[#allocation4 + $0x38] sm:$0x1] %v10715
      %v10717 = vld [vmem:[#allocation4 + $0x40] sm:$0x1]
      %v10718 = vsel %vm10692, 0, %v10717
      %10719 = vst [vmem:[#allocation4 + $0x40] sm:$0x1] %v10718
      %v10720 = vld [vmem:[#allocation4 + $0x48] sm:$0x1]
      %v10721 = vsel %vm10692, 0, %v10720
      %10722 = vst [vmem:[#allocation4 + $0x48] sm:$0x1] %v10721
      %vm10723 = vmand %vm10691, %vm1055
      %v10724 = vld [vmem:[#allocation4 + $0x4] sm:$0x1]
      %v10725 = vsel %vm10723, 0, %v10724
      %10726 = vst [vmem:[#allocation4 + $0x4] sm:$0x1] %v10725
      %v10727 = vld [vmem:[#allocation4 + $0xc] sm:$0x1]
      %v10728 = vsel %vm10723, 0, %v10727
      %10729 = vst [vmem:[#allocation4 + $0xc] sm:$0x1] %v10728
      %v10730 = vld [vmem:[#allocation4 + $0x14] sm:$0x1]
      %v10731 = vsel %vm10723, 0, %v10730
      %10732 = vst [vmem:[#allocation4 + $0x14] sm:$0x1] %v10731
      %v10733 = vld [vmem:[#allocation4 + $0x1c] sm:$0x1]
      %v10734 = vsel %vm10723, 0, %v10733
      %10735 = vst [vmem:[#allocation4 + $0x1c] sm:$0x1] %v10734
      %v10736 = vld [vmem:[#allocation4 + $0x24] sm:$0x1]
      %v10737 = vsel %vm10723, 0, %v10736
      %10738 = vst [vmem:[#allocation4 + $0x24] sm:$0x1] %v10737
      %v10739 = vld [vmem:[#allocation4 + $0x2c] sm:$0x1]
      %v10740 = vsel %vm10723, 0, %v10739
      %10741 = vst [vmem:[#allocation4 + $0x2c] sm:$0x1] %v10740
      %v10742 = vld [vmem:[#allocation4 + $0x34] sm:$0x1]
      %v10743 = vsel %vm10723, 0, %v10742
      %10744 = vst [vmem:[#allocation4 + $0x34] sm:$0x1] %v10743
      %v10745 = vld [vmem:[#allocation4 + $0x3c] sm:$0x1]
      %v10746 = vsel %vm10723, 0, %v10745
      %10747 = vst [vmem:[#allocation4 + $0x3c] sm:$0x1] %v10746
      %v10748 = vld [vmem:[#allocation4 + $0x44] sm:$0x1]
      %v10749 = vsel %vm10723, 0, %v10748
      %10750 = vst [vmem:[#allocation4 + $0x44] sm:$0x1] %v10749
      %v10751 = vld [vmem:[#allocation4 + $0x4c] sm:$0x1]
      %v10752 = vsel %vm10723, 0, %v10751
      %10753 = vst [vmem:[#allocation4 + $0x4c] sm:$0x1] %v10752
      %v10762 = vunpack.c.l.b16 %v10670
      %v10763 = vunpack.c.l.b16 %v10671
      %v10764 = vunpack.c.l.b16 %v10672
      %v10765 = vunpack.c.l.b16 %v10673
      %v10766 = vunpack.c.l.b16 %v10674
      %v10767 = vunpack.c.l.b16 %v10675
      %v10768 = vunpack.c.l.b16 %v10676
      %v10769 = vunpack.c.l.b16 %v10677
      %v10770 = vpack.c.b16 %v10762, %v10762
      %v10771 = vpack.c.b16 %v10763, %v10763
      %v10772 = vpack.c.b16 %v10764, %v10764
      %v10773 = vpack.c.b16 %v10765, %v10765
      %v10774 = vpack.c.b16 %v10766, %v10766
      %v10775 = vpack.c.b16 %v10767, %v10767
      %v10776 = vpack.c.b16 %v10768, %v10768
      %v10777 = vpack.c.b16 %v10769, %v10769
      %v10779 = vshrl.u32 %v10770, 16
      %v10781 = vrot.slane %v10779, 7
      %v10782 = vshll.u32 %v10770, 16
      %v10784 = vor.u32 %v10781, %v10782
      %v10785 = vrot.slane %v10781, 4
      %v10787 = vshrl.u32 %v10771, 16
      %v10789 = vrot.slane %v10787, 7
      %v10790 = vshll.u32 %v10771, 16
      %v10792 = vor.u32 %v10789, %v10790
      %v10793 = vrot.slane %v10789, 4
      %v10795 = vshrl.u32 %v10772, 16
      %v10797 = vrot.slane %v10795, 7
      %v10798 = vshll.u32 %v10772, 16
      %v10800 = vor.u32 %v10797, %v10798
      %v10801 = vrot.slane %v10797, 4
      %v10803 = vshrl.u32 %v10773, 16
      %v10805 = vrot.slane %v10803, 7
      %v10806 = vshll.u32 %v10773, 16
      %v10808 = vor.u32 %v10805, %v10806
      %v10809 = vrot.slane %v10805, 4
      %v10811 = vshrl.u32 %v10774, 16
      %v10813 = vrot.slane %v10811, 7
      %v10814 = vshll.u32 %v10774, 16
      %v10816 = vor.u32 %v10813, %v10814
      %v10817 = vrot.slane %v10813, 4
      %v10819 = vshrl.u32 %v10775, 16
      %v10821 = vrot.slane %v10819, 7
      %v10822 = vshll.u32 %v10775, 16
      %v10824 = vor.u32 %v10821, %v10822
      %v10825 = vrot.slane %v10821, 4
      %v10827 = vshrl.u32 %v10776, 16
      %v10829 = vrot.slane %v10827, 7
      %v10830 = vshll.u32 %v10776, 16
      %v10832 = vor.u32 %v10829, %v10830
      %v10833 = vrot.slane %v10829, 4
      %v10835 = vshrl.u32 %v10777, 16
      %v10837 = vrot.slane %v10835, 7
      %v10838 = vshll.u32 %v10777, 16
      %v10840 = vor.u32 %v10837, %v10838
      %v10841 = vrot.slane %v10837, 4
      %s10858 = scalar_lea.vmem [#allocation4], 8
      %vm10859 = vcmask 1043456
      %vm10860 = vmand %vm10859, %vm1055
      %v10861 = vld [vmem:[%s10858] sm:$0xf]
      %v10862 = vsel %vm10860, %v10784, %v10861
      %10863 = vst [vmem:[%s10858] sm:$0xf] %v10862
      %v10864 = vld [vmem:[%s10858 + $0x4] sm:$0x1]
      %v10865 = vsel %vm10692, %v10785, %v10864
      %10866 = vst [vmem:[%s10858 + $0x4] sm:$0x1] %v10865
      %v10867 = vld [vmem:[%s10858 + $0x8] sm:$0xf]
      %v10868 = vsel %vm10860, %v10792, %v10867
      %10869 = vst [vmem:[%s10858 + $0x8] sm:$0xf] %v10868
      %v10870 = vld [vmem:[%s10858 + $0xc] sm:$0x1]
      %v10871 = vsel %vm10692, %v10793, %v10870
      %10872 = vst [vmem:[%s10858 + $0xc] sm:$0x1] %v10871
      %v10873 = vld [vmem:[%s10858 + $0x10] sm:$0xf]
      %v10874 = vsel %vm10860, %v10800, %v10873
      %10875 = vst [vmem:[%s10858 + $0x10] sm:$0xf] %v10874
      %v10876 = vld [vmem:[%s10858 + $0x14] sm:$0x1]
      %v10877 = vsel %vm10692, %v10801, %v10876
      %10878 = vst [vmem:[%s10858 + $0x14] sm:$0x1] %v10877
      %v10879 = vld [vmem:[%s10858 + $0x18] sm:$0xf]
      %v10880 = vsel %vm10860, %v10808, %v10879
      %10881 = vst [vmem:[%s10858 + $0x18] sm:$0xf] %v10880
      %v10882 = vld [vmem:[%s10858 + $0x1c] sm:$0x1]
      %v10883 = vsel %vm10692, %v10809, %v10882
      %10884 = vst [vmem:[%s10858 + $0x1c] sm:$0x1] %v10883
      %v10885 = vld [vmem:[%s10858 + $0x20] sm:$0xf]
      %v10886 = vsel %vm10860, %v10816, %v10885
      %10887 = vst [vmem:[%s10858 + $0x20] sm:$0xf] %v10886
      %v10888 = vld [vmem:[%s10858 + $0x24] sm:$0x1]
      %v10889 = vsel %vm10692, %v10817, %v10888
      %10890 = vst [vmem:[%s10858 + $0x24] sm:$0x1] %v10889
      %v10891 = vld [vmem:[%s10858 + $0x28] sm:$0xf]
      %v10892 = vsel %vm10860, %v10824, %v10891
      %10893 = vst [vmem:[%s10858 + $0x28] sm:$0xf] %v10892
      %v10894 = vld [vmem:[%s10858 + $0x2c] sm:$0x1]
      %v10895 = vsel %vm10692, %v10825, %v10894
      %10896 = vst [vmem:[%s10858 + $0x2c] sm:$0x1] %v10895
      %v10897 = vld [vmem:[%s10858 + $0x30] sm:$0xf]
      %v10898 = vsel %vm10860, %v10832, %v10897
      %10899 = vst [vmem:[%s10858 + $0x30] sm:$0xf] %v10898
      %v10900 = vld [vmem:[%s10858 + $0x34] sm:$0x1]
      %v10901 = vsel %vm10692, %v10833, %v10900
      %10902 = vst [vmem:[%s10858 + $0x34] sm:$0x1] %v10901
      %v10903 = vld [vmem:[%s10858 + $0x38] sm:$0xf]
      %v10904 = vsel %vm10860, %v10840, %v10903
      %10905 = vst [vmem:[%s10858 + $0x38] sm:$0xf] %v10904
      %v10906 = vld [vmem:[%s10858 + $0x3c] sm:$0x1]
      %v10907 = vsel %vm10692, %v10841, %v10906
      %10908 = vst [vmem:[%s10858 + $0x3c] sm:$0x1] %v10907
      %v10909 = vld [vmem:[#allocation4] sm:$0xf]
      %v10910 = vld [vmem:[#allocation4 + $0x8] sm:$0xf]
      %v10911 = vld [vmem:[#allocation4 + $0x10] sm:$0xf]
      %v10912 = vld [vmem:[#allocation4 + $0x18] sm:$0xf]
      %v10913 = vld [vmem:[#allocation4 + $0x20] sm:$0xf]
      %v10914 = vld [vmem:[#allocation4 + $0x28] sm:$0xf]
      %v10915 = vld [vmem:[#allocation4 + $0x30] sm:$0xf]
      %v10916 = vld [vmem:[#allocation4 + $0x38] sm:$0xf]
      %v10917 = vld [vmem:[%s7] sm:$0xf]
      %v10918 = vld [vmem:[%s7 + $0x4] sm:$0xf]
      %v10919 = vld [vmem:[%s7 + $0x8] sm:$0xf]
      %v10920 = vld [vmem:[%s7 + $0xc] sm:$0xf]
      %v10921 = vld [vmem:[%s7 + $0x10] sm:$0xf]
      %v10922 = vld [vmem:[%s7 + $0x14] sm:$0xf]
      %v10923 = vld [vmem:[%s7 + $0x18] sm:$0xf]
      %v10924 = vld [vmem:[%s7 + $0x1c] sm:$0xf]
      %v10925 = vld [vmem:[%s7 + $0x20] sm:$0xf]
      %v10926 = vld [vmem:[%s7 + $0x24] sm:$0xf]
      %v10927 = vld [vmem:[%s7 + $0x28] sm:$0xf]
      %v10928 = vld [vmem:[%s7 + $0x2c] sm:$0xf]
      %v10929 = vld [vmem:[%s7 + $0x30] sm:$0xf]
      %v10930 = vld [vmem:[%s7 + $0x34] sm:$0xf]
      %v10931 = vld [vmem:[%s7 + $0x38] sm:$0xf]
      %v10932 = vld [vmem:[%s7 + $0x3c] sm:$0xf]
      %v10933 = vld [vmem:[#allocation4 + $0x4] sm:$0x1]
      %v10934 = vld [vmem:[#allocation4 + $0xc] sm:$0x1]
      %v10935 = vld [vmem:[#allocation4 + $0x14] sm:$0x1]
      %v10936 = vld [vmem:[#allocation4 + $0x1c] sm:$0x1]
      %v10937 = vld [vmem:[#allocation4 + $0x24] sm:$0x1]
      %v10938 = vld [vmem:[#allocation4 + $0x2c] sm:$0x1]
      %v10939 = vld [vmem:[#allocation4 + $0x34] sm:$0x1]
      %v10940 = vld [vmem:[#allocation4 + $0x3c] sm:$0x1]
      %v10942 = vshrl.u32 %v10909, 16
      %v10944 = vrot.slane %v10942, 4
      %v10945 = vshll.u32 %v10909, 16
      %v10947 = vrot.slane %v10945, 5
      %v10948 = vor.u32 %v10944, %v10947
      %v10949 = vrot.slane %v10948, 4
      %v10951 = vshll.u32 %v10933, 16
      %v10953 = vrot.slane %v10951, 5
      %v10954 = vsel %vm1606, %v10949, %v10953
      %v10956 = vshrl.u32 %v10910, 16
      %v10958 = vrot.slane %v10956, 4
      %v10959 = vshll.u32 %v10910, 16
      %v10961 = vrot.slane %v10959, 5
      %v10962 = vor.u32 %v10958, %v10961
      %v10963 = vrot.slane %v10962, 4
      %v10965 = vshll.u32 %v10934, 16
      %v10967 = vrot.slane %v10965, 5
      %v10968 = vsel %vm1606, %v10963, %v10967
      %v10970 = vshrl.u32 %v10911, 16
      %v10972 = vrot.slane %v10970, 4
      %v10973 = vshll.u32 %v10911, 16
      %v10975 = vrot.slane %v10973, 5
      %v10976 = vor.u32 %v10972, %v10975
      %v10977 = vrot.slane %v10976, 4
      %v10979 = vshll.u32 %v10935, 16
      %v10981 = vrot.slane %v10979, 5
      %v10982 = vsel %vm1606, %v10977, %v10981
      %v10984 = vshrl.u32 %v10912, 16
      %v10986 = vrot.slane %v10984, 4
      %v10987 = vshll.u32 %v10912, 16
      %v10989 = vrot.slane %v10987, 5
      %v10990 = vor.u32 %v10986, %v10989
      %v10991 = vrot.slane %v10990, 4
      %v10993 = vshll.u32 %v10936, 16
      %v10995 = vrot.slane %v10993, 5
      %v10996 = vsel %vm1606, %v10991, %v10995
      %v10998 = vshrl.u32 %v10913, 16
      %v11000 = vrot.slane %v10998, 4
      %v11001 = vshll.u32 %v10913, 16
      %v11003 = vrot.slane %v11001, 5
      %v11004 = vor.u32 %v11000, %v11003
      %v11005 = vrot.slane %v11004, 4
      %v11007 = vshll.u32 %v10937, 16
      %v11009 = vrot.slane %v11007, 5
      %v11010 = vsel %vm1606, %v11005, %v11009
      %v11012 = vshrl.u32 %v10914, 16
      %v11014 = vrot.slane %v11012, 4
      %v11015 = vshll.u32 %v10914, 16
      %v11017 = vrot.slane %v11015, 5
      %v11018 = vor.u32 %v11014, %v11017
      %v11019 = vrot.slane %v11018, 4
      %v11021 = vshll.u32 %v10938, 16
      %v11023 = vrot.slane %v11021, 5
      %v11024 = vsel %vm1606, %v11019, %v11023
      %v11026 = vshrl.u32 %v10915, 16
      %v11028 = vrot.slane %v11026, 4
      %v11029 = vshll.u32 %v10915, 16
      %v11031 = vrot.slane %v11029, 5
      %v11032 = vor.u32 %v11028, %v11031
      %v11033 = vrot.slane %v11032, 4
      %v11035 = vshll.u32 %v10939, 16
      %v11037 = vrot.slane %v11035, 5
      %v11038 = vsel %vm1606, %v11033, %v11037
      %v11040 = vshrl.u32 %v10916, 16
      %v11042 = vrot.slane %v11040, 4
      %v11043 = vshll.u32 %v10916, 16
      %v11045 = vrot.slane %v11043, 5
      %v11046 = vor.u32 %v11042, %v11045
      %v11047 = vrot.slane %v11046, 4
      %v11049 = vshll.u32 %v10940, 16
      %v11051 = vrot.slane %v11049, 5
      %v11052 = vsel %vm1606, %v11047, %v11051
      %s11053 = scalar_lea.vmem %s7, 64
      %v11054 = vld [vmem:[%s11053] sm:$0xf]
      %v11055 = vld [vmem:[%s11053 + $0x4] sm:$0xf]
      %v11056 = vld [vmem:[%s11053 + $0x8] sm:$0xf]
      %v11057 = vld [vmem:[%s11053 + $0xc] sm:$0xf]
      %v11058 = vld [vmem:[%s11053 + $0x10] sm:$0xf]
      %v11059 = vld [vmem:[%s11053 + $0x14] sm:$0xf]
      %v11060 = vld [vmem:[%s11053 + $0x18] sm:$0xf]
      %v11061 = vld [vmem:[%s11053 + $0x1c] sm:$0xf]
      %v11062 = vld [vmem:[%s11053 + $0x20] sm:$0xf]
      %v11063 = vld [vmem:[%s11053 + $0x24] sm:$0xf]
      %v11064 = vld [vmem:[%s11053 + $0x28] sm:$0xf]
      %v11065 = vld [vmem:[%s11053 + $0x2c] sm:$0xf]
      %v11066 = vld [vmem:[%s11053 + $0x30] sm:$0xf]
      %v11067 = vld [vmem:[%s11053 + $0x34] sm:$0xf]
      %v11068 = vld [vmem:[%s11053 + $0x38] sm:$0xf]
      %v11069 = vld [vmem:[%s11053 + $0x3c] sm:$0xf]
      %v11070 = vunpack.c.l.b16 %v10954
      %v11071 = vunpack.c.l.b16 %v10968
      %v11072 = vunpack.c.l.b16 %v10982
      %v11073 = vunpack.c.l.b16 %v10996
      %v11074 = vunpack.c.l.b16 %v11010
      %v11075 = vunpack.c.l.b16 %v11024
      %v11076 = vunpack.c.l.b16 %v11038
      %v11077 = vunpack.c.l.b16 %v11052
      %v11078 = vpack.c.b16 %v11071, %v11070
      %v11079 = vpack.c.b16 %v11073, %v11072
      %v11080 = vpack.c.b16 %v11075, %v11074
      %v11081 = vpack.c.b16 %v11077, %v11076
      %v11102 = vunpack.c.l.b16 %v11054
      %v11103 = vunpack.c.l.b16 %v11055
      %v11104 = vunpack.c.l.b16 %v11056
      %v11105 = vunpack.c.l.b16 %v11057
      %v11106 = vunpack.c.l.b16 %v11058
      %v11107 = vunpack.c.l.b16 %v11059
      %v11108 = vunpack.c.l.b16 %v11060
      %v11109 = vunpack.c.l.b16 %v11061
      %v11110 = vunpack.c.l.b16 %v11062
      %v11111 = vunpack.c.l.b16 %v11063
      %v11112 = vunpack.c.l.b16 %v11064
      %v11113 = vunpack.c.l.b16 %v11065
      %v11114 = vunpack.c.l.b16 %v11066
      %v11115 = vunpack.c.l.b16 %v11067
      %v11116 = vunpack.c.l.b16 %v11068
      %v11117 = vunpack.c.l.b16 %v11069
      %v11118 = vpack.c.b16 %v11103, %v11102
      %v11119 = vpack.c.b16 %v11105, %v11104
      %v11120 = vpack.c.b16 %v11107, %v11106
      %v11121 = vpack.c.b16 %v11109, %v11108
      %v11122 = vpack.c.b16 %v11111, %v11110
      %v11123 = vpack.c.b16 %v11113, %v11112
      %v11124 = vpack.c.b16 %v11115, %v11114
      %v11125 = vpack.c.b16 %v11117, %v11116
      %11134 = vmatprep.subr.bf16.mxu0 0
      %11135 = vmatpush1.bf16.msra.mxu0 %v11118
      %11136 = vmatprep.subr.bf16.mxu0 0
      %11137 = vmatpush1.bf16.msra.mxu0 %v11119
      %11138 = vmatprep.subr.bf16.mxu0 0
      %11139 = vmatpush1.bf16.msra.mxu0 %v11120
      %11140 = vmatprep.subr.bf16.mxu0 0
      %11141 = vmatpush1.bf16.msra.mxu0 %v11121
      %11142 = vmatprep.subr.bf16.mxu0 0
      %11143 = vmatpush1.bf16.msra.mxu0 %v11122
      %11144 = vmatprep.subr.bf16.mxu0 0
      %11145 = vmatpush1.bf16.msra.mxu0 %v11123
      %11146 = vmatprep.subr.bf16.mxu0 0
      %11147 = vmatpush1.bf16.msra.mxu0 %v11124
      %11148 = vmatprep.subr.bf16.mxu0 0
      %11149 = vmatpush1.bf16.msra.mxu0 %v11125
      %11150 = vmatprep.subr.bf16.mxu0 0
      %11151 = vmatpush1.bf16.msra.mxu0 0
      %11152 = vmatprep.subr.bf16.mxu0 0
      %11153 = vmatpush1.bf16.msra.mxu0 0
      %11154 = vmatprep.subr.bf16.mxu0 0
      %11155 = vmatpush1.bf16.msra.mxu0 0
      %11156 = vmatprep.subr.bf16.mxu0 0
      %11157 = vmatpush1.bf16.msra.mxu0 0
      %11158 = vmatprep.subr.bf16.mxu0 0
      %11159 = vmatpush1.bf16.msra.mxu0 0
      %11160 = vmatprep.subr.bf16.mxu0 0
      %11161 = vmatpush1.bf16.msra.mxu0 0
      %11162 = vmatprep.subr.bf16.mxu0 0
      %11163 = vmatpush1.bf16.msra.mxu0 0
      %11164 = vmatprep.subr.bf16.mxu0 0
      %11165 = vmatpush1.bf16.msra.mxu0 0
      %11166 = vmatprep.mubr.bf16.mxu0 0
      %11167 = vmatmul.mubr.bf16.gmra.mrb[0].mxu0 %v11078
      %v11168 = vpop.f32.mrb[0].mxu0
      %v11169 = vadd.f32 0.0, %v11168
      %v11170 = vpop.f32.mrb[0].mxu0
      %v11171 = vpop.f32.mrb[0].mxu0
      %v11172 = vadd.f32 0.0, %v11171
      %v11173 = vpop.f32.mrb[0].mxu0
      %11174 = vmatprep.mubr.bf16.mxu0 0
      %11175 = vmatmul.mubr.bf16.gmra.mrb[0].mxu0 %v11079
      %v11176 = vpop.f32.mrb[0].mxu0
      %v11177 = vadd.f32 0.0, %v11176
      %v11178 = vpop.f32.mrb[0].mxu0
      %v11179 = vpop.f32.mrb[0].mxu0
      %v11180 = vadd.f32 0.0, %v11179
      %v11181 = vpop.f32.mrb[0].mxu0
      %11182 = vmatprep.mubr.bf16.mxu0 0
      %11183 = vmatmul.mubr.bf16.gmra.mrb[0].mxu0 %v11080
      %v11184 = vpop.f32.mrb[0].mxu0
      %v11185 = vadd.f32 0.0, %v11184
      %v11186 = vpop.f32.mrb[0].mxu0
      %v11187 = vpop.f32.mrb[0].mxu0
      %v11188 = vadd.f32 0.0, %v11187
      %v11189 = vpop.f32.mrb[0].mxu0
      %11190 = vmatprep.mubr.bf16.mxu0 0
      %11191 = vmatmul.mubr.bf16.gmra.mrb[0].mxu0 %v11081
      %v11192 = vpop.f32.mrb[0].mxu0
      %v11193 = vadd.f32 0.0, %v11192
      %v11194 = vpop.f32.mrb[0].mxu0
      %v11195 = vpop.f32.mrb[0].mxu0
      %v11196 = vadd.f32 0.0, %v11195
      %v11197 = vpop.f32.mrb[0].mxu0
      %11198 = vdwg.mxu0
      %v11207 = vunpack.c.l.b16 %v10909
      %v11208 = vunpack.c.l.b16 %v10910
      %v11209 = vunpack.c.l.b16 %v10911
      %v11210 = vunpack.c.l.b16 %v10912
      %v11211 = vunpack.c.l.b16 %v10913
      %v11212 = vunpack.c.l.b16 %v10914
      %v11213 = vunpack.c.l.b16 %v10915
      %v11214 = vunpack.c.l.b16 %v10916
      %v11215 = vpack.c.b16 %v11208, %v11207
      %v11216 = vpack.c.b16 %v11210, %v11209
      %v11217 = vpack.c.b16 %v11212, %v11211
      %v11218 = vpack.c.b16 %v11214, %v11213
      %v11239 = vunpack.c.l.b16 %v10917
      %v11240 = vunpack.c.l.b16 %v10918
      %v11241 = vunpack.c.l.b16 %v10919
      %v11242 = vunpack.c.l.b16 %v10920
      %v11243 = vunpack.c.l.b16 %v10921
      %v11244 = vunpack.c.l.b16 %v10922
      %v11245 = vunpack.c.l.b16 %v10923
      %v11246 = vunpack.c.l.b16 %v10924
      %v11247 = vunpack.c.l.b16 %v10925
      %v11248 = vunpack.c.l.b16 %v10926
      %v11249 = vunpack.c.l.b16 %v10927
      %v11250 = vunpack.c.l.b16 %v10928
      %v11251 = vunpack.c.l.b16 %v10929
      %v11252 = vunpack.c.l.b16 %v10930
      %v11253 = vunpack.c.l.b16 %v10931
      %v11254 = vunpack.c.l.b16 %v10932
      %v11255 = vpack.c.b16 %v11240, %v11239
      %v11256 = vpack.c.b16 %v11242, %v11241
      %v11257 = vpack.c.b16 %v11244, %v11243
      %v11258 = vpack.c.b16 %v11246, %v11245
      %v11259 = vpack.c.b16 %v11248, %v11247
      %v11260 = vpack.c.b16 %v11250, %v11249
      %v11261 = vpack.c.b16 %v11252, %v11251
      %v11262 = vpack.c.b16 %v11254, %v11253
      %11271 = vmatprep.subr.bf16.mxu0 0
      %11272 = vmatpush1.bf16.msra.mxu0 %v11255
      %11273 = vmatprep.subr.bf16.mxu0 0
      %11274 = vmatpush1.bf16.msra.mxu0 %v11256
      %11275 = vmatprep.subr.bf16.mxu0 0
      %11276 = vmatpush1.bf16.msra.mxu0 %v11257
      %11277 = vmatprep.subr.bf16.mxu0 0
      %11278 = vmatpush1.bf16.msra.mxu0 %v11258
      %11279 = vmatprep.subr.bf16.mxu0 0
      %11280 = vmatpush1.bf16.msra.mxu0 %v11259
      %11281 = vmatprep.subr.bf16.mxu0 0
      %11282 = vmatpush1.bf16.msra.mxu0 %v11260
      %11283 = vmatprep.subr.bf16.mxu0 0
      %11284 = vmatpush1.bf16.msra.mxu0 %v11261
      %11285 = vmatprep.subr.bf16.mxu0 0
      %11286 = vmatpush1.bf16.msra.mxu0 %v11262
      %11287 = vmatprep.subr.bf16.mxu0 0
      %11288 = vmatpush1.bf16.msra.mxu0 0
      %11289 = vmatprep.subr.bf16.mxu0 0
      %11290 = vmatpush1.bf16.msra.mxu0 0
      %11291 = vmatprep.subr.bf16.mxu0 0
      %11292 = vmatpush1.bf16.msra.mxu0 0
      %11293 = vmatprep.subr.bf16.mxu0 0
      %11294 = vmatpush1.bf16.msra.mxu0 0
      %11295 = vmatprep.subr.bf16.mxu0 0
      %11296 = vmatpush1.bf16.msra.mxu0 0
      %11297 = vmatprep.subr.bf16.mxu0 0
      %11298 = vmatpush1.bf16.msra.mxu0 0
      %11299 = vmatprep.subr.bf16.mxu0 0
      %11300 = vmatpush1.bf16.msra.mxu0 0
      %11301 = vmatprep.subr.bf16.mxu0 0
      %11302 = vmatpush1.bf16.msra.mxu0 0
      %11303 = vmatprep.mubr.bf16.mxu0 0
      %11304 = vmatmul.mubr.bf16.gmra.mrb[0].mxu0 %v11215
      %v11305 = vpop.f32.mrb[0].mxu0
      %v11306 = vadd.f32 %v11169, %v11305
      %v11307 = vpop.f32.mrb[0].mxu0
      %v11308 = vpop.f32.mrb[0].mxu0
      %v11309 = vadd.f32 %v11172, %v11308
      %v11310 = vpop.f32.mrb[0].mxu0
      %11311 = vmatprep.mubr.bf16.mxu0 0
      %11312 = vmatmul.mubr.bf16.gmra.mrb[0].mxu0 %v11216
      %v11313 = vpop.f32.mrb[0].mxu0
      %v11314 = vadd.f32 %v11177, %v11313
      %v11315 = vpop.f32.mrb[0].mxu0
      %v11316 = vpop.f32.mrb[0].mxu0
      %v11317 = vadd.f32 %v11180, %v11316
      %v11318 = vpop.f32.mrb[0].mxu0
      %11319 = vmatprep.mubr.bf16.mxu0 0
      %11320 = vmatmul.mubr.bf16.gmra.mrb[0].mxu0 %v11217
      %v11321 = vpop.f32.mrb[0].mxu0
      %v11322 = vadd.f32 %v11185, %v11321
      %v11323 = vpop.f32.mrb[0].mxu0
      %v11324 = vpop.f32.mrb[0].mxu0
      %v11325 = vadd.f32 %v11188, %v11324
      %v11326 = vpop.f32.mrb[0].mxu0
      %11327 = vmatprep.mubr.bf16.mxu0 0
      %11328 = vmatmul.mubr.bf16.gmra.mrb[0].mxu0 %v11218
      %v11329 = vpop.f32.mrb[0].mxu0
      %v11330 = vadd.f32 %v11193, %v11329
      %v11331 = vpop.f32.mrb[0].mxu0
      %v11332 = vpop.f32.mrb[0].mxu0
      %v11333 = vadd.f32 %v11196, %v11332
      %v11334 = vpop.f32.mrb[0].mxu0
      %11335 = vdwg.mxu0
      %v11336 = vld [vmem:[#allocation4] sm:$0xe]
      %v11337 = vld [vmem:[#allocation4 + $0x8] sm:$0xe]
      %v11338 = vld [vmem:[#allocation4 + $0x10] sm:$0xe]
      %v11339 = vld [vmem:[#allocation4 + $0x18] sm:$0xe]
      %v11340 = vld [vmem:[#allocation4 + $0x20] sm:$0xe]
      %v11341 = vld [vmem:[#allocation4 + $0x28] sm:$0xe]
      %v11342 = vld [vmem:[#allocation4 + $0x30] sm:$0xe]
      %v11343 = vld [vmem:[#allocation4 + $0x38] sm:$0xe]
      %v11360 = vrot.slane %v11336, 5
      %v11361 = vrot.slane %v11360, 4
      %v11362 = vrot.slane %v10933, 5
      %v11363 = vsel %vm2645, %v11361, %v11362
      %v11364 = vrot.slane %v11337, 5
      %v11365 = vrot.slane %v11364, 4
      %v11366 = vrot.slane %v10934, 5
      %v11367 = vsel %vm2645, %v11365, %v11366
      %v11368 = vrot.slane %v11338, 5
      %v11369 = vrot.slane %v11368, 4
      %v11370 = vrot.slane %v10935, 5
      %v11371 = vsel %vm2645, %v11369, %v11370
      %v11372 = vrot.slane %v11339, 5
      %v11373 = vrot.slane %v11372, 4
      %v11374 = vrot.slane %v10936, 5
      %v11375 = vsel %vm2645, %v11373, %v11374
      %v11376 = vrot.slane %v11340, 5
      %v11377 = vrot.slane %v11376, 4
      %v11378 = vrot.slane %v10937, 5
      %v11379 = vsel %vm2645, %v11377, %v11378
      %v11380 = vrot.slane %v11341, 5
      %v11381 = vrot.slane %v11380, 4
      %v11382 = vrot.slane %v10938, 5
      %v11383 = vsel %vm2645, %v11381, %v11382
      %v11384 = vrot.slane %v11342, 5
      %v11385 = vrot.slane %v11384, 4
      %v11386 = vrot.slane %v10939, 5
      %v11387 = vsel %vm2645, %v11385, %v11386
      %v11388 = vrot.slane %v11343, 5
      %v11389 = vrot.slane %v11388, 4
      %v11390 = vrot.slane %v10940, 5
      %v11391 = vsel %vm2645, %v11389, %v11390
      %s11392 = scalar_lea.vmem %s7, 128
      %v11393 = vld [vmem:[%s11392] sm:$0xf]
      %v11394 = vld [vmem:[%s11392 + $0x4] sm:$0xf]
      %v11395 = vld [vmem:[%s11392 + $0x8] sm:$0xf]
      %v11396 = vld [vmem:[%s11392 + $0xc] sm:$0xf]
      %v11397 = vld [vmem:[%s11392 + $0x10] sm:$0xf]
      %v11398 = vld [vmem:[%s11392 + $0x14] sm:$0xf]
      %v11399 = vld [vmem:[%s11392 + $0x18] sm:$0xf]
      %v11400 = vld [vmem:[%s11392 + $0x1c] sm:$0xf]
      %v11401 = vld [vmem:[%s11392 + $0x20] sm:$0xf]
      %v11402 = vld [vmem:[%s11392 + $0x24] sm:$0xf]
      %v11403 = vld [vmem:[%s11392 + $0x28] sm:$0xf]
      %v11404 = vld [vmem:[%s11392 + $0x2c] sm:$0xf]
      %v11405 = vld [vmem:[%s11392 + $0x30] sm:$0xf]
      %v11406 = vld [vmem:[%s11392 + $0x34] sm:$0xf]
      %v11407 = vld [vmem:[%s11392 + $0x38] sm:$0xf]
      %v11408 = vld [vmem:[%s11392 + $0x3c] sm:$0xf]
      %v11409 = vunpack.c.l.b16 %v11363
      %v11410 = vunpack.c.l.b16 %v11367
      %v11411 = vunpack.c.l.b16 %v11371
      %v11412 = vunpack.c.l.b16 %v11375
      %v11413 = vunpack.c.l.b16 %v11379
      %v11414 = vunpack.c.l.b16 %v11383
      %v11415 = vunpack.c.l.b16 %v11387
      %v11416 = vunpack.c.l.b16 %v11391
      %v11417 = vpack.c.b16 %v11410, %v11409
      %v11418 = vpack.c.b16 %v11412, %v11411
      %v11419 = vpack.c.b16 %v11414, %v11413
      %v11420 = vpack.c.b16 %v11416, %v11415
      %v11441 = vunpack.c.l.b16 %v11393
      %v11442 = vunpack.c.l.b16 %v11394
      %v11443 = vunpack.c.l.b16 %v11395
      %v11444 = vunpack.c.l.b16 %v11396
      %v11445 = vunpack.c.l.b16 %v11397
      %v11446 = vunpack.c.l.b16 %v11398
      %v11447 = vunpack.c.l.b16 %v11399
      %v11448 = vunpack.c.l.b16 %v11400
      %v11449 = vunpack.c.l.b16 %v11401
      %v11450 = vunpack.c.l.b16 %v11402
      %v11451 = vunpack.c.l.b16 %v11403
      %v11452 = vunpack.c.l.b16 %v11404
      %v11453 = vunpack.c.l.b16 %v11405
      %v11454 = vunpack.c.l.b16 %v11406
      %v11455 = vunpack.c.l.b16 %v11407
      %v11456 = vunpack.c.l.b16 %v11408
      %v11457 = vpack.c.b16 %v11442, %v11441
      %v11458 = vpack.c.b16 %v11444, %v11443
      %v11459 = vpack.c.b16 %v11446, %v11445
      %v11460 = vpack.c.b16 %v11448, %v11447
      %v11461 = vpack.c.b16 %v11450, %v11449
      %v11462 = vpack.c.b16 %v11452, %v11451
      %v11463 = vpack.c.b16 %v11454, %v11453
      %v11464 = vpack.c.b16 %v11456, %v11455
      %11473 = vmatprep.subr.bf16.mxu0 0
      %11474 = vmatpush1.bf16.msra.mxu0 %v11457
      %11475 = vmatprep.subr.bf16.mxu0 0
      %11476 = vmatpush1.bf16.msra.mxu0 %v11458
      %11477 = vmatprep.subr.bf16.mxu0 0
      %11478 = vmatpush1.bf16.msra.mxu0 %v11459
      %11479 = vmatprep.subr.bf16.mxu0 0
      %11480 = vmatpush1.bf16.msra.mxu0 %v11460
      %11481 = vmatprep.subr.bf16.mxu0 0
      %11482 = vmatpush1.bf16.msra.mxu0 %v11461
      %11483 = vmatprep.subr.bf16.mxu0 0
      %11484 = vmatpush1.bf16.msra.mxu0 %v11462
      %11485 = vmatprep.subr.bf16.mxu0 0
      %11486 = vmatpush1.bf16.msra.mxu0 %v11463
      %11487 = vmatprep.subr.bf16.mxu0 0
      %11488 = vmatpush1.bf16.msra.mxu0 %v11464
      %11489 = vmatprep.subr.bf16.mxu0 0
      %11490 = vmatpush1.bf16.msra.mxu0 0
      %11491 = vmatprep.subr.bf16.mxu0 0
      %11492 = vmatpush1.bf16.msra.mxu0 0
      %11493 = vmatprep.subr.bf16.mxu0 0
      %11494 = vmatpush1.bf16.msra.mxu0 0
      %11495 = vmatprep.subr.bf16.mxu0 0
      %11496 = vmatpush1.bf16.msra.mxu0 0
      %11497 = vmatprep.subr.bf16.mxu0 0
      %11498 = vmatpush1.bf16.msra.mxu0 0
      %11499 = vmatprep.subr.bf16.mxu0 0
      %11500 = vmatpush1.bf16.msra.mxu0 0
      %11501 = vmatprep.subr.bf16.mxu0 0
      %11502 = vmatpush1.bf16.msra.mxu0 0
      %11503 = vmatprep.subr.bf16.mxu0 0
      %11504 = vmatpush1.bf16.msra.mxu0 0
      %11505 = vmatprep.mubr.bf16.mxu0 0
      %11506 = vmatmul.mubr.bf16.gmra.mrb[0].mxu0 %v11417
      %v11507 = vpop.f32.mrb[0].mxu0
      %v11508 = vadd.f32 0.0, %v11507
      %v11509 = vpop.f32.mrb[0].mxu0
      %v11510 = vpop.f32.mrb[0].mxu0
      %v11511 = vadd.f32 0.0, %v11510
      %v11512 = vpop.f32.mrb[0].mxu0
      %11513 = vmatprep.mubr.bf16.mxu0 0
      %11514 = vmatmul.mubr.bf16.gmra.mrb[0].mxu0 %v11418
      %v11515 = vpop.f32.mrb[0].mxu0
      %v11516 = vadd.f32 0.0, %v11515
      %v11517 = vpop.f32.mrb[0].mxu0
      %v11518 = vpop.f32.mrb[0].mxu0
      %v11519 = vadd.f32 0.0, %v11518
      %v11520 = vpop.f32.mrb[0].mxu0
      %11521 = vmatprep.mubr.bf16.mxu0 0
      %11522 = vmatmul.mubr.bf16.gmra.mrb[0].mxu0 %v11419
      %v11523 = vpop.f32.mrb[0].mxu0
      %v11524 = vadd.f32 0.0, %v11523
      %v11525 = vpop.f32.mrb[0].mxu0
      %v11526 = vpop.f32.mrb[0].mxu0
      %v11527 = vadd.f32 0.0, %v11526
      %v11528 = vpop.f32.mrb[0].mxu0
      %11529 = vmatprep.mubr.bf16.mxu0 0
      %11530 = vmatmul.mubr.bf16.gmra.mrb[0].mxu0 %v11420
      %v11531 = vpop.f32.mrb[0].mxu0
      %v11532 = vadd.f32 0.0, %v11531
      %v11533 = vpop.f32.mrb[0].mxu0
      %v11534 = vpop.f32.mrb[0].mxu0
      %v11535 = vadd.f32 0.0, %v11534
      %v11536 = vpop.f32.mrb[0].mxu0
      %11537 = vdwg.mxu0
      %v11538 = vadd.f32 %v11306, %v11508
      %v11539 = vadd.f32 %v11309, %v11511
      %v11540 = vadd.f32 %v11314, %v11516
      %v11541 = vadd.f32 %v11317, %v11519
      %v11542 = vadd.f32 %v11322, %v11524
      %v11543 = vadd.f32 %v11325, %v11527
      %v11544 = vadd.f32 %v11330, %v11532
      %v11545 = vadd.f32 %v11333, %v11535
      %v11546 = vld [vmem:[%s10858] sm:$0xf]
      %v11547 = vld [vmem:[%s10858 + $0x8] sm:$0xf]
      %v11548 = vld [vmem:[%s10858 + $0x10] sm:$0xf]
      %v11549 = vld [vmem:[%s10858 + $0x18] sm:$0xf]
      %v11550 = vld [vmem:[%s10858 + $0x20] sm:$0xf]
      %v11551 = vld [vmem:[%s10858 + $0x28] sm:$0xf]
      %v11552 = vld [vmem:[%s10858 + $0x30] sm:$0xf]
      %v11553 = vld [vmem:[%s10858 + $0x38] sm:$0xf]
      %s11554 = scalar_lea.vmem %s7, 192
      %v11555 = vld [vmem:[%s11554] sm:$0xf]
      %v11556 = vld [vmem:[%s11554 + $0x4] sm:$0xf]
      %v11557 = vld [vmem:[%s11554 + $0x8] sm:$0xf]
      %v11558 = vld [vmem:[%s11554 + $0xc] sm:$0xf]
      %v11559 = vld [vmem:[%s11554 + $0x10] sm:$0xf]
      %v11560 = vld [vmem:[%s11554 + $0x14] sm:$0xf]
      %v11561 = vld [vmem:[%s11554 + $0x18] sm:$0xf]
      %v11562 = vld [vmem:[%s11554 + $0x1c] sm:$0xf]
      %v11563 = vld [vmem:[%s11554 + $0x20] sm:$0xf]
      %v11564 = vld [vmem:[%s11554 + $0x24] sm:$0xf]
      %v11565 = vld [vmem:[%s11554 + $0x28] sm:$0xf]
      %v11566 = vld [vmem:[%s11554 + $0x2c] sm:$0xf]
      %v11567 = vld [vmem:[%s11554 + $0x30] sm:$0xf]
      %v11568 = vld [vmem:[%s11554 + $0x34] sm:$0xf]
      %v11569 = vld [vmem:[%s11554 + $0x38] sm:$0xf]
      %v11570 = vld [vmem:[%s11554 + $0x3c] sm:$0xf]
      %v11579 = vunpack.c.l.b16 %v11546
      %v11580 = vunpack.c.l.b16 %v11547
      %v11581 = vunpack.c.l.b16 %v11548
      %v11582 = vunpack.c.l.b16 %v11549
      %v11583 = vunpack.c.l.b16 %v11550
      %v11584 = vunpack.c.l.b16 %v11551
      %v11585 = vunpack.c.l.b16 %v11552
      %v11586 = vunpack.c.l.b16 %v11553
      %v11587 = vpack.c.b16 %v11580, %v11579
      %v11588 = vpack.c.b16 %v11582, %v11581
      %v11589 = vpack.c.b16 %v11584, %v11583
      %v11590 = vpack.c.b16 %v11586, %v11585
      %v11611 = vunpack.c.l.b16 %v11555
      %v11612 = vunpack.c.l.b16 %v11556
      %v11613 = vunpack.c.l.b16 %v11557
      %v11614 = vunpack.c.l.b16 %v11558
      %v11615 = vunpack.c.l.b16 %v11559
      %v11616 = vunpack.c.l.b16 %v11560
      %v11617 = vunpack.c.l.b16 %v11561
      %v11618 = vunpack.c.l.b16 %v11562
      %v11619 = vunpack.c.l.b16 %v11563
      %v11620 = vunpack.c.l.b16 %v11564
      %v11621 = vunpack.c.l.b16 %v11565
      %v11622 = vunpack.c.l.b16 %v11566
      %v11623 = vunpack.c.l.b16 %v11567
      %v11624 = vunpack.c.l.b16 %v11568
      %v11625 = vunpack.c.l.b16 %v11569
      %v11626 = vunpack.c.l.b16 %v11570
      %v11627 = vpack.c.b16 %v11612, %v11611
      %v11628 = vpack.c.b16 %v11614, %v11613
      %v11629 = vpack.c.b16 %v11616, %v11615
      %v11630 = vpack.c.b16 %v11618, %v11617
      %v11631 = vpack.c.b16 %v11620, %v11619
      %v11632 = vpack.c.b16 %v11622, %v11621
      %v11633 = vpack.c.b16 %v11624, %v11623
      %v11634 = vpack.c.b16 %v11626, %v11625
      %11643 = vmatprep.subr.bf16.mxu0 0
      %11644 = vmatpush1.bf16.msra.mxu0 %v11627
      %11645 = vmatprep.subr.bf16.mxu0 0
      %11646 = vmatpush1.bf16.msra.mxu0 %v11628
      %11647 = vmatprep.subr.bf16.mxu0 0
      %11648 = vmatpush1.bf16.msra.mxu0 %v11629
      %11649 = vmatprep.subr.bf16.mxu0 0
      %11650 = vmatpush1.bf16.msra.mxu0 %v11630
      %11651 = vmatprep.subr.bf16.mxu0 0
      %11652 = vmatpush1.bf16.msra.mxu0 %v11631
      %11653 = vmatprep.subr.bf16.mxu0 0
      %11654 = vmatpush1.bf16.msra.mxu0 %v11632
      %11655 = vmatprep.subr.bf16.mxu0 0
      %11656 = vmatpush1.bf16.msra.mxu0 %v11633
      %11657 = vmatprep.subr.bf16.mxu0 0
      %11658 = vmatpush1.bf16.msra.mxu0 %v11634
      %11659 = vmatprep.subr.bf16.mxu0 0
      %11660 = vmatpush1.bf16.msra.mxu0 0
      %11661 = vmatprep.subr.bf16.mxu0 0
      %11662 = vmatpush1.bf16.msra.mxu0 0
      %11663 = vmatprep.subr.bf16.mxu0 0
      %11664 = vmatpush1.bf16.msra.mxu0 0
      %11665 = vmatprep.subr.bf16.mxu0 0
      %11666 = vmatpush1.bf16.msra.mxu0 0
      %11667 = vmatprep.subr.bf16.mxu0 0
      %11668 = vmatpush1.bf16.msra.mxu0 0
      %11669 = vmatprep.subr.bf16.mxu0 0
      %11670 = vmatpush1.bf16.msra.mxu0 0
      %11671 = vmatprep.subr.bf16.mxu0 0
      %11672 = vmatpush1.bf16.msra.mxu0 0
      %11673 = vmatprep.subr.bf16.mxu0 0
      %11674 = vmatpush1.bf16.msra.mxu0 0
      %11675 = vmatprep.mubr.bf16.mxu0 0
      %11676 = vmatmul.mubr.bf16.gmra.mrb[0].mxu0 %v11587
      %v11677 = vpop.f32.mrb[0].mxu0
      %v11678 = vadd.f32 0.0, %v11677
      %v11679 = vpop.f32.mrb[0].mxu0
      %v11680 = vpop.f32.mrb[0].mxu0
      %v11681 = vadd.f32 0.0, %v11680
      %v11682 = vpop.f32.mrb[0].mxu0
      %11683 = vmatprep.mubr.bf16.mxu0 0
      %11684 = vmatmul.mubr.bf16.gmra.mrb[0].mxu0 %v11588
      %v11685 = vpop.f32.mrb[0].mxu0
      %v11686 = vadd.f32 0.0, %v11685
      %v11687 = vpop.f32.mrb[0].mxu0
      %v11688 = vpop.f32.mrb[0].mxu0
      %v11689 = vadd.f32 0.0, %v11688
      %v11690 = vpop.f32.mrb[0].mxu0
      %11691 = vmatprep.mubr.bf16.mxu0 0
      %11692 = vmatmul.mubr.bf16.gmra.mrb[0].mxu0 %v11589
      %v11693 = vpop.f32.mrb[0].mxu0
      %v11694 = vadd.f32 0.0, %v11693
      %v11695 = vpop.f32.mrb[0].mxu0
      %v11696 = vpop.f32.mrb[0].mxu0
      %v11697 = vadd.f32 0.0, %v11696
      %v11698 = vpop.f32.mrb[0].mxu0
      %11699 = vmatprep.mubr.bf16.mxu0 0
      %11700 = vmatmul.mubr.bf16.gmra.mrb[0].mxu0 %v11590
      %v11701 = vpop.f32.mrb[0].mxu0
      %v11702 = vadd.f32 0.0, %v11701
      %v11703 = vpop.f32.mrb[0].mxu0
      %v11704 = vpop.f32.mrb[0].mxu0
      %v11705 = vadd.f32 0.0, %v11704
      %v11706 = vpop.f32.mrb[0].mxu0
      %11707 = vdwg.mxu0
      %v11708 = vadd.f32 %v11538, %v11678
      %v11709 = vadd.f32 %v11539, %v11681
      %v11710 = vadd.f32 %v11540, %v11686
      %v11711 = vadd.f32 %v11541, %v11689
      %v11712 = vadd.f32 %v11542, %v11694
      %v11713 = vadd.f32 %v11543, %v11697
      %v11714 = vadd.f32 %v11544, %v11702
      %v11715 = vadd.f32 %v11545, %v11705
      %v11716 = vld [vmem:[%s10858] sm:$0xf]
      %v11717 = vld [vmem:[%s10858 + $0x4] sm:$0x1]
      %v11718 = vld [vmem:[%s10858 + $0x8] sm:$0xf]
      %v11719 = vld [vmem:[%s10858 + $0xc] sm:$0x1]
      %v11720 = vld [vmem:[%s10858 + $0x10] sm:$0xf]
      %v11721 = vld [vmem:[%s10858 + $0x14] sm:$0x1]
      %v11722 = vld [vmem:[%s10858 + $0x18] sm:$0xf]
      %v11723 = vld [vmem:[%s10858 + $0x1c] sm:$0x1]
      %v11724 = vld [vmem:[%s10858 + $0x20] sm:$0xf]
      %v11725 = vld [vmem:[%s10858 + $0x24] sm:$0x1]
      %v11726 = vld [vmem:[%s10858 + $0x28] sm:$0xf]
      %v11727 = vld [vmem:[%s10858 + $0x2c] sm:$0x1]
      %v11728 = vld [vmem:[%s10858 + $0x30] sm:$0xf]
      %v11729 = vld [vmem:[%s10858 + $0x34] sm:$0x1]
      %v11730 = vld [vmem:[%s10858 + $0x38] sm:$0xf]
      %v11731 = vld [vmem:[%s10858 + $0x3c] sm:$0x1]
      %v11733 = vshrl.u32 %v11716, 16
      %v11735 = vrot.slane %v11733, 4
      %v11736 = vshll.u32 %v11716, 16
      %v11738 = vrot.slane %v11736, 5
      %v11739 = vor.u32 %v11735, %v11738
      %v11740 = vrot.slane %v11739, 4
      %v11742 = vshll.u32 %v11717, 16
      %v11744 = vrot.slane %v11742, 5
      %v11745 = vsel %vm1606, %v11740, %v11744
      %v11747 = vshrl.u32 %v11718, 16
      %v11749 = vrot.slane %v11747, 4
      %v11750 = vshll.u32 %v11718, 16
      %v11752 = vrot.slane %v11750, 5
      %v11753 = vor.u32 %v11749, %v11752
      %v11754 = vrot.slane %v11753, 4
      %v11756 = vshll.u32 %v11719, 16
      %v11758 = vrot.slane %v11756, 5
      %v11759 = vsel %vm1606, %v11754, %v11758
      %v11761 = vshrl.u32 %v11720, 16
      %v11763 = vrot.slane %v11761, 4
      %v11764 = vshll.u32 %v11720, 16
      %v11766 = vrot.slane %v11764, 5
      %v11767 = vor.u32 %v11763, %v11766
      %v11768 = vrot.slane %v11767, 4
      %v11770 = vshll.u32 %v11721, 16
      %v11772 = vrot.slane %v11770, 5
      %v11773 = vsel %vm1606, %v11768, %v11772
      %v11775 = vshrl.u32 %v11722, 16
      %v11777 = vrot.slane %v11775, 4
      %v11778 = vshll.u32 %v11722, 16
      %v11780 = vrot.slane %v11778, 5
      %v11781 = vor.u32 %v11777, %v11780
      %v11782 = vrot.slane %v11781, 4
      %v11784 = vshll.u32 %v11723, 16
      %v11786 = vrot.slane %v11784, 5
      %v11787 = vsel %vm1606, %v11782, %v11786
      %v11789 = vshrl.u32 %v11724, 16
      %v11791 = vrot.slane %v11789, 4
      %v11792 = vshll.u32 %v11724, 16
      %v11794 = vrot.slane %v11792, 5
      %v11795 = vor.u32 %v11791, %v11794
      %v11796 = vrot.slane %v11795, 4
      %v11798 = vshll.u32 %v11725, 16
      %v11800 = vrot.slane %v11798, 5
      %v11801 = vsel %vm1606, %v11796, %v11800
      %v11803 = vshrl.u32 %v11726, 16
      %v11805 = vrot.slane %v11803, 4
      %v11806 = vshll.u32 %v11726, 16
      %v11808 = vrot.slane %v11806, 5
      %v11809 = vor.u32 %v11805, %v11808
      %v11810 = vrot.slane %v11809, 4
      %v11812 = vshll.u32 %v11727, 16
      %v11814 = vrot.slane %v11812, 5
      %v11815 = vsel %vm1606, %v11810, %v11814
      %v11817 = vshrl.u32 %v11728, 16
      %v11819 = vrot.slane %v11817, 4
      %v11820 = vshll.u32 %v11728, 16
      %v11822 = vrot.slane %v11820, 5
      %v11823 = vor.u32 %v11819, %v11822
      %v11824 = vrot.slane %v11823, 4
      %v11826 = vshll.u32 %v11729, 16
      %v11828 = vrot.slane %v11826, 5
      %v11829 = vsel %vm1606, %v11824, %v11828
      %v11831 = vshrl.u32 %v11730, 16
      %v11833 = vrot.slane %v11831, 4
      %v11834 = vshll.u32 %v11730, 16
      %v11836 = vrot.slane %v11834, 5
      %v11837 = vor.u32 %v11833, %v11836
      %v11838 = vrot.slane %v11837, 4
      %v11840 = vshll.u32 %v11731, 16
      %v11842 = vrot.slane %v11840, 5
      %v11843 = vsel %vm1606, %v11838, %v11842
      %s11844 = scalar_lea.vmem %s7, 256
      %v11845 = vld [vmem:[%s11844] sm:$0xf]
      %v11846 = vld [vmem:[%s11844 + $0x4] sm:$0xf]
      %v11847 = vld [vmem:[%s11844 + $0x8] sm:$0xf]
      %v11848 = vld [vmem:[%s11844 + $0xc] sm:$0xf]
      %v11849 = vld [vmem:[%s11844 + $0x10] sm:$0xf]
      %v11850 = vld [vmem:[%s11844 + $0x14] sm:$0xf]
      %v11851 = vld [vmem:[%s11844 + $0x18] sm:$0xf]
      %v11852 = vld [vmem:[%s11844 + $0x1c] sm:$0xf]
      %v11853 = vld [vmem:[%s11844 + $0x20] sm:$0xf]
      %v11854 = vld [vmem:[%s11844 + $0x24] sm:$0xf]
      %v11855 = vld [vmem:[%s11844 + $0x28] sm:$0xf]
      %v11856 = vld [vmem:[%s11844 + $0x2c] sm:$0xf]
      %v11857 = vld [vmem:[%s11844 + $0x30] sm:$0xf]
      %v11858 = vld [vmem:[%s11844 + $0x34] sm:$0xf]
      %v11859 = vld [vmem:[%s11844 + $0x38] sm:$0xf]
      %v11860 = vld [vmem:[%s11844 + $0x3c] sm:$0xf]
      %v11861 = vunpack.c.l.b16 %v11745
      %v11862 = vunpack.c.l.b16 %v11759
      %v11863 = vunpack.c.l.b16 %v11773
      %v11864 = vunpack.c.l.b16 %v11787
      %v11865 = vunpack.c.l.b16 %v11801
      %v11866 = vunpack.c.l.b16 %v11815
      %v11867 = vunpack.c.l.b16 %v11829
      %v11868 = vunpack.c.l.b16 %v11843
      %v11869 = vpack.c.b16 %v11862, %v11861
      %v11870 = vpack.c.b16 %v11864, %v11863
      %v11871 = vpack.c.b16 %v11866, %v11865
      %v11872 = vpack.c.b16 %v11868, %v11867
      %v11893 = vunpack.c.l.b16 %v11845
      %v11894 = vunpack.c.l.b16 %v11846
      %v11895 = vunpack.c.l.b16 %v11847
      %v11896 = vunpack.c.l.b16 %v11848
      %v11897 = vunpack.c.l.b16 %v11849
      %v11898 = vunpack.c.l.b16 %v11850
      %v11899 = vunpack.c.l.b16 %v11851
      %v11900 = vunpack.c.l.b16 %v11852
      %v11901 = vunpack.c.l.b16 %v11853
      %v11902 = vunpack.c.l.b16 %v11854
      %v11903 = vunpack.c.l.b16 %v11855
      %v11904 = vunpack.c.l.b16 %v11856
      %v11905 = vunpack.c.l.b16 %v11857
      %v11906 = vunpack.c.l.b16 %v11858
      %v11907 = vunpack.c.l.b16 %v11859
      %v11908 = vunpack.c.l.b16 %v11860
      %v11909 = vpack.c.b16 %v11894, %v11893
      %v11910 = vpack.c.b16 %v11896, %v11895
      %v11911 = vpack.c.b16 %v11898, %v11897
      %v11912 = vpack.c.b16 %v11900, %v11899
      %v11913 = vpack.c.b16 %v11902, %v11901
      %v11914 = vpack.c.b16 %v11904, %v11903
      %v11915 = vpack.c.b16 %v11906, %v11905
      %v11916 = vpack.c.b16 %v11908, %v11907
      %11925 = vmatprep.subr.bf16.mxu0 0
      %11926 = vmatpush1.bf16.msra.mxu0 %v11909
      %11927 = vmatprep.subr.bf16.mxu0 0
      %11928 = vmatpush1.bf16.msra.mxu0 %v11910
      %11929 = vmatprep.subr.bf16.mxu0 0
      %11930 = vmatpush1.bf16.msra.mxu0 %v11911
      %11931 = vmatprep.subr.bf16.mxu0 0
      %11932 = vmatpush1.bf16.msra.mxu0 %v11912
      %11933 = vmatprep.subr.bf16.mxu0 0
      %11934 = vmatpush1.bf16.msra.mxu0 %v11913
      %11935 = vmatprep.subr.bf16.mxu0 0
      %11936 = vmatpush1.bf16.msra.mxu0 %v11914
      %11937 = vmatprep.subr.bf16.mxu0 0
      %11938 = vmatpush1.bf16.msra.mxu0 %v11915
      %11939 = vmatprep.subr.bf16.mxu0 0
      %11940 = vmatpush1.bf16.msra.mxu0 %v11916
      %11941 = vmatprep.subr.bf16.mxu0 0
      %11942 = vmatpush1.bf16.msra.mxu0 0
      %11943 = vmatprep.subr.bf16.mxu0 0
      %11944 = vmatpush1.bf16.msra.mxu0 0
      %11945 = vmatprep.subr.bf16.mxu0 0
      %11946 = vmatpush1.bf16.msra.mxu0 0
      %11947 = vmatprep.subr.bf16.mxu0 0
      %11948 = vmatpush1.bf16.msra.mxu0 0
      %11949 = vmatprep.subr.bf16.mxu0 0
      %11950 = vmatpush1.bf16.msra.mxu0 0
      %11951 = vmatprep.subr.bf16.mxu0 0
      %11952 = vmatpush1.bf16.msra.mxu0 0
      %11953 = vmatprep.subr.bf16.mxu0 0
      %11954 = vmatpush1.bf16.msra.mxu0 0
      %11955 = vmatprep.subr.bf16.mxu0 0
      %11956 = vmatpush1.bf16.msra.mxu0 0
      %11957 = vmatprep.mubr.bf16.mxu0 0
      %11958 = vmatmul.mubr.bf16.gmra.mrb[0].mxu0 %v11869
      %v11959 = vpop.f32.mrb[0].mxu0
      %v11960 = vadd.f32 0.0, %v11959
      %v11961 = vpop.f32.mrb[0].mxu0
      %v11962 = vpop.f32.mrb[0].mxu0
      %v11963 = vadd.f32 0.0, %v11962
      %v11964 = vpop.f32.mrb[0].mxu0
      %11965 = vmatprep.mubr.bf16.mxu0 0
      %11966 = vmatmul.mubr.bf16.gmra.mrb[0].mxu0 %v11870
      %v11967 = vpop.f32.mrb[0].mxu0
      %v11968 = vadd.f32 0.0, %v11967
      %v11969 = vpop.f32.mrb[0].mxu0
      %v11970 = vpop.f32.mrb[0].mxu0
      %v11971 = vadd.f32 0.0, %v11970
      %v11972 = vpop.f32.mrb[0].mxu0
      %11973 = vmatprep.mubr.bf16.mxu0 0
      %11974 = vmatmul.mubr.bf16.gmra.mrb[0].mxu0 %v11871
      %v11975 = vpop.f32.mrb[0].mxu0
      %v11976 = vadd.f32 0.0, %v11975
      %v11977 = vpop.f32.mrb[0].mxu0
      %v11978 = vpop.f32.mrb[0].mxu0
      %v11979 = vadd.f32 0.0, %v11978
      %v11980 = vpop.f32.mrb[0].mxu0
      %11981 = vmatprep.mubr.bf16.mxu0 0
      %11982 = vmatmul.mubr.bf16.gmra.mrb[0].mxu0 %v11872
      %v11983 = vpop.f32.mrb[0].mxu0
      %v11984 = vadd.f32 0.0, %v11983
      %v11985 = vpop.f32.mrb[0].mxu0
      %v11986 = vpop.f32.mrb[0].mxu0
      %v11987 = vadd.f32 0.0, %v11986
      %v11988 = vpop.f32.mrb[0].mxu0
      %11989 = vdwg.mxu0
      %v11990 = vadd.f32 %v11708, %v11960
      %v11991 = vadd.f32 %v11709, %v11963
      %v11992 = vadd.f32 %v11710, %v11968
      %v11993 = vadd.f32 %v11711, %v11971
      %v11994 = vadd.f32 %v11712, %v11976
      %v11995 = vadd.f32 %v11713, %v11979
      %v11996 = vadd.f32 %v11714, %v11984
      %v11997 = vadd.f32 %v11715, %v11987
      %v11998 = vld [vmem:[%s10858] sm:$0xe]
      %v11999 = vld [vmem:[%s10858 + $0x8] sm:$0xe]
      %v12000 = vld [vmem:[%s10858 + $0x10] sm:$0xe]
      %v12001 = vld [vmem:[%s10858 + $0x18] sm:$0xe]
      %v12002 = vld [vmem:[%s10858 + $0x20] sm:$0xe]
      %v12003 = vld [vmem:[%s10858 + $0x28] sm:$0xe]
      %v12004 = vld [vmem:[%s10858 + $0x30] sm:$0xe]
      %v12005 = vld [vmem:[%s10858 + $0x38] sm:$0xe]
      %v12022 = vrot.slane %v11998, 5
      %v12023 = vrot.slane %v12022, 4
      %v12024 = vrot.slane %v11717, 5
      %v12025 = vsel %vm2645, %v12023, %v12024
      %v12026 = vrot.slane %v11999, 5
      %v12027 = vrot.slane %v12026, 4
      %v12028 = vrot.slane %v11719, 5
      %v12029 = vsel %vm2645, %v12027, %v12028
      %v12030 = vrot.slane %v12000, 5
      %v12031 = vrot.slane %v12030, 4
      %v12032 = vrot.slane %v11721, 5
      %v12033 = vsel %vm2645, %v12031, %v12032
      %v12034 = vrot.slane %v12001, 5
      %v12035 = vrot.slane %v12034, 4
      %v12036 = vrot.slane %v11723, 5
      %v12037 = vsel %vm2645, %v12035, %v12036
      %v12038 = vrot.slane %v12002, 5
      %v12039 = vrot.slane %v12038, 4
      %v12040 = vrot.slane %v11725, 5
      %v12041 = vsel %vm2645, %v12039, %v12040
      %v12042 = vrot.slane %v12003, 5
      %v12043 = vrot.slane %v12042, 4
      %v12044 = vrot.slane %v11727, 5
      %v12045 = vsel %vm2645, %v12043, %v12044
      %v12046 = vrot.slane %v12004, 5
      %v12047 = vrot.slane %v12046, 4
      %v12048 = vrot.slane %v11729, 5
      %v12049 = vsel %vm2645, %v12047, %v12048
      %v12050 = vrot.slane %v12005, 5
      %v12051 = vrot.slane %v12050, 4
      %v12052 = vrot.slane %v11731, 5
      %v12053 = vsel %vm2645, %v12051, %v12052
      %s12054 = scalar_lea.vmem %s7, 320
      %v12055 = vld [vmem:[%s12054] sm:$0xf]
      %v12056 = vld [vmem:[%s12054 + $0x4] sm:$0xf]
      %v12057 = vld [vmem:[%s12054 + $0x8] sm:$0xf]
      %v12058 = vld [vmem:[%s12054 + $0xc] sm:$0xf]
      %v12059 = vld [vmem:[%s12054 + $0x10] sm:$0xf]
      %v12060 = vld [vmem:[%s12054 + $0x14] sm:$0xf]
      %v12061 = vld [vmem:[%s12054 + $0x18] sm:$0xf]
      %v12062 = vld [vmem:[%s12054 + $0x1c] sm:$0xf]
      %v12063 = vld [vmem:[%s12054 + $0x20] sm:$0xf]
      %v12064 = vld [vmem:[%s12054 + $0x24] sm:$0xf]
      %v12065 = vld [vmem:[%s12054 + $0x28] sm:$0xf]
      %v12066 = vld [vmem:[%s12054 + $0x2c] sm:$0xf]
      %v12067 = vld [vmem:[%s12054 + $0x30] sm:$0xf]
      %v12068 = vld [vmem:[%s12054 + $0x34] sm:$0xf]
      %v12069 = vld [vmem:[%s12054 + $0x38] sm:$0xf]
      %v12070 = vld [vmem:[%s12054 + $0x3c] sm:$0xf]
      %v12071 = vunpack.c.l.b16 %v12025
      %v12072 = vunpack.c.l.b16 %v12029
      %v12073 = vunpack.c.l.b16 %v12033
      %v12074 = vunpack.c.l.b16 %v12037
      %v12075 = vunpack.c.l.b16 %v12041
      %v12076 = vunpack.c.l.b16 %v12045
      %v12077 = vunpack.c.l.b16 %v12049
      %v12078 = vunpack.c.l.b16 %v12053
      %v12079 = vpack.c.b16 %v12072, %v12071
      %v12080 = vpack.c.b16 %v12074, %v12073
      %v12081 = vpack.c.b16 %v12076, %v12075
      %v12082 = vpack.c.b16 %v12078, %v12077
      %v12103 = vunpack.c.l.b16 %v12055
      %v12104 = vunpack.c.l.b16 %v12056
      %v12105 = vunpack.c.l.b16 %v12057
      %v12106 = vunpack.c.l.b16 %v12058
      %v12107 = vunpack.c.l.b16 %v12059
      %v12108 = vunpack.c.l.b16 %v12060
      %v12109 = vunpack.c.l.b16 %v12061
      %v12110 = vunpack.c.l.b16 %v12062
      %v12111 = vunpack.c.l.b16 %v12063
      %v12112 = vunpack.c.l.b16 %v12064
      %v12113 = vunpack.c.l.b16 %v12065
      %v12114 = vunpack.c.l.b16 %v12066
      %v12115 = vunpack.c.l.b16 %v12067
      %v12116 = vunpack.c.l.b16 %v12068
      %v12117 = vunpack.c.l.b16 %v12069
      %v12118 = vunpack.c.l.b16 %v12070
      %v12119 = vpack.c.b16 %v12104, %v12103
      %v12120 = vpack.c.b16 %v12106, %v12105
      %v12121 = vpack.c.b16 %v12108, %v12107
      %v12122 = vpack.c.b16 %v12110, %v12109
      %v12123 = vpack.c.b16 %v12112, %v12111
      %v12124 = vpack.c.b16 %v12114, %v12113
      %v12125 = vpack.c.b16 %v12116, %v12115
      %v12126 = vpack.c.b16 %v12118, %v12117
      %12135 = vmatprep.subr.bf16.mxu0 0
      %12136 = vmatpush1.bf16.msra.mxu0 %v12119
      %12137 = vmatprep.subr.bf16.mxu0 0
      %12138 = vmatpush1.bf16.msra.mxu0 %v12120
      %12139 = vmatprep.subr.bf16.mxu0 0
      %12140 = vmatpush1.bf16.msra.mxu0 %v12121
      %12141 = vmatprep.subr.bf16.mxu0 0
      %12142 = vmatpush1.bf16.msra.mxu0 %v12122
      %12143 = vmatprep.subr.bf16.mxu0 0
      %12144 = vmatpush1.bf16.msra.mxu0 %v12123
      %12145 = vmatprep.subr.bf16.mxu0 0
      %12146 = vmatpush1.bf16.msra.mxu0 %v12124
      %12147 = vmatprep.subr.bf16.mxu0 0
      %12148 = vmatpush1.bf16.msra.mxu0 %v12125
      %12149 = vmatprep.subr.bf16.mxu0 0
      %12150 = vmatpush1.bf16.msra.mxu0 %v12126
      %12151 = vmatprep.subr.bf16.mxu0 0
      %12152 = vmatpush1.bf16.msra.mxu0 0
      %12153 = vmatprep.subr.bf16.mxu0 0
      %12154 = vmatpush1.bf16.msra.mxu0 0
      %12155 = vmatprep.subr.bf16.mxu0 0
      %12156 = vmatpush1.bf16.msra.mxu0 0
      %12157 = vmatprep.subr.bf16.mxu0 0
      %12158 = vmatpush1.bf16.msra.mxu0 0
      %12159 = vmatprep.subr.bf16.mxu0 0
      %12160 = vmatpush1.bf16.msra.mxu0 0
      %12161 = vmatprep.subr.bf16.mxu0 0
      %12162 = vmatpush1.bf16.msra.mxu0 0
      %12163 = vmatprep.subr.bf16.mxu0 0
      %12164 = vmatpush1.bf16.msra.mxu0 0
      %12165 = vmatprep.subr.bf16.mxu0 0
      %12166 = vmatpush1.bf16.msra.mxu0 0
      %12167 = vmatprep.mubr.bf16.mxu0 0
      %12168 = vmatmul.mubr.bf16.gmra.mrb[0].mxu0 %v12079
      %v12169 = vpop.f32.mrb[0].mxu0
      %v12170 = vadd.f32 0.0, %v12169
      %v12171 = vpop.f32.mrb[0].mxu0
      %v12172 = vpop.f32.mrb[0].mxu0
      %v12173 = vadd.f32 0.0, %v12172
      %v12174 = vpop.f32.mrb[0].mxu0
      %12175 = vmatprep.mubr.bf16.mxu0 0
      %12176 = vmatmul.mubr.bf16.gmra.mrb[0].mxu0 %v12080
      %v12177 = vpop.f32.mrb[0].mxu0
      %v12178 = vadd.f32 0.0, %v12177
      %v12179 = vpop.f32.mrb[0].mxu0
      %v12180 = vpop.f32.mrb[0].mxu0
      %v12181 = vadd.f32 0.0, %v12180
      %v12182 = vpop.f32.mrb[0].mxu0
      %12183 = vmatprep.mubr.bf16.mxu0 0
      %12184 = vmatmul.mubr.bf16.gmra.mrb[0].mxu0 %v12081
      %v12185 = vpop.f32.mrb[0].mxu0
      %v12186 = vadd.f32 0.0, %v12185
      %v12187 = vpop.f32.mrb[0].mxu0
      %v12188 = vpop.f32.mrb[0].mxu0
      %v12189 = vadd.f32 0.0, %v12188
      %v12190 = vpop.f32.mrb[0].mxu0
      %12191 = vmatprep.mubr.bf16.mxu0 0
      %12192 = vmatmul.mubr.bf16.gmra.mrb[0].mxu0 %v12082
      %v12193 = vpop.f32.mrb[0].mxu0
      %v12194 = vadd.f32 0.0, %v12193
      %v12195 = vpop.f32.mrb[0].mxu0
      %v12196 = vpop.f32.mrb[0].mxu0
      %v12197 = vadd.f32 0.0, %v12196
      %v12198 = vpop.f32.mrb[0].mxu0
      %12199 = vdwg.mxu0
      %v12200 = vadd.f32 %v11990, %v12170
      %v12201 = vadd.f32 %v11991, %v12173
      %v12202 = vadd.f32 %v11992, %v12178
      %v12203 = vadd.f32 %v11993, %v12181
      %v12204 = vadd.f32 %v11994, %v12186
      %v12205 = vadd.f32 %v11995, %v12189
      %v12206 = vadd.f32 %v11996, %v12194
      %v12207 = vadd.f32 %v11997, %v12197
      %s12208 = scalar_lea.vmem [#allocation4], 16
      %v12209 = vld [vmem:[%s12208] sm:$0xf]
      %v12210 = vld [vmem:[%s12208 + $0x8] sm:$0xf]
      %v12211 = vld [vmem:[%s12208 + $0x10] sm:$0xf]
      %v12212 = vld [vmem:[%s12208 + $0x18] sm:$0xf]
      %v12213 = vld [vmem:[%s12208 + $0x20] sm:$0xf]
      %v12214 = vld [vmem:[%s12208 + $0x28] sm:$0xf]
      %v12215 = vld [vmem:[%s12208 + $0x30] sm:$0xf]
      %v12216 = vld [vmem:[%s12208 + $0x38] sm:$0xf]
      %s12217 = scalar_lea.vmem %s7, 384
      %v12218 = vld [vmem:[%s12217] sm:$0xf]
      %v12219 = vld [vmem:[%s12217 + $0x4] sm:$0xf]
      %v12220 = vld [vmem:[%s12217 + $0x8] sm:$0xf]
      %v12221 = vld [vmem:[%s12217 + $0xc] sm:$0xf]
      %v12222 = vld [vmem:[%s12217 + $0x10] sm:$0xf]
      %v12223 = vld [vmem:[%s12217 + $0x14] sm:$0xf]
      %v12224 = vld [vmem:[%s12217 + $0x18] sm:$0xf]
      %v12225 = vld [vmem:[%s12217 + $0x1c] sm:$0xf]
      %v12226 = vld [vmem:[%s12217 + $0x20] sm:$0xf]
      %v12227 = vld [vmem:[%s12217 + $0x24] sm:$0xf]
      %v12228 = vld [vmem:[%s12217 + $0x28] sm:$0xf]
      %v12229 = vld [vmem:[%s12217 + $0x2c] sm:$0xf]
      %v12230 = vld [vmem:[%s12217 + $0x30] sm:$0xf]
      %v12231 = vld [vmem:[%s12217 + $0x34] sm:$0xf]
      %v12232 = vld [vmem:[%s12217 + $0x38] sm:$0xf]
      %v12233 = vld [vmem:[%s12217 + $0x3c] sm:$0xf]
      %v12242 = vunpack.c.l.b16 %v12209
      %v12243 = vunpack.c.l.b16 %v12210
      %v12244 = vunpack.c.l.b16 %v12211
      %v12245 = vunpack.c.l.b16 %v12212
      %v12246 = vunpack.c.l.b16 %v12213
      %v12247 = vunpack.c.l.b16 %v12214
      %v12248 = vunpack.c.l.b16 %v12215
      %v12249 = vunpack.c.l.b16 %v12216
      %v12250 = vpack.c.b16 %v12243, %v12242
      %v12251 = vpack.c.b16 %v12245, %v12244
      %v12252 = vpack.c.b16 %v12247, %v12246
      %v12253 = vpack.c.b16 %v12249, %v12248
      %v12274 = vunpack.c.l.b16 %v12218
      %v12275 = vunpack.c.l.b16 %v12219
      %v12276 = vunpack.c.l.b16 %v12220
      %v12277 = vunpack.c.l.b16 %v12221
      %v12278 = vunpack.c.l.b16 %v12222
      %v12279 = vunpack.c.l.b16 %v12223
      %v12280 = vunpack.c.l.b16 %v12224
      %v12281 = vunpack.c.l.b16 %v12225
      %v12282 = vunpack.c.l.b16 %v12226
      %v12283 = vunpack.c.l.b16 %v12227
      %v12284 = vunpack.c.l.b16 %v12228
      %v12285 = vunpack.c.l.b16 %v12229
      %v12286 = vunpack.c.l.b16 %v12230
      %v12287 = vunpack.c.l.b16 %v12231
      %v12288 = vunpack.c.l.b16 %v12232
      %v12289 = vunpack.c.l.b16 %v12233
      %v12290 = vpack.c.b16 %v12275, %v12274
      %v12291 = vpack.c.b16 %v12277, %v12276
      %v12292 = vpack.c.b16 %v12279, %v12278
      %v12293 = vpack.c.b16 %v12281, %v12280
      %v12294 = vpack.c.b16 %v12283, %v12282
      %v12295 = vpack.c.b16 %v12285, %v12284
      %v12296 = vpack.c.b16 %v12287, %v12286
      %v12297 = vpack.c.b16 %v12289, %v12288
      %12306 = vmatprep.subr.bf16.mxu0 0
      %12307 = vmatpush1.bf16.msra.mxu0 %v12290
      %12308 = vmatprep.subr.bf16.mxu0 0
      %12309 = vmatpush1.bf16.msra.mxu0 %v12291
      %12310 = vmatprep.subr.bf16.mxu0 0
      %12311 = vmatpush1.bf16.msra.mxu0 %v12292
      %12312 = vmatprep.subr.bf16.mxu0 0
      %12313 = vmatpush1.bf16.msra.mxu0 %v12293
      %12314 = vmatprep.subr.bf16.mxu0 0
      %12315 = vmatpush1.bf16.msra.mxu0 %v12294
      %12316 = vmatprep.subr.bf16.mxu0 0
      %12317 = vmatpush1.bf16.msra.mxu0 %v12295
      %12318 = vmatprep.subr.bf16.mxu0 0
      %12319 = vmatpush1.bf16.msra.mxu0 %v12296
      %12320 = vmatprep.subr.bf16.mxu0 0
      %12321 = vmatpush1.bf16.msra.mxu0 %v12297
      %12322 = vmatprep.subr.bf16.mxu0 0
      %12323 = vmatpush1.bf16.msra.mxu0 0
      %12324 = vmatprep.subr.bf16.mxu0 0
      %12325 = vmatpush1.bf16.msra.mxu0 0
      %12326 = vmatprep.subr.bf16.mxu0 0
      %12327 = vmatpush1.bf16.msra.mxu0 0
      %12328 = vmatprep.subr.bf16.mxu0 0
      %12329 = vmatpush1.bf16.msra.mxu0 0
      %12330 = vmatprep.subr.bf16.mxu0 0
      %12331 = vmatpush1.bf16.msra.mxu0 0
      %12332 = vmatprep.subr.bf16.mxu0 0
      %12333 = vmatpush1.bf16.msra.mxu0 0
      %12334 = vmatprep.subr.bf16.mxu0 0
      %12335 = vmatpush1.bf16.msra.mxu0 0
      %12336 = vmatprep.subr.bf16.mxu0 0
      %12337 = vmatpush1.bf16.msra.mxu0 0
      %12338 = vmatprep.mubr.bf16.mxu0 0
      %12339 = vmatmul.mubr.bf16.gmra.mrb[0].mxu0 %v12250
      %v12340 = vpop.f32.mrb[0].mxu0
      %v12341 = vadd.f32 0.0, %v12340
      %v12342 = vpop.f32.mrb[0].mxu0
      %v12343 = vpop.f32.mrb[0].mxu0
      %v12344 = vadd.f32 0.0, %v12343
      %v12345 = vpop.f32.mrb[0].mxu0
      %12346 = vmatprep.mubr.bf16.mxu0 0
      %12347 = vmatmul.mubr.bf16.gmra.mrb[0].mxu0 %v12251
      %v12348 = vpop.f32.mrb[0].mxu0
      %v12349 = vadd.f32 0.0, %v12348
      %v12350 = vpop.f32.mrb[0].mxu0
      %v12351 = vpop.f32.mrb[0].mxu0
      %v12352 = vadd.f32 0.0, %v12351
      %v12353 = vpop.f32.mrb[0].mxu0
      %12354 = vmatprep.mubr.bf16.mxu0 0
      %12355 = vmatmul.mubr.bf16.gmra.mrb[0].mxu0 %v12252
      %v12356 = vpop.f32.mrb[0].mxu0
      %v12357 = vadd.f32 0.0, %v12356
      %v12358 = vpop.f32.mrb[0].mxu0
      %v12359 = vpop.f32.mrb[0].mxu0
      %v12360 = vadd.f32 0.0, %v12359
      %v12361 = vpop.f32.mrb[0].mxu0
      %12362 = vmatprep.mubr.bf16.mxu0 0
      %12363 = vmatmul.mubr.bf16.gmra.mrb[0].mxu0 %v12253
      %v12364 = vpop.f32.mrb[0].mxu0
      %v12365 = vadd.f32 0.0, %v12364
      %v12366 = vpop.f32.mrb[0].mxu0
      %v12367 = vpop.f32.mrb[0].mxu0
      %v12368 = vadd.f32 0.0, %v12367
      %v12369 = vpop.f32.mrb[0].mxu0
      %12370 = vdwg.mxu0
      %v12371 = vadd.f32 %v12200, %v12341
      %v12372 = vadd.f32 %v12201, %v12344
      %v12373 = vadd.f32 %v12202, %v12349
      %v12374 = vadd.f32 %v12203, %v12352
      %v12375 = vadd.f32 %v12204, %v12357
      %v12376 = vadd.f32 %v12205, %v12360
      %v12377 = vadd.f32 %v12206, %v12365
      %v12378 = vadd.f32 %v12207, %v12368
      %v12379 = vld [vmem:[%s12208] sm:$0xf]
      %v12380 = vld [vmem:[%s12208 + $0x4] sm:$0x1]
      %v12381 = vld [vmem:[%s12208 + $0x8] sm:$0xf]
      %v12382 = vld [vmem:[%s12208 + $0xc] sm:$0x1]
      %v12383 = vld [vmem:[%s12208 + $0x10] sm:$0xf]
      %v12384 = vld [vmem:[%s12208 + $0x14] sm:$0x1]
      %v12385 = vld [vmem:[%s12208 + $0x18] sm:$0xf]
      %v12386 = vld [vmem:[%s12208 + $0x1c] sm:$0x1]
      %v12387 = vld [vmem:[%s12208 + $0x20] sm:$0xf]
      %v12388 = vld [vmem:[%s12208 + $0x24] sm:$0x1]
      %v12389 = vld [vmem:[%s12208 + $0x28] sm:$0xf]
      %v12390 = vld [vmem:[%s12208 + $0x2c] sm:$0x1]
      %v12391 = vld [vmem:[%s12208 + $0x30] sm:$0xf]
      %v12392 = vld [vmem:[%s12208 + $0x34] sm:$0x1]
      %v12393 = vld [vmem:[%s12208 + $0x38] sm:$0xf]
      %v12394 = vld [vmem:[%s12208 + $0x3c] sm:$0x1]
      %v12396 = vshrl.u32 %v12379, 16
      %v12398 = vrot.slane %v12396, 4
      %v12399 = vshll.u32 %v12379, 16
      %v12401 = vrot.slane %v12399, 5
      %v12402 = vor.u32 %v12398, %v12401
      %v12403 = vrot.slane %v12402, 4
      %v12405 = vshll.u32 %v12380, 16
      %v12407 = vrot.slane %v12405, 5
      %v12408 = vsel %vm1606, %v12403, %v12407
      %v12410 = vshrl.u32 %v12381, 16
      %v12412 = vrot.slane %v12410, 4
      %v12413 = vshll.u32 %v12381, 16
      %v12415 = vrot.slane %v12413, 5
      %v12416 = vor.u32 %v12412, %v12415
      %v12417 = vrot.slane %v12416, 4
      %v12419 = vshll.u32 %v12382, 16
      %v12421 = vrot.slane %v12419, 5
      %v12422 = vsel %vm1606, %v12417, %v12421
      %v12424 = vshrl.u32 %v12383, 16
      %v12426 = vrot.slane %v12424, 4
      %v12427 = vshll.u32 %v12383, 16
      %v12429 = vrot.slane %v12427, 5
      %v12430 = vor.u32 %v12426, %v12429
      %v12431 = vrot.slane %v12430, 4
      %v12433 = vshll.u32 %v12384, 16
      %v12435 = vrot.slane %v12433, 5
      %v12436 = vsel %vm1606, %v12431, %v12435
      %v12438 = vshrl.u32 %v12385, 16
      %v12440 = vrot.slane %v12438, 4
      %v12441 = vshll.u32 %v12385, 16
      %v12443 = vrot.slane %v12441, 5
      %v12444 = vor.u32 %v12440, %v12443
      %v12445 = vrot.slane %v12444, 4
      %v12447 = vshll.u32 %v12386, 16
      %v12449 = vrot.slane %v12447, 5
      %v12450 = vsel %vm1606, %v12445, %v12449
      %v12452 = vshrl.u32 %v12387, 16
      %v12454 = vrot.slane %v12452, 4
      %v12455 = vshll.u32 %v12387, 16
      %v12457 = vrot.slane %v12455, 5
      %v12458 = vor.u32 %v12454, %v12457
      %v12459 = vrot.slane %v12458, 4
      %v12461 = vshll.u32 %v12388, 16
      %v12463 = vrot.slane %v12461, 5
      %v12464 = vsel %vm1606, %v12459, %v12463
      %v12466 = vshrl.u32 %v12389, 16
      %v12468 = vrot.slane %v12466, 4
      %v12469 = vshll.u32 %v12389, 16
      %v12471 = vrot.slane %v12469, 5
      %v12472 = vor.u32 %v12468, %v12471
      %v12473 = vrot.slane %v12472, 4
      %v12475 = vshll.u32 %v12390, 16
      %v12477 = vrot.slane %v12475, 5
      %v12478 = vsel %vm1606, %v12473, %v12477
      %v12480 = vshrl.u32 %v12391, 16
      %v12482 = vrot.slane %v12480, 4
      %v12483 = vshll.u32 %v12391, 16
      %v12485 = vrot.slane %v12483, 5
      %v12486 = vor.u32 %v12482, %v12485
      %v12487 = vrot.slane %v12486, 4
      %v12489 = vshll.u32 %v12392, 16
      %v12491 = vrot.slane %v12489, 5
      %v12492 = vsel %vm1606, %v12487, %v12491
      %v12494 = vshrl.u32 %v12393, 16
      %v12496 = vrot.slane %v12494, 4
      %v12497 = vshll.u32 %v12393, 16
      %v12499 = vrot.slane %v12497, 5
      %v12500 = vor.u32 %v12496, %v12499
      %v12501 = vrot.slane %v12500, 4
      %v12503 = vshll.u32 %v12394, 16
      %v12505 = vrot.slane %v12503, 5
      %v12506 = vsel %vm1606, %v12501, %v12505
      %s12507 = scalar_lea.vmem %s7, 448
      %v12508 = vld [vmem:[%s12507] sm:$0xf]
      %v12509 = vld [vmem:[%s12507 + $0x4] sm:$0xf]
      %v12510 = vld [vmem:[%s12507 + $0x8] sm:$0xf]
      %v12511 = vld [vmem:[%s12507 + $0xc] sm:$0xf]
      %v12512 = vld [vmem:[%s12507 + $0x10] sm:$0xf]
      %v12513 = vld [vmem:[%s12507 + $0x14] sm:$0xf]
      %v12514 = vld [vmem:[%s12507 + $0x18] sm:$0xf]
      %v12515 = vld [vmem:[%s12507 + $0x1c] sm:$0xf]
      %v12516 = vld [vmem:[%s12507 + $0x20] sm:$0xf]
      %v12517 = vld [vmem:[%s12507 + $0x24] sm:$0xf]
      %v12518 = vld [vmem:[%s12507 + $0x28] sm:$0xf]
      %v12519 = vld [vmem:[%s12507 + $0x2c] sm:$0xf]
      %v12520 = vld [vmem:[%s12507 + $0x30] sm:$0xf]
      %v12521 = vld [vmem:[%s12507 + $0x34] sm:$0xf]
      %v12522 = vld [vmem:[%s12507 + $0x38] sm:$0xf]
      %v12523 = vld [vmem:[%s12507 + $0x3c] sm:$0xf]
      %v12524 = vunpack.c.l.b16 %v12408
      %v12525 = vunpack.c.l.b16 %v12422
      %v12526 = vunpack.c.l.b16 %v12436
      %v12527 = vunpack.c.l.b16 %v12450
      %v12528 = vunpack.c.l.b16 %v12464
      %v12529 = vunpack.c.l.b16 %v12478
      %v12530 = vunpack.c.l.b16 %v12492
      %v12531 = vunpack.c.l.b16 %v12506
      %v12532 = vpack.c.b16 %v12525, %v12524
      %v12533 = vpack.c.b16 %v12527, %v12526
      %v12534 = vpack.c.b16 %v12529, %v12528
      %v12535 = vpack.c.b16 %v12531, %v12530
      %v12556 = vunpack.c.l.b16 %v12508
      %v12557 = vunpack.c.l.b16 %v12509
      %v12558 = vunpack.c.l.b16 %v12510
      %v12559 = vunpack.c.l.b16 %v12511
      %v12560 = vunpack.c.l.b16 %v12512
      %v12561 = vunpack.c.l.b16 %v12513
      %v12562 = vunpack.c.l.b16 %v12514
      %v12563 = vunpack.c.l.b16 %v12515
      %v12564 = vunpack.c.l.b16 %v12516
      %v12565 = vunpack.c.l.b16 %v12517
      %v12566 = vunpack.c.l.b16 %v12518
      %v12567 = vunpack.c.l.b16 %v12519
      %v12568 = vunpack.c.l.b16 %v12520
      %v12569 = vunpack.c.l.b16 %v12521
      %v12570 = vunpack.c.l.b16 %v12522
      %v12571 = vunpack.c.l.b16 %v12523
      %v12572 = vpack.c.b16 %v12557, %v12556
      %v12573 = vpack.c.b16 %v12559, %v12558
      %v12574 = vpack.c.b16 %v12561, %v12560
      %v12575 = vpack.c.b16 %v12563, %v12562
      %v12576 = vpack.c.b16 %v12565, %v12564
      %v12577 = vpack.c.b16 %v12567, %v12566
      %v12578 = vpack.c.b16 %v12569, %v12568
      %v12579 = vpack.c.b16 %v12571, %v12570
      %12588 = vmatprep.subr.bf16.mxu0 0
      %12589 = vmatpush1.bf16.msra.mxu0 %v12572
      %12590 = vmatprep.subr.bf16.mxu0 0
      %12591 = vmatpush1.bf16.msra.mxu0 %v12573
      %12592 = vmatprep.subr.bf16.mxu0 0
      %12593 = vmatpush1.bf16.msra.mxu0 %v12574
      %12594 = vmatprep.subr.bf16.mxu0 0
      %12595 = vmatpush1.bf16.msra.mxu0 %v12575
      %12596 = vmatprep.subr.bf16.mxu0 0
      %12597 = vmatpush1.bf16.msra.mxu0 %v12576
      %12598 = vmatprep.subr.bf16.mxu0 0
      %12599 = vmatpush1.bf16.msra.mxu0 %v12577
      %12600 = vmatprep.subr.bf16.mxu0 0
      %12601 = vmatpush1.bf16.msra.mxu0 %v12578
      %12602 = vmatprep.subr.bf16.mxu0 0
      %12603 = vmatpush1.bf16.msra.mxu0 %v12579
      %12604 = vmatprep.subr.bf16.mxu0 0
      %12605 = vmatpush1.bf16.msra.mxu0 0
      %12606 = vmatprep.subr.bf16.mxu0 0
      %12607 = vmatpush1.bf16.msra.mxu0 0
      %12608 = vmatprep.subr.bf16.mxu0 0
      %12609 = vmatpush1.bf16.msra.mxu0 0
      %12610 = vmatprep.subr.bf16.mxu0 0
      %12611 = vmatpush1.bf16.msra.mxu0 0
      %12612 = vmatprep.subr.bf16.mxu0 0
      %12613 = vmatpush1.bf16.msra.mxu0 0
      %12614 = vmatprep.subr.bf16.mxu0 0
      %12615 = vmatpush1.bf16.msra.mxu0 0
      %12616 = vmatprep.subr.bf16.mxu0 0
      %12617 = vmatpush1.bf16.msra.mxu0 0
      %12618 = vmatprep.subr.bf16.mxu0 0
      %12619 = vmatpush1.bf16.msra.mxu0 0
      %12620 = vmatprep.mubr.bf16.mxu0 0
      %12621 = vmatmul.mubr.bf16.gmra.mrb[0].mxu0 %v12532
      %v12622 = vpop.f32.mrb[0].mxu0
      %v12623 = vadd.f32 0.0, %v12622
      %v12624 = vpop.f32.mrb[0].mxu0
      %v12625 = vpop.f32.mrb[0].mxu0
      %v12626 = vadd.f32 0.0, %v12625
      %v12627 = vpop.f32.mrb[0].mxu0
      %12628 = vmatprep.mubr.bf16.mxu0 0
      %12629 = vmatmul.mubr.bf16.gmra.mrb[0].mxu0 %v12533
      %v12630 = vpop.f32.mrb[0].mxu0
      %v12631 = vadd.f32 0.0, %v12630
      %v12632 = vpop.f32.mrb[0].mxu0
      %v12633 = vpop.f32.mrb[0].mxu0
      %v12634 = vadd.f32 0.0, %v12633
      %v12635 = vpop.f32.mrb[0].mxu0
      %12636 = vmatprep.mubr.bf16.mxu0 0
      %12637 = vmatmul.mubr.bf16.gmra.mrb[0].mxu0 %v12534
      %v12638 = vpop.f32.mrb[0].mxu0
      %v12639 = vadd.f32 0.0, %v12638
      %v12640 = vpop.f32.mrb[0].mxu0
      %v12641 = vpop.f32.mrb[0].mxu0
      %v12642 = vadd.f32 0.0, %v12641
      %v12643 = vpop.f32.mrb[0].mxu0
      %12644 = vmatprep.mubr.bf16.mxu0 0
      %12645 = vmatmul.mubr.bf16.gmra.mrb[0].mxu0 %v12535
      %v12646 = vpop.f32.mrb[0].mxu0
      %v12647 = vadd.f32 0.0, %v12646
      %v12648 = vpop.f32.mrb[0].mxu0
      %v12649 = vpop.f32.mrb[0].mxu0
      %v12650 = vadd.f32 0.0, %v12649
      %v12651 = vpop.f32.mrb[0].mxu0
      %12652 = vdwg.mxu0
      %v12653 = vadd.f32 %v12371, %v12623
      %v12654 = vadd.f32 %v12372, %v12626
      %v12655 = vadd.f32 %v12373, %v12631
      %v12656 = vadd.f32 %v12374, %v12634
      %v12657 = vadd.f32 %v12375, %v12639
      %v12658 = vadd.f32 %v12376, %v12642
      %v12659 = vadd.f32 %v12377, %v12647
      %v12660 = vadd.f32 %v12378, %v12650
      %v12661 = vld [vmem:[%s12208] sm:$0xe]
      %v12662 = vld [vmem:[%s12208 + $0x8] sm:$0xe]
      %v12663 = vld [vmem:[%s12208 + $0x10] sm:$0xe]
      %v12664 = vld [vmem:[%s12208 + $0x18] sm:$0xe]
      %v12665 = vld [vmem:[%s12208 + $0x20] sm:$0xe]
      %v12666 = vld [vmem:[%s12208 + $0x28] sm:$0xe]
      %v12667 = vld [vmem:[%s12208 + $0x30] sm:$0xe]
      %v12668 = vld [vmem:[%s12208 + $0x38] sm:$0xe]
      %v12685 = vrot.slane %v12661, 5
      %v12686 = vrot.slane %v12685, 4
      %v12687 = vrot.slane %v12380, 5
      %v12688 = vsel %vm2645, %v12686, %v12687
      %v12689 = vrot.slane %v12662, 5
      %v12690 = vrot.slane %v12689, 4
      %v12691 = vrot.slane %v12382, 5
      %v12692 = vsel %vm2645, %v12690, %v12691
      %v12693 = vrot.slane %v12663, 5
      %v12694 = vrot.slane %v12693, 4
      %v12695 = vrot.slane %v12384, 5
      %v12696 = vsel %vm2645, %v12694, %v12695
      %v12697 = vrot.slane %v12664, 5
      %v12698 = vrot.slane %v12697, 4
      %v12699 = vrot.slane %v12386, 5
      %v12700 = vsel %vm2645, %v12698, %v12699
      %v12701 = vrot.slane %v12665, 5
      %v12702 = vrot.slane %v12701, 4
      %v12703 = vrot.slane %v12388, 5
      %v12704 = vsel %vm2645, %v12702, %v12703
      %v12705 = vrot.slane %v12666, 5
      %v12706 = vrot.slane %v12705, 4
      %v12707 = vrot.slane %v12390, 5
      %v12708 = vsel %vm2645, %v12706, %v12707
      %v12709 = vrot.slane %v12667, 5
      %v12710 = vrot.slane %v12709, 4
      %v12711 = vrot.slane %v12392, 5
      %v12712 = vsel %vm2645, %v12710, %v12711
      %v12713 = vrot.slane %v12668, 5
      %v12714 = vrot.slane %v12713, 4
      %v12715 = vrot.slane %v12394, 5
      %v12716 = vsel %vm2645, %v12714, %v12715
      %s12717 = scalar_lea.vmem %s7, 512
      %v12718 = vld [vmem:[%s12717] sm:$0xf]
      %v12719 = vld [vmem:[%s12717 + $0x4] sm:$0xf]
      %v12720 = vld [vmem:[%s12717 + $0x8] sm:$0xf]
      %v12721 = vld [vmem:[%s12717 + $0xc] sm:$0xf]
      %v12722 = vld [vmem:[%s12717 + $0x10] sm:$0xf]
      %v12723 = vld [vmem:[%s12717 + $0x14] sm:$0xf]
      %v12724 = vld [vmem:[%s12717 + $0x18] sm:$0xf]
      %v12725 = vld [vmem:[%s12717 + $0x1c] sm:$0xf]
      %v12726 = vld [vmem:[%s12717 + $0x20] sm:$0xf]
      %v12727 = vld [vmem:[%s12717 + $0x24] sm:$0xf]
      %v12728 = vld [vmem:[%s12717 + $0x28] sm:$0xf]
      %v12729 = vld [vmem:[%s12717 + $0x2c] sm:$0xf]
      %v12730 = vld [vmem:[%s12717 + $0x30] sm:$0xf]
      %v12731 = vld [vmem:[%s12717 + $0x34] sm:$0xf]
      %v12732 = vld [vmem:[%s12717 + $0x38] sm:$0xf]
      %v12733 = vld [vmem:[%s12717 + $0x3c] sm:$0xf]
      %v12734 = vunpack.c.l.b16 %v12688
      %v12735 = vunpack.c.l.b16 %v12692
      %v12736 = vunpack.c.l.b16 %v12696
      %v12737 = vunpack.c.l.b16 %v12700
      %v12738 = vunpack.c.l.b16 %v12704
      %v12739 = vunpack.c.l.b16 %v12708
      %v12740 = vunpack.c.l.b16 %v12712
      %v12741 = vunpack.c.l.b16 %v12716
      %v12742 = vpack.c.b16 %v12735, %v12734
      %v12743 = vpack.c.b16 %v12737, %v12736
      %v12744 = vpack.c.b16 %v12739, %v12738
      %v12745 = vpack.c.b16 %v12741, %v12740
      %v12766 = vunpack.c.l.b16 %v12718
      %v12767 = vunpack.c.l.b16 %v12719
      %v12768 = vunpack.c.l.b16 %v12720
      %v12769 = vunpack.c.l.b16 %v12721
      %v12770 = vunpack.c.l.b16 %v12722
      %v12771 = vunpack.c.l.b16 %v12723
      %v12772 = vunpack.c.l.b16 %v12724
      %v12773 = vunpack.c.l.b16 %v12725
      %v12774 = vunpack.c.l.b16 %v12726
      %v12775 = vunpack.c.l.b16 %v12727
      %v12776 = vunpack.c.l.b16 %v12728
      %v12777 = vunpack.c.l.b16 %v12729
      %v12778 = vunpack.c.l.b16 %v12730
      %v12779 = vunpack.c.l.b16 %v12731
      %v12780 = vunpack.c.l.b16 %v12732
      %v12781 = vunpack.c.l.b16 %v12733
      %v12782 = vpack.c.b16 %v12767, %v12766
      %v12783 = vpack.c.b16 %v12769, %v12768
      %v12784 = vpack.c.b16 %v12771, %v12770
      %v12785 = vpack.c.b16 %v12773, %v12772
      %v12786 = vpack.c.b16 %v12775, %v12774
      %v12787 = vpack.c.b16 %v12777, %v12776
      %v12788 = vpack.c.b16 %v12779, %v12778
      %v12789 = vpack.c.b16 %v12781, %v12780
      %12798 = vmatprep.subr.bf16.mxu0 0
      %12799 = vmatpush1.bf16.msra.mxu0 %v12782
      %12800 = vmatprep.subr.bf16.mxu0 0
      %12801 = vmatpush1.bf16.msra.mxu0 %v12783
      %12802 = vmatprep.subr.bf16.mxu0 0
      %12803 = vmatpush1.bf16.msra.mxu0 %v12784
      %12804 = vmatprep.subr.bf16.mxu0 0
      %12805 = vmatpush1.bf16.msra.mxu0 %v12785
      %12806 = vmatprep.subr.bf16.mxu0 0
      %12807 = vmatpush1.bf16.msra.mxu0 %v12786
      %12808 = vmatprep.subr.bf16.mxu0 0
      %12809 = vmatpush1.bf16.msra.mxu0 %v12787
      %12810 = vmatprep.subr.bf16.mxu0 0
      %12811 = vmatpush1.bf16.msra.mxu0 %v12788
      %12812 = vmatprep.subr.bf16.mxu0 0
      %12813 = vmatpush1.bf16.msra.mxu0 %v12789
      %12814 = vmatprep.subr.bf16.mxu0 0
      %12815 = vmatpush1.bf16.msra.mxu0 0
      %12816 = vmatprep.subr.bf16.mxu0 0
      %12817 = vmatpush1.bf16.msra.mxu0 0
      %12818 = vmatprep.subr.bf16.mxu0 0
      %12819 = vmatpush1.bf16.msra.mxu0 0
      %12820 = vmatprep.subr.bf16.mxu0 0
      %12821 = vmatpush1.bf16.msra.mxu0 0
      %12822 = vmatprep.subr.bf16.mxu0 0
      %12823 = vmatpush1.bf16.msra.mxu0 0
      %12824 = vmatprep.subr.bf16.mxu0 0
      %12825 = vmatpush1.bf16.msra.mxu0 0
      %12826 = vmatprep.subr.bf16.mxu0 0
      %12827 = vmatpush1.bf16.msra.mxu0 0
      %12828 = vmatprep.subr.bf16.mxu0 0
      %12829 = vmatpush1.bf16.msra.mxu0 0
      %12830 = vmatprep.mubr.bf16.mxu0 0
      %12831 = vmatmul.mubr.bf16.gmra.mrb[0].mxu0 %v12742
      %v12832 = vpop.f32.mrb[0].mxu0
      %v12833 = vadd.f32 0.0, %v12832
      %v12834 = vpop.f32.mrb[0].mxu0
      %v12835 = vpop.f32.mrb[0].mxu0
      %v12836 = vadd.f32 0.0, %v12835
      %v12837 = vpop.f32.mrb[0].mxu0
      %12838 = vmatprep.mubr.bf16.mxu0 0
      %12839 = vmatmul.mubr.bf16.gmra.mrb[0].mxu0 %v12743
      %v12840 = vpop.f32.mrb[0].mxu0
      %v12841 = vadd.f32 0.0, %v12840
      %v12842 = vpop.f32.mrb[0].mxu0
      %v12843 = vpop.f32.mrb[0].mxu0
      %v12844 = vadd.f32 0.0, %v12843
      %v12845 = vpop.f32.mrb[0].mxu0
      %12846 = vmatprep.mubr.bf16.mxu0 0
      %12847 = vmatmul.mubr.bf16.gmra.mrb[0].mxu0 %v12744
      %v12848 = vpop.f32.mrb[0].mxu0
      %v12849 = vadd.f32 0.0, %v12848
      %v12850 = vpop.f32.mrb[0].mxu0
      %v12851 = vpop.f32.mrb[0].mxu0
      %v12852 = vadd.f32 0.0, %v12851
      %v12853 = vpop.f32.mrb[0].mxu0
      %12854 = vmatprep.mubr.bf16.mxu0 0
      %12855 = vmatmul.mubr.bf16.gmra.mrb[0].mxu0 %v12745
      %v12856 = vpop.f32.mrb[0].mxu0
      %v12857 = vadd.f32 0.0, %v12856
      %v12858 = vpop.f32.mrb[0].mxu0
      %v12859 = vpop.f32.mrb[0].mxu0
      %v12860 = vadd.f32 0.0, %v12859
      %v12861 = vpop.f32.mrb[0].mxu0
      %12862 = vdwg.mxu0
      %v12863 = vadd.f32 %v12653, %v12833
      %v12864 = vadd.f32 %v12654, %v12836
      %v12865 = vadd.f32 %v12655, %v12841
      %v12866 = vadd.f32 %v12656, %v12844
      %v12867 = vadd.f32 %v12657, %v12849
      %v12868 = vadd.f32 %v12658, %v12852
      %v12869 = vadd.f32 %v12659, %v12857
      %v12870 = vadd.f32 %v12660, %v12860
      %v12871 = vld [vmem:[%s8] sm:$0x1]
      %v12873 = vlaneseq
      %v12874 = vshrl.u32 %v12873, 7
      %v12875 = vsub.s32 0, %v12874
      %v12876 = vrot.slane %v12871, %v12875
      %v12878 = vadd.f32 %v12863, %v12876
      %v12879 = vadd.f32 %v12864, %v12876
      %v12880 = vadd.f32 %v12865, %v12876
      %v12881 = vadd.f32 %v12866, %v12876
      %v12882 = vadd.f32 %v12867, %v12876
      %v12883 = vadd.f32 %v12868, %v12876
      %v12884 = vadd.f32 %v12869, %v12876
      %v12885 = vadd.f32 %v12870, %v12876
      %v12886 = vmax.f32 %v12878, 0.0
      %v12887 = vmax.f32 %v12879, 0.0
      %v12888 = vmax.f32 %v12880, 0.0
      %v12889 = vmax.f32 %v12881, 0.0
      %v12890 = vmax.f32 %v12882, 0.0
      %v12891 = vmax.f32 %v12883, 0.0
      %v12892 = vmax.f32 %v12884, 0.0
      %v12893 = vmax.f32 %v12885, 0.0
      %v12894 = vpack.c.bf16 %v12886, %v12886
      %v12895 = vpack.c.bf16 %v12887, %v12887
      %v12896 = vpack.c.bf16 %v12888, %v12888
      %v12897 = vpack.c.bf16 %v12889, %v12889
      %v12898 = vpack.c.bf16 %v12890, %v12890
      %v12899 = vpack.c.bf16 %v12891, %v12891
      %v12900 = vpack.c.bf16 %v12892, %v12892
      %v12901 = vpack.c.bf16 %v12893, %v12893
      %12902 = vst [vmem:[%s450] sm:$0xf] %v12894
      %12903 = vst [vmem:[%s450 + $0x4] sm:$0xf] %v12895
      %12904 = vst [vmem:[%s450 + $0x8] sm:$0xf] %v12896
      %12905 = vst [vmem:[%s450 + $0xc] sm:$0xf] %v12897
      %12906 = vst [vmem:[%s450 + $0x10] sm:$0xf] %v12898
      %12907 = vst [vmem:[%s450 + $0x14] sm:$0xf] %v12899
      %12908 = vst [vmem:[%s450 + $0x18] sm:$0xf] %v12900
      %12909 = vst [vmem:[%s450 + $0x1c] sm:$0xf] %v12901
      %p12910 = scmp.lt.s32.totalorder %s24, 1
      %s12911 = scalar_select %p12910, %s24, 1
      %s12912 = smul.addr %s12911, 32
      %s12913 = smul.addr %s12912, 4
      %s12914 = scalar_lea.vmem %s9, %s12913
      %p12915 = scmp.lt.s32.totalorder %s24, 1
      %s12916 = scalar_select %p12915, %s24, 1
      %s12917 = smul.addr %s12916, 32
      %s12918 = smul.addr %s12917, 4
      %s12919 = scalar_lea.vmem %s10, %s12918
      %p12920 = scmp.lt.s32.totalorder %s24, 1
      %s12921 = scalar_select %p12920, %s24, 1
      %s12922 = smul.addr %s12921, 8
      %s12923 = smul.addr %s12922, 4
      %s12924 = scalar_lea.vmem %s11, %s12923
      %p12925 = scmp.lt.s32.totalorder %s24, 1
      %s12926 = scalar_select %p12925, %s24, 1
      %s12927 = smul.addr %s12926, 8
      %s12928 = smul.addr %s12927, 4
      %s12929 = scalar_lea.vmem %s12, %s12928
      // Predicated region
      $region57: #{vgg_forward.1} parent=55 // pred_check
        %p12930 = pneg %p236
      $region58: #{vgg_forward.1} parent=55 // pred_check_branch
        %12932 = sbr.rel (%p12930) target = $region60
      $region59: #{vgg_forward.1} parent=55 // pred_region
        _
      $region60: #{vgg_forward.1} parent=55 // pred_fallthru
        _
      // Predicated region
      $region61: #{vgg_forward.1} parent=55 // pred_check
        %p12933 = pneg %p262
      $region62: #{vgg_forward.1} parent=55 // pred_check_branch
        %12935 = sbr.rel (%p12933) target = $region64
      $region63: #{vgg_forward.1} parent=55 // pred_region
        _
      $region64: #{vgg_forward.1} parent=55 // pred_fallthru
        _
      // Predicated region
      $region65: #{vgg_forward.1} parent=55 // pred_check
        %p12936 = pneg %p288
      $region66: #{vgg_forward.1} parent=55 // pred_check_branch
        %12938 = sbr.rel (%p12936) target = $region68
      $region67: #{vgg_forward.1} parent=55 // pred_region
        _
      $region68: #{vgg_forward.1} parent=55 // pred_fallthru
        _
      // Predicated region
      $region69: #{vgg_forward.1} parent=55 // pred_check
        %p12939 = pneg %p314
      $region70: #{vgg_forward.1} parent=55 // pred_check_branch
        %12941 = sbr.rel (%p12939) target = $region72
      $region71: #{vgg_forward.1} parent=55 // pred_region
        _
      $region72: #{vgg_forward.1} parent=55 // pred_fallthru
        _
    $region56: #{vgg_forward.1} parent=5 // pred_fallthru
      _
    %p12942 = scmp.le.s32.totalorder 2, %s19
    // Predicated region
    $region73: #{vgg_forward.1} parent=5 // pred_check
      %p12943 = pneg %p12942
    $region74: #{vgg_forward.1} parent=5 // pred_check_branch
      %12945 = sbr.rel (%p12943) target = $region76
    $region75: #{vgg_forward.1} parent=5 // pred_region
      %s12946 = ssub.s32 %s19, 2
      // Predicated region
      $region77: #{vgg_forward.1} parent=75 // pred_check
        %p12947 = pneg %p242
      $region78: #{vgg_forward.1} parent=75 // pred_check_branch
        %12949 = sbr.rel (%p12947) target = $region80
      $region79: #{vgg_forward.1} parent=75 // pred_region
        %p12950 = scmp.lt.s32.totalorder %s25, 1
        %s12951 = scalar_select %p12950, %s25, 1
        %s12952 = smul.addr %s12951, 32
        %s12953 = smul.addr %s12952, 4
        %s12954 = scalar_lea.vmem %s9, %s12953
      $region80: #{vgg_forward.1} parent=75 // pred_fallthru
        _
      // Predicated region
      $region81: #{vgg_forward.1} parent=75 // pred_check
        %p12955 = pneg %p268
      $region82: #{vgg_forward.1} parent=75 // pred_check_branch
        %12957 = sbr.rel (%p12955) target = $region84
      $region83: #{vgg_forward.1} parent=75 // pred_region
        %p12958 = scmp.lt.s32.totalorder %s25, 1
        %s12959 = scalar_select %p12958, %s25, 1
        %s12960 = smul.addr %s12959, 32
        %s12961 = smul.addr %s12960, 4
        %s12962 = scalar_lea.vmem %s10, %s12961
      $region84: #{vgg_forward.1} parent=75 // pred_fallthru
        _
      // Predicated region
      $region85: #{vgg_forward.1} parent=75 // pred_check
        %p12963 = pneg %p294
      $region86: #{vgg_forward.1} parent=75 // pred_check_branch
        %12965 = sbr.rel (%p12963) target = $region88
      $region87: #{vgg_forward.1} parent=75 // pred_region
        %p12966 = scmp.lt.s32.totalorder %s25, 1
        %s12967 = scalar_select %p12966, %s25, 1
        %s12968 = smul.addr %s12967, 8
        %s12969 = smul.addr %s12968, 4
        %s12970 = scalar_lea.vmem %s11, %s12969
      $region88: #{vgg_forward.1} parent=75 // pred_fallthru
        _
      // Predicated region
      $region89: #{vgg_forward.1} parent=75 // pred_check
        %p12971 = pneg %p320
      $region90: #{vgg_forward.1} parent=75 // pred_check_branch
        %12973 = sbr.rel (%p12971) target = $region92
      $region91: #{vgg_forward.1} parent=75 // pred_region
        %p12974 = scmp.lt.s32.totalorder %s25, 1
        %s12975 = scalar_select %p12974, %s25, 1
        %s12976 = smul.addr %s12975, 8
        %s12977 = smul.addr %s12976, 4
        %s12978 = scalar_lea.vmem %s12, %s12977
      $region92: #{vgg_forward.1} parent=75 // pred_fallthru
        _
    $region76: #{vgg_forward.1} parent=5 // pred_fallthru
      _
  $region6: #{vgg_forward.1} parent=0 // loop_footer
    %s23 = sadd.s32 1, %s19
  $region7: #{vgg_forward.1} parent=0 // loop_footer_branch
    %18 = sbr.rel target = $region3
  $region8: #{vgg_forward.1} parent=0 // loop_exit
    _

</llo_original>
